<compile_context>
chip_gen: v5e
topology: v5e:2x2
jax: 0.10.0
libtpu: 0.0.40
codegen_flags: <defaults>
</compile_context>

<pallas_src>
import functools

import numpy as np

import jax
import jax.numpy as jnp
from jax.experimental import pallas as pl
from jax.experimental.pallas import tpu as pltpu

LRELU_SLOPE = 0.2
BN_EPS = 1e-5
K = 4  # conv kernel size (non-mnist GPND encoder: all convs are 4x4)


# ----------------------------- fused Pallas kernel -----------------------------

def encoder_kernel(x_ref, m1_ref, b1_ref, m2_ref, g2_ref, bt2_ref,
                   m3_ref, g3_ref, bt3_ref, m4_ref, b4_ref,
                   o_ref, s2_ref, s3_ref, y2_ref, y3_ref, *, cfg):
    (N, H, OH1, OW1, C1, OH2, OW2, C2, OH3, OW3, C3, Z) = cfg

    # Zero the padded activation scratches once: their halo rows provide the
    # H-padding zeros of conv2 / conv3 (the W-padding is folded into the
    # banded weight matrices).
    s2_ref[...] = jnp.zeros(s2_ref.shape, s2_ref.dtype)
    s3_ref[...] = jnp.zeros(s3_ref.shape, s3_ref.dtype)

    def lrelu(z):
        return jnp.where(z > 0, z, LRELU_SLOPE * z)

    def conv_rows(src_ref, m_ref, rows_per_img, oh, ow, cout, stride, emit):
        """Generic 4x4 conv.  For output row r, the 4 kernel rows correspond to
        4 CONTIGUOUS rows of the (H-padded, W-unpadded) row-major activation;
        one matmul against the banded weight matrix [M_0 | M_1 | M_2 | M_3]
        (kw-shifts folded in) gives all 4 kernel-row contributions, which are
        summed from the block diagonal.  f32 accumulation, bf16 MXU operands."""
        owc = ow * cout
        for n in range(N):
            for r in range(oh):
                r0 = n * rows_per_img + stride * r
                v = src_ref[r0:r0 + K, :].astype(jnp.bfloat16)      # (K, Win*Cin)
                p = jnp.dot(v, m_ref[...],
                            preferred_element_type=jnp.float32)     # (K, K*owc)
                row = p[0:1, 0:owc]
                for i in range(1, K):
                    row = row + p[i:i + 1, i * owc:(i + 1) * owc]
                emit(n, r, row)                                     # (1, ow*cout)

    def bn_lrelu(y, gamma, beta, ow, c):
        """Training-mode BatchNorm (biased batch variance over N*OH*OW) fused
        with leaky-relu, on the full (N*OH, OW*C) layer output (columns are
        ow-major / channel-minor)."""
        total = y.shape[0] * ow

        def chan_sum(row_sum):                       # (1, ow*c) -> (1, c)
            s = row_sum[:, 0:c]
            for b in range(1, ow):
                s = s + row_sum[:, b * c:(b + 1) * c]
            return s

        mean = chan_sum(jnp.sum(y, axis=0, keepdims=True)) / total
        d = y - jnp.concatenate([mean] * ow, axis=1)
        var = chan_sum(jnp.sum(d * d, axis=0, keepdims=True)) / total
        scale = gamma * jax.lax.rsqrt(var + BN_EPS)
        z = (d * jnp.concatenate([scale] * ow, axis=1)
             + jnp.concatenate([beta] * ow, axis=1))
        return lrelu(z)

    # ---- layer 1: conv1_1(4,2,1) + bias + leaky-relu -> interior of s2 ----
    hp2 = OH1 + 2

    def emit1(n, r, row):
        s2_ref[n * hp2 + r + 1:n * hp2 + r + 2, :] = lrelu(row + b1_ref[...])

    conv_rows(x_ref, m1_ref, H + 2, OH1, OW1, C1, 2, emit1)

    # ---- layer 2: conv2(4,2,1) + BN + leaky-relu (conv bias dropped: it is ----
    # ---- exactly cancelled by the BN mean subtraction)                     ----
    def emit2(n, r, row):
        y2_ref[n * OH2 + r:n * OH2 + r + 1, :] = row

    conv_rows(s2_ref, m2_ref, hp2, OH2, OW2, C2, 2, emit2)
    y2 = bn_lrelu(y2_ref[...], g2_ref[...], bt2_ref[...], OW2, C2)
    hp3 = OH2 + 2
    for n in range(N):
        s3_ref[n * hp3 + 1:n * hp3 + 1 + OH2, :] = y2[n * OH2:(n + 1) * OH2, :]

    # ---- layer 3: conv3(4,2,1) + BN + leaky-relu ----
    def emit3(n, r, row):
        y3_ref[n * OH3 + r:n * OH3 + r + 1, :] = row

    conv_rows(s3_ref, m3_ref, hp3, OH3, OW3, C3, 2, emit3)
    y3_ref[...] = bn_lrelu(y3_ref[...], g3_ref[...], bt3_ref[...], OW3, C3)

    # ---- layer 4: conv4(4,1,0) + bias, no activation (its input is exactly ----
    # ---- the VMEM-resident layer-3 output)                                  ----
    def emit4(n, r, row):
        o_ref[n:n + 1, :] = row + b4_ref[...]

    conv_rows(y3_ref, m4_ref, OH3, 1, 1, Z, 1, emit4)


# ----------------------------- one-time parameter prep -----------------------------

def prepare_params(p, in_hw=32):
    """Hoisted out of the forward path.  Builds, per layer, the banded weight
    matrix M = [M_0 | M_1 | M_2 | M_3] (bf16) with
        M_i[w*Cin + ci, ow*Cout + co] = W[co, ci, i, j]   where j = stride*ow + j
    (the kw-shift and the W-padding are folded into the band structure), plus
    f32 bias / BN-affine rows.  conv2/conv3 biases are intentionally omitted
    (cancelled by BN)."""
    def band(w, win, ow, stride, pad):
        w = np.asarray(w, np.float32)
        cout, cin, k, _ = w.shape
        blocks = []
        for i in range(k):
            m = np.zeros((win * cin, ow * cout), np.float32)
            for o in range(ow):
                for j in range(k):
                    wu = stride * o + j - pad
                    if 0 <= wu < win:
                        m[wu * cin:(wu + 1) * cin,
                          o * cout:(o + 1) * cout] = w[:, :, i, j].T
            blocks.append(m)
        return jnp.asarray(np.concatenate(blocks, axis=1), jnp.bfloat16)

    def row(v):
        return jnp.asarray(np.asarray(v, np.float32).reshape(1, -1))

    def tiled_bias(v, ow):
        return jnp.asarray(
            np.tile(np.asarray(v, np.float32).reshape(1, -1), (1, ow)))

    w1_ow, w2_ow, w3_ow = in_hw // 2, in_hw // 4, in_hw // 8
    return {
        "m1": band(p["w1"], in_hw, w1_ow, 2, 1), "b1": tiled_bias(p["b1"], w1_ow),
        "m2": band(p["w2"], w1_ow, w2_ow, 2, 1),
        "g2": row(p["g2"]), "bt2": row(p["beta2"]),
        "m3": band(p["w3"], w2_ow, w3_ow, 2, 1),
        "g3": row(p["g3"]), "bt3": row(p["beta3"]),
        "m4": band(p["w4"], w3_ow, 1, 1, 0), "b4": row(p["b4"]),
    }


# ----------------------------- Encoder forward (single dispatch) -----------------------------

def encoder_forward(x_nchw, q):
    N, C0, H, W = x_nchw.shape
    OH1, OW1 = H // 2, W // 2
    OH2, OW2 = OH1 // 2, OW1 // 2
    OH3, OW3 = OH2 // 2, OW2 // 2
    C1 = q["b1"].shape[1] // OW1
    C2 = q["g2"].shape[1]
    C3 = q["g3"].shape[1]
    Z = q["b4"].shape[1]
    cfg = (N, H, OH1, OW1, C1, OH2, OW2, C2, OH3, OW3, C3, Z)

    # Only remaining trace-time glue: NCHW -> row-major (N*(H+2), W*C0) f32
    # rows with zero H-halo rows (W-halo lives in the banded weights).
    x = jnp.transpose(x_nchw, (0, 2, 3, 1)).astype(jnp.float32)
    x = jnp.pad(x, ((0, 0), (1, 1), (0, 0), (0, 0)))
    x2d = x.reshape(N * (H + 2), W * C0)

    full = lambda a: pl.BlockSpec(a.shape, lambda i: (0, 0))

    out = pl.pallas_call(
        functools.partial(encoder_kernel, cfg=cfg),
        out_shape=jax.ShapeDtypeStruct((N, Z), jnp.float32),
        grid=(1,),
        in_specs=[full(x2d),
                  full(q["m1"]), full(q["b1"]),
                  full(q["m2"]), full(q["g2"]), full(q["bt2"]),
                  full(q["m3"]), full(q["g3"]), full(q["bt3"]),
                  full(q["m4"]), full(q["b4"])],
        out_specs=pl.BlockSpec((N, Z), lambda i: (0, 0)),
        scratch_shapes=[
            pltpu.VMEM((N * (OH1 + 2), OW1 * C1), jnp.float32),  # layer-2 input (H-halo)
            pltpu.VMEM((N * (OH2 + 2), OW2 * C2), jnp.float32),  # layer-3 input (H-halo)
            pltpu.VMEM((N * OH2, OW2 * C2), jnp.float32),        # layer-2 pre-act (BN)
            pltpu.VMEM((N * OH3, OW3 * C3), jnp.float32),        # layer-3 pre-act / layer-4 input
        ],
        compiler_params=pltpu.CompilerParams(dimension_semantics=("arbitrary",)),
    )(x2d, q["m1"], q["b1"], q["m2"], q["g2"], q["bt2"],
      q["m3"], q["g3"], q["bt3"], q["m4"], q["b4"])

    return out[:, :, None, None]                     # (N, z_size, 1, 1), NCHW


# ----------------------------- pure-JAX reference (f32) -----------------------------

def _ref_forward(x, p):
    def conv(x, w, b, s, pad):
        y = jax.lax.conv_general_dilated(
            x, w, (s, s), [(pad, pad), (pad, pad)],
            dimension_numbers=("NCHW", "OIHW", "NCHW"))
        return y + b[None, :, None, None]

    def bn(x, g, b):
        mu = jnp.mean(x, axis=(0, 2, 3), keepdims=True)
        var = jnp.mean((x - mu) ** 2, axis=(0, 2, 3), keepdims=True)
        return (x - mu) / jnp.sqrt(var + BN_EPS) * g[None, :, None, None] \
               + b[None, :, None, None]

    lrelu = lambda t: jnp.where(t > 0, t, LRELU_SLOPE * t)
    x = lrelu(conv(x, p["w1"], p["b1"], 2, 1))
    x = lrelu(bn(conv(x, p["w2"], p["b2"], 2, 1), p["g2"], p["beta2"]))
    x = lrelu(bn(conv(x, p["w3"], p["b3"], 2, 1), p["g3"], p["beta3"]))
    return conv(x, p["w4"], p["b4"], 1, 0)


# ----------------------------- main -----------------------------

if __name__ == "__main__":
    key = jax.random.PRNGKey(0)

    # Small but shape-consistent config: 32x32 input -> 16 -> 8 -> 4 -> 1x1.
    z_size, d, channels = 16, 8, 1
    N, HW = 2, 32

    ks = jax.random.split(key, 8)
    std = 0.02  # Encoder.weight_init(0.0, 0.02); conv biases zero; BN affine default.
    params = {
        "w1": std * jax.random.normal(ks[0], (d, channels, 4, 4), jnp.float32),
        "b1": jnp.zeros((d,), jnp.float32),
        "w2": std * jax.random.normal(ks[1], (2 * d, d, 4, 4), jnp.float32),
        "b2": jnp.zeros((2 * d,), jnp.float32),
        "g2": jnp.ones((2 * d,), jnp.float32),
        "beta2": jnp.zeros((2 * d,), jnp.float32),
        "w3": std * jax.random.normal(ks[2], (4 * d, 2 * d, 4, 4), jnp.float32),
        "b3": jnp.zeros((4 * d,), jnp.float32),
        "g3": jnp.ones((4 * d,), jnp.float32),
        "beta3": jnp.zeros((4 * d,), jnp.float32),
        "w4": std * jax.random.normal(ks[3], (z_size, 4 * d, 4, 4), jnp.float32),
        "b4": jnp.zeros((z_size,), jnp.float32),
    }

    x = jax.random.normal(ks[4], (N, channels, HW, HW), jnp.float32)

    prep = prepare_params(params, in_hw=HW)          # hoisted: once, outside jit
    fwd = jax.jit(encoder_forward)
    out = jax.block_until_ready(fwd(x, prep))

    ref = _ref_forward(x, params)
    assert out.shape == (N, z_size, 1, 1), out.shape
    # bf16 MXU operands (f32 accumulation + f32 VMEM-resident activations);
    # compare against the pure-f32 reference at bf16-operand tolerance.
    assert jnp.allclose(out, ref, rtol=2e-2, atol=2e-2), \
        float(jnp.max(jnp.abs(out - ref)))

    print("KERNEL_OK")
</pallas_src>

<mosaic_0001>
module attributes {stable_mosaic.version = 11 : i64} {
  func.func @encoder_kernel(%arg0: i32, %arg1: memref<68x32xf32, #tpu.memory_space<vmem>>, %arg2: memref<32x512xbf16, #tpu.memory_space<vmem>>, %arg3: memref<1x128xf32, #tpu.memory_space<vmem>>, %arg4: memref<128x512xbf16, #tpu.memory_space<vmem>>, %arg5: memref<1x16xf32, #tpu.memory_space<vmem>>, %arg6: memref<1x16xf32, #tpu.memory_space<vmem>>, %arg7: memref<128x512xbf16, #tpu.memory_space<vmem>>, %arg8: memref<1x32xf32, #tpu.memory_space<vmem>>, %arg9: memref<1x32xf32, #tpu.memory_space<vmem>>, %arg10: memref<128x64xbf16, #tpu.memory_space<vmem>>, %arg11: memref<1x16xf32, #tpu.memory_space<vmem>>, %arg12: memref<2x16xf32, #tpu.memory_space<vmem>>, %arg13: memref<36x128xf32, #tpu.memory_space<vmem>>, %arg14: memref<20x128xf32, #tpu.memory_space<vmem>>, %arg15: memref<16x128xf32, #tpu.memory_space<vmem>>, %arg16: memref<8x128xf32, #tpu.memory_space<vmem>>) attributes {dimension_semantics = [#tpu.dimension_semantics<arbitrary>], iteration_bounds = array<i64: 1>, scalar_prefetch = 0 : i64, scratch_operands = 4 : i64, tpu.core_type = #tpu.core_type<tc>, window_params = [{pipeline_mode = #tpu.pipeline_mode<synchronous>, transform_indices = @transform_0, window_bounds = array<i64: 68, 32>}, {pipeline_mode = #tpu.pipeline_mode<synchronous>, transform_indices = @transform_1, window_bounds = array<i64: 32, 512>}, {pipeline_mode = #tpu.pipeline_mode<synchronous>, transform_indices = @transform_2, window_bounds = array<i64: 1, 128>}, {pipeline_mode = #tpu.pipeline_mode<synchronous>, transform_indices = @transform_3, window_bounds = array<i64: 128, 512>}, {pipeline_mode = #tpu.pipeline_mode<synchronous>, transform_indices = @transform_4, window_bounds = array<i64: 1, 16>}, {pipeline_mode = #tpu.pipeline_mode<synchronous>, transform_indices = @transform_5, window_bounds = array<i64: 1, 16>}, {pipeline_mode = #tpu.pipeline_mode<synchronous>, transform_indices = @transform_6, window_bounds = array<i64: 128, 512>}, {pipeline_mode = #tpu.pipeline_mode<synchronous>, transform_indices = @transform_7, window_bounds = array<i64: 1, 32>}, {pipeline_mode = #tpu.pipeline_mode<synchronous>, transform_indices = @transform_8, window_bounds = array<i64: 1, 32>}, {pipeline_mode = #tpu.pipeline_mode<synchronous>, transform_indices = @transform_9, window_bounds = array<i64: 128, 64>}, {pipeline_mode = #tpu.pipeline_mode<synchronous>, transform_indices = @transform_10, window_bounds = array<i64: 1, 16>}, {pipeline_mode = #tpu.pipeline_mode<synchronous>, transform_indices = @transform_11, window_bounds = array<i64: 2, 16>}]} {
    %cst = arith.constant 0.000000e+00 : f32
    %0 = vector.broadcast %cst : f32 to vector<36x128xf32>
    %c0 = arith.constant 0 : index
    %c0_0 = arith.constant 0 : index
    %1 = vector.load %arg13[%c0, %c0_0] : memref<36x128xf32, #tpu.memory_space<vmem>>, vector<36x128xf32>
    tpu.vector_store %arg13[%c0, %c0_0], %0 {strides = array<i32>} : memref<36x128xf32, #tpu.memory_space<vmem>>, vector<36x128xf32>,
    %cst_1 = arith.constant 0.000000e+00 : f32
    %2 = vector.broadcast %cst_1 : f32 to vector<20x128xf32>
    %c0_2 = arith.constant 0 : index
    %c0_3 = arith.constant 0 : index
    %3 = vector.load %arg14[%c0_2, %c0_3] : memref<20x128xf32, #tpu.memory_space<vmem>>, vector<20x128xf32>
    tpu.vector_store %arg14[%c0_2, %c0_3], %2 {strides = array<i32>} : memref<20x128xf32, #tpu.memory_space<vmem>>, vector<20x128xf32>,
    %c0_4 = arith.constant 0 : index
    %c0_5 = arith.constant 0 : index
    %4 = vector.load %arg1[%c0_4, %c0_5] : memref<68x32xf32, #tpu.memory_space<vmem>>, vector<4x32xf32>
    %5 = arith.truncf %4 : vector<4x32xf32> to vector<4x32xbf16>
    %c0_6 = arith.constant 0 : index
    %c0_7 = arith.constant 0 : index
    %6 = vector.load %arg2[%c0_6, %c0_7] : memref<32x512xbf16, #tpu.memory_space<vmem>>, vector<32x512xbf16>
    %cst_8 = arith.constant dense<0.000000e+00> : vector<4x512xf32>
    %7 = tpu.matmul %5, %6, %cst_8 {dimension_numbers = #tpu.dot_dimension_numbers<[1], [0], [0], [1], [0, 0, 1, 1], [], []>} : vector<4x32xbf16>, vector<32x512xbf16>, vector<4x512xf32> -> vector<4x512xf32>
    %8 = vector.extract_strided_slice %7 {offsets = [0, 0], sizes = [1, 128], strides = [1, 1]} : vector<4x512xf32> to vector<1x128xf32>
    %9 = vector.extract_strided_slice %7 {offsets = [1, 128], sizes = [1, 128], strides = [1, 1]} : vector<4x512xf32> to vector<1x128xf32>
    %10 = arith.addf %8, %9 : vector<1x128xf32>
    %11 = vector.extract_strided_slice %7 {offsets = [2, 256], sizes = [1, 128], strides = [1, 1]} : vector<4x512xf32> to vector<1x128xf32>
    %12 = arith.addf %10, %11 : vector<1x128xf32>
    %13 = vector.extract_strided_slice %7 {offsets = [3, 384], sizes = [1, 128], strides = [1, 1]} : vector<4x512xf32> to vector<1x128xf32>
    %14 = arith.addf %12, %13 : vector<1x128xf32>
    %c0_9 = arith.constant 0 : index
    %c0_10 = arith.constant 0 : index
    %15 = vector.load %arg3[%c0_9, %c0_10] : memref<1x128xf32, #tpu.memory_space<vmem>>, vector<1x128xf32>
    %16 = arith.addf %14, %15 : vector<1x128xf32>
    %cst_11 = arith.constant 0.000000e+00 : f32
    %17 = vector.broadcast %cst_11 : f32 to vector<1x128xf32>
    %18 = arith.cmpf ogt, %16, %17 : vector<1x128xf32>
    %cst_12 = arith.constant 2.000000e-01 : f32
    %19 = vector.broadcast %cst_12 : f32 to vector<1x128xf32>
    %20 = arith.mulf %19, %16 : vector<1x128xf32>
    %21 = arith.select %18, %16, %20 : vector<1x128xi1>, vector<1x128xf32>
    %c1 = arith.constant 1 : index
    %c0_13 = arith.constant 0 : index
    %22 = vector.load %arg13[%c1, %c0_13] : memref<36x128xf32, #tpu.memory_space<vmem>>, vector<1x128xf32>
    tpu.vector_store %arg13[%c1, %c0_13], %21 {strides = array<i32>} : memref<36x128xf32, #tpu.memory_space<vmem>>, vector<1x128xf32>,
    %c2 = arith.constant 2 : index
    %c0_14 = arith.constant 0 : index
    %23 = vector.load %arg1[%c2, %c0_14] : memref<68x32xf32, #tpu.memory_space<vmem>>, vector<4x32xf32>
    %24 = arith.truncf %23 : vector<4x32xf32> to vector<4x32xbf16>
    %c0_15 = arith.constant 0 : index
    %c0_16 = arith.constant 0 : index
    %25 = vector.load %arg2[%c0_15, %c0_16] : memref<32x512xbf16, #tpu.memory_space<vmem>>, vector<32x512xbf16>
    %cst_17 = arith.constant dense<0.000000e+00> : vector<4x512xf32>
    %26 = tpu.matmul %24, %25, %cst_17 {dimension_numbers = #tpu.dot_dimension_numbers<[1], [0], [0], [1], [0, 0, 1, 1], [], []>} : vector<4x32xbf16>, vector<32x512xbf16>, vector<4x512xf32> -> vector<4x512xf32>
    %27 = vector.extract_strided_slice %26 {offsets = [0, 0], sizes = [1, 128], strides = [1, 1]} : vector<4x512xf32> to vector<1x128xf32>
    %28 = vector.extract_strided_slice %26 {offsets = [1, 128], sizes = [1, 128], strides = [1, 1]} : vector<4x512xf32> to vector<1x128xf32>
    %29 = arith.addf %27, %28 : vector<1x128xf32>
    %30 = vector.extract_strided_slice %26 {offsets = [2, 256], sizes = [1, 128], strides = [1, 1]} : vector<4x512xf32> to vector<1x128xf32>
    %31 = arith.addf %29, %30 : vector<1x128xf32>
    %32 = vector.extract_strided_slice %26 {offsets = [3, 384], sizes = [1, 128], strides = [1, 1]} : vector<4x512xf32> to vector<1x128xf32>
    %33 = arith.addf %31, %32 : vector<1x128xf32>
    %c0_18 = arith.constant 0 : index
    %c0_19 = arith.constant 0 : index
    %34 = vector.load %arg3[%c0_18, %c0_19] : memref<1x128xf32, #tpu.memory_space<vmem>>, vector<1x128xf32>
    %35 = arith.addf %33, %34 : vector<1x128xf32>
    %cst_20 = arith.constant 0.000000e+00 : f32
    %36 = vector.broadcast %cst_20 : f32 to vector<1x128xf32>
    %37 = arith.cmpf ogt, %35, %36 : vector<1x128xf32>
    %cst_21 = arith.constant 2.000000e-01 : f32
    %38 = vector.broadcast %cst_21 : f32 to vector<1x128xf32>
    %39 = arith.mulf %38, %35 : vector<1x128xf32>
    %40 = arith.select %37, %35, %39 : vector<1x128xi1>, vector<1x128xf32>
    %c2_22 = arith.constant 2 : index
    %c0_23 = arith.constant 0 : index
    %41 = vector.load %arg13[%c2_22, %c0_23] : memref<36x128xf32, #tpu.memory_space<vmem>>, vector<1x128xf32>
    tpu.vector_store %arg13[%c2_22, %c0_23], %40 {strides = array<i32>} : memref<36x128xf32, #tpu.memory_space<vmem>>, vector<1x128xf32>,
    %c4 = arith.constant 4 : index
    %c0_24 = arith.constant 0 : index
    %42 = vector.load %arg1[%c4, %c0_24] : memref<68x32xf32, #tpu.memory_space<vmem>>, vector<4x32xf32>
    %43 = arith.truncf %42 : vector<4x32xf32> to vector<4x32xbf16>
    %c0_25 = arith.constant 0 : index
    %c0_26 = arith.constant 0 : index
    %44 = vector.load %arg2[%c0_25, %c0_26] : memref<32x512xbf16, #tpu.memory_space<vmem>>, vector<32x512xbf16>
    %cst_27 = arith.constant dense<0.000000e+00> : vector<4x512xf32>
    %45 = tpu.matmul %43, %44, %cst_27 {dimension_numbers = #tpu.dot_dimension_numbers<[1], [0], [0], [1], [0, 0, 1, 1], [], []>} : vector<4x32xbf16>, vector<32x512xbf16>, vector<4x512xf32> -> vector<4x512xf32>
    %46 = vector.extract_strided_slice %45 {offsets = [0, 0], sizes = [1, 128], strides = [1, 1]} : vector<4x512xf32> to vector<1x128xf32>
    %47 = vector.extract_strided_slice %45 {offsets = [1, 128], sizes = [1, 128], strides = [1, 1]} : vector<4x512xf32> to vector<1x128xf32>
    %48 = arith.addf %46, %47 : vector<1x128xf32>
    %49 = vector.extract_strided_slice %45 {offsets = [2, 256], sizes = [1, 128], strides = [1, 1]} : vector<4x512xf32> to vector<1x128xf32>
    %50 = arith.addf %48, %49 : vector<1x128xf32>
    %51 = vector.extract_strided_slice %45 {offsets = [3, 384], sizes = [1, 128], strides = [1, 1]} : vector<4x512xf32> to vector<1x128xf32>
    %52 = arith.addf %50, %51 : vector<1x128xf32>
    %c0_28 = arith.constant 0 : index
    %c0_29 = arith.constant 0 : index
    %53 = vector.load %arg3[%c0_28, %c0_29] : memref<1x128xf32, #tpu.memory_space<vmem>>, vector<1x128xf32>
    %54 = arith.addf %52, %53 : vector<1x128xf32>
    %cst_30 = arith.constant 0.000000e+00 : f32
    %55 = vector.broadcast %cst_30 : f32 to vector<1x128xf32>
    %56 = arith.cmpf ogt, %54, %55 : vector<1x128xf32>
    %cst_31 = arith.constant 2.000000e-01 : f32
    %57 = vector.broadcast %cst_31 : f32 to vector<1x128xf32>
    %58 = arith.mulf %57, %54 : vector<1x128xf32>
    %59 = arith.select %56, %54, %58 : vector<1x128xi1>, vector<1x128xf32>
    %c3 = arith.constant 3 : index
    %c0_32 = arith.constant 0 : index
    %60 = vector.load %arg13[%c3, %c0_32] : memref<36x128xf32, #tpu.memory_space<vmem>>, vector<1x128xf32>
    tpu.vector_store %arg13[%c3, %c0_32], %59 {strides = array<i32>} : memref<36x128xf32, #tpu.memory_space<vmem>>, vector<1x128xf32>,
    %c6 = arith.constant 6 : index
    %c0_33 = arith.constant 0 : index
    %61 = vector.load %arg1[%c6, %c0_33] : memref<68x32xf32, #tpu.memory_space<vmem>>, vector<4x32xf32>
    %62 = arith.truncf %61 : vector<4x32xf32> to vector<4x32xbf16>
    %c0_34 = arith.constant 0 : index
    %c0_35 = arith.constant 0 : index
    %63 = vector.load %arg2[%c0_34, %c0_35] : memref<32x512xbf16, #tpu.memory_space<vmem>>, vector<32x512xbf16>
    %cst_36 = arith.constant dense<0.000000e+00> : vector<4x512xf32>
    %64 = tpu.matmul %62, %63, %cst_36 {dimension_numbers = #tpu.dot_dimension_numbers<[1], [0], [0], [1], [0, 0, 1, 1], [], []>} : vector<4x32xbf16>, vector<32x512xbf16>, vector<4x512xf32> -> vector<4x512xf32>
    %65 = vector.extract_strided_slice %64 {offsets = [0, 0], sizes = [1, 128], strides = [1, 1]} : vector<4x512xf32> to vector<1x128xf32>
    %66 = vector.extract_strided_slice %64 {offsets = [1, 128], sizes = [1, 128], strides = [1, 1]} : vector<4x512xf32> to vector<1x128xf32>
    %67 = arith.addf %65, %66 : vector<1x128xf32>
    %68 = vector.extract_strided_slice %64 {offsets = [2, 256], sizes = [1, 128], strides = [1, 1]} : vector<4x512xf32> to vector<1x128xf32>
    %69 = arith.addf %67, %68 : vector<1x128xf32>
    %70 = vector.extract_strided_slice %64 {offsets = [3, 384], sizes = [1, 128], strides = [1, 1]} : vector<4x512xf32> to vector<1x128xf32>
    %71 = arith.addf %69, %70 : vector<1x128xf32>
    %c0_37 = arith.constant 0 : index
    %c0_38 = arith.constant 0 : index
    %72 = vector.load %arg3[%c0_37, %c0_38] : memref<1x128xf32, #tpu.memory_space<vmem>>, vector<1x128xf32>
    %73 = arith.addf %71, %72 : vector<1x128xf32>
    %cst_39 = arith.constant 0.000000e+00 : f32
    %74 = vector.broadcast %cst_39 : f32 to vector<1x128xf32>
    %75 = arith.cmpf ogt, %73, %74 : vector<1x128xf32>
    %cst_40 = arith.constant 2.000000e-01 : f32
    %76 = vector.broadcast %cst_40 : f32 to vector<1x128xf32>
    %77 = arith.mulf %76, %73 : vector<1x128xf32>
    %78 = arith.select %75, %73, %77 : vector<1x128xi1>, vector<1x128xf32>
    %c4_41 = arith.constant 4 : index
    %c0_42 = arith.constant 0 : index
    %79 = vector.load %arg13[%c4_41, %c0_42] : memref<36x128xf32, #tpu.memory_space<vmem>>, vector<1x128xf32>
    tpu.vector_store %arg13[%c4_41, %c0_42], %78 {strides = array<i32>} : memref<36x128xf32, #tpu.memory_space<vmem>>, vector<1x128xf32>,
    %c8 = arith.constant 8 : index
    %c0_43 = arith.constant 0 : index
    %80 = vector.load %arg1[%c8, %c0_43] : memref<68x32xf32, #tpu.memory_space<vmem>>, vector<4x32xf32>
    %81 = arith.truncf %80 : vector<4x32xf32> to vector<4x32xbf16>
    %c0_44 = arith.constant 0 : index
    %c0_45 = arith.constant 0 : index
    %82 = vector.load %arg2[%c0_44, %c0_45] : memref<32x512xbf16, #tpu.memory_space<vmem>>, vector<32x512xbf16>
    %cst_46 = arith.constant dense<0.000000e+00> : vector<4x512xf32>
    %83 = tpu.matmul %81, %82, %cst_46 {dimension_numbers = #tpu.dot_dimension_numbers<[1], [0], [0], [1], [0, 0, 1, 1], [], []>} : vector<4x32xbf16>, vector<32x512xbf16>, vector<4x512xf32> -> vector<4x512xf32>
    %84 = vector.extract_strided_slice %83 {offsets = [0, 0], sizes = [1, 128], strides = [1, 1]} : vector<4x512xf32> to vector<1x128xf32>
    %85 = vector.extract_strided_slice %83 {offsets = [1, 128], sizes = [1, 128], strides = [1, 1]} : vector<4x512xf32> to vector<1x128xf32>
    %86 = arith.addf %84, %85 : vector<1x128xf32>
    %87 = vector.extract_strided_slice %83 {offsets = [2, 256], sizes = [1, 128], strides = [1, 1]} : vector<4x512xf32> to vector<1x128xf32>
    %88 = arith.addf %86, %87 : vector<1x128xf32>
    %89 = vector.extract_strided_slice %83 {offsets = [3, 384], sizes = [1, 128], strides = [1, 1]} : vector<4x512xf32> to vector<1x128xf32>
    %90 = arith.addf %88, %89 : vector<1x128xf32>
    %c0_47 = arith.constant 0 : index
    %c0_48 = arith.constant 0 : index
    %91 = vector.load %arg3[%c0_47, %c0_48] : memref<1x128xf32, #tpu.memory_space<vmem>>, vector<1x128xf32>
    %92 = arith.addf %90, %91 : vector<1x128xf32>
    %cst_49 = arith.constant 0.000000e+00 : f32
    %93 = vector.broadcast %cst_49 : f32 to vector<1x128xf32>
    %94 = arith.cmpf ogt, %92, %93 : vector<1x128xf32>
    %cst_50 = arith.constant 2.000000e-01 : f32
    %95 = vector.broadcast %cst_50 : f32 to vector<1x128xf32>
    %96 = arith.mulf %95, %92 : vector<1x128xf32>
    %97 = arith.select %94, %92, %96 : vector<1x128xi1>, vector<1x128xf32>
    %c5 = arith.constant 5 : index
    %c0_51 = arith.constant 0 : index
    %98 = vector.load %arg13[%c5, %c0_51] : memref<36x128xf32, #tpu.memory_space<vmem>>, vector<1x128xf32>
    tpu.vector_store %arg13[%c5, %c0_51], %97 {strides = array<i32>} : memref<36x128xf32, #tpu.memory_space<vmem>>, vector<1x128xf32>,
    %c10 = arith.constant 10 : index
    %c0_52 = arith.constant 0 : index
    %99 = vector.load %arg1[%c10, %c0_52] : memref<68x32xf32, #tpu.memory_space<vmem>>, vector<4x32xf32>
    %100 = arith.truncf %99 : vector<4x32xf32> to vector<4x32xbf16>
    %c0_53 = arith.constant 0 : index
    %c0_54 = arith.constant 0 : index
    %101 = vector.load %arg2[%c0_53, %c0_54] : memref<32x512xbf16, #tpu.memory_space<vmem>>, vector<32x512xbf16>
    %cst_55 = arith.constant dense<0.000000e+00> : vector<4x512xf32>
    %102 = tpu.matmul %100, %101, %cst_55 {dimension_numbers = #tpu.dot_dimension_numbers<[1], [0], [0], [1], [0, 0, 1, 1], [], []>} : vector<4x32xbf16>, vector<32x512xbf16>, vector<4x512xf32> -> vector<4x512xf32>
    %103 = vector.extract_strided_slice %102 {offsets = [0, 0], sizes = [1, 128], strides = [1, 1]} : vector<4x512xf32> to vector<1x128xf32>
    %104 = vector.extract_strided_slice %102 {offsets = [1, 128], sizes = [1, 128], strides = [1, 1]} : vector<4x512xf32> to vector<1x128xf32>
    %105 = arith.addf %103, %104 : vector<1x128xf32>
    %106 = vector.extract_strided_slice %102 {offsets = [2, 256], sizes = [1, 128], strides = [1, 1]} : vector<4x512xf32> to vector<1x128xf32>
    %107 = arith.addf %105, %106 : vector<1x128xf32>
    %108 = vector.extract_strided_slice %102 {offsets = [3, 384], sizes = [1, 128], strides = [1, 1]} : vector<4x512xf32> to vector<1x128xf32>
    %109 = arith.addf %107, %108 : vector<1x128xf32>
    %c0_56 = arith.constant 0 : index
    %c0_57 = arith.constant 0 : index
    %110 = vector.load %arg3[%c0_56, %c0_57] : memref<1x128xf32, #tpu.memory_space<vmem>>, vector<1x128xf32>
    %111 = arith.addf %109, %110 : vector<1x128xf32>
    %cst_58 = arith.constant 0.000000e+00 : f32
    %112 = vector.broadcast %cst_58 : f32 to vector<1x128xf32>
    %113 = arith.cmpf ogt, %111, %112 : vector<1x128xf32>
    %cst_59 = arith.constant 2.000000e-01 : f32
    %114 = vector.broadcast %cst_59 : f32 to vector<1x128xf32>
    %115 = arith.mulf %114, %111 : vector<1x128xf32>
    %116 = arith.select %113, %111, %115 : vector<1x128xi1>, vector<1x128xf32>
    %c6_60 = arith.constant 6 : index
    %c0_61 = arith.constant 0 : index
    %117 = vector.load %arg13[%c6_60, %c0_61] : memref<36x128xf32, #tpu.memory_space<vmem>>, vector<1x128xf32>
    tpu.vector_store %arg13[%c6_60, %c0_61], %116 {strides = array<i32>} : memref<36x128xf32, #tpu.memory_space<vmem>>, vector<1x128xf32>,
    %c12 = arith.constant 12 : index
    %c0_62 = arith.constant 0 : index
    %118 = vector.load %arg1[%c12, %c0_62] : memref<68x32xf32, #tpu.memory_space<vmem>>, vector<4x32xf32>
    %119 = arith.truncf %118 : vector<4x32xf32> to vector<4x32xbf16>
    %c0_63 = arith.constant 0 : index
    %c0_64 = arith.constant 0 : index
    %120 = vector.load %arg2[%c0_63, %c0_64] : memref<32x512xbf16, #tpu.memory_space<vmem>>, vector<32x512xbf16>
    %cst_65 = arith.constant dense<0.000000e+00> : vector<4x512xf32>
    %121 = tpu.matmul %119, %120, %cst_65 {dimension_numbers = #tpu.dot_dimension_numbers<[1], [0], [0], [1], [0, 0, 1, 1], [], []>} : vector<4x32xbf16>, vector<32x512xbf16>, vector<4x512xf32> -> vector<4x512xf32>
    %122 = vector.extract_strided_slice %121 {offsets = [0, 0], sizes = [1, 128], strides = [1, 1]} : vector<4x512xf32> to vector<1x128xf32>
    %123 = vector.extract_strided_slice %121 {offsets = [1, 128], sizes = [1, 128], strides = [1, 1]} : vector<4x512xf32> to vector<1x128xf32>
    %124 = arith.addf %122, %123 : vector<1x128xf32>
    %125 = vector.extract_strided_slice %121 {offsets = [2, 256], sizes = [1, 128], strides = [1, 1]} : vector<4x512xf32> to vector<1x128xf32>
    %126 = arith.addf %124, %125 : vector<1x128xf32>
    %127 = vector.extract_strided_slice %121 {offsets = [3, 384], sizes = [1, 128], strides = [1, 1]} : vector<4x512xf32> to vector<1x128xf32>
    %128 = arith.addf %126, %127 : vector<1x128xf32>
    %c0_66 = arith.constant 0 : index
    %c0_67 = arith.constant 0 : index
    %129 = vector.load %arg3[%c0_66, %c0_67] : memref<1x128xf32, #tpu.memory_space<vmem>>, vector<1x128xf32>
    %130 = arith.addf %128, %129 : vector<1x128xf32>
    %cst_68 = arith.constant 0.000000e+00 : f32
    %131 = vector.broadcast %cst_68 : f32 to vector<1x128xf32>
    %132 = arith.cmpf ogt, %130, %131 : vector<1x128xf32>
    %cst_69 = arith.constant 2.000000e-01 : f32
    %133 = vector.broadcast %cst_69 : f32 to vector<1x128xf32>
    %134 = arith.mulf %133, %130 : vector<1x128xf32>
    %135 = arith.select %132, %130, %134 : vector<1x128xi1>, vector<1x128xf32>
    %c7 = arith.constant 7 : index
    %c0_70 = arith.constant 0 : index
    %136 = vector.load %arg13[%c7, %c0_70] : memref<36x128xf32, #tpu.memory_space<vmem>>, vector<1x128xf32>
    tpu.vector_store %arg13[%c7, %c0_70], %135 {strides = array<i32>} : memref<36x128xf32, #tpu.memory_space<vmem>>, vector<1x128xf32>,
    %c14 = arith.constant 14 : index
    %c0_71 = arith.constant 0 : index
    %137 = vector.load %arg1[%c14, %c0_71] : memref<68x32xf32, #tpu.memory_space<vmem>>, vector<4x32xf32>
    %138 = arith.truncf %137 : vector<4x32xf32> to vector<4x32xbf16>
    %c0_72 = arith.constant 0 : index
    %c0_73 = arith.constant 0 : index
    %139 = vector.load %arg2[%c0_72, %c0_73] : memref<32x512xbf16, #tpu.memory_space<vmem>>, vector<32x512xbf16>
    %cst_74 = arith.constant dense<0.000000e+00> : vector<4x512xf32>
    %140 = tpu.matmul %138, %139, %cst_74 {dimension_numbers = #tpu.dot_dimension_numbers<[1], [0], [0], [1], [0, 0, 1, 1], [], []>} : vector<4x32xbf16>, vector<32x512xbf16>, vector<4x512xf32> -> vector<4x512xf32>
    %141 = vector.extract_strided_slice %140 {offsets = [0, 0], sizes = [1, 128], strides = [1, 1]} : vector<4x512xf32> to vector<1x128xf32>
    %142 = vector.extract_strided_slice %140 {offsets = [1, 128], sizes = [1, 128], strides = [1, 1]} : vector<4x512xf32> to vector<1x128xf32>
    %143 = arith.addf %141, %142 : vector<1x128xf32>
    %144 = vector.extract_strided_slice %140 {offsets = [2, 256], sizes = [1, 128], strides = [1, 1]} : vector<4x512xf32> to vector<1x128xf32>
    %145 = arith.addf %143, %144 : vector<1x128xf32>
    %146 = vector.extract_strided_slice %140 {offsets = [3, 384], sizes = [1, 128], strides = [1, 1]} : vector<4x512xf32> to vector<1x128xf32>
    %147 = arith.addf %145, %146 : vector<1x128xf32>
    %c0_75 = arith.constant 0 : index
    %c0_76 = arith.constant 0 : index
    %148 = vector.load %arg3[%c0_75, %c0_76] : memref<1x128xf32, #tpu.memory_space<vmem>>, vector<1x128xf32>
    %149 = arith.addf %147, %148 : vector<1x128xf32>
    %cst_77 = arith.constant 0.000000e+00 : f32
    %150 = vector.broadcast %cst_77 : f32 to vector<1x128xf32>
    %151 = arith.cmpf ogt, %149, %150 : vector<1x128xf32>
    %cst_78 = arith.constant 2.000000e-01 : f32
    %152 = vector.broadcast %cst_78 : f32 to vector<1x128xf32>
    %153 = arith.mulf %152, %149 : vector<1x128xf32>
    %154 = arith.select %151, %149, %153 : vector<1x128xi1>, vector<1x128xf32>
    %c8_79 = arith.constant 8 : index
    %c0_80 = arith.constant 0 : index
    %155 = vector.load %arg13[%c8_79, %c0_80] : memref<36x128xf32, #tpu.memory_space<vmem>>, vector<1x128xf32>
    tpu.vector_store %arg13[%c8_79, %c0_80], %154 {strides = array<i32>} : memref<36x128xf32, #tpu.memory_space<vmem>>, vector<1x128xf32>,
    %c16 = arith.constant 16 : index
    %c0_81 = arith.constant 0 : index
    %156 = vector.load %arg1[%c16, %c0_81] : memref<68x32xf32, #tpu.memory_space<vmem>>, vector<4x32xf32>
    %157 = arith.truncf %156 : vector<4x32xf32> to vector<4x32xbf16>
    %c0_82 = arith.constant 0 : index
    %c0_83 = arith.constant 0 : index
    %158 = vector.load %arg2[%c0_82, %c0_83] : memref<32x512xbf16, #tpu.memory_space<vmem>>, vector<32x512xbf16>
    %cst_84 = arith.constant dense<0.000000e+00> : vector<4x512xf32>
    %159 = tpu.matmul %157, %158, %cst_84 {dimension_numbers = #tpu.dot_dimension_numbers<[1], [0], [0], [1], [0, 0, 1, 1], [], []>} : vector<4x32xbf16>, vector<32x512xbf16>, vector<4x512xf32> -> vector<4x512xf32>
    %160 = vector.extract_strided_slice %159 {offsets = [0, 0], sizes = [1, 128], strides = [1, 1]} : vector<4x512xf32> to vector<1x128xf32>
    %161 = vector.extract_strided_slice %159 {offsets = [1, 128], sizes = [1, 128], strides = [1, 1]} : vector<4x512xf32> to vector<1x128xf32>
    %162 = arith.addf %160, %161 : vector<1x128xf32>
    %163 = vector.extract_strided_slice %159 {offsets = [2, 256], sizes = [1, 128], strides = [1, 1]} : vector<4x512xf32> to vector<1x128xf32>
    %164 = arith.addf %162, %163 : vector<1x128xf32>
    %165 = vector.extract_strided_slice %159 {offsets = [3, 384], sizes = [1, 128], strides = [1, 1]} : vector<4x512xf32> to vector<1x128xf32>
    %166 = arith.addf %164, %165 : vector<1x128xf32>
    %c0_85 = arith.constant 0 : index
    %c0_86 = arith.constant 0 : index
    %167 = vector.load %arg3[%c0_85, %c0_86] : memref<1x128xf32, #tpu.memory_space<vmem>>, vector<1x128xf32>
    %168 = arith.addf %166, %167 : vector<1x128xf32>
    %cst_87 = arith.constant 0.000000e+00 : f32
    %169 = vector.broadcast %cst_87 : f32 to vector<1x128xf32>
    %170 = arith.cmpf ogt, %168, %169 : vector<1x128xf32>
    %cst_88 = arith.constant 2.000000e-01 : f32
    %171 = vector.broadcast %cst_88 : f32 to vector<1x128xf32>
    %172 = arith.mulf %171, %168 : vector<1x128xf32>
    %173 = arith.select %170, %168, %172 : vector<1x128xi1>, vector<1x128xf32>
    %c9 = arith.constant 9 : index
    %c0_89 = arith.constant 0 : index
    %174 = vector.load %arg13[%c9, %c0_89] : memref<36x128xf32, #tpu.memory_space<vmem>>, vector<1x128xf32>
    tpu.vector_store %arg13[%c9, %c0_89], %173 {strides = array<i32>} : memref<36x128xf32, #tpu.memory_space<vmem>>, vector<1x128xf32>,
    %c18 = arith.constant 18 : index
    %c0_90 = arith.constant 0 : index
    %175 = vector.load %arg1[%c18, %c0_90] : memref<68x32xf32, #tpu.memory_space<vmem>>, vector<4x32xf32>
    %176 = arith.truncf %175 : vector<4x32xf32> to vector<4x32xbf16>
    %c0_91 = arith.constant 0 : index
    %c0_92 = arith.constant 0 : index
    %177 = vector.load %arg2[%c0_91, %c0_92] : memref<32x512xbf16, #tpu.memory_space<vmem>>, vector<32x512xbf16>
    %cst_93 = arith.constant dense<0.000000e+00> : vector<4x512xf32>
    %178 = tpu.matmul %176, %177, %cst_93 {dimension_numbers = #tpu.dot_dimension_numbers<[1], [0], [0], [1], [0, 0, 1, 1], [], []>} : vector<4x32xbf16>, vector<32x512xbf16>, vector<4x512xf32> -> vector<4x512xf32>
    %179 = vector.extract_strided_slice %178 {offsets = [0, 0], sizes = [1, 128], strides = [1, 1]} : vector<4x512xf32> to vector<1x128xf32>
    %180 = vector.extract_strided_slice %178 {offsets = [1, 128], sizes = [1, 128], strides = [1, 1]} : vector<4x512xf32> to vector<1x128xf32>
    %181 = arith.addf %179, %180 : vector<1x128xf32>
    %182 = vector.extract_strided_slice %178 {offsets = [2, 256], sizes = [1, 128], strides = [1, 1]} : vector<4x512xf32> to vector<1x128xf32>
    %183 = arith.addf %181, %182 : vector<1x128xf32>
    %184 = vector.extract_strided_slice %178 {offsets = [3, 384], sizes = [1, 128], strides = [1, 1]} : vector<4x512xf32> to vector<1x128xf32>
    %185 = arith.addf %183, %184 : vector<1x128xf32>
    %c0_94 = arith.constant 0 : index
    %c0_95 = arith.constant 0 : index
    %186 = vector.load %arg3[%c0_94, %c0_95] : memref<1x128xf32, #tpu.memory_space<vmem>>, vector<1x128xf32>
    %187 = arith.addf %185, %186 : vector<1x128xf32>
    %cst_96 = arith.constant 0.000000e+00 : f32
    %188 = vector.broadcast %cst_96 : f32 to vector<1x128xf32>
    %189 = arith.cmpf ogt, %187, %188 : vector<1x128xf32>
    %cst_97 = arith.constant 2.000000e-01 : f32
    %190 = vector.broadcast %cst_97 : f32 to vector<1x128xf32>
    %191 = arith.mulf %190, %187 : vector<1x128xf32>
    %192 = arith.select %189, %187, %191 : vector<1x128xi1>, vector<1x128xf32>
    %c10_98 = arith.constant 10 : index
    %c0_99 = arith.constant 0 : index
    %193 = vector.load %arg13[%c10_98, %c0_99] : memref<36x128xf32, #tpu.memory_space<vmem>>, vector<1x128xf32>
    tpu.vector_store %arg13[%c10_98, %c0_99], %192 {strides = array<i32>} : memref<36x128xf32, #tpu.memory_space<vmem>>, vector<1x128xf32>,
    %c20 = arith.constant 20 : index
    %c0_100 = arith.constant 0 : index
    %194 = vector.load %arg1[%c20, %c0_100] : memref<68x32xf32, #tpu.memory_space<vmem>>, vector<4x32xf32>
    %195 = arith.truncf %194 : vector<4x32xf32> to vector<4x32xbf16>
    %c0_101 = arith.constant 0 : index
    %c0_102 = arith.constant 0 : index
    %196 = vector.load %arg2[%c0_101, %c0_102] : memref<32x512xbf16, #tpu.memory_space<vmem>>, vector<32x512xbf16>
    %cst_103 = arith.constant dense<0.000000e+00> : vector<4x512xf32>
    %197 = tpu.matmul %195, %196, %cst_103 {dimension_numbers = #tpu.dot_dimension_numbers<[1], [0], [0], [1], [0, 0, 1, 1], [], []>} : vector<4x32xbf16>, vector<32x512xbf16>, vector<4x512xf32> -> vector<4x512xf32>
    %198 = vector.extract_strided_slice %197 {offsets = [0, 0], sizes = [1, 128], strides = [1, 1]} : vector<4x512xf32> to vector<1x128xf32>
    %199 = vector.extract_strided_slice %197 {offsets = [1, 128], sizes = [1, 128], strides = [1, 1]} : vector<4x512xf32> to vector<1x128xf32>
    %200 = arith.addf %198, %199 : vector<1x128xf32>
    %201 = vector.extract_strided_slice %197 {offsets = [2, 256], sizes = [1, 128], strides = [1, 1]} : vector<4x512xf32> to vector<1x128xf32>
    %202 = arith.addf %200, %201 : vector<1x128xf32>
    %203 = vector.extract_strided_slice %197 {offsets = [3, 384], sizes = [1, 128], strides = [1, 1]} : vector<4x512xf32> to vector<1x128xf32>
    %204 = arith.addf %202, %203 : vector<1x128xf32>
    %c0_104 = arith.constant 0 : index
    %c0_105 = arith.constant 0 : index
    %205 = vector.load %arg3[%c0_104, %c0_105] : memref<1x128xf32, #tpu.memory_space<vmem>>, vector<1x128xf32>
    %206 = arith.addf %204, %205 : vector<1x128xf32>
    %cst_106 = arith.constant 0.000000e+00 : f32
    %207 = vector.broadcast %cst_106 : f32 to vector<1x128xf32>
    %208 = arith.cmpf ogt, %206, %207 : vector<1x128xf32>
    %cst_107 = arith.constant 2.000000e-01 : f32
    %209 = vector.broadcast %cst_107 : f32 to vector<1x128xf32>
    %210 = arith.mulf %209, %206 : vector<1x128xf32>
    %211 = arith.select %208, %206, %210 : vector<1x128xi1>, vector<1x128xf32>
    %c11 = arith.constant 11 : index
    %c0_108 = arith.constant 0 : index
    %212 = vector.load %arg13[%c11, %c0_108] : memref<36x128xf32, #tpu.memory_space<vmem>>, vector<1x128xf32>
    tpu.vector_store %arg13[%c11, %c0_108], %211 {strides = array<i32>} : memref<36x128xf32, #tpu.memory_space<vmem>>, vector<1x128xf32>,
    %c22 = arith.constant 22 : index
    %c0_109 = arith.constant 0 : index
    %213 = vector.load %arg1[%c22, %c0_109] : memref<68x32xf32, #tpu.memory_space<vmem>>, vector<4x32xf32>
    %214 = arith.truncf %213 : vector<4x32xf32> to vector<4x32xbf16>
    %c0_110 = arith.constant 0 : index
    %c0_111 = arith.constant 0 : index
    %215 = vector.load %arg2[%c0_110, %c0_111] : memref<32x512xbf16, #tpu.memory_space<vmem>>, vector<32x512xbf16>
    %cst_112 = arith.constant dense<0.000000e+00> : vector<4x512xf32>
    %216 = tpu.matmul %214, %215, %cst_112 {dimension_numbers = #tpu.dot_dimension_numbers<[1], [0], [0], [1], [0, 0, 1, 1], [], []>} : vector<4x32xbf16>, vector<32x512xbf16>, vector<4x512xf32> -> vector<4x512xf32>
    %217 = vector.extract_strided_slice %216 {offsets = [0, 0], sizes = [1, 128], strides = [1, 1]} : vector<4x512xf32> to vector<1x128xf32>
    %218 = vector.extract_strided_slice %216 {offsets = [1, 128], sizes = [1, 128], strides = [1, 1]} : vector<4x512xf32> to vector<1x128xf32>
    %219 = arith.addf %217, %218 : vector<1x128xf32>
    %220 = vector.extract_strided_slice %216 {offsets = [2, 256], sizes = [1, 128], strides = [1, 1]} : vector<4x512xf32> to vector<1x128xf32>
    %221 = arith.addf %219, %220 : vector<1x128xf32>
    %222 = vector.extract_strided_slice %216 {offsets = [3, 384], sizes = [1, 128], strides = [1, 1]} : vector<4x512xf32> to vector<1x128xf32>
    %223 = arith.addf %221, %222 : vector<1x128xf32>
    %c0_113 = arith.constant 0 : index
    %c0_114 = arith.constant 0 : index
    %224 = vector.load %arg3[%c0_113, %c0_114] : memref<1x128xf32, #tpu.memory_space<vmem>>, vector<1x128xf32>
    %225 = arith.addf %223, %224 : vector<1x128xf32>
    %cst_115 = arith.constant 0.000000e+00 : f32
    %226 = vector.broadcast %cst_115 : f32 to vector<1x128xf32>
    %227 = arith.cmpf ogt, %225, %226 : vector<1x128xf32>
    %cst_116 = arith.constant 2.000000e-01 : f32
    %228 = vector.broadcast %cst_116 : f32 to vector<1x128xf32>
    %229 = arith.mulf %228, %225 : vector<1x128xf32>
    %230 = arith.select %227, %225, %229 : vector<1x128xi1>, vector<1x128xf32>
    %c12_117 = arith.constant 12 : index
    %c0_118 = arith.constant 0 : index
    %231 = vector.load %arg13[%c12_117, %c0_118] : memref<36x128xf32, #tpu.memory_space<vmem>>, vector<1x128xf32>
    tpu.vector_store %arg13[%c12_117, %c0_118], %230 {strides = array<i32>} : memref<36x128xf32, #tpu.memory_space<vmem>>, vector<1x128xf32>,
    %c24 = arith.constant 24 : index
    %c0_119 = arith.constant 0 : index
    %232 = vector.load %arg1[%c24, %c0_119] : memref<68x32xf32, #tpu.memory_space<vmem>>, vector<4x32xf32>
    %233 = arith.truncf %232 : vector<4x32xf32> to vector<4x32xbf16>
    %c0_120 = arith.constant 0 : index
    %c0_121 = arith.constant 0 : index
    %234 = vector.load %arg2[%c0_120, %c0_121] : memref<32x512xbf16, #tpu.memory_space<vmem>>, vector<32x512xbf16>
    %cst_122 = arith.constant dense<0.000000e+00> : vector<4x512xf32>
    %235 = tpu.matmul %233, %234, %cst_122 {dimension_numbers = #tpu.dot_dimension_numbers<[1], [0], [0], [1], [0, 0, 1, 1], [], []>} : vector<4x32xbf16>, vector<32x512xbf16>, vector<4x512xf32> -> vector<4x512xf32>
    %236 = vector.extract_strided_slice %235 {offsets = [0, 0], sizes = [1, 128], strides = [1, 1]} : vector<4x512xf32> to vector<1x128xf32>
    %237 = vector.extract_strided_slice %235 {offsets = [1, 128], sizes = [1, 128], strides = [1, 1]} : vector<4x512xf32> to vector<1x128xf32>
    %238 = arith.addf %236, %237 : vector<1x128xf32>
    %239 = vector.extract_strided_slice %235 {offsets = [2, 256], sizes = [1, 128], strides = [1, 1]} : vector<4x512xf32> to vector<1x128xf32>
    %240 = arith.addf %238, %239 : vector<1x128xf32>
    %241 = vector.extract_strided_slice %235 {offsets = [3, 384], sizes = [1, 128], strides = [1, 1]} : vector<4x512xf32> to vector<1x128xf32>
    %242 = arith.addf %240, %241 : vector<1x128xf32>
    %c0_123 = arith.constant 0 : index
    %c0_124 = arith.constant 0 : index
    %243 = vector.load %arg3[%c0_123, %c0_124] : memref<1x128xf32, #tpu.memory_space<vmem>>, vector<1x128xf32>
    %244 = arith.addf %242, %243 : vector<1x128xf32>
    %cst_125 = arith.constant 0.000000e+00 : f32
    %245 = vector.broadcast %cst_125 : f32 to vector<1x128xf32>
    %246 = arith.cmpf ogt, %244, %245 : vector<1x128xf32>
    %cst_126 = arith.constant 2.000000e-01 : f32
    %247 = vector.broadcast %cst_126 : f32 to vector<1x128xf32>
    %248 = arith.mulf %247, %244 : vector<1x128xf32>
    %249 = arith.select %246, %244, %248 : vector<1x128xi1>, vector<1x128xf32>
    %c13 = arith.constant 13 : index
    %c0_127 = arith.constant 0 : index
    %250 = vector.load %arg13[%c13, %c0_127] : memref<36x128xf32, #tpu.memory_space<vmem>>, vector<1x128xf32>
    tpu.vector_store %arg13[%c13, %c0_127], %249 {strides = array<i32>} : memref<36x128xf32, #tpu.memory_space<vmem>>, vector<1x128xf32>,
    %c26 = arith.constant 26 : index
    %c0_128 = arith.constant 0 : index
    %251 = vector.load %arg1[%c26, %c0_128] : memref<68x32xf32, #tpu.memory_space<vmem>>, vector<4x32xf32>
    %252 = arith.truncf %251 : vector<4x32xf32> to vector<4x32xbf16>
    %c0_129 = arith.constant 0 : index
    %c0_130 = arith.constant 0 : index
    %253 = vector.load %arg2[%c0_129, %c0_130] : memref<32x512xbf16, #tpu.memory_space<vmem>>, vector<32x512xbf16>
    %cst_131 = arith.constant dense<0.000000e+00> : vector<4x512xf32>
    %254 = tpu.matmul %252, %253, %cst_131 {dimension_numbers = #tpu.dot_dimension_numbers<[1], [0], [0], [1], [0, 0, 1, 1], [], []>} : vector<4x32xbf16>, vector<32x512xbf16>, vector<4x512xf32> -> vector<4x512xf32>
    %255 = vector.extract_strided_slice %254 {offsets = [0, 0], sizes = [1, 128], strides = [1, 1]} : vector<4x512xf32> to vector<1x128xf32>
    %256 = vector.extract_strided_slice %254 {offsets = [1, 128], sizes = [1, 128], strides = [1, 1]} : vector<4x512xf32> to vector<1x128xf32>
    %257 = arith.addf %255, %256 : vector<1x128xf32>
    %258 = vector.extract_strided_slice %254 {offsets = [2, 256], sizes = [1, 128], strides = [1, 1]} : vector<4x512xf32> to vector<1x128xf32>
    %259 = arith.addf %257, %258 : vector<1x128xf32>
    %260 = vector.extract_strided_slice %254 {offsets = [3, 384], sizes = [1, 128], strides = [1, 1]} : vector<4x512xf32> to vector<1x128xf32>
    %261 = arith.addf %259, %260 : vector<1x128xf32>
    %c0_132 = arith.constant 0 : index
    %c0_133 = arith.constant 0 : index
    %262 = vector.load %arg3[%c0_132, %c0_133] : memref<1x128xf32, #tpu.memory_space<vmem>>, vector<1x128xf32>
    %263 = arith.addf %261, %262 : vector<1x128xf32>
    %cst_134 = arith.constant 0.000000e+00 : f32
    %264 = vector.broadcast %cst_134 : f32 to vector<1x128xf32>
    %265 = arith.cmpf ogt, %263, %264 : vector<1x128xf32>
    %cst_135 = arith.constant 2.000000e-01 : f32
    %266 = vector.broadcast %cst_135 : f32 to vector<1x128xf32>
    %267 = arith.mulf %266, %263 : vector<1x128xf32>
    %268 = arith.select %265, %263, %267 : vector<1x128xi1>, vector<1x128xf32>
    %c14_136 = arith.constant 14 : index
    %c0_137 = arith.constant 0 : index
    %269 = vector.load %arg13[%c14_136, %c0_137] : memref<36x128xf32, #tpu.memory_space<vmem>>, vector<1x128xf32>
    tpu.vector_store %arg13[%c14_136, %c0_137], %268 {strides = array<i32>} : memref<36x128xf32, #tpu.memory_space<vmem>>, vector<1x128xf32>,
    %c28 = arith.constant 28 : index
    %c0_138 = arith.constant 0 : index
    %270 = vector.load %arg1[%c28, %c0_138] : memref<68x32xf32, #tpu.memory_space<vmem>>, vector<4x32xf32>
    %271 = arith.truncf %270 : vector<4x32xf32> to vector<4x32xbf16>
    %c0_139 = arith.constant 0 : index
    %c0_140 = arith.constant 0 : index
    %272 = vector.load %arg2[%c0_139, %c0_140] : memref<32x512xbf16, #tpu.memory_space<vmem>>, vector<32x512xbf16>
    %cst_141 = arith.constant dense<0.000000e+00> : vector<4x512xf32>
    %273 = tpu.matmul %271, %272, %cst_141 {dimension_numbers = #tpu.dot_dimension_numbers<[1], [0], [0], [1], [0, 0, 1, 1], [], []>} : vector<4x32xbf16>, vector<32x512xbf16>, vector<4x512xf32> -> vector<4x512xf32>
    %274 = vector.extract_strided_slice %273 {offsets = [0, 0], sizes = [1, 128], strides = [1, 1]} : vector<4x512xf32> to vector<1x128xf32>
    %275 = vector.extract_strided_slice %273 {offsets = [1, 128], sizes = [1, 128], strides = [1, 1]} : vector<4x512xf32> to vector<1x128xf32>
    %276 = arith.addf %274, %275 : vector<1x128xf32>
    %277 = vector.extract_strided_slice %273 {offsets = [2, 256], sizes = [1, 128], strides = [1, 1]} : vector<4x512xf32> to vector<1x128xf32>
    %278 = arith.addf %276, %277 : vector<1x128xf32>
    %279 = vector.extract_strided_slice %273 {offsets = [3, 384], sizes = [1, 128], strides = [1, 1]} : vector<4x512xf32> to vector<1x128xf32>
    %280 = arith.addf %278, %279 : vector<1x128xf32>
    %c0_142 = arith.constant 0 : index
    %c0_143 = arith.constant 0 : index
    %281 = vector.load %arg3[%c0_142, %c0_143] : memref<1x128xf32, #tpu.memory_space<vmem>>, vector<1x128xf32>
    %282 = arith.addf %280, %281 : vector<1x128xf32>
    %cst_144 = arith.constant 0.000000e+00 : f32
    %283 = vector.broadcast %cst_144 : f32 to vector<1x128xf32>
    %284 = arith.cmpf ogt, %282, %283 : vector<1x128xf32>
    %cst_145 = arith.constant 2.000000e-01 : f32
    %285 = vector.broadcast %cst_145 : f32 to vector<1x128xf32>
    %286 = arith.mulf %285, %282 : vector<1x128xf32>
    %287 = arith.select %284, %282, %286 : vector<1x128xi1>, vector<1x128xf32>
    %c15 = arith.constant 15 : index
    %c0_146 = arith.constant 0 : index
    %288 = vector.load %arg13[%c15, %c0_146] : memref<36x128xf32, #tpu.memory_space<vmem>>, vector<1x128xf32>
    tpu.vector_store %arg13[%c15, %c0_146], %287 {strides = array<i32>} : memref<36x128xf32, #tpu.memory_space<vmem>>, vector<1x128xf32>,
    %c30 = arith.constant 30 : index
    %c0_147 = arith.constant 0 : index
    %289 = vector.load %arg1[%c30, %c0_147] : memref<68x32xf32, #tpu.memory_space<vmem>>, vector<4x32xf32>
    %290 = arith.truncf %289 : vector<4x32xf32> to vector<4x32xbf16>
    %c0_148 = arith.constant 0 : index
    %c0_149 = arith.constant 0 : index
    %291 = vector.load %arg2[%c0_148, %c0_149] : memref<32x512xbf16, #tpu.memory_space<vmem>>, vector<32x512xbf16>
    %cst_150 = arith.constant dense<0.000000e+00> : vector<4x512xf32>
    %292 = tpu.matmul %290, %291, %cst_150 {dimension_numbers = #tpu.dot_dimension_numbers<[1], [0], [0], [1], [0, 0, 1, 1], [], []>} : vector<4x32xbf16>, vector<32x512xbf16>, vector<4x512xf32> -> vector<4x512xf32>
    %293 = vector.extract_strided_slice %292 {offsets = [0, 0], sizes = [1, 128], strides = [1, 1]} : vector<4x512xf32> to vector<1x128xf32>
    %294 = vector.extract_strided_slice %292 {offsets = [1, 128], sizes = [1, 128], strides = [1, 1]} : vector<4x512xf32> to vector<1x128xf32>
    %295 = arith.addf %293, %294 : vector<1x128xf32>
    %296 = vector.extract_strided_slice %292 {offsets = [2, 256], sizes = [1, 128], strides = [1, 1]} : vector<4x512xf32> to vector<1x128xf32>
    %297 = arith.addf %295, %296 : vector<1x128xf32>
    %298 = vector.extract_strided_slice %292 {offsets = [3, 384], sizes = [1, 128], strides = [1, 1]} : vector<4x512xf32> to vector<1x128xf32>
    %299 = arith.addf %297, %298 : vector<1x128xf32>
    %c0_151 = arith.constant 0 : index
    %c0_152 = arith.constant 0 : index
    %300 = vector.load %arg3[%c0_151, %c0_152] : memref<1x128xf32, #tpu.memory_space<vmem>>, vector<1x128xf32>
    %301 = arith.addf %299, %300 : vector<1x128xf32>
    %cst_153 = arith.constant 0.000000e+00 : f32
    %302 = vector.broadcast %cst_153 : f32 to vector<1x128xf32>
    %303 = arith.cmpf ogt, %301, %302 : vector<1x128xf32>
    %cst_154 = arith.constant 2.000000e-01 : f32
    %304 = vector.broadcast %cst_154 : f32 to vector<1x128xf32>
    %305 = arith.mulf %304, %301 : vector<1x128xf32>
    %306 = arith.select %303, %301, %305 : vector<1x128xi1>, vector<1x128xf32>
    %c16_155 = arith.constant 16 : index
    %c0_156 = arith.constant 0 : index
    %307 = vector.load %arg13[%c16_155, %c0_156] : memref<36x128xf32, #tpu.memory_space<vmem>>, vector<1x128xf32>
    tpu.vector_store %arg13[%c16_155, %c0_156], %306 {strides = array<i32>} : memref<36x128xf32, #tpu.memory_space<vmem>>, vector<1x128xf32>,
    %c34 = arith.constant 34 : index
    %c0_157 = arith.constant 0 : index
    %308 = vector.load %arg1[%c34, %c0_157] : memref<68x32xf32, #tpu.memory_space<vmem>>, vector<4x32xf32>
    %309 = arith.truncf %308 : vector<4x32xf32> to vector<4x32xbf16>
    %c0_158 = arith.constant 0 : index
    %c0_159 = arith.constant 0 : index
    %310 = vector.load %arg2[%c0_158, %c0_159] : memref<32x512xbf16, #tpu.memory_space<vmem>>, vector<32x512xbf16>
    %cst_160 = arith.constant dense<0.000000e+00> : vector<4x512xf32>
    %311 = tpu.matmul %309, %310, %cst_160 {dimension_numbers = #tpu.dot_dimension_numbers<[1], [0], [0], [1], [0, 0, 1, 1], [], []>} : vector<4x32xbf16>, vector<32x512xbf16>, vector<4x512xf32> -> vector<4x512xf32>
    %312 = vector.extract_strided_slice %311 {offsets = [0, 0], sizes = [1, 128], strides = [1, 1]} : vector<4x512xf32> to vector<1x128xf32>
    %313 = vector.extract_strided_slice %311 {offsets = [1, 128], sizes = [1, 128], strides = [1, 1]} : vector<4x512xf32> to vector<1x128xf32>
    %314 = arith.addf %312, %313 : vector<1x128xf32>
    %315 = vector.extract_strided_slice %311 {offsets = [2, 256], sizes = [1, 128], strides = [1, 1]} : vector<4x512xf32> to vector<1x128xf32>
    %316 = arith.addf %314, %315 : vector<1x128xf32>
    %317 = vector.extract_strided_slice %311 {offsets = [3, 384], sizes = [1, 128], strides = [1, 1]} : vector<4x512xf32> to vector<1x128xf32>
    %318 = arith.addf %316, %317 : vector<1x128xf32>
    %c0_161 = arith.constant 0 : index
    %c0_162 = arith.constant 0 : index
    %319 = vector.load %arg3[%c0_161, %c0_162] : memref<1x128xf32, #tpu.memory_space<vmem>>, vector<1x128xf32>
    %320 = arith.addf %318, %319 : vector<1x128xf32>
    %cst_163 = arith.constant 0.000000e+00 : f32
    %321 = vector.broadcast %cst_163 : f32 to vector<1x128xf32>
    %322 = arith.cmpf ogt, %320, %321 : vector<1x128xf32>
    %cst_164 = arith.constant 2.000000e-01 : f32
    %323 = vector.broadcast %cst_164 : f32 to vector<1x128xf32>
    %324 = arith.mulf %323, %320 : vector<1x128xf32>
    %325 = arith.select %322, %320, %324 : vector<1x128xi1>, vector<1x128xf32>
    %c19 = arith.constant 19 : index
    %c0_165 = arith.constant 0 : index
    %326 = vector.load %arg13[%c19, %c0_165] : memref<36x128xf32, #tpu.memory_space<vmem>>, vector<1x128xf32>
    tpu.vector_store %arg13[%c19, %c0_165], %325 {strides = array<i32>} : memref<36x128xf32, #tpu.memory_space<vmem>>, vector<1x128xf32>,
    %c36 = arith.constant 36 : index
    %c0_166 = arith.constant 0 : index
    %327 = vector.load %arg1[%c36, %c0_166] : memref<68x32xf32, #tpu.memory_space<vmem>>, vector<4x32xf32>
    %328 = arith.truncf %327 : vector<4x32xf32> to vector<4x32xbf16>
    %c0_167 = arith.constant 0 : index
    %c0_168 = arith.constant 0 : index
    %329 = vector.load %arg2[%c0_167, %c0_168] : memref<32x512xbf16, #tpu.memory_space<vmem>>, vector<32x512xbf16>
    %cst_169 = arith.constant dense<0.000000e+00> : vector<4x512xf32>
    %330 = tpu.matmul %328, %329, %cst_169 {dimension_numbers = #tpu.dot_dimension_numbers<[1], [0], [0], [1], [0, 0, 1, 1], [], []>} : vector<4x32xbf16>, vector<32x512xbf16>, vector<4x512xf32> -> vector<4x512xf32>
    %331 = vector.extract_strided_slice %330 {offsets = [0, 0], sizes = [1, 128], strides = [1, 1]} : vector<4x512xf32> to vector<1x128xf32>
    %332 = vector.extract_strided_slice %330 {offsets = [1, 128], sizes = [1, 128], strides = [1, 1]} : vector<4x512xf32> to vector<1x128xf32>
    %333 = arith.addf %331, %332 : vector<1x128xf32>
    %334 = vector.extract_strided_slice %330 {offsets = [2, 256], sizes = [1, 128], strides = [1, 1]} : vector<4x512xf32> to vector<1x128xf32>
    %335 = arith.addf %333, %334 : vector<1x128xf32>
    %336 = vector.extract_strided_slice %330 {offsets = [3, 384], sizes = [1, 128], strides = [1, 1]} : vector<4x512xf32> to vector<1x128xf32>
    %337 = arith.addf %335, %336 : vector<1x128xf32>
    %c0_170 = arith.constant 0 : index
    %c0_171 = arith.constant 0 : index
    %338 = vector.load %arg3[%c0_170, %c0_171] : memref<1x128xf32, #tpu.memory_space<vmem>>, vector<1x128xf32>
    %339 = arith.addf %337, %338 : vector<1x128xf32>
    %cst_172 = arith.constant 0.000000e+00 : f32
    %340 = vector.broadcast %cst_172 : f32 to vector<1x128xf32>
    %341 = arith.cmpf ogt, %339, %340 : vector<1x128xf32>
    %cst_173 = arith.constant 2.000000e-01 : f32
    %342 = vector.broadcast %cst_173 : f32 to vector<1x128xf32>
    %343 = arith.mulf %342, %339 : vector<1x128xf32>
    %344 = arith.select %341, %339, %343 : vector<1x128xi1>, vector<1x128xf32>
    %c20_174 = arith.constant 20 : index
    %c0_175 = arith.constant 0 : index
    %345 = vector.load %arg13[%c20_174, %c0_175] : memref<36x128xf32, #tpu.memory_space<vmem>>, vector<1x128xf32>
    tpu.vector_store %arg13[%c20_174, %c0_175], %344 {strides = array<i32>} : memref<36x128xf32, #tpu.memory_space<vmem>>, vector<1x128xf32>,
    %c38 = arith.constant 38 : index
    %c0_176 = arith.constant 0 : index
    %346 = vector.load %arg1[%c38, %c0_176] : memref<68x32xf32, #tpu.memory_space<vmem>>, vector<4x32xf32>
    %347 = arith.truncf %346 : vector<4x32xf32> to vector<4x32xbf16>
    %c0_177 = arith.constant 0 : index
    %c0_178 = arith.constant 0 : index
    %348 = vector.load %arg2[%c0_177, %c0_178] : memref<32x512xbf16, #tpu.memory_space<vmem>>, vector<32x512xbf16>
    %cst_179 = arith.constant dense<0.000000e+00> : vector<4x512xf32>
    %349 = tpu.matmul %347, %348, %cst_179 {dimension_numbers = #tpu.dot_dimension_numbers<[1], [0], [0], [1], [0, 0, 1, 1], [], []>} : vector<4x32xbf16>, vector<32x512xbf16>, vector<4x512xf32> -> vector<4x512xf32>
    %350 = vector.extract_strided_slice %349 {offsets = [0, 0], sizes = [1, 128], strides = [1, 1]} : vector<4x512xf32> to vector<1x128xf32>
    %351 = vector.extract_strided_slice %349 {offsets = [1, 128], sizes = [1, 128], strides = [1, 1]} : vector<4x512xf32> to vector<1x128xf32>
    %352 = arith.addf %350, %351 : vector<1x128xf32>
    %353 = vector.extract_strided_slice %349 {offsets = [2, 256], sizes = [1, 128], strides = [1, 1]} : vector<4x512xf32> to vector<1x128xf32>
    %354 = arith.addf %352, %353 : vector<1x128xf32>
    %355 = vector.extract_strided_slice %349 {offsets = [3, 384], sizes = [1, 128], strides = [1, 1]} : vector<4x512xf32> to vector<1x128xf32>
    %356 = arith.addf %354, %355 : vector<1x128xf32>
    %c0_180 = arith.constant 0 : index
    %c0_181 = arith.constant 0 : index
    %357 = vector.load %arg3[%c0_180, %c0_181] : memref<1x128xf32, #tpu.memory_space<vmem>>, vector<1x128xf32>
    %358 = arith.addf %356, %357 : vector<1x128xf32>
    %cst_182 = arith.constant 0.000000e+00 : f32
    %359 = vector.broadcast %cst_182 : f32 to vector<1x128xf32>
    %360 = arith.cmpf ogt, %358, %359 : vector<1x128xf32>
    %cst_183 = arith.constant 2.000000e-01 : f32
    %361 = vector.broadcast %cst_183 : f32 to vector<1x128xf32>
    %362 = arith.mulf %361, %358 : vector<1x128xf32>
    %363 = arith.select %360, %358, %362 : vector<1x128xi1>, vector<1x128xf32>
    %c21 = arith.constant 21 : index
    %c0_184 = arith.constant 0 : index
    %364 = vector.load %arg13[%c21, %c0_184] : memref<36x128xf32, #tpu.memory_space<vmem>>, vector<1x128xf32>
    tpu.vector_store %arg13[%c21, %c0_184], %363 {strides = array<i32>} : memref<36x128xf32, #tpu.memory_space<vmem>>, vector<1x128xf32>,
    %c40 = arith.constant 40 : index
    %c0_185 = arith.constant 0 : index
    %365 = vector.load %arg1[%c40, %c0_185] : memref<68x32xf32, #tpu.memory_space<vmem>>, vector<4x32xf32>
    %366 = arith.truncf %365 : vector<4x32xf32> to vector<4x32xbf16>
    %c0_186 = arith.constant 0 : index
    %c0_187 = arith.constant 0 : index
    %367 = vector.load %arg2[%c0_186, %c0_187] : memref<32x512xbf16, #tpu.memory_space<vmem>>, vector<32x512xbf16>
    %cst_188 = arith.constant dense<0.000000e+00> : vector<4x512xf32>
    %368 = tpu.matmul %366, %367, %cst_188 {dimension_numbers = #tpu.dot_dimension_numbers<[1], [0], [0], [1], [0, 0, 1, 1], [], []>} : vector<4x32xbf16>, vector<32x512xbf16>, vector<4x512xf32> -> vector<4x512xf32>
    %369 = vector.extract_strided_slice %368 {offsets = [0, 0], sizes = [1, 128], strides = [1, 1]} : vector<4x512xf32> to vector<1x128xf32>
    %370 = vector.extract_strided_slice %368 {offsets = [1, 128], sizes = [1, 128], strides = [1, 1]} : vector<4x512xf32> to vector<1x128xf32>
    %371 = arith.addf %369, %370 : vector<1x128xf32>
    %372 = vector.extract_strided_slice %368 {offsets = [2, 256], sizes = [1, 128], strides = [1, 1]} : vector<4x512xf32> to vector<1x128xf32>
    %373 = arith.addf %371, %372 : vector<1x128xf32>
    %374 = vector.extract_strided_slice %368 {offsets = [3, 384], sizes = [1, 128], strides = [1, 1]} : vector<4x512xf32> to vector<1x128xf32>
    %375 = arith.addf %373, %374 : vector<1x128xf32>
    %c0_189 = arith.constant 0 : index
    %c0_190 = arith.constant 0 : index
    %376 = vector.load %arg3[%c0_189, %c0_190] : memref<1x128xf32, #tpu.memory_space<vmem>>, vector<1x128xf32>
    %377 = arith.addf %375, %376 : vector<1x128xf32>
    %cst_191 = arith.constant 0.000000e+00 : f32
    %378 = vector.broadcast %cst_191 : f32 to vector<1x128xf32>
    %379 = arith.cmpf ogt, %377, %378 : vector<1x128xf32>
    %cst_192 = arith.constant 2.000000e-01 : f32
    %380 = vector.broadcast %cst_192 : f32 to vector<1x128xf32>
    %381 = arith.mulf %380, %377 : vector<1x128xf32>
    %382 = arith.select %379, %377, %381 : vector<1x128xi1>, vector<1x128xf32>
    %c22_193 = arith.constant 22 : index
    %c0_194 = arith.constant 0 : index
    %383 = vector.load %arg13[%c22_193, %c0_194] : memref<36x128xf32, #tpu.memory_space<vmem>>, vector<1x128xf32>
    tpu.vector_store %arg13[%c22_193, %c0_194], %382 {strides = array<i32>} : memref<36x128xf32, #tpu.memory_space<vmem>>, vector<1x128xf32>,
    %c42 = arith.constant 42 : index
    %c0_195 = arith.constant 0 : index
    %384 = vector.load %arg1[%c42, %c0_195] : memref<68x32xf32, #tpu.memory_space<vmem>>, vector<4x32xf32>
    %385 = arith.truncf %384 : vector<4x32xf32> to vector<4x32xbf16>
    %c0_196 = arith.constant 0 : index
    %c0_197 = arith.constant 0 : index
    %386 = vector.load %arg2[%c0_196, %c0_197] : memref<32x512xbf16, #tpu.memory_space<vmem>>, vector<32x512xbf16>
    %cst_198 = arith.constant dense<0.000000e+00> : vector<4x512xf32>
    %387 = tpu.matmul %385, %386, %cst_198 {dimension_numbers = #tpu.dot_dimension_numbers<[1], [0], [0], [1], [0, 0, 1, 1], [], []>} : vector<4x32xbf16>, vector<32x512xbf16>, vector<4x512xf32> -> vector<4x512xf32>
    %388 = vector.extract_strided_slice %387 {offsets = [0, 0], sizes = [1, 128], strides = [1, 1]} : vector<4x512xf32> to vector<1x128xf32>
    %389 = vector.extract_strided_slice %387 {offsets = [1, 128], sizes = [1, 128], strides = [1, 1]} : vector<4x512xf32> to vector<1x128xf32>
    %390 = arith.addf %388, %389 : vector<1x128xf32>
    %391 = vector.extract_strided_slice %387 {offsets = [2, 256], sizes = [1, 128], strides = [1, 1]} : vector<4x512xf32> to vector<1x128xf32>
    %392 = arith.addf %390, %391 : vector<1x128xf32>
    %393 = vector.extract_strided_slice %387 {offsets = [3, 384], sizes = [1, 128], strides = [1, 1]} : vector<4x512xf32> to vector<1x128xf32>
    %394 = arith.addf %392, %393 : vector<1x128xf32>
    %c0_199 = arith.constant 0 : index
    %c0_200 = arith.constant 0 : index
    %395 = vector.load %arg3[%c0_199, %c0_200] : memref<1x128xf32, #tpu.memory_space<vmem>>, vector<1x128xf32>
    %396 = arith.addf %394, %395 : vector<1x128xf32>
    %cst_201 = arith.constant 0.000000e+00 : f32
    %397 = vector.broadcast %cst_201 : f32 to vector<1x128xf32>
    %398 = arith.cmpf ogt, %396, %397 : vector<1x128xf32>
    %cst_202 = arith.constant 2.000000e-01 : f32
    %399 = vector.broadcast %cst_202 : f32 to vector<1x128xf32>
    %400 = arith.mulf %399, %396 : vector<1x128xf32>
    %401 = arith.select %398, %396, %400 : vector<1x128xi1>, vector<1x128xf32>
    %c23 = arith.constant 23 : index
    %c0_203 = arith.constant 0 : index
    %402 = vector.load %arg13[%c23, %c0_203] : memref<36x128xf32, #tpu.memory_space<vmem>>, vector<1x128xf32>
    tpu.vector_store %arg13[%c23, %c0_203], %401 {strides = array<i32>} : memref<36x128xf32, #tpu.memory_space<vmem>>, vector<1x128xf32>,
    %c44 = arith.constant 44 : index
    %c0_204 = arith.constant 0 : index
    %403 = vector.load %arg1[%c44, %c0_204] : memref<68x32xf32, #tpu.memory_space<vmem>>, vector<4x32xf32>
    %404 = arith.truncf %403 : vector<4x32xf32> to vector<4x32xbf16>
    %c0_205 = arith.constant 0 : index
    %c0_206 = arith.constant 0 : index
    %405 = vector.load %arg2[%c0_205, %c0_206] : memref<32x512xbf16, #tpu.memory_space<vmem>>, vector<32x512xbf16>
    %cst_207 = arith.constant dense<0.000000e+00> : vector<4x512xf32>
    %406 = tpu.matmul %404, %405, %cst_207 {dimension_numbers = #tpu.dot_dimension_numbers<[1], [0], [0], [1], [0, 0, 1, 1], [], []>} : vector<4x32xbf16>, vector<32x512xbf16>, vector<4x512xf32> -> vector<4x512xf32>
    %407 = vector.extract_strided_slice %406 {offsets = [0, 0], sizes = [1, 128], strides = [1, 1]} : vector<4x512xf32> to vector<1x128xf32>
    %408 = vector.extract_strided_slice %406 {offsets = [1, 128], sizes = [1, 128], strides = [1, 1]} : vector<4x512xf32> to vector<1x128xf32>
    %409 = arith.addf %407, %408 : vector<1x128xf32>
    %410 = vector.extract_strided_slice %406 {offsets = [2, 256], sizes = [1, 128], strides = [1, 1]} : vector<4x512xf32> to vector<1x128xf32>
    %411 = arith.addf %409, %410 : vector<1x128xf32>
    %412 = vector.extract_strided_slice %406 {offsets = [3, 384], sizes = [1, 128], strides = [1, 1]} : vector<4x512xf32> to vector<1x128xf32>
    %413 = arith.addf %411, %412 : vector<1x128xf32>
    %c0_208 = arith.constant 0 : index
    %c0_209 = arith.constant 0 : index
    %414 = vector.load %arg3[%c0_208, %c0_209] : memref<1x128xf32, #tpu.memory_space<vmem>>, vector<1x128xf32>
    %415 = arith.addf %413, %414 : vector<1x128xf32>
    %cst_210 = arith.constant 0.000000e+00 : f32
    %416 = vector.broadcast %cst_210 : f32 to vector<1x128xf32>
    %417 = arith.cmpf ogt, %415, %416 : vector<1x128xf32>
    %cst_211 = arith.constant 2.000000e-01 : f32
    %418 = vector.broadcast %cst_211 : f32 to vector<1x128xf32>
    %419 = arith.mulf %418, %415 : vector<1x128xf32>
    %420 = arith.select %417, %415, %419 : vector<1x128xi1>, vector<1x128xf32>
    %c24_212 = arith.constant 24 : index
    %c0_213 = arith.constant 0 : index
    %421 = vector.load %arg13[%c24_212, %c0_213] : memref<36x128xf32, #tpu.memory_space<vmem>>, vector<1x128xf32>
    tpu.vector_store %arg13[%c24_212, %c0_213], %420 {strides = array<i32>} : memref<36x128xf32, #tpu.memory_space<vmem>>, vector<1x128xf32>,
    %c46 = arith.constant 46 : index
    %c0_214 = arith.constant 0 : index
    %422 = vector.load %arg1[%c46, %c0_214] : memref<68x32xf32, #tpu.memory_space<vmem>>, vector<4x32xf32>
    %423 = arith.truncf %422 : vector<4x32xf32> to vector<4x32xbf16>
    %c0_215 = arith.constant 0 : index
    %c0_216 = arith.constant 0 : index
    %424 = vector.load %arg2[%c0_215, %c0_216] : memref<32x512xbf16, #tpu.memory_space<vmem>>, vector<32x512xbf16>
    %cst_217 = arith.constant dense<0.000000e+00> : vector<4x512xf32>
    %425 = tpu.matmul %423, %424, %cst_217 {dimension_numbers = #tpu.dot_dimension_numbers<[1], [0], [0], [1], [0, 0, 1, 1], [], []>} : vector<4x32xbf16>, vector<32x512xbf16>, vector<4x512xf32> -> vector<4x512xf32>
    %426 = vector.extract_strided_slice %425 {offsets = [0, 0], sizes = [1, 128], strides = [1, 1]} : vector<4x512xf32> to vector<1x128xf32>
    %427 = vector.extract_strided_slice %425 {offsets = [1, 128], sizes = [1, 128], strides = [1, 1]} : vector<4x512xf32> to vector<1x128xf32>
    %428 = arith.addf %426, %427 : vector<1x128xf32>
    %429 = vector.extract_strided_slice %425 {offsets = [2, 256], sizes = [1, 128], strides = [1, 1]} : vector<4x512xf32> to vector<1x128xf32>
    %430 = arith.addf %428, %429 : vector<1x128xf32>
    %431 = vector.extract_strided_slice %425 {offsets = [3, 384], sizes = [1, 128], strides = [1, 1]} : vector<4x512xf32> to vector<1x128xf32>
    %432 = arith.addf %430, %431 : vector<1x128xf32>
    %c0_218 = arith.constant 0 : index
    %c0_219 = arith.constant 0 : index
    %433 = vector.load %arg3[%c0_218, %c0_219] : memref<1x128xf32, #tpu.memory_space<vmem>>, vector<1x128xf32>
    %434 = arith.addf %432, %433 : vector<1x128xf32>
    %cst_220 = arith.constant 0.000000e+00 : f32
    %435 = vector.broadcast %cst_220 : f32 to vector<1x128xf32>
    %436 = arith.cmpf ogt, %434, %435 : vector<1x128xf32>
    %cst_221 = arith.constant 2.000000e-01 : f32
    %437 = vector.broadcast %cst_221 : f32 to vector<1x128xf32>
    %438 = arith.mulf %437, %434 : vector<1x128xf32>
    %439 = arith.select %436, %434, %438 : vector<1x128xi1>, vector<1x128xf32>
    %c25 = arith.constant 25 : index
    %c0_222 = arith.constant 0 : index
    %440 = vector.load %arg13[%c25, %c0_222] : memref<36x128xf32, #tpu.memory_space<vmem>>, vector<1x128xf32>
    tpu.vector_store %arg13[%c25, %c0_222], %439 {strides = array<i32>} : memref<36x128xf32, #tpu.memory_space<vmem>>, vector<1x128xf32>,
    %c48 = arith.constant 48 : index
    %c0_223 = arith.constant 0 : index
    %441 = vector.load %arg1[%c48, %c0_223] : memref<68x32xf32, #tpu.memory_space<vmem>>, vector<4x32xf32>
    %442 = arith.truncf %441 : vector<4x32xf32> to vector<4x32xbf16>
    %c0_224 = arith.constant 0 : index
    %c0_225 = arith.constant 0 : index
    %443 = vector.load %arg2[%c0_224, %c0_225] : memref<32x512xbf16, #tpu.memory_space<vmem>>, vector<32x512xbf16>
    %cst_226 = arith.constant dense<0.000000e+00> : vector<4x512xf32>
    %444 = tpu.matmul %442, %443, %cst_226 {dimension_numbers = #tpu.dot_dimension_numbers<[1], [0], [0], [1], [0, 0, 1, 1], [], []>} : vector<4x32xbf16>, vector<32x512xbf16>, vector<4x512xf32> -> vector<4x512xf32>
    %445 = vector.extract_strided_slice %444 {offsets = [0, 0], sizes = [1, 128], strides = [1, 1]} : vector<4x512xf32> to vector<1x128xf32>
    %446 = vector.extract_strided_slice %444 {offsets = [1, 128], sizes = [1, 128], strides = [1, 1]} : vector<4x512xf32> to vector<1x128xf32>
    %447 = arith.addf %445, %446 : vector<1x128xf32>
    %448 = vector.extract_strided_slice %444 {offsets = [2, 256], sizes = [1, 128], strides = [1, 1]} : vector<4x512xf32> to vector<1x128xf32>
    %449 = arith.addf %447, %448 : vector<1x128xf32>
    %450 = vector.extract_strided_slice %444 {offsets = [3, 384], sizes = [1, 128], strides = [1, 1]} : vector<4x512xf32> to vector<1x128xf32>
    %451 = arith.addf %449, %450 : vector<1x128xf32>
    %c0_227 = arith.constant 0 : index
    %c0_228 = arith.constant 0 : index
    %452 = vector.load %arg3[%c0_227, %c0_228] : memref<1x128xf32, #tpu.memory_space<vmem>>, vector<1x128xf32>
    %453 = arith.addf %451, %452 : vector<1x128xf32>
    %cst_229 = arith.constant 0.000000e+00 : f32
    %454 = vector.broadcast %cst_229 : f32 to vector<1x128xf32>
    %455 = arith.cmpf ogt, %453, %454 : vector<1x128xf32>
    %cst_230 = arith.constant 2.000000e-01 : f32
    %456 = vector.broadcast %cst_230 : f32 to vector<1x128xf32>
    %457 = arith.mulf %456, %453 : vector<1x128xf32>
    %458 = arith.select %455, %453, %457 : vector<1x128xi1>, vector<1x128xf32>
    %c26_231 = arith.constant 26 : index
    %c0_232 = arith.constant 0 : index
    %459 = vector.load %arg13[%c26_231, %c0_232] : memref<36x128xf32, #tpu.memory_space<vmem>>, vector<1x128xf32>
    tpu.vector_store %arg13[%c26_231, %c0_232], %458 {strides = array<i32>} : memref<36x128xf32, #tpu.memory_space<vmem>>, vector<1x128xf32>,
    %c50 = arith.constant 50 : index
    %c0_233 = arith.constant 0 : index
    %460 = vector.load %arg1[%c50, %c0_233] : memref<68x32xf32, #tpu.memory_space<vmem>>, vector<4x32xf32>
    %461 = arith.truncf %460 : vector<4x32xf32> to vector<4x32xbf16>
    %c0_234 = arith.constant 0 : index
    %c0_235 = arith.constant 0 : index
    %462 = vector.load %arg2[%c0_234, %c0_235] : memref<32x512xbf16, #tpu.memory_space<vmem>>, vector<32x512xbf16>
    %cst_236 = arith.constant dense<0.000000e+00> : vector<4x512xf32>
    %463 = tpu.matmul %461, %462, %cst_236 {dimension_numbers = #tpu.dot_dimension_numbers<[1], [0], [0], [1], [0, 0, 1, 1], [], []>} : vector<4x32xbf16>, vector<32x512xbf16>, vector<4x512xf32> -> vector<4x512xf32>
    %464 = vector.extract_strided_slice %463 {offsets = [0, 0], sizes = [1, 128], strides = [1, 1]} : vector<4x512xf32> to vector<1x128xf32>
    %465 = vector.extract_strided_slice %463 {offsets = [1, 128], sizes = [1, 128], strides = [1, 1]} : vector<4x512xf32> to vector<1x128xf32>
    %466 = arith.addf %464, %465 : vector<1x128xf32>
    %467 = vector.extract_strided_slice %463 {offsets = [2, 256], sizes = [1, 128], strides = [1, 1]} : vector<4x512xf32> to vector<1x128xf32>
    %468 = arith.addf %466, %467 : vector<1x128xf32>
    %469 = vector.extract_strided_slice %463 {offsets = [3, 384], sizes = [1, 128], strides = [1, 1]} : vector<4x512xf32> to vector<1x128xf32>
    %470 = arith.addf %468, %469 : vector<1x128xf32>
    %c0_237 = arith.constant 0 : index
    %c0_238 = arith.constant 0 : index
    %471 = vector.load %arg3[%c0_237, %c0_238] : memref<1x128xf32, #tpu.memory_space<vmem>>, vector<1x128xf32>
    %472 = arith.addf %470, %471 : vector<1x128xf32>
    %cst_239 = arith.constant 0.000000e+00 : f32
    %473 = vector.broadcast %cst_239 : f32 to vector<1x128xf32>
    %474 = arith.cmpf ogt, %472, %473 : vector<1x128xf32>
    %cst_240 = arith.constant 2.000000e-01 : f32
    %475 = vector.broadcast %cst_240 : f32 to vector<1x128xf32>
    %476 = arith.mulf %475, %472 : vector<1x128xf32>
    %477 = arith.select %474, %472, %476 : vector<1x128xi1>, vector<1x128xf32>
    %c27 = arith.constant 27 : index
    %c0_241 = arith.constant 0 : index
    %478 = vector.load %arg13[%c27, %c0_241] : memref<36x128xf32, #tpu.memory_space<vmem>>, vector<1x128xf32>
    tpu.vector_store %arg13[%c27, %c0_241], %477 {strides = array<i32>} : memref<36x128xf32, #tpu.memory_space<vmem>>, vector<1x128xf32>,
    %c52 = arith.constant 52 : index
    %c0_242 = arith.constant 0 : index
    %479 = vector.load %arg1[%c52, %c0_242] : memref<68x32xf32, #tpu.memory_space<vmem>>, vector<4x32xf32>
    %480 = arith.truncf %479 : vector<4x32xf32> to vector<4x32xbf16>
    %c0_243 = arith.constant 0 : index
    %c0_244 = arith.constant 0 : index
    %481 = vector.load %arg2[%c0_243, %c0_244] : memref<32x512xbf16, #tpu.memory_space<vmem>>, vector<32x512xbf16>
    %cst_245 = arith.constant dense<0.000000e+00> : vector<4x512xf32>
    %482 = tpu.matmul %480, %481, %cst_245 {dimension_numbers = #tpu.dot_dimension_numbers<[1], [0], [0], [1], [0, 0, 1, 1], [], []>} : vector<4x32xbf16>, vector<32x512xbf16>, vector<4x512xf32> -> vector<4x512xf32>
    %483 = vector.extract_strided_slice %482 {offsets = [0, 0], sizes = [1, 128], strides = [1, 1]} : vector<4x512xf32> to vector<1x128xf32>
    %484 = vector.extract_strided_slice %482 {offsets = [1, 128], sizes = [1, 128], strides = [1, 1]} : vector<4x512xf32> to vector<1x128xf32>
    %485 = arith.addf %483, %484 : vector<1x128xf32>
    %486 = vector.extract_strided_slice %482 {offsets = [2, 256], sizes = [1, 128], strides = [1, 1]} : vector<4x512xf32> to vector<1x128xf32>
    %487 = arith.addf %485, %486 : vector<1x128xf32>
    %488 = vector.extract_strided_slice %482 {offsets = [3, 384], sizes = [1, 128], strides = [1, 1]} : vector<4x512xf32> to vector<1x128xf32>
    %489 = arith.addf %487, %488 : vector<1x128xf32>
    %c0_246 = arith.constant 0 : index
    %c0_247 = arith.constant 0 : index
    %490 = vector.load %arg3[%c0_246, %c0_247] : memref<1x128xf32, #tpu.memory_space<vmem>>, vector<1x128xf32>
    %491 = arith.addf %489, %490 : vector<1x128xf32>
    %cst_248 = arith.constant 0.000000e+00 : f32
    %492 = vector.broadcast %cst_248 : f32 to vector<1x128xf32>
    %493 = arith.cmpf ogt, %491, %492 : vector<1x128xf32>
    %cst_249 = arith.constant 2.000000e-01 : f32
    %494 = vector.broadcast %cst_249 : f32 to vector<1x128xf32>
    %495 = arith.mulf %494, %491 : vector<1x128xf32>
    %496 = arith.select %493, %491, %495 : vector<1x128xi1>, vector<1x128xf32>
    %c28_250 = arith.constant 28 : index
    %c0_251 = arith.constant 0 : index
    %497 = vector.load %arg13[%c28_250, %c0_251] : memref<36x128xf32, #tpu.memory_space<vmem>>, vector<1x128xf32>
    tpu.vector_store %arg13[%c28_250, %c0_251], %496 {strides = array<i32>} : memref<36x128xf32, #tpu.memory_space<vmem>>, vector<1x128xf32>,
    %c54 = arith.constant 54 : index
    %c0_252 = arith.constant 0 : index
    %498 = vector.load %arg1[%c54, %c0_252] : memref<68x32xf32, #tpu.memory_space<vmem>>, vector<4x32xf32>
    %499 = arith.truncf %498 : vector<4x32xf32> to vector<4x32xbf16>
    %c0_253 = arith.constant 0 : index
    %c0_254 = arith.constant 0 : index
    %500 = vector.load %arg2[%c0_253, %c0_254] : memref<32x512xbf16, #tpu.memory_space<vmem>>, vector<32x512xbf16>
    %cst_255 = arith.constant dense<0.000000e+00> : vector<4x512xf32>
    %501 = tpu.matmul %499, %500, %cst_255 {dimension_numbers = #tpu.dot_dimension_numbers<[1], [0], [0], [1], [0, 0, 1, 1], [], []>} : vector<4x32xbf16>, vector<32x512xbf16>, vector<4x512xf32> -> vector<4x512xf32>
    %502 = vector.extract_strided_slice %501 {offsets = [0, 0], sizes = [1, 128], strides = [1, 1]} : vector<4x512xf32> to vector<1x128xf32>
    %503 = vector.extract_strided_slice %501 {offsets = [1, 128], sizes = [1, 128], strides = [1, 1]} : vector<4x512xf32> to vector<1x128xf32>
    %504 = arith.addf %502, %503 : vector<1x128xf32>
    %505 = vector.extract_strided_slice %501 {offsets = [2, 256], sizes = [1, 128], strides = [1, 1]} : vector<4x512xf32> to vector<1x128xf32>
    %506 = arith.addf %504, %505 : vector<1x128xf32>
    %507 = vector.extract_strided_slice %501 {offsets = [3, 384], sizes = [1, 128], strides = [1, 1]} : vector<4x512xf32> to vector<1x128xf32>
    %508 = arith.addf %506, %507 : vector<1x128xf32>
    %c0_256 = arith.constant 0 : index
    %c0_257 = arith.constant 0 : index
    %509 = vector.load %arg3[%c0_256, %c0_257] : memref<1x128xf32, #tpu.memory_space<vmem>>, vector<1x128xf32>
    %510 = arith.addf %508, %509 : vector<1x128xf32>
    %cst_258 = arith.constant 0.000000e+00 : f32
    %511 = vector.broadcast %cst_258 : f32 to vector<1x128xf32>
    %512 = arith.cmpf ogt, %510, %511 : vector<1x128xf32>
    %cst_259 = arith.constant 2.000000e-01 : f32
    %513 = vector.broadcast %cst_259 : f32 to vector<1x128xf32>
    %514 = arith.mulf %513, %510 : vector<1x128xf32>
    %515 = arith.select %512, %510, %514 : vector<1x128xi1>, vector<1x128xf32>
    %c29 = arith.constant 29 : index
    %c0_260 = arith.constant 0 : index
    %516 = vector.load %arg13[%c29, %c0_260] : memref<36x128xf32, #tpu.memory_space<vmem>>, vector<1x128xf32>
    tpu.vector_store %arg13[%c29, %c0_260], %515 {strides = array<i32>} : memref<36x128xf32, #tpu.memory_space<vmem>>, vector<1x128xf32>,
    %c56 = arith.constant 56 : index
    %c0_261 = arith.constant 0 : index
    %517 = vector.load %arg1[%c56, %c0_261] : memref<68x32xf32, #tpu.memory_space<vmem>>, vector<4x32xf32>
    %518 = arith.truncf %517 : vector<4x32xf32> to vector<4x32xbf16>
    %c0_262 = arith.constant 0 : index
    %c0_263 = arith.constant 0 : index
    %519 = vector.load %arg2[%c0_262, %c0_263] : memref<32x512xbf16, #tpu.memory_space<vmem>>, vector<32x512xbf16>
    %cst_264 = arith.constant dense<0.000000e+00> : vector<4x512xf32>
    %520 = tpu.matmul %518, %519, %cst_264 {dimension_numbers = #tpu.dot_dimension_numbers<[1], [0], [0], [1], [0, 0, 1, 1], [], []>} : vector<4x32xbf16>, vector<32x512xbf16>, vector<4x512xf32> -> vector<4x512xf32>
    %521 = vector.extract_strided_slice %520 {offsets = [0, 0], sizes = [1, 128], strides = [1, 1]} : vector<4x512xf32> to vector<1x128xf32>
    %522 = vector.extract_strided_slice %520 {offsets = [1, 128], sizes = [1, 128], strides = [1, 1]} : vector<4x512xf32> to vector<1x128xf32>
    %523 = arith.addf %521, %522 : vector<1x128xf32>
    %524 = vector.extract_strided_slice %520 {offsets = [2, 256], sizes = [1, 128], strides = [1, 1]} : vector<4x512xf32> to vector<1x128xf32>
    %525 = arith.addf %523, %524 : vector<1x128xf32>
    %526 = vector.extract_strided_slice %520 {offsets = [3, 384], sizes = [1, 128], strides = [1, 1]} : vector<4x512xf32> to vector<1x128xf32>
    %527 = arith.addf %525, %526 : vector<1x128xf32>
    %c0_265 = arith.constant 0 : index
    %c0_266 = arith.constant 0 : index
    %528 = vector.load %arg3[%c0_265, %c0_266] : memref<1x128xf32, #tpu.memory_space<vmem>>, vector<1x128xf32>
    %529 = arith.addf %527, %528 : vector<1x128xf32>
    %cst_267 = arith.constant 0.000000e+00 : f32
    %530 = vector.broadcast %cst_267 : f32 to vector<1x128xf32>
    %531 = arith.cmpf ogt, %529, %530 : vector<1x128xf32>
    %cst_268 = arith.constant 2.000000e-01 : f32
    %532 = vector.broadcast %cst_268 : f32 to vector<1x128xf32>
    %533 = arith.mulf %532, %529 : vector<1x128xf32>
    %534 = arith.select %531, %529, %533 : vector<1x128xi1>, vector<1x128xf32>
    %c30_269 = arith.constant 30 : index
    %c0_270 = arith.constant 0 : index
    %535 = vector.load %arg13[%c30_269, %c0_270] : memref<36x128xf32, #tpu.memory_space<vmem>>, vector<1x128xf32>
    tpu.vector_store %arg13[%c30_269, %c0_270], %534 {strides = array<i32>} : memref<36x128xf32, #tpu.memory_space<vmem>>, vector<1x128xf32>,
    %c58 = arith.constant 58 : index
    %c0_271 = arith.constant 0 : index
    %536 = vector.load %arg1[%c58, %c0_271] : memref<68x32xf32, #tpu.memory_space<vmem>>, vector<4x32xf32>
    %537 = arith.truncf %536 : vector<4x32xf32> to vector<4x32xbf16>
    %c0_272 = arith.constant 0 : index
    %c0_273 = arith.constant 0 : index
    %538 = vector.load %arg2[%c0_272, %c0_273] : memref<32x512xbf16, #tpu.memory_space<vmem>>, vector<32x512xbf16>
    %cst_274 = arith.constant dense<0.000000e+00> : vector<4x512xf32>
    %539 = tpu.matmul %537, %538, %cst_274 {dimension_numbers = #tpu.dot_dimension_numbers<[1], [0], [0], [1], [0, 0, 1, 1], [], []>} : vector<4x32xbf16>, vector<32x512xbf16>, vector<4x512xf32> -> vector<4x512xf32>
    %540 = vector.extract_strided_slice %539 {offsets = [0, 0], sizes = [1, 128], strides = [1, 1]} : vector<4x512xf32> to vector<1x128xf32>
    %541 = vector.extract_strided_slice %539 {offsets = [1, 128], sizes = [1, 128], strides = [1, 1]} : vector<4x512xf32> to vector<1x128xf32>
    %542 = arith.addf %540, %541 : vector<1x128xf32>
    %543 = vector.extract_strided_slice %539 {offsets = [2, 256], sizes = [1, 128], strides = [1, 1]} : vector<4x512xf32> to vector<1x128xf32>
    %544 = arith.addf %542, %543 : vector<1x128xf32>
    %545 = vector.extract_strided_slice %539 {offsets = [3, 384], sizes = [1, 128], strides = [1, 1]} : vector<4x512xf32> to vector<1x128xf32>
    %546 = arith.addf %544, %545 : vector<1x128xf32>
    %c0_275 = arith.constant 0 : index
    %c0_276 = arith.constant 0 : index
    %547 = vector.load %arg3[%c0_275, %c0_276] : memref<1x128xf32, #tpu.memory_space<vmem>>, vector<1x128xf32>
    %548 = arith.addf %546, %547 : vector<1x128xf32>
    %cst_277 = arith.constant 0.000000e+00 : f32
    %549 = vector.broadcast %cst_277 : f32 to vector<1x128xf32>
    %550 = arith.cmpf ogt, %548, %549 : vector<1x128xf32>
    %cst_278 = arith.constant 2.000000e-01 : f32
    %551 = vector.broadcast %cst_278 : f32 to vector<1x128xf32>
    %552 = arith.mulf %551, %548 : vector<1x128xf32>
    %553 = arith.select %550, %548, %552 : vector<1x128xi1>, vector<1x128xf32>
    %c31 = arith.constant 31 : index
    %c0_279 = arith.constant 0 : index
    %554 = vector.load %arg13[%c31, %c0_279] : memref<36x128xf32, #tpu.memory_space<vmem>>, vector<1x128xf32>
    tpu.vector_store %arg13[%c31, %c0_279], %553 {strides = array<i32>} : memref<36x128xf32, #tpu.memory_space<vmem>>, vector<1x128xf32>,
    %c60 = arith.constant 60 : index
    %c0_280 = arith.constant 0 : index
    %555 = vector.load %arg1[%c60, %c0_280] : memref<68x32xf32, #tpu.memory_space<vmem>>, vector<4x32xf32>
    %556 = arith.truncf %555 : vector<4x32xf32> to vector<4x32xbf16>
    %c0_281 = arith.constant 0 : index
    %c0_282 = arith.constant 0 : index
    %557 = vector.load %arg2[%c0_281, %c0_282] : memref<32x512xbf16, #tpu.memory_space<vmem>>, vector<32x512xbf16>
    %cst_283 = arith.constant dense<0.000000e+00> : vector<4x512xf32>
    %558 = tpu.matmul %556, %557, %cst_283 {dimension_numbers = #tpu.dot_dimension_numbers<[1], [0], [0], [1], [0, 0, 1, 1], [], []>} : vector<4x32xbf16>, vector<32x512xbf16>, vector<4x512xf32> -> vector<4x512xf32>
    %559 = vector.extract_strided_slice %558 {offsets = [0, 0], sizes = [1, 128], strides = [1, 1]} : vector<4x512xf32> to vector<1x128xf32>
    %560 = vector.extract_strided_slice %558 {offsets = [1, 128], sizes = [1, 128], strides = [1, 1]} : vector<4x512xf32> to vector<1x128xf32>
    %561 = arith.addf %559, %560 : vector<1x128xf32>
    %562 = vector.extract_strided_slice %558 {offsets = [2, 256], sizes = [1, 128], strides = [1, 1]} : vector<4x512xf32> to vector<1x128xf32>
    %563 = arith.addf %561, %562 : vector<1x128xf32>
    %564 = vector.extract_strided_slice %558 {offsets = [3, 384], sizes = [1, 128], strides = [1, 1]} : vector<4x512xf32> to vector<1x128xf32>
    %565 = arith.addf %563, %564 : vector<1x128xf32>
    %c0_284 = arith.constant 0 : index
    %c0_285 = arith.constant 0 : index
    %566 = vector.load %arg3[%c0_284, %c0_285] : memref<1x128xf32, #tpu.memory_space<vmem>>, vector<1x128xf32>
    %567 = arith.addf %565, %566 : vector<1x128xf32>
    %cst_286 = arith.constant 0.000000e+00 : f32
    %568 = vector.broadcast %cst_286 : f32 to vector<1x128xf32>
    %569 = arith.cmpf ogt, %567, %568 : vector<1x128xf32>
    %cst_287 = arith.constant 2.000000e-01 : f32
    %570 = vector.broadcast %cst_287 : f32 to vector<1x128xf32>
    %571 = arith.mulf %570, %567 : vector<1x128xf32>
    %572 = arith.select %569, %567, %571 : vector<1x128xi1>, vector<1x128xf32>
    %c32 = arith.constant 32 : index
    %c0_288 = arith.constant 0 : index
    %573 = vector.load %arg13[%c32, %c0_288] : memref<36x128xf32, #tpu.memory_space<vmem>>, vector<1x128xf32>
    tpu.vector_store %arg13[%c32, %c0_288], %572 {strides = array<i32>} : memref<36x128xf32, #tpu.memory_space<vmem>>, vector<1x128xf32>,
    %c62 = arith.constant 62 : index
    %c0_289 = arith.constant 0 : index
    %574 = vector.load %arg1[%c62, %c0_289] : memref<68x32xf32, #tpu.memory_space<vmem>>, vector<4x32xf32>
    %575 = arith.truncf %574 : vector<4x32xf32> to vector<4x32xbf16>
    %c0_290 = arith.constant 0 : index
    %c0_291 = arith.constant 0 : index
    %576 = vector.load %arg2[%c0_290, %c0_291] : memref<32x512xbf16, #tpu.memory_space<vmem>>, vector<32x512xbf16>
    %cst_292 = arith.constant dense<0.000000e+00> : vector<4x512xf32>
    %577 = tpu.matmul %575, %576, %cst_292 {dimension_numbers = #tpu.dot_dimension_numbers<[1], [0], [0], [1], [0, 0, 1, 1], [], []>} : vector<4x32xbf16>, vector<32x512xbf16>, vector<4x512xf32> -> vector<4x512xf32>
    %578 = vector.extract_strided_slice %577 {offsets = [0, 0], sizes = [1, 128], strides = [1, 1]} : vector<4x512xf32> to vector<1x128xf32>
    %579 = vector.extract_strided_slice %577 {offsets = [1, 128], sizes = [1, 128], strides = [1, 1]} : vector<4x512xf32> to vector<1x128xf32>
    %580 = arith.addf %578, %579 : vector<1x128xf32>
    %581 = vector.extract_strided_slice %577 {offsets = [2, 256], sizes = [1, 128], strides = [1, 1]} : vector<4x512xf32> to vector<1x128xf32>
    %582 = arith.addf %580, %581 : vector<1x128xf32>
    %583 = vector.extract_strided_slice %577 {offsets = [3, 384], sizes = [1, 128], strides = [1, 1]} : vector<4x512xf32> to vector<1x128xf32>
    %584 = arith.addf %582, %583 : vector<1x128xf32>
    %c0_293 = arith.constant 0 : index
    %c0_294 = arith.constant 0 : index
    %585 = vector.load %arg3[%c0_293, %c0_294] : memref<1x128xf32, #tpu.memory_space<vmem>>, vector<1x128xf32>
    %586 = arith.addf %584, %585 : vector<1x128xf32>
    %cst_295 = arith.constant 0.000000e+00 : f32
    %587 = vector.broadcast %cst_295 : f32 to vector<1x128xf32>
    %588 = arith.cmpf ogt, %586, %587 : vector<1x128xf32>
    %cst_296 = arith.constant 2.000000e-01 : f32
    %589 = vector.broadcast %cst_296 : f32 to vector<1x128xf32>
    %590 = arith.mulf %589, %586 : vector<1x128xf32>
    %591 = arith.select %588, %586, %590 : vector<1x128xi1>, vector<1x128xf32>
    %c33 = arith.constant 33 : index
    %c0_297 = arith.constant 0 : index
    %592 = vector.load %arg13[%c33, %c0_297] : memref<36x128xf32, #tpu.memory_space<vmem>>, vector<1x128xf32>
    tpu.vector_store %arg13[%c33, %c0_297], %591 {strides = array<i32>} : memref<36x128xf32, #tpu.memory_space<vmem>>, vector<1x128xf32>,
    %c64 = arith.constant 64 : index
    %c0_298 = arith.constant 0 : index
    %593 = vector.load %arg1[%c64, %c0_298] : memref<68x32xf32, #tpu.memory_space<vmem>>, vector<4x32xf32>
    %594 = arith.truncf %593 : vector<4x32xf32> to vector<4x32xbf16>
    %c0_299 = arith.constant 0 : index
    %c0_300 = arith.constant 0 : index
    %595 = vector.load %arg2[%c0_299, %c0_300] : memref<32x512xbf16, #tpu.memory_space<vmem>>, vector<32x512xbf16>
    %cst_301 = arith.constant dense<0.000000e+00> : vector<4x512xf32>
    %596 = tpu.matmul %594, %595, %cst_301 {dimension_numbers = #tpu.dot_dimension_numbers<[1], [0], [0], [1], [0, 0, 1, 1], [], []>} : vector<4x32xbf16>, vector<32x512xbf16>, vector<4x512xf32> -> vector<4x512xf32>
    %597 = vector.extract_strided_slice %596 {offsets = [0, 0], sizes = [1, 128], strides = [1, 1]} : vector<4x512xf32> to vector<1x128xf32>
    %598 = vector.extract_strided_slice %596 {offsets = [1, 128], sizes = [1, 128], strides = [1, 1]} : vector<4x512xf32> to vector<1x128xf32>
    %599 = arith.addf %597, %598 : vector<1x128xf32>
    %600 = vector.extract_strided_slice %596 {offsets = [2, 256], sizes = [1, 128], strides = [1, 1]} : vector<4x512xf32> to vector<1x128xf32>
    %601 = arith.addf %599, %600 : vector<1x128xf32>
    %602 = vector.extract_strided_slice %596 {offsets = [3, 384], sizes = [1, 128], strides = [1, 1]} : vector<4x512xf32> to vector<1x128xf32>
    %603 = arith.addf %601, %602 : vector<1x128xf32>
    %c0_302 = arith.constant 0 : index
    %c0_303 = arith.constant 0 : index
    %604 = vector.load %arg3[%c0_302, %c0_303] : memref<1x128xf32, #tpu.memory_space<vmem>>, vector<1x128xf32>
    %605 = arith.addf %603, %604 : vector<1x128xf32>
    %cst_304 = arith.constant 0.000000e+00 : f32
    %606 = vector.broadcast %cst_304 : f32 to vector<1x128xf32>
    %607 = arith.cmpf ogt, %605, %606 : vector<1x128xf32>
    %cst_305 = arith.constant 2.000000e-01 : f32
    %608 = vector.broadcast %cst_305 : f32 to vector<1x128xf32>
    %609 = arith.mulf %608, %605 : vector<1x128xf32>
    %610 = arith.select %607, %605, %609 : vector<1x128xi1>, vector<1x128xf32>
    %c34_306 = arith.constant 34 : index
    %c0_307 = arith.constant 0 : index
    %611 = vector.load %arg13[%c34_306, %c0_307] : memref<36x128xf32, #tpu.memory_space<vmem>>, vector<1x128xf32>
    tpu.vector_store %arg13[%c34_306, %c0_307], %610 {strides = array<i32>} : memref<36x128xf32, #tpu.memory_space<vmem>>, vector<1x128xf32>,
    %c0_308 = arith.constant 0 : index
    %c0_309 = arith.constant 0 : index
    %612 = vector.load %arg13[%c0_308, %c0_309] : memref<36x128xf32, #tpu.memory_space<vmem>>, vector<4x128xf32>
    %613 = arith.truncf %612 : vector<4x128xf32> to vector<4x128xbf16>
    %c0_310 = arith.constant 0 : index
    %c0_311 = arith.constant 0 : index
    %614 = vector.load %arg4[%c0_310, %c0_311] : memref<128x512xbf16, #tpu.memory_space<vmem>>, vector<128x512xbf16>
    %cst_312 = arith.constant dense<0.000000e+00> : vector<4x512xf32>
    %615 = tpu.matmul %613, %614, %cst_312 {dimension_numbers = #tpu.dot_dimension_numbers<[1], [0], [0], [1], [0, 0, 1, 1], [], []>} : vector<4x128xbf16>, vector<128x512xbf16>, vector<4x512xf32> -> vector<4x512xf32>
    %616 = vector.extract_strided_slice %615 {offsets = [0, 0], sizes = [1, 128], strides = [1, 1]} : vector<4x512xf32> to vector<1x128xf32>
    %617 = vector.extract_strided_slice %615 {offsets = [1, 128], sizes = [1, 128], strides = [1, 1]} : vector<4x512xf32> to vector<1x128xf32>
    %618 = arith.addf %616, %617 : vector<1x128xf32>
    %619 = vector.extract_strided_slice %615 {offsets = [2, 256], sizes = [1, 128], strides = [1, 1]} : vector<4x512xf32> to vector<1x128xf32>
    %620 = arith.addf %618, %619 : vector<1x128xf32>
    %621 = vector.extract_strided_slice %615 {offsets = [3, 384], sizes = [1, 128], strides = [1, 1]} : vector<4x512xf32> to vector<1x128xf32>
    %622 = arith.addf %620, %621 : vector<1x128xf32>
    %c0_313 = arith.constant 0 : index
    %c0_314 = arith.constant 0 : index
    %623 = vector.load %arg15[%c0_313, %c0_314] : memref<16x128xf32, #tpu.memory_space<vmem>>, vector<1x128xf32>
    tpu.vector_store %arg15[%c0_313, %c0_314], %622 {strides = array<i32>} : memref<16x128xf32, #tpu.memory_space<vmem>>, vector<1x128xf32>,
    %c2_315 = arith.constant 2 : index
    %c0_316 = arith.constant 0 : index
    %624 = vector.load %arg13[%c2_315, %c0_316] : memref<36x128xf32, #tpu.memory_space<vmem>>, vector<4x128xf32>
    %625 = arith.truncf %624 : vector<4x128xf32> to vector<4x128xbf16>
    %c0_317 = arith.constant 0 : index
    %c0_318 = arith.constant 0 : index
    %626 = vector.load %arg4[%c0_317, %c0_318] : memref<128x512xbf16, #tpu.memory_space<vmem>>, vector<128x512xbf16>
    %cst_319 = arith.constant dense<0.000000e+00> : vector<4x512xf32>
    %627 = tpu.matmul %625, %626, %cst_319 {dimension_numbers = #tpu.dot_dimension_numbers<[1], [0], [0], [1], [0, 0, 1, 1], [], []>} : vector<4x128xbf16>, vector<128x512xbf16>, vector<4x512xf32> -> vector<4x512xf32>
    %628 = vector.extract_strided_slice %627 {offsets = [0, 0], sizes = [1, 128], strides = [1, 1]} : vector<4x512xf32> to vector<1x128xf32>
    %629 = vector.extract_strided_slice %627 {offsets = [1, 128], sizes = [1, 128], strides = [1, 1]} : vector<4x512xf32> to vector<1x128xf32>
    %630 = arith.addf %628, %629 : vector<1x128xf32>
    %631 = vector.extract_strided_slice %627 {offsets = [2, 256], sizes = [1, 128], strides = [1, 1]} : vector<4x512xf32> to vector<1x128xf32>
    %632 = arith.addf %630, %631 : vector<1x128xf32>
    %633 = vector.extract_strided_slice %627 {offsets = [3, 384], sizes = [1, 128], strides = [1, 1]} : vector<4x512xf32> to vector<1x128xf32>
    %634 = arith.addf %632, %633 : vector<1x128xf32>
    %c1_320 = arith.constant 1 : index
    %c0_321 = arith.constant 0 : index
    %635 = vector.load %arg15[%c1_320, %c0_321] : memref<16x128xf32, #tpu.memory_space<vmem>>, vector<1x128xf32>
    tpu.vector_store %arg15[%c1_320, %c0_321], %634 {strides = array<i32>} : memref<16x128xf32, #tpu.memory_space<vmem>>, vector<1x128xf32>,
    %c4_322 = arith.constant 4 : index
    %c0_323 = arith.constant 0 : index
    %636 = vector.load %arg13[%c4_322, %c0_323] : memref<36x128xf32, #tpu.memory_space<vmem>>, vector<4x128xf32>
    %637 = arith.truncf %636 : vector<4x128xf32> to vector<4x128xbf16>
    %c0_324 = arith.constant 0 : index
    %c0_325 = arith.constant 0 : index
    %638 = vector.load %arg4[%c0_324, %c0_325] : memref<128x512xbf16, #tpu.memory_space<vmem>>, vector<128x512xbf16>
    %cst_326 = arith.constant dense<0.000000e+00> : vector<4x512xf32>
    %639 = tpu.matmul %637, %638, %cst_326 {dimension_numbers = #tpu.dot_dimension_numbers<[1], [0], [0], [1], [0, 0, 1, 1], [], []>} : vector<4x128xbf16>, vector<128x512xbf16>, vector<4x512xf32> -> vector<4x512xf32>
    %640 = vector.extract_strided_slice %639 {offsets = [0, 0], sizes = [1, 128], strides = [1, 1]} : vector<4x512xf32> to vector<1x128xf32>
    %641 = vector.extract_strided_slice %639 {offsets = [1, 128], sizes = [1, 128], strides = [1, 1]} : vector<4x512xf32> to vector<1x128xf32>
    %642 = arith.addf %640, %641 : vector<1x128xf32>
    %643 = vector.extract_strided_slice %639 {offsets = [2, 256], sizes = [1, 128], strides = [1, 1]} : vector<4x512xf32> to vector<1x128xf32>
    %644 = arith.addf %642, %643 : vector<1x128xf32>
    %645 = vector.extract_strided_slice %639 {offsets = [3, 384], sizes = [1, 128], strides = [1, 1]} : vector<4x512xf32> to vector<1x128xf32>
    %646 = arith.addf %644, %645 : vector<1x128xf32>
    %c2_327 = arith.constant 2 : index
    %c0_328 = arith.constant 0 : index
    %647 = vector.load %arg15[%c2_327, %c0_328] : memref<16x128xf32, #tpu.memory_space<vmem>>, vector<1x128xf32>
    tpu.vector_store %arg15[%c2_327, %c0_328], %646 {strides = array<i32>} : memref<16x128xf32, #tpu.memory_space<vmem>>, vector<1x128xf32>,
    %c6_329 = arith.constant 6 : index
    %c0_330 = arith.constant 0 : index
    %648 = vector.load %arg13[%c6_329, %c0_330] : memref<36x128xf32, #tpu.memory_space<vmem>>, vector<4x128xf32>
    %649 = arith.truncf %648 : vector<4x128xf32> to vector<4x128xbf16>
    %c0_331 = arith.constant 0 : index
    %c0_332 = arith.constant 0 : index
    %650 = vector.load %arg4[%c0_331, %c0_332] : memref<128x512xbf16, #tpu.memory_space<vmem>>, vector<128x512xbf16>
    %cst_333 = arith.constant dense<0.000000e+00> : vector<4x512xf32>
    %651 = tpu.matmul %649, %650, %cst_333 {dimension_numbers = #tpu.dot_dimension_numbers<[1], [0], [0], [1], [0, 0, 1, 1], [], []>} : vector<4x128xbf16>, vector<128x512xbf16>, vector<4x512xf32> -> vector<4x512xf32>
    %652 = vector.extract_strided_slice %651 {offsets = [0, 0], sizes = [1, 128], strides = [1, 1]} : vector<4x512xf32> to vector<1x128xf32>
    %653 = vector.extract_strided_slice %651 {offsets = [1, 128], sizes = [1, 128], strides = [1, 1]} : vector<4x512xf32> to vector<1x128xf32>
    %654 = arith.addf %652, %653 : vector<1x128xf32>
    %655 = vector.extract_strided_slice %651 {offsets = [2, 256], sizes = [1, 128], strides = [1, 1]} : vector<4x512xf32> to vector<1x128xf32>
    %656 = arith.addf %654, %655 : vector<1x128xf32>
    %657 = vector.extract_strided_slice %651 {offsets = [3, 384], sizes = [1, 128], strides = [1, 1]} : vector<4x512xf32> to vector<1x128xf32>
    %658 = arith.addf %656, %657 : vector<1x128xf32>
    %c3_334 = arith.constant 3 : index
    %c0_335 = arith.constant 0 : index
    %659 = vector.load %arg15[%c3_334, %c0_335] : memref<16x128xf32, #tpu.memory_space<vmem>>, vector<1x128xf32>
    tpu.vector_store %arg15[%c3_334, %c0_335], %658 {strides = array<i32>} : memref<16x128xf32, #tpu.memory_space<vmem>>, vector<1x128xf32>,
    %c8_336 = arith.constant 8 : index
    %c0_337 = arith.constant 0 : index
    %660 = vector.load %arg13[%c8_336, %c0_337] : memref<36x128xf32, #tpu.memory_space<vmem>>, vector<4x128xf32>
    %661 = arith.truncf %660 : vector<4x128xf32> to vector<4x128xbf16>
    %c0_338 = arith.constant 0 : index
    %c0_339 = arith.constant 0 : index
    %662 = vector.load %arg4[%c0_338, %c0_339] : memref<128x512xbf16, #tpu.memory_space<vmem>>, vector<128x512xbf16>
    %cst_340 = arith.constant dense<0.000000e+00> : vector<4x512xf32>
    %663 = tpu.matmul %661, %662, %cst_340 {dimension_numbers = #tpu.dot_dimension_numbers<[1], [0], [0], [1], [0, 0, 1, 1], [], []>} : vector<4x128xbf16>, vector<128x512xbf16>, vector<4x512xf32> -> vector<4x512xf32>
    %664 = vector.extract_strided_slice %663 {offsets = [0, 0], sizes = [1, 128], strides = [1, 1]} : vector<4x512xf32> to vector<1x128xf32>
    %665 = vector.extract_strided_slice %663 {offsets = [1, 128], sizes = [1, 128], strides = [1, 1]} : vector<4x512xf32> to vector<1x128xf32>
    %666 = arith.addf %664, %665 : vector<1x128xf32>
    %667 = vector.extract_strided_slice %663 {offsets = [2, 256], sizes = [1, 128], strides = [1, 1]} : vector<4x512xf32> to vector<1x128xf32>
    %668 = arith.addf %666, %667 : vector<1x128xf32>
    %669 = vector.extract_strided_slice %663 {offsets = [3, 384], sizes = [1, 128], strides = [1, 1]} : vector<4x512xf32> to vector<1x128xf32>
    %670 = arith.addf %668, %669 : vector<1x128xf32>
    %c4_341 = arith.constant 4 : index
    %c0_342 = arith.constant 0 : index
    %671 = vector.load %arg15[%c4_341, %c0_342] : memref<16x128xf32, #tpu.memory_space<vmem>>, vector<1x128xf32>
    tpu.vector_store %arg15[%c4_341, %c0_342], %670 {strides = array<i32>} : memref<16x128xf32, #tpu.memory_space<vmem>>, vector<1x128xf32>,
    %c10_343 = arith.constant 10 : index
    %c0_344 = arith.constant 0 : index
    %672 = vector.load %arg13[%c10_343, %c0_344] : memref<36x128xf32, #tpu.memory_space<vmem>>, vector<4x128xf32>
    %673 = arith.truncf %672 : vector<4x128xf32> to vector<4x128xbf16>
    %c0_345 = arith.constant 0 : index
    %c0_346 = arith.constant 0 : index
    %674 = vector.load %arg4[%c0_345, %c0_346] : memref<128x512xbf16, #tpu.memory_space<vmem>>, vector<128x512xbf16>
    %cst_347 = arith.constant dense<0.000000e+00> : vector<4x512xf32>
    %675 = tpu.matmul %673, %674, %cst_347 {dimension_numbers = #tpu.dot_dimension_numbers<[1], [0], [0], [1], [0, 0, 1, 1], [], []>} : vector<4x128xbf16>, vector<128x512xbf16>, vector<4x512xf32> -> vector<4x512xf32>
    %676 = vector.extract_strided_slice %675 {offsets = [0, 0], sizes = [1, 128], strides = [1, 1]} : vector<4x512xf32> to vector<1x128xf32>
    %677 = vector.extract_strided_slice %675 {offsets = [1, 128], sizes = [1, 128], strides = [1, 1]} : vector<4x512xf32> to vector<1x128xf32>
    %678 = arith.addf %676, %677 : vector<1x128xf32>
    %679 = vector.extract_strided_slice %675 {offsets = [2, 256], sizes = [1, 128], strides = [1, 1]} : vector<4x512xf32> to vector<1x128xf32>
    %680 = arith.addf %678, %679 : vector<1x128xf32>
    %681 = vector.extract_strided_slice %675 {offsets = [3, 384], sizes = [1, 128], strides = [1, 1]} : vector<4x512xf32> to vector<1x128xf32>
    %682 = arith.addf %680, %681 : vector<1x128xf32>
    %c5_348 = arith.constant 5 : index
    %c0_349 = arith.constant 0 : index
    %683 = vector.load %arg15[%c5_348, %c0_349] : memref<16x128xf32, #tpu.memory_space<vmem>>, vector<1x128xf32>
    tpu.vector_store %arg15[%c5_348, %c0_349], %682 {strides = array<i32>} : memref<16x128xf32, #tpu.memory_space<vmem>>, vector<1x128xf32>,
    %c12_350 = arith.constant 12 : index
    %c0_351 = arith.constant 0 : index
    %684 = vector.load %arg13[%c12_350, %c0_351] : memref<36x128xf32, #tpu.memory_space<vmem>>, vector<4x128xf32>
    %685 = arith.truncf %684 : vector<4x128xf32> to vector<4x128xbf16>
    %c0_352 = arith.constant 0 : index
    %c0_353 = arith.constant 0 : index
    %686 = vector.load %arg4[%c0_352, %c0_353] : memref<128x512xbf16, #tpu.memory_space<vmem>>, vector<128x512xbf16>
    %cst_354 = arith.constant dense<0.000000e+00> : vector<4x512xf32>
    %687 = tpu.matmul %685, %686, %cst_354 {dimension_numbers = #tpu.dot_dimension_numbers<[1], [0], [0], [1], [0, 0, 1, 1], [], []>} : vector<4x128xbf16>, vector<128x512xbf16>, vector<4x512xf32> -> vector<4x512xf32>
    %688 = vector.extract_strided_slice %687 {offsets = [0, 0], sizes = [1, 128], strides = [1, 1]} : vector<4x512xf32> to vector<1x128xf32>
    %689 = vector.extract_strided_slice %687 {offsets = [1, 128], sizes = [1, 128], strides = [1, 1]} : vector<4x512xf32> to vector<1x128xf32>
    %690 = arith.addf %688, %689 : vector<1x128xf32>
    %691 = vector.extract_strided_slice %687 {offsets = [2, 256], sizes = [1, 128], strides = [1, 1]} : vector<4x512xf32> to vector<1x128xf32>
    %692 = arith.addf %690, %691 : vector<1x128xf32>
    %693 = vector.extract_strided_slice %687 {offsets = [3, 384], sizes = [1, 128], strides = [1, 1]} : vector<4x512xf32> to vector<1x128xf32>
    %694 = arith.addf %692, %693 : vector<1x128xf32>
    %c6_355 = arith.constant 6 : index
    %c0_356 = arith.constant 0 : index
    %695 = vector.load %arg15[%c6_355, %c0_356] : memref<16x128xf32, #tpu.memory_space<vmem>>, vector<1x128xf32>
    tpu.vector_store %arg15[%c6_355, %c0_356], %694 {strides = array<i32>} : memref<16x128xf32, #tpu.memory_space<vmem>>, vector<1x128xf32>,
    %c14_357 = arith.constant 14 : index
    %c0_358 = arith.constant 0 : index
    %696 = vector.load %arg13[%c14_357, %c0_358] : memref<36x128xf32, #tpu.memory_space<vmem>>, vector<4x128xf32>
    %697 = arith.truncf %696 : vector<4x128xf32> to vector<4x128xbf16>
    %c0_359 = arith.constant 0 : index
    %c0_360 = arith.constant 0 : index
    %698 = vector.load %arg4[%c0_359, %c0_360] : memref<128x512xbf16, #tpu.memory_space<vmem>>, vector<128x512xbf16>
    %cst_361 = arith.constant dense<0.000000e+00> : vector<4x512xf32>
    %699 = tpu.matmul %697, %698, %cst_361 {dimension_numbers = #tpu.dot_dimension_numbers<[1], [0], [0], [1], [0, 0, 1, 1], [], []>} : vector<4x128xbf16>, vector<128x512xbf16>, vector<4x512xf32> -> vector<4x512xf32>
    %700 = vector.extract_strided_slice %699 {offsets = [0, 0], sizes = [1, 128], strides = [1, 1]} : vector<4x512xf32> to vector<1x128xf32>
    %701 = vector.extract_strided_slice %699 {offsets = [1, 128], sizes = [1, 128], strides = [1, 1]} : vector<4x512xf32> to vector<1x128xf32>
    %702 = arith.addf %700, %701 : vector<1x128xf32>
    %703 = vector.extract_strided_slice %699 {offsets = [2, 256], sizes = [1, 128], strides = [1, 1]} : vector<4x512xf32> to vector<1x128xf32>
    %704 = arith.addf %702, %703 : vector<1x128xf32>
    %705 = vector.extract_strided_slice %699 {offsets = [3, 384], sizes = [1, 128], strides = [1, 1]} : vector<4x512xf32> to vector<1x128xf32>
    %706 = arith.addf %704, %705 : vector<1x128xf32>
    %c7_362 = arith.constant 7 : index
    %c0_363 = arith.constant 0 : index
    %707 = vector.load %arg15[%c7_362, %c0_363] : memref<16x128xf32, #tpu.memory_space<vmem>>, vector<1x128xf32>
    tpu.vector_store %arg15[%c7_362, %c0_363], %706 {strides = array<i32>} : memref<16x128xf32, #tpu.memory_space<vmem>>, vector<1x128xf32>,
    %c18_364 = arith.constant 18 : index
    %c0_365 = arith.constant 0 : index
    %708 = vector.load %arg13[%c18_364, %c0_365] : memref<36x128xf32, #tpu.memory_space<vmem>>, vector<4x128xf32>
    %709 = arith.truncf %708 : vector<4x128xf32> to vector<4x128xbf16>
    %c0_366 = arith.constant 0 : index
    %c0_367 = arith.constant 0 : index
    %710 = vector.load %arg4[%c0_366, %c0_367] : memref<128x512xbf16, #tpu.memory_space<vmem>>, vector<128x512xbf16>
    %cst_368 = arith.constant dense<0.000000e+00> : vector<4x512xf32>
    %711 = tpu.matmul %709, %710, %cst_368 {dimension_numbers = #tpu.dot_dimension_numbers<[1], [0], [0], [1], [0, 0, 1, 1], [], []>} : vector<4x128xbf16>, vector<128x512xbf16>, vector<4x512xf32> -> vector<4x512xf32>
    %712 = vector.extract_strided_slice %711 {offsets = [0, 0], sizes = [1, 128], strides = [1, 1]} : vector<4x512xf32> to vector<1x128xf32>
    %713 = vector.extract_strided_slice %711 {offsets = [1, 128], sizes = [1, 128], strides = [1, 1]} : vector<4x512xf32> to vector<1x128xf32>
    %714 = arith.addf %712, %713 : vector<1x128xf32>
    %715 = vector.extract_strided_slice %711 {offsets = [2, 256], sizes = [1, 128], strides = [1, 1]} : vector<4x512xf32> to vector<1x128xf32>
    %716 = arith.addf %714, %715 : vector<1x128xf32>
    %717 = vector.extract_strided_slice %711 {offsets = [3, 384], sizes = [1, 128], strides = [1, 1]} : vector<4x512xf32> to vector<1x128xf32>
    %718 = arith.addf %716, %717 : vector<1x128xf32>
    %c8_369 = arith.constant 8 : index
    %c0_370 = arith.constant 0 : index
    %719 = vector.load %arg15[%c8_369, %c0_370] : memref<16x128xf32, #tpu.memory_space<vmem>>, vector<1x128xf32>
    tpu.vector_store %arg15[%c8_369, %c0_370], %718 {strides = array<i32>} : memref<16x128xf32, #tpu.memory_space<vmem>>, vector<1x128xf32>,
    %c20_371 = arith.constant 20 : index
    %c0_372 = arith.constant 0 : index
    %720 = vector.load %arg13[%c20_371, %c0_372] : memref<36x128xf32, #tpu.memory_space<vmem>>, vector<4x128xf32>
    %721 = arith.truncf %720 : vector<4x128xf32> to vector<4x128xbf16>
    %c0_373 = arith.constant 0 : index
    %c0_374 = arith.constant 0 : index
    %722 = vector.load %arg4[%c0_373, %c0_374] : memref<128x512xbf16, #tpu.memory_space<vmem>>, vector<128x512xbf16>
    %cst_375 = arith.constant dense<0.000000e+00> : vector<4x512xf32>
    %723 = tpu.matmul %721, %722, %cst_375 {dimension_numbers = #tpu.dot_dimension_numbers<[1], [0], [0], [1], [0, 0, 1, 1], [], []>} : vector<4x128xbf16>, vector<128x512xbf16>, vector<4x512xf32> -> vector<4x512xf32>
    %724 = vector.extract_strided_slice %723 {offsets = [0, 0], sizes = [1, 128], strides = [1, 1]} : vector<4x512xf32> to vector<1x128xf32>
    %725 = vector.extract_strided_slice %723 {offsets = [1, 128], sizes = [1, 128], strides = [1, 1]} : vector<4x512xf32> to vector<1x128xf32>
    %726 = arith.addf %724, %725 : vector<1x128xf32>
    %727 = vector.extract_strided_slice %723 {offsets = [2, 256], sizes = [1, 128], strides = [1, 1]} : vector<4x512xf32> to vector<1x128xf32>
    %728 = arith.addf %726, %727 : vector<1x128xf32>
    %729 = vector.extract_strided_slice %723 {offsets = [3, 384], sizes = [1, 128], strides = [1, 1]} : vector<4x512xf32> to vector<1x128xf32>
    %730 = arith.addf %728, %729 : vector<1x128xf32>
    %c9_376 = arith.constant 9 : index
    %c0_377 = arith.constant 0 : index
    %731 = vector.load %arg15[%c9_376, %c0_377] : memref<16x128xf32, #tpu.memory_space<vmem>>, vector<1x128xf32>
    tpu.vector_store %arg15[%c9_376, %c0_377], %730 {strides = array<i32>} : memref<16x128xf32, #tpu.memory_space<vmem>>, vector<1x128xf32>,
    %c22_378 = arith.constant 22 : index
    %c0_379 = arith.constant 0 : index
    %732 = vector.load %arg13[%c22_378, %c0_379] : memref<36x128xf32, #tpu.memory_space<vmem>>, vector<4x128xf32>
    %733 = arith.truncf %732 : vector<4x128xf32> to vector<4x128xbf16>
    %c0_380 = arith.constant 0 : index
    %c0_381 = arith.constant 0 : index
    %734 = vector.load %arg4[%c0_380, %c0_381] : memref<128x512xbf16, #tpu.memory_space<vmem>>, vector<128x512xbf16>
    %cst_382 = arith.constant dense<0.000000e+00> : vector<4x512xf32>
    %735 = tpu.matmul %733, %734, %cst_382 {dimension_numbers = #tpu.dot_dimension_numbers<[1], [0], [0], [1], [0, 0, 1, 1], [], []>} : vector<4x128xbf16>, vector<128x512xbf16>, vector<4x512xf32> -> vector<4x512xf32>
    %736 = vector.extract_strided_slice %735 {offsets = [0, 0], sizes = [1, 128], strides = [1, 1]} : vector<4x512xf32> to vector<1x128xf32>
    %737 = vector.extract_strided_slice %735 {offsets = [1, 128], sizes = [1, 128], strides = [1, 1]} : vector<4x512xf32> to vector<1x128xf32>
    %738 = arith.addf %736, %737 : vector<1x128xf32>
    %739 = vector.extract_strided_slice %735 {offsets = [2, 256], sizes = [1, 128], strides = [1, 1]} : vector<4x512xf32> to vector<1x128xf32>
    %740 = arith.addf %738, %739 : vector<1x128xf32>
    %741 = vector.extract_strided_slice %735 {offsets = [3, 384], sizes = [1, 128], strides = [1, 1]} : vector<4x512xf32> to vector<1x128xf32>
    %742 = arith.addf %740, %741 : vector<1x128xf32>
    %c10_383 = arith.constant 10 : index
    %c0_384 = arith.constant 0 : index
    %743 = vector.load %arg15[%c10_383, %c0_384] : memref<16x128xf32, #tpu.memory_space<vmem>>, vector<1x128xf32>
    tpu.vector_store %arg15[%c10_383, %c0_384], %742 {strides = array<i32>} : memref<16x128xf32, #tpu.memory_space<vmem>>, vector<1x128xf32>,
    %c24_385 = arith.constant 24 : index
    %c0_386 = arith.constant 0 : index
    %744 = vector.load %arg13[%c24_385, %c0_386] : memref<36x128xf32, #tpu.memory_space<vmem>>, vector<4x128xf32>
    %745 = arith.truncf %744 : vector<4x128xf32> to vector<4x128xbf16>
    %c0_387 = arith.constant 0 : index
    %c0_388 = arith.constant 0 : index
    %746 = vector.load %arg4[%c0_387, %c0_388] : memref<128x512xbf16, #tpu.memory_space<vmem>>, vector<128x512xbf16>
    %cst_389 = arith.constant dense<0.000000e+00> : vector<4x512xf32>
    %747 = tpu.matmul %745, %746, %cst_389 {dimension_numbers = #tpu.dot_dimension_numbers<[1], [0], [0], [1], [0, 0, 1, 1], [], []>} : vector<4x128xbf16>, vector<128x512xbf16>, vector<4x512xf32> -> vector<4x512xf32>
    %748 = vector.extract_strided_slice %747 {offsets = [0, 0], sizes = [1, 128], strides = [1, 1]} : vector<4x512xf32> to vector<1x128xf32>
    %749 = vector.extract_strided_slice %747 {offsets = [1, 128], sizes = [1, 128], strides = [1, 1]} : vector<4x512xf32> to vector<1x128xf32>
    %750 = arith.addf %748, %749 : vector<1x128xf32>
    %751 = vector.extract_strided_slice %747 {offsets = [2, 256], sizes = [1, 128], strides = [1, 1]} : vector<4x512xf32> to vector<1x128xf32>
    %752 = arith.addf %750, %751 : vector<1x128xf32>
    %753 = vector.extract_strided_slice %747 {offsets = [3, 384], sizes = [1, 128], strides = [1, 1]} : vector<4x512xf32> to vector<1x128xf32>
    %754 = arith.addf %752, %753 : vector<1x128xf32>
    %c11_390 = arith.constant 11 : index
    %c0_391 = arith.constant 0 : index
    %755 = vector.load %arg15[%c11_390, %c0_391] : memref<16x128xf32, #tpu.memory_space<vmem>>, vector<1x128xf32>
    tpu.vector_store %arg15[%c11_390, %c0_391], %754 {strides = array<i32>} : memref<16x128xf32, #tpu.memory_space<vmem>>, vector<1x128xf32>,
    %c26_392 = arith.constant 26 : index
    %c0_393 = arith.constant 0 : index
    %756 = vector.load %arg13[%c26_392, %c0_393] : memref<36x128xf32, #tpu.memory_space<vmem>>, vector<4x128xf32>
    %757 = arith.truncf %756 : vector<4x128xf32> to vector<4x128xbf16>
    %c0_394 = arith.constant 0 : index
    %c0_395 = arith.constant 0 : index
    %758 = vector.load %arg4[%c0_394, %c0_395] : memref<128x512xbf16, #tpu.memory_space<vmem>>, vector<128x512xbf16>
    %cst_396 = arith.constant dense<0.000000e+00> : vector<4x512xf32>
    %759 = tpu.matmul %757, %758, %cst_396 {dimension_numbers = #tpu.dot_dimension_numbers<[1], [0], [0], [1], [0, 0, 1, 1], [], []>} : vector<4x128xbf16>, vector<128x512xbf16>, vector<4x512xf32> -> vector<4x512xf32>
    %760 = vector.extract_strided_slice %759 {offsets = [0, 0], sizes = [1, 128], strides = [1, 1]} : vector<4x512xf32> to vector<1x128xf32>
    %761 = vector.extract_strided_slice %759 {offsets = [1, 128], sizes = [1, 128], strides = [1, 1]} : vector<4x512xf32> to vector<1x128xf32>
    %762 = arith.addf %760, %761 : vector<1x128xf32>
    %763 = vector.extract_strided_slice %759 {offsets = [2, 256], sizes = [1, 128], strides = [1, 1]} : vector<4x512xf32> to vector<1x128xf32>
    %764 = arith.addf %762, %763 : vector<1x128xf32>
    %765 = vector.extract_strided_slice %759 {offsets = [3, 384], sizes = [1, 128], strides = [1, 1]} : vector<4x512xf32> to vector<1x128xf32>
    %766 = arith.addf %764, %765 : vector<1x128xf32>
    %c12_397 = arith.constant 12 : index
    %c0_398 = arith.constant 0 : index
    %767 = vector.load %arg15[%c12_397, %c0_398] : memref<16x128xf32, #tpu.memory_space<vmem>>, vector<1x128xf32>
    tpu.vector_store %arg15[%c12_397, %c0_398], %766 {strides = array<i32>} : memref<16x128xf32, #tpu.memory_space<vmem>>, vector<1x128xf32>,
    %c28_399 = arith.constant 28 : index
    %c0_400 = arith.constant 0 : index
    %768 = vector.load %arg13[%c28_399, %c0_400] : memref<36x128xf32, #tpu.memory_space<vmem>>, vector<4x128xf32>
    %769 = arith.truncf %768 : vector<4x128xf32> to vector<4x128xbf16>
    %c0_401 = arith.constant 0 : index
    %c0_402 = arith.constant 0 : index
    %770 = vector.load %arg4[%c0_401, %c0_402] : memref<128x512xbf16, #tpu.memory_space<vmem>>, vector<128x512xbf16>
    %cst_403 = arith.constant dense<0.000000e+00> : vector<4x512xf32>
    %771 = tpu.matmul %769, %770, %cst_403 {dimension_numbers = #tpu.dot_dimension_numbers<[1], [0], [0], [1], [0, 0, 1, 1], [], []>} : vector<4x128xbf16>, vector<128x512xbf16>, vector<4x512xf32> -> vector<4x512xf32>
    %772 = vector.extract_strided_slice %771 {offsets = [0, 0], sizes = [1, 128], strides = [1, 1]} : vector<4x512xf32> to vector<1x128xf32>
    %773 = vector.extract_strided_slice %771 {offsets = [1, 128], sizes = [1, 128], strides = [1, 1]} : vector<4x512xf32> to vector<1x128xf32>
    %774 = arith.addf %772, %773 : vector<1x128xf32>
    %775 = vector.extract_strided_slice %771 {offsets = [2, 256], sizes = [1, 128], strides = [1, 1]} : vector<4x512xf32> to vector<1x128xf32>
    %776 = arith.addf %774, %775 : vector<1x128xf32>
    %777 = vector.extract_strided_slice %771 {offsets = [3, 384], sizes = [1, 128], strides = [1, 1]} : vector<4x512xf32> to vector<1x128xf32>
    %778 = arith.addf %776, %777 : vector<1x128xf32>
    %c13_404 = arith.constant 13 : index
    %c0_405 = arith.constant 0 : index
    %779 = vector.load %arg15[%c13_404, %c0_405] : memref<16x128xf32, #tpu.memory_space<vmem>>, vector<1x128xf32>
    tpu.vector_store %arg15[%c13_404, %c0_405], %778 {strides = array<i32>} : memref<16x128xf32, #tpu.memory_space<vmem>>, vector<1x128xf32>,
    %c30_406 = arith.constant 30 : index
    %c0_407 = arith.constant 0 : index
    %780 = vector.load %arg13[%c30_406, %c0_407] : memref<36x128xf32, #tpu.memory_space<vmem>>, vector<4x128xf32>
    %781 = arith.truncf %780 : vector<4x128xf32> to vector<4x128xbf16>
    %c0_408 = arith.constant 0 : index
    %c0_409 = arith.constant 0 : index
    %782 = vector.load %arg4[%c0_408, %c0_409] : memref<128x512xbf16, #tpu.memory_space<vmem>>, vector<128x512xbf16>
    %cst_410 = arith.constant dense<0.000000e+00> : vector<4x512xf32>
    %783 = tpu.matmul %781, %782, %cst_410 {dimension_numbers = #tpu.dot_dimension_numbers<[1], [0], [0], [1], [0, 0, 1, 1], [], []>} : vector<4x128xbf16>, vector<128x512xbf16>, vector<4x512xf32> -> vector<4x512xf32>
    %784 = vector.extract_strided_slice %783 {offsets = [0, 0], sizes = [1, 128], strides = [1, 1]} : vector<4x512xf32> to vector<1x128xf32>
    %785 = vector.extract_strided_slice %783 {offsets = [1, 128], sizes = [1, 128], strides = [1, 1]} : vector<4x512xf32> to vector<1x128xf32>
    %786 = arith.addf %784, %785 : vector<1x128xf32>
    %787 = vector.extract_strided_slice %783 {offsets = [2, 256], sizes = [1, 128], strides = [1, 1]} : vector<4x512xf32> to vector<1x128xf32>
    %788 = arith.addf %786, %787 : vector<1x128xf32>
    %789 = vector.extract_strided_slice %783 {offsets = [3, 384], sizes = [1, 128], strides = [1, 1]} : vector<4x512xf32> to vector<1x128xf32>
    %790 = arith.addf %788, %789 : vector<1x128xf32>
    %c14_411 = arith.constant 14 : index
    %c0_412 = arith.constant 0 : index
    %791 = vector.load %arg15[%c14_411, %c0_412] : memref<16x128xf32, #tpu.memory_space<vmem>>, vector<1x128xf32>
    tpu.vector_store %arg15[%c14_411, %c0_412], %790 {strides = array<i32>} : memref<16x128xf32, #tpu.memory_space<vmem>>, vector<1x128xf32>,
    %c32_413 = arith.constant 32 : index
    %c0_414 = arith.constant 0 : index
    %792 = vector.load %arg13[%c32_413, %c0_414] : memref<36x128xf32, #tpu.memory_space<vmem>>, vector<4x128xf32>
    %793 = arith.truncf %792 : vector<4x128xf32> to vector<4x128xbf16>
    %c0_415 = arith.constant 0 : index
    %c0_416 = arith.constant 0 : index
    %794 = vector.load %arg4[%c0_415, %c0_416] : memref<128x512xbf16, #tpu.memory_space<vmem>>, vector<128x512xbf16>
    %cst_417 = arith.constant dense<0.000000e+00> : vector<4x512xf32>
    %795 = tpu.matmul %793, %794, %cst_417 {dimension_numbers = #tpu.dot_dimension_numbers<[1], [0], [0], [1], [0, 0, 1, 1], [], []>} : vector<4x128xbf16>, vector<128x512xbf16>, vector<4x512xf32> -> vector<4x512xf32>
    %796 = vector.extract_strided_slice %795 {offsets = [0, 0], sizes = [1, 128], strides = [1, 1]} : vector<4x512xf32> to vector<1x128xf32>
    %797 = vector.extract_strided_slice %795 {offsets = [1, 128], sizes = [1, 128], strides = [1, 1]} : vector<4x512xf32> to vector<1x128xf32>
    %798 = arith.addf %796, %797 : vector<1x128xf32>
    %799 = vector.extract_strided_slice %795 {offsets = [2, 256], sizes = [1, 128], strides = [1, 1]} : vector<4x512xf32> to vector<1x128xf32>
    %800 = arith.addf %798, %799 : vector<1x128xf32>
    %801 = vector.extract_strided_slice %795 {offsets = [3, 384], sizes = [1, 128], strides = [1, 1]} : vector<4x512xf32> to vector<1x128xf32>
    %802 = arith.addf %800, %801 : vector<1x128xf32>
    %c15_418 = arith.constant 15 : index
    %c0_419 = arith.constant 0 : index
    %803 = vector.load %arg15[%c15_418, %c0_419] : memref<16x128xf32, #tpu.memory_space<vmem>>, vector<1x128xf32>
    tpu.vector_store %arg15[%c15_418, %c0_419], %802 {strides = array<i32>} : memref<16x128xf32, #tpu.memory_space<vmem>>, vector<1x128xf32>,
    %c0_420 = arith.constant 0 : index
    %c0_421 = arith.constant 0 : index
    %804 = vector.load %arg15[%c0_420, %c0_421] : memref<16x128xf32, #tpu.memory_space<vmem>>, vector<16x128xf32>
    %c0_422 = arith.constant 0 : index
    %c0_423 = arith.constant 0 : index
    %805 = vector.load %arg5[%c0_422, %c0_423] : memref<1x16xf32, #tpu.memory_space<vmem>>, vector<1x16xf32>
    %c0_424 = arith.constant 0 : index
    %c0_425 = arith.constant 0 : index
    %806 = vector.load %arg6[%c0_424, %c0_425] : memref<1x16xf32, #tpu.memory_space<vmem>>, vector<1x16xf32>
    %cst_426 = arith.constant dense<0.000000e+00> : vector<128xf32>
    %807 = vector.multi_reduction <add>, %804, %cst_426 [0] : vector<16x128xf32> to vector<128xf32>
    %808 = vector.shape_cast %807 : vector<128xf32> to vector<1x128xf32>
    %809 = vector.extract_strided_slice %808 {offsets = [0, 0], sizes = [1, 16], strides = [1, 1]} : vector<1x128xf32> to vector<1x16xf32>
    %810 = vector.extract_strided_slice %808 {offsets = [0, 16], sizes = [1, 16], strides = [1, 1]} : vector<1x128xf32> to vector<1x16xf32>
    %811 = arith.addf %809, %810 : vector<1x16xf32>
    %812 = vector.extract_strided_slice %808 {offsets = [0, 32], sizes = [1, 16], strides = [1, 1]} : vector<1x128xf32> to vector<1x16xf32>
    %813 = arith.addf %811, %812 : vector<1x16xf32>
    %814 = vector.extract_strided_slice %808 {offsets = [0, 48], sizes = [1, 16], strides = [1, 1]} : vector<1x128xf32> to vector<1x16xf32>
    %815 = arith.addf %813, %814 : vector<1x16xf32>
    %816 = vector.extract_strided_slice %808 {offsets = [0, 64], sizes = [1, 16], strides = [1, 1]} : vector<1x128xf32> to vector<1x16xf32>
    %817 = arith.addf %815, %816 : vector<1x16xf32>
    %818 = vector.extract_strided_slice %808 {offsets = [0, 80], sizes = [1, 16], strides = [1, 1]} : vector<1x128xf32> to vector<1x16xf32>
    %819 = arith.addf %817, %818 : vector<1x16xf32>
    %820 = vector.extract_strided_slice %808 {offsets = [0, 96], sizes = [1, 16], strides = [1, 1]} : vector<1x128xf32> to vector<1x16xf32>
    %821 = arith.addf %819, %820 : vector<1x16xf32>
    %822 = vector.extract_strided_slice %808 {offsets = [0, 112], sizes = [1, 16], strides = [1, 1]} : vector<1x128xf32> to vector<1x16xf32>
    %823 = arith.addf %821, %822 : vector<1x16xf32>
    %cst_427 = arith.constant 1.280000e+02 : f32
    %824 = vector.broadcast %cst_427 : f32 to vector<1x16xf32>
    %825 = arith.divf %823, %824 : vector<1x16xf32>
    %826 = tpu.concatenate %825, %825, %825, %825, %825, %825, %825, %825 in 1 : vector<1x16xf32>, vector<1x16xf32>, vector<1x16xf32>, vector<1x16xf32>, vector<1x16xf32>, vector<1x16xf32>, vector<1x16xf32>, vector<1x16xf32> -> vector<1x128xf32>
    %827 = vector.broadcast %826 : vector<1x128xf32> to vector<16x128xf32>
    %828 = arith.subf %804, %827 : vector<16x128xf32>
    %829 = arith.mulf %828, %828 : vector<16x128xf32>
    %cst_428 = arith.constant dense<0.000000e+00> : vector<128xf32>
    %830 = vector.multi_reduction <add>, %829, %cst_428 [0] : vector<16x128xf32> to vector<128xf32>
    %831 = vector.shape_cast %830 : vector<128xf32> to vector<1x128xf32>
    %832 = vector.extract_strided_slice %831 {offsets = [0, 0], sizes = [1, 16], strides = [1, 1]} : vector<1x128xf32> to vector<1x16xf32>
    %833 = vector.extract_strided_slice %831 {offsets = [0, 16], sizes = [1, 16], strides = [1, 1]} : vector<1x128xf32> to vector<1x16xf32>
    %834 = arith.addf %832, %833 : vector<1x16xf32>
    %835 = vector.extract_strided_slice %831 {offsets = [0, 32], sizes = [1, 16], strides = [1, 1]} : vector<1x128xf32> to vector<1x16xf32>
    %836 = arith.addf %834, %835 : vector<1x16xf32>
    %837 = vector.extract_strided_slice %831 {offsets = [0, 48], sizes = [1, 16], strides = [1, 1]} : vector<1x128xf32> to vector<1x16xf32>
    %838 = arith.addf %836, %837 : vector<1x16xf32>
    %839 = vector.extract_strided_slice %831 {offsets = [0, 64], sizes = [1, 16], strides = [1, 1]} : vector<1x128xf32> to vector<1x16xf32>
    %840 = arith.addf %838, %839 : vector<1x16xf32>
    %841 = vector.extract_strided_slice %831 {offsets = [0, 80], sizes = [1, 16], strides = [1, 1]} : vector<1x128xf32> to vector<1x16xf32>
    %842 = arith.addf %840, %841 : vector<1x16xf32>
    %843 = vector.extract_strided_slice %831 {offsets = [0, 96], sizes = [1, 16], strides = [1, 1]} : vector<1x128xf32> to vector<1x16xf32>
    %844 = arith.addf %842, %843 : vector<1x16xf32>
    %845 = vector.extract_strided_slice %831 {offsets = [0, 112], sizes = [1, 16], strides = [1, 1]} : vector<1x128xf32> to vector<1x16xf32>
    %846 = arith.addf %844, %845 : vector<1x16xf32>
    %cst_429 = arith.constant 1.280000e+02 : f32
    %847 = vector.broadcast %cst_429 : f32 to vector<1x16xf32>
    %848 = arith.divf %846, %847 : vector<1x16xf32>
    %cst_430 = arith.constant 9.99999974E-6 : f32
    %849 = vector.broadcast %cst_430 : f32 to vector<1x16xf32>
    %850 = arith.addf %848, %849 : vector<1x16xf32>
    %851 = math.rsqrt %850 : vector<1x16xf32>
    %852 = arith.mulf %805, %851 : vector<1x16xf32>
    %853 = tpu.concatenate %852, %852, %852, %852, %852, %852, %852, %852 in 1 : vector<1x16xf32>, vector<1x16xf32>, vector<1x16xf32>, vector<1x16xf32>, vector<1x16xf32>, vector<1x16xf32>, vector<1x16xf32>, vector<1x16xf32> -> vector<1x128xf32>
    %854 = vector.broadcast %853 : vector<1x128xf32> to vector<16x128xf32>
    %855 = arith.mulf %828, %854 : vector<16x128xf32>
    %856 = tpu.concatenate %806, %806, %806, %806, %806, %806, %806, %806 in 1 : vector<1x16xf32>, vector<1x16xf32>, vector<1x16xf32>, vector<1x16xf32>, vector<1x16xf32>, vector<1x16xf32>, vector<1x16xf32>, vector<1x16xf32> -> vector<1x128xf32>
    %857 = vector.broadcast %856 : vector<1x128xf32> to vector<16x128xf32>
    %858 = arith.addf %855, %857 : vector<16x128xf32>
    %cst_431 = arith.constant 0.000000e+00 : f32
    %859 = vector.broadcast %cst_431 : f32 to vector<16x128xf32>
    %860 = arith.cmpf ogt, %858, %859 : vector<16x128xf32>
    %cst_432 = arith.constant 2.000000e-01 : f32
    %861 = vector.broadcast %cst_432 : f32 to vector<16x128xf32>
    %862 = arith.mulf %861, %858 : vector<16x128xf32>
    %863 = arith.select %860, %858, %862 : vector<16x128xi1>, vector<16x128xf32>
    %864 = vector.extract_strided_slice %863 {offsets = [0, 0], sizes = [8, 128], strides = [1, 1]} : vector<16x128xf32> to vector<8x128xf32>
    %c1_433 = arith.constant 1 : index
    %c0_434 = arith.constant 0 : index
    %865 = vector.load %arg14[%c1_433, %c0_434] : memref<20x128xf32, #tpu.memory_space<vmem>>, vector<8x128xf32>
    tpu.vector_store %arg14[%c1_433, %c0_434], %864 {strides = array<i32>} : memref<20x128xf32, #tpu.memory_space<vmem>>, vector<8x128xf32>,
    %866 = vector.extract_strided_slice %863 {offsets = [8, 0], sizes = [8, 128], strides = [1, 1]} : vector<16x128xf32> to vector<8x128xf32>
    %c11_435 = arith.constant 11 : index
    %c0_436 = arith.constant 0 : index
    %867 = vector.load %arg14[%c11_435, %c0_436] : memref<20x128xf32, #tpu.memory_space<vmem>>, vector<8x128xf32>
    tpu.vector_store %arg14[%c11_435, %c0_436], %866 {strides = array<i32>} : memref<20x128xf32, #tpu.memory_space<vmem>>, vector<8x128xf32>,
    %c0_437 = arith.constant 0 : index
    %c0_438 = arith.constant 0 : index
    %868 = vector.load %arg14[%c0_437, %c0_438] : memref<20x128xf32, #tpu.memory_space<vmem>>, vector<4x128xf32>
    %869 = arith.truncf %868 : vector<4x128xf32> to vector<4x128xbf16>
    %c0_439 = arith.constant 0 : index
    %c0_440 = arith.constant 0 : index
    %870 = vector.load %arg7[%c0_439, %c0_440] : memref<128x512xbf16, #tpu.memory_space<vmem>>, vector<128x512xbf16>
    %cst_441 = arith.constant dense<0.000000e+00> : vector<4x512xf32>
    %871 = tpu.matmul %869, %870, %cst_441 {dimension_numbers = #tpu.dot_dimension_numbers<[1], [0], [0], [1], [0, 0, 1, 1], [], []>} : vector<4x128xbf16>, vector<128x512xbf16>, vector<4x512xf32> -> vector<4x512xf32>
    %872 = vector.extract_strided_slice %871 {offsets = [0, 0], sizes = [1, 128], strides = [1, 1]} : vector<4x512xf32> to vector<1x128xf32>
    %873 = vector.extract_strided_slice %871 {offsets = [1, 128], sizes = [1, 128], strides = [1, 1]} : vector<4x512xf32> to vector<1x128xf32>
    %874 = arith.addf %872, %873 : vector<1x128xf32>
    %875 = vector.extract_strided_slice %871 {offsets = [2, 256], sizes = [1, 128], strides = [1, 1]} : vector<4x512xf32> to vector<1x128xf32>
    %876 = arith.addf %874, %875 : vector<1x128xf32>
    %877 = vector.extract_strided_slice %871 {offsets = [3, 384], sizes = [1, 128], strides = [1, 1]} : vector<4x512xf32> to vector<1x128xf32>
    %878 = arith.addf %876, %877 : vector<1x128xf32>
    %c0_442 = arith.constant 0 : index
    %c0_443 = arith.constant 0 : index
    %879 = vector.load %arg16[%c0_442, %c0_443] : memref<8x128xf32, #tpu.memory_space<vmem>>, vector<1x128xf32>
    tpu.vector_store %arg16[%c0_442, %c0_443], %878 {strides = array<i32>} : memref<8x128xf32, #tpu.memory_space<vmem>>, vector<1x128xf32>,
    %c2_444 = arith.constant 2 : index
    %c0_445 = arith.constant 0 : index
    %880 = vector.load %arg14[%c2_444, %c0_445] : memref<20x128xf32, #tpu.memory_space<vmem>>, vector<4x128xf32>
    %881 = arith.truncf %880 : vector<4x128xf32> to vector<4x128xbf16>
    %c0_446 = arith.constant 0 : index
    %c0_447 = arith.constant 0 : index
    %882 = vector.load %arg7[%c0_446, %c0_447] : memref<128x512xbf16, #tpu.memory_space<vmem>>, vector<128x512xbf16>
    %cst_448 = arith.constant dense<0.000000e+00> : vector<4x512xf32>
    %883 = tpu.matmul %881, %882, %cst_448 {dimension_numbers = #tpu.dot_dimension_numbers<[1], [0], [0], [1], [0, 0, 1, 1], [], []>} : vector<4x128xbf16>, vector<128x512xbf16>, vector<4x512xf32> -> vector<4x512xf32>
    %884 = vector.extract_strided_slice %883 {offsets = [0, 0], sizes = [1, 128], strides = [1, 1]} : vector<4x512xf32> to vector<1x128xf32>
    %885 = vector.extract_strided_slice %883 {offsets = [1, 128], sizes = [1, 128], strides = [1, 1]} : vector<4x512xf32> to vector<1x128xf32>
    %886 = arith.addf %884, %885 : vector<1x128xf32>
    %887 = vector.extract_strided_slice %883 {offsets = [2, 256], sizes = [1, 128], strides = [1, 1]} : vector<4x512xf32> to vector<1x128xf32>
    %888 = arith.addf %886, %887 : vector<1x128xf32>
    %889 = vector.extract_strided_slice %883 {offsets = [3, 384], sizes = [1, 128], strides = [1, 1]} : vector<4x512xf32> to vector<1x128xf32>
    %890 = arith.addf %888, %889 : vector<1x128xf32>
    %c1_449 = arith.constant 1 : index
    %c0_450 = arith.constant 0 : index
    %891 = vector.load %arg16[%c1_449, %c0_450] : memref<8x128xf32, #tpu.memory_space<vmem>>, vector<1x128xf32>
    tpu.vector_store %arg16[%c1_449, %c0_450], %890 {strides = array<i32>} : memref<8x128xf32, #tpu.memory_space<vmem>>, vector<1x128xf32>,
    %c4_451 = arith.constant 4 : index
    %c0_452 = arith.constant 0 : index
    %892 = vector.load %arg14[%c4_451, %c0_452] : memref<20x128xf32, #tpu.memory_space<vmem>>, vector<4x128xf32>
    %893 = arith.truncf %892 : vector<4x128xf32> to vector<4x128xbf16>
    %c0_453 = arith.constant 0 : index
    %c0_454 = arith.constant 0 : index
    %894 = vector.load %arg7[%c0_453, %c0_454] : memref<128x512xbf16, #tpu.memory_space<vmem>>, vector<128x512xbf16>
    %cst_455 = arith.constant dense<0.000000e+00> : vector<4x512xf32>
    %895 = tpu.matmul %893, %894, %cst_455 {dimension_numbers = #tpu.dot_dimension_numbers<[1], [0], [0], [1], [0, 0, 1, 1], [], []>} : vector<4x128xbf16>, vector<128x512xbf16>, vector<4x512xf32> -> vector<4x512xf32>
    %896 = vector.extract_strided_slice %895 {offsets = [0, 0], sizes = [1, 128], strides = [1, 1]} : vector<4x512xf32> to vector<1x128xf32>
    %897 = vector.extract_strided_slice %895 {offsets = [1, 128], sizes = [1, 128], strides = [1, 1]} : vector<4x512xf32> to vector<1x128xf32>
    %898 = arith.addf %896, %897 : vector<1x128xf32>
    %899 = vector.extract_strided_slice %895 {offsets = [2, 256], sizes = [1, 128], strides = [1, 1]} : vector<4x512xf32> to vector<1x128xf32>
    %900 = arith.addf %898, %899 : vector<1x128xf32>
    %901 = vector.extract_strided_slice %895 {offsets = [3, 384], sizes = [1, 128], strides = [1, 1]} : vector<4x512xf32> to vector<1x128xf32>
    %902 = arith.addf %900, %901 : vector<1x128xf32>
    %c2_456 = arith.constant 2 : index
    %c0_457 = arith.constant 0 : index
    %903 = vector.load %arg16[%c2_456, %c0_457] : memref<8x128xf32, #tpu.memory_space<vmem>>, vector<1x128xf32>
    tpu.vector_store %arg16[%c2_456, %c0_457], %902 {strides = array<i32>} : memref<8x128xf32, #tpu.memory_space<vmem>>, vector<1x128xf32>,
    %c6_458 = arith.constant 6 : index
    %c0_459 = arith.constant 0 : index
    %904 = vector.load %arg14[%c6_458, %c0_459] : memref<20x128xf32, #tpu.memory_space<vmem>>, vector<4x128xf32>
    %905 = arith.truncf %904 : vector<4x128xf32> to vector<4x128xbf16>
    %c0_460 = arith.constant 0 : index
    %c0_461 = arith.constant 0 : index
    %906 = vector.load %arg7[%c0_460, %c0_461] : memref<128x512xbf16, #tpu.memory_space<vmem>>, vector<128x512xbf16>
    %cst_462 = arith.constant dense<0.000000e+00> : vector<4x512xf32>
    %907 = tpu.matmul %905, %906, %cst_462 {dimension_numbers = #tpu.dot_dimension_numbers<[1], [0], [0], [1], [0, 0, 1, 1], [], []>} : vector<4x128xbf16>, vector<128x512xbf16>, vector<4x512xf32> -> vector<4x512xf32>
    %908 = vector.extract_strided_slice %907 {offsets = [0, 0], sizes = [1, 128], strides = [1, 1]} : vector<4x512xf32> to vector<1x128xf32>
    %909 = vector.extract_strided_slice %907 {offsets = [1, 128], sizes = [1, 128], strides = [1, 1]} : vector<4x512xf32> to vector<1x128xf32>
    %910 = arith.addf %908, %909 : vector<1x128xf32>
    %911 = vector.extract_strided_slice %907 {offsets = [2, 256], sizes = [1, 128], strides = [1, 1]} : vector<4x512xf32> to vector<1x128xf32>
    %912 = arith.addf %910, %911 : vector<1x128xf32>
    %913 = vector.extract_strided_slice %907 {offsets = [3, 384], sizes = [1, 128], strides = [1, 1]} : vector<4x512xf32> to vector<1x128xf32>
    %914 = arith.addf %912, %913 : vector<1x128xf32>
    %c3_463 = arith.constant 3 : index
    %c0_464 = arith.constant 0 : index
    %915 = vector.load %arg16[%c3_463, %c0_464] : memref<8x128xf32, #tpu.memory_space<vmem>>, vector<1x128xf32>
    tpu.vector_store %arg16[%c3_463, %c0_464], %914 {strides = array<i32>} : memref<8x128xf32, #tpu.memory_space<vmem>>, vector<1x128xf32>,
    %c10_465 = arith.constant 10 : index
    %c0_466 = arith.constant 0 : index
    %916 = vector.load %arg14[%c10_465, %c0_466] : memref<20x128xf32, #tpu.memory_space<vmem>>, vector<4x128xf32>
    %917 = arith.truncf %916 : vector<4x128xf32> to vector<4x128xbf16>
    %c0_467 = arith.constant 0 : index
    %c0_468 = arith.constant 0 : index
    %918 = vector.load %arg7[%c0_467, %c0_468] : memref<128x512xbf16, #tpu.memory_space<vmem>>, vector<128x512xbf16>
    %cst_469 = arith.constant dense<0.000000e+00> : vector<4x512xf32>
    %919 = tpu.matmul %917, %918, %cst_469 {dimension_numbers = #tpu.dot_dimension_numbers<[1], [0], [0], [1], [0, 0, 1, 1], [], []>} : vector<4x128xbf16>, vector<128x512xbf16>, vector<4x512xf32> -> vector<4x512xf32>
    %920 = vector.extract_strided_slice %919 {offsets = [0, 0], sizes = [1, 128], strides = [1, 1]} : vector<4x512xf32> to vector<1x128xf32>
    %921 = vector.extract_strided_slice %919 {offsets = [1, 128], sizes = [1, 128], strides = [1, 1]} : vector<4x512xf32> to vector<1x128xf32>
    %922 = arith.addf %920, %921 : vector<1x128xf32>
    %923 = vector.extract_strided_slice %919 {offsets = [2, 256], sizes = [1, 128], strides = [1, 1]} : vector<4x512xf32> to vector<1x128xf32>
    %924 = arith.addf %922, %923 : vector<1x128xf32>
    %925 = vector.extract_strided_slice %919 {offsets = [3, 384], sizes = [1, 128], strides = [1, 1]} : vector<4x512xf32> to vector<1x128xf32>
    %926 = arith.addf %924, %925 : vector<1x128xf32>
    %c4_470 = arith.constant 4 : index
    %c0_471 = arith.constant 0 : index
    %927 = vector.load %arg16[%c4_470, %c0_471] : memref<8x128xf32, #tpu.memory_space<vmem>>, vector<1x128xf32>
    tpu.vector_store %arg16[%c4_470, %c0_471], %926 {strides = array<i32>} : memref<8x128xf32, #tpu.memory_space<vmem>>, vector<1x128xf32>,
    %c12_472 = arith.constant 12 : index
    %c0_473 = arith.constant 0 : index
    %928 = vector.load %arg14[%c12_472, %c0_473] : memref<20x128xf32, #tpu.memory_space<vmem>>, vector<4x128xf32>
    %929 = arith.truncf %928 : vector<4x128xf32> to vector<4x128xbf16>
    %c0_474 = arith.constant 0 : index
    %c0_475 = arith.constant 0 : index
    %930 = vector.load %arg7[%c0_474, %c0_475] : memref<128x512xbf16, #tpu.memory_space<vmem>>, vector<128x512xbf16>
    %cst_476 = arith.constant dense<0.000000e+00> : vector<4x512xf32>
    %931 = tpu.matmul %929, %930, %cst_476 {dimension_numbers = #tpu.dot_dimension_numbers<[1], [0], [0], [1], [0, 0, 1, 1], [], []>} : vector<4x128xbf16>, vector<128x512xbf16>, vector<4x512xf32> -> vector<4x512xf32>
    %932 = vector.extract_strided_slice %931 {offsets = [0, 0], sizes = [1, 128], strides = [1, 1]} : vector<4x512xf32> to vector<1x128xf32>
    %933 = vector.extract_strided_slice %931 {offsets = [1, 128], sizes = [1, 128], strides = [1, 1]} : vector<4x512xf32> to vector<1x128xf32>
    %934 = arith.addf %932, %933 : vector<1x128xf32>
    %935 = vector.extract_strided_slice %931 {offsets = [2, 256], sizes = [1, 128], strides = [1, 1]} : vector<4x512xf32> to vector<1x128xf32>
    %936 = arith.addf %934, %935 : vector<1x128xf32>
    %937 = vector.extract_strided_slice %931 {offsets = [3, 384], sizes = [1, 128], strides = [1, 1]} : vector<4x512xf32> to vector<1x128xf32>
    %938 = arith.addf %936, %937 : vector<1x128xf32>
    %c5_477 = arith.constant 5 : index
    %c0_478 = arith.constant 0 : index
    %939 = vector.load %arg16[%c5_477, %c0_478] : memref<8x128xf32, #tpu.memory_space<vmem>>, vector<1x128xf32>
    tpu.vector_store %arg16[%c5_477, %c0_478], %938 {strides = array<i32>} : memref<8x128xf32, #tpu.memory_space<vmem>>, vector<1x128xf32>,
    %c14_479 = arith.constant 14 : index
    %c0_480 = arith.constant 0 : index
    %940 = vector.load %arg14[%c14_479, %c0_480] : memref<20x128xf32, #tpu.memory_space<vmem>>, vector<4x128xf32>
    %941 = arith.truncf %940 : vector<4x128xf32> to vector<4x128xbf16>
    %c0_481 = arith.constant 0 : index
    %c0_482 = arith.constant 0 : index
    %942 = vector.load %arg7[%c0_481, %c0_482] : memref<128x512xbf16, #tpu.memory_space<vmem>>, vector<128x512xbf16>
    %cst_483 = arith.constant dense<0.000000e+00> : vector<4x512xf32>
    %943 = tpu.matmul %941, %942, %cst_483 {dimension_numbers = #tpu.dot_dimension_numbers<[1], [0], [0], [1], [0, 0, 1, 1], [], []>} : vector<4x128xbf16>, vector<128x512xbf16>, vector<4x512xf32> -> vector<4x512xf32>
    %944 = vector.extract_strided_slice %943 {offsets = [0, 0], sizes = [1, 128], strides = [1, 1]} : vector<4x512xf32> to vector<1x128xf32>
    %945 = vector.extract_strided_slice %943 {offsets = [1, 128], sizes = [1, 128], strides = [1, 1]} : vector<4x512xf32> to vector<1x128xf32>
    %946 = arith.addf %944, %945 : vector<1x128xf32>
    %947 = vector.extract_strided_slice %943 {offsets = [2, 256], sizes = [1, 128], strides = [1, 1]} : vector<4x512xf32> to vector<1x128xf32>
    %948 = arith.addf %946, %947 : vector<1x128xf32>
    %949 = vector.extract_strided_slice %943 {offsets = [3, 384], sizes = [1, 128], strides = [1, 1]} : vector<4x512xf32> to vector<1x128xf32>
    %950 = arith.addf %948, %949 : vector<1x128xf32>
    %c6_484 = arith.constant 6 : index
    %c0_485 = arith.constant 0 : index
    %951 = vector.load %arg16[%c6_484, %c0_485] : memref<8x128xf32, #tpu.memory_space<vmem>>, vector<1x128xf32>
    tpu.vector_store %arg16[%c6_484, %c0_485], %950 {strides = array<i32>} : memref<8x128xf32, #tpu.memory_space<vmem>>, vector<1x128xf32>,
    %c16_486 = arith.constant 16 : index
    %c0_487 = arith.constant 0 : index
    %952 = vector.load %arg14[%c16_486, %c0_487] : memref<20x128xf32, #tpu.memory_space<vmem>>, vector<4x128xf32>
    %953 = arith.truncf %952 : vector<4x128xf32> to vector<4x128xbf16>
    %c0_488 = arith.constant 0 : index
    %c0_489 = arith.constant 0 : index
    %954 = vector.load %arg7[%c0_488, %c0_489] : memref<128x512xbf16, #tpu.memory_space<vmem>>, vector<128x512xbf16>
    %cst_490 = arith.constant dense<0.000000e+00> : vector<4x512xf32>
    %955 = tpu.matmul %953, %954, %cst_490 {dimension_numbers = #tpu.dot_dimension_numbers<[1], [0], [0], [1], [0, 0, 1, 1], [], []>} : vector<4x128xbf16>, vector<128x512xbf16>, vector<4x512xf32> -> vector<4x512xf32>
    %956 = vector.extract_strided_slice %955 {offsets = [0, 0], sizes = [1, 128], strides = [1, 1]} : vector<4x512xf32> to vector<1x128xf32>
    %957 = vector.extract_strided_slice %955 {offsets = [1, 128], sizes = [1, 128], strides = [1, 1]} : vector<4x512xf32> to vector<1x128xf32>
    %958 = arith.addf %956, %957 : vector<1x128xf32>
    %959 = vector.extract_strided_slice %955 {offsets = [2, 256], sizes = [1, 128], strides = [1, 1]} : vector<4x512xf32> to vector<1x128xf32>
    %960 = arith.addf %958, %959 : vector<1x128xf32>
    %961 = vector.extract_strided_slice %955 {offsets = [3, 384], sizes = [1, 128], strides = [1, 1]} : vector<4x512xf32> to vector<1x128xf32>
    %962 = arith.addf %960, %961 : vector<1x128xf32>
    %c7_491 = arith.constant 7 : index
    %c0_492 = arith.constant 0 : index
    %963 = vector.load %arg16[%c7_491, %c0_492] : memref<8x128xf32, #tpu.memory_space<vmem>>, vector<1x128xf32>
    tpu.vector_store %arg16[%c7_491, %c0_492], %962 {strides = array<i32>} : memref<8x128xf32, #tpu.memory_space<vmem>>, vector<1x128xf32>,
    %c0_493 = arith.constant 0 : index
    %c0_494 = arith.constant 0 : index
    %964 = vector.load %arg16[%c0_493, %c0_494] : memref<8x128xf32, #tpu.memory_space<vmem>>, vector<8x128xf32>
    %c0_495 = arith.constant 0 : index
    %c0_496 = arith.constant 0 : index
    %965 = vector.load %arg8[%c0_495, %c0_496] : memref<1x32xf32, #tpu.memory_space<vmem>>, vector<1x32xf32>
    %c0_497 = arith.constant 0 : index
    %c0_498 = arith.constant 0 : index
    %966 = vector.load %arg9[%c0_497, %c0_498] : memref<1x32xf32, #tpu.memory_space<vmem>>, vector<1x32xf32>
    %cst_499 = arith.constant dense<0.000000e+00> : vector<128xf32>
    %967 = vector.multi_reduction <add>, %964, %cst_499 [0] : vector<8x128xf32> to vector<128xf32>
    %968 = vector.shape_cast %967 : vector<128xf32> to vector<1x128xf32>
    %969 = vector.extract_strided_slice %968 {offsets = [0, 0], sizes = [1, 32], strides = [1, 1]} : vector<1x128xf32> to vector<1x32xf32>
    %970 = vector.extract_strided_slice %968 {offsets = [0, 32], sizes = [1, 32], strides = [1, 1]} : vector<1x128xf32> to vector<1x32xf32>
    %971 = arith.addf %969, %970 : vector<1x32xf32>
    %972 = vector.extract_strided_slice %968 {offsets = [0, 64], sizes = [1, 32], strides = [1, 1]} : vector<1x128xf32> to vector<1x32xf32>
    %973 = arith.addf %971, %972 : vector<1x32xf32>
    %974 = vector.extract_strided_slice %968 {offsets = [0, 96], sizes = [1, 32], strides = [1, 1]} : vector<1x128xf32> to vector<1x32xf32>
    %975 = arith.addf %973, %974 : vector<1x32xf32>
    %cst_500 = arith.constant 3.200000e+01 : f32
    %976 = vector.broadcast %cst_500 : f32 to vector<1x32xf32>
    %977 = arith.divf %975, %976 : vector<1x32xf32>
    %978 = tpu.concatenate %977, %977, %977, %977 in 1 : vector<1x32xf32>, vector<1x32xf32>, vector<1x32xf32>, vector<1x32xf32> -> vector<1x128xf32>
    %979 = vector.broadcast %978 : vector<1x128xf32> to vector<8x128xf32>
    %980 = arith.subf %964, %979 : vector<8x128xf32>
    %981 = arith.mulf %980, %980 : vector<8x128xf32>
    %cst_501 = arith.constant dense<0.000000e+00> : vector<128xf32>
    %982 = vector.multi_reduction <add>, %981, %cst_501 [0] : vector<8x128xf32> to vector<128xf32>
    %983 = vector.shape_cast %982 : vector<128xf32> to vector<1x128xf32>
    %984 = vector.extract_strided_slice %983 {offsets = [0, 0], sizes = [1, 32], strides = [1, 1]} : vector<1x128xf32> to vector<1x32xf32>
    %985 = vector.extract_strided_slice %983 {offsets = [0, 32], sizes = [1, 32], strides = [1, 1]} : vector<1x128xf32> to vector<1x32xf32>
    %986 = arith.addf %984, %985 : vector<1x32xf32>
    %987 = vector.extract_strided_slice %983 {offsets = [0, 64], sizes = [1, 32], strides = [1, 1]} : vector<1x128xf32> to vector<1x32xf32>
    %988 = arith.addf %986, %987 : vector<1x32xf32>
    %989 = vector.extract_strided_slice %983 {offsets = [0, 96], sizes = [1, 32], strides = [1, 1]} : vector<1x128xf32> to vector<1x32xf32>
    %990 = arith.addf %988, %989 : vector<1x32xf32>
    %cst_502 = arith.constant 3.200000e+01 : f32
    %991 = vector.broadcast %cst_502 : f32 to vector<1x32xf32>
    %992 = arith.divf %990, %991 : vector<1x32xf32>
    %cst_503 = arith.constant 9.99999974E-6 : f32
    %993 = vector.broadcast %cst_503 : f32 to vector<1x32xf32>
    %994 = arith.addf %992, %993 : vector<1x32xf32>
    %995 = math.rsqrt %994 : vector<1x32xf32>
    %996 = arith.mulf %965, %995 : vector<1x32xf32>
    %997 = tpu.concatenate %996, %996, %996, %996 in 1 : vector<1x32xf32>, vector<1x32xf32>, vector<1x32xf32>, vector<1x32xf32> -> vector<1x128xf32>
    %998 = vector.broadcast %997 : vector<1x128xf32> to vector<8x128xf32>
    %999 = arith.mulf %980, %998 : vector<8x128xf32>
    %1000 = tpu.concatenate %966, %966, %966, %966 in 1 : vector<1x32xf32>, vector<1x32xf32>, vector<1x32xf32>, vector<1x32xf32> -> vector<1x128xf32>
    %1001 = vector.broadcast %1000 : vector<1x128xf32> to vector<8x128xf32>
    %1002 = arith.addf %999, %1001 : vector<8x128xf32>
    %cst_504 = arith.constant 0.000000e+00 : f32
    %1003 = vector.broadcast %cst_504 : f32 to vector<8x128xf32>
    %1004 = arith.cmpf ogt, %1002, %1003 : vector<8x128xf32>
    %cst_505 = arith.constant 2.000000e-01 : f32
    %1005 = vector.broadcast %cst_505 : f32 to vector<8x128xf32>
    %1006 = arith.mulf %1005, %1002 : vector<8x128xf32>
    %1007 = arith.select %1004, %1002, %1006 : vector<8x128xi1>, vector<8x128xf32>
    %c0_506 = arith.constant 0 : index
    %c0_507 = arith.constant 0 : index
    %1008 = vector.load %arg16[%c0_506, %c0_507] : memref<8x128xf32, #tpu.memory_space<vmem>>, vector<8x128xf32>
    tpu.vector_store %arg16[%c0_506, %c0_507], %1007 {strides = array<i32>} : memref<8x128xf32, #tpu.memory_space<vmem>>, vector<8x128xf32>,
    %c0_508 = arith.constant 0 : index
    %c0_509 = arith.constant 0 : index
    %1009 = vector.load %arg16[%c0_508, %c0_509] : memref<8x128xf32, #tpu.memory_space<vmem>>, vector<4x128xf32>
    %1010 = arith.truncf %1009 : vector<4x128xf32> to vector<4x128xbf16>
    %c0_510 = arith.constant 0 : index
    %c0_511 = arith.constant 0 : index
    %1011 = vector.load %arg10[%c0_510, %c0_511] : memref<128x64xbf16, #tpu.memory_space<vmem>>, vector<128x64xbf16>
    %cst_512 = arith.constant dense<0.000000e+00> : vector<4x64xf32>
    %1012 = tpu.matmul %1010, %1011, %cst_512 {dimension_numbers = #tpu.dot_dimension_numbers<[1], [0], [0], [1], [0, 0, 1, 1], [], []>} : vector<4x128xbf16>, vector<128x64xbf16>, vector<4x64xf32> -> vector<4x64xf32>
    %1013 = vector.extract_strided_slice %1012 {offsets = [0, 0], sizes = [1, 16], strides = [1, 1]} : vector<4x64xf32> to vector<1x16xf32>
    %1014 = vector.extract_strided_slice %1012 {offsets = [1, 16], sizes = [1, 16], strides = [1, 1]} : vector<4x64xf32> to vector<1x16xf32>
    %1015 = arith.addf %1013, %1014 : vector<1x16xf32>
    %1016 = vector.extract_strided_slice %1012 {offsets = [2, 32], sizes = [1, 16], strides = [1, 1]} : vector<4x64xf32> to vector<1x16xf32>
    %1017 = arith.addf %1015, %1016 : vector<1x16xf32>
    %1018 = vector.extract_strided_slice %1012 {offsets = [3, 48], sizes = [1, 16], strides = [1, 1]} : vector<4x64xf32> to vector<1x16xf32>
    %1019 = arith.addf %1017, %1018 : vector<1x16xf32>
    %c0_513 = arith.constant 0 : index
    %c0_514 = arith.constant 0 : index
    %1020 = vector.load %arg11[%c0_513, %c0_514] : memref<1x16xf32, #tpu.memory_space<vmem>>, vector<1x16xf32>
    %1021 = arith.addf %1019, %1020 : vector<1x16xf32>
    %c0_515 = arith.constant 0 : index
    %c0_516 = arith.constant 0 : index
    %1022 = vector.load %arg12[%c0_515, %c0_516] : memref<2x16xf32, #tpu.memory_space<vmem>>, vector<1x16xf32>
    tpu.vector_store %arg12[%c0_515, %c0_516], %1021 {strides = array<i32>} : memref<2x16xf32, #tpu.memory_space<vmem>>, vector<1x16xf32>,
    %c4_517 = arith.constant 4 : index
    %c0_518 = arith.constant 0 : index
    %1023 = vector.load %arg16[%c4_517, %c0_518] : memref<8x128xf32, #tpu.memory_space<vmem>>, vector<4x128xf32>
    %1024 = arith.truncf %1023 : vector<4x128xf32> to vector<4x128xbf16>
    %c0_519 = arith.constant 0 : index
    %c0_520 = arith.constant 0 : index
    %1025 = vector.load %arg10[%c0_519, %c0_520] : memref<128x64xbf16, #tpu.memory_space<vmem>>, vector<128x64xbf16>
    %cst_521 = arith.constant dense<0.000000e+00> : vector<4x64xf32>
    %1026 = tpu.matmul %1024, %1025, %cst_521 {dimension_numbers = #tpu.dot_dimension_numbers<[1], [0], [0], [1], [0, 0, 1, 1], [], []>} : vector<4x128xbf16>, vector<128x64xbf16>, vector<4x64xf32> -> vector<4x64xf32>
    %1027 = vector.extract_strided_slice %1026 {offsets = [0, 0], sizes = [1, 16], strides = [1, 1]} : vector<4x64xf32> to vector<1x16xf32>
    %1028 = vector.extract_strided_slice %1026 {offsets = [1, 16], sizes = [1, 16], strides = [1, 1]} : vector<4x64xf32> to vector<1x16xf32>
    %1029 = arith.addf %1027, %1028 : vector<1x16xf32>
    %1030 = vector.extract_strided_slice %1026 {offsets = [2, 32], sizes = [1, 16], strides = [1, 1]} : vector<4x64xf32> to vector<1x16xf32>
    %1031 = arith.addf %1029, %1030 : vector<1x16xf32>
    %1032 = vector.extract_strided_slice %1026 {offsets = [3, 48], sizes = [1, 16], strides = [1, 1]} : vector<4x64xf32> to vector<1x16xf32>
    %1033 = arith.addf %1031, %1032 : vector<1x16xf32>
    %c0_522 = arith.constant 0 : index
    %c0_523 = arith.constant 0 : index
    %1034 = vector.load %arg11[%c0_522, %c0_523] : memref<1x16xf32, #tpu.memory_space<vmem>>, vector<1x16xf32>
    %1035 = arith.addf %1033, %1034 : vector<1x16xf32>
    %c1_524 = arith.constant 1 : index
    %c0_525 = arith.constant 0 : index
    %1036 = vector.load %arg12[%c1_524, %c0_525] : memref<2x16xf32, #tpu.memory_space<vmem>>, vector<1x16xf32>
    tpu.vector_store %arg12[%c1_524, %c0_525], %1035 {strides = array<i32>} : memref<2x16xf32, #tpu.memory_space<vmem>>, vector<1x16xf32>,
    return
  }
  func.func @transform_0(%arg0: i32) -> (i32, i32) {
    %c0_i32 = arith.constant 0 : i32
    %c0_i32_0 = arith.constant 0 : i32
    %c0_i32_1 = arith.constant 0 : i32
    return %c0_i32, %c0_i32_0 : i32, i32
  }
  func.func @transform_1(%arg0: i32) -> (i32, i32) {
    %c0_i32 = arith.constant 0 : i32
    %c0_i32_0 = arith.constant 0 : i32
    %c0_i32_1 = arith.constant 0 : i32
    return %c0_i32, %c0_i32_0 : i32, i32
  }
  func.func @transform_2(%arg0: i32) -> (i32, i32) {
    %c0_i32 = arith.constant 0 : i32
    %c0_i32_0 = arith.constant 0 : i32
    %c0_i32_1 = arith.constant 0 : i32
    return %c0_i32, %c0_i32_0 : i32, i32
  }
  func.func @transform_3(%arg0: i32) -> (i32, i32) {
    %c0_i32 = arith.constant 0 : i32
    %c0_i32_0 = arith.constant 0 : i32
    %c0_i32_1 = arith.constant 0 : i32
    return %c0_i32, %c0_i32_0 : i32, i32
  }
  func.func @transform_4(%arg0: i32) -> (i32, i32) {
    %c0_i32 = arith.constant 0 : i32
    %c0_i32_0 = arith.constant 0 : i32
    %c0_i32_1 = arith.constant 0 : i32
    return %c0_i32, %c0_i32_0 : i32, i32
  }
  func.func @transform_5(%arg0: i32) -> (i32, i32) {
    %c0_i32 = arith.constant 0 : i32
    %c0_i32_0 = arith.constant 0 : i32
    %c0_i32_1 = arith.constant 0 : i32
    return %c0_i32, %c0_i32_0 : i32, i32
  }
  func.func @transform_6(%arg0: i32) -> (i32, i32) {
    %c0_i32 = arith.constant 0 : i32
    %c0_i32_0 = arith.constant 0 : i32
    %c0_i32_1 = arith.constant 0 : i32
    return %c0_i32, %c0_i32_0 : i32, i32
  }
  func.func @transform_7(%arg0: i32) -> (i32, i32) {
    %c0_i32 = arith.constant 0 : i32
    %c0_i32_0 = arith.constant 0 : i32
    %c0_i32_1 = arith.constant 0 : i32
    return %c0_i32, %c0_i32_0 : i32, i32
  }
  func.func @transform_8(%arg0: i32) -> (i32, i32) {
    %c0_i32 = arith.constant 0 : i32
    %c0_i32_0 = arith.constant 0 : i32
    %c0_i32_1 = arith.constant 0 : i32
    return %c0_i32, %c0_i32_0 : i32, i32
  }
  func.func @transform_9(%arg0: i32) -> (i32, i32) {
    %c0_i32 = arith.constant 0 : i32
    %c0_i32_0 = arith.constant 0 : i32
    %c0_i32_1 = arith.constant 0 : i32
    return %c0_i32, %c0_i32_0 : i32, i32
  }
  func.func @transform_10(%arg0: i32) -> (i32, i32) {
    %c0_i32 = arith.constant 0 : i32
    %c0_i32_0 = arith.constant 0 : i32
    %c0_i32_1 = arith.constant 0 : i32
    return %c0_i32, %c0_i32_0 : i32, i32
  }
  func.func @transform_11(%arg0: i32) -> (i32, i32) {
    %c0_i32 = arith.constant 0 : i32
    %c0_i32_0 = arith.constant 0 : i32
    %c0_i32_1 = arith.constant 0 : i32
    return %c0_i32, %c0_i32_0 : i32, i32
  }
}

</mosaic_0001>

<llo_original>
// kernel: encoder_forward.1
$region0: #{encoder_forward.1}
  #allocation0 [shape = 'u32[]', space=smem, size = 0x4, offset = 0x4, fixed_abs, tag = 'smem constant byte address 0x4 - core index']
  #allocation1 [shape = 'u32[72,128]{1,0:T(1,128)}', space=vmem, size = 0x9000, scoped, tag = 'internal scratch']
  #allocation2 [shape = 'f32[36,128]{1,0:T(8,128)}', space=vmem, size = 0x5000, scoped, tag = 'scratch operand']
  #allocation3 [shape = 'f32[20,128]{1,0:T(8,128)}', space=vmem, size = 0x3000, scoped, tag = 'scratch operand']
  #allocation4 [shape = 'f32[16,128]{1,0:T(8,128)}', space=vmem, size = 0x2000, scoped, tag = 'scratch operand']
  #allocation5 [shape = 'f32[8,128]{1,0:T(8,128)}', space=vmem, size = 0x1000, scoped, tag = 'scratch operand']
  %s0 = inlined_call_operand.vmem [shape: f32[68,32], index: 0, kind: input, shape index: {}]
  %s1 = inlined_call_operand.vmem [shape: bf16[32,512], index: 1, kind: input, shape index: {}]
  %s2 = inlined_call_operand.vmem [shape: f32[1,128], index: 2, kind: input, shape index: {}]
  %s3 = inlined_call_operand.vmem [shape: bf16[128,512], index: 3, kind: input, shape index: {}]
  %s4 = inlined_call_operand.vmem [shape: f32[1,16], index: 4, kind: input, shape index: {}]
  %s5 = inlined_call_operand.vmem [shape: f32[1,16], index: 5, kind: input, shape index: {}]
  %s6 = inlined_call_operand.hbm [shape: bf16[128,512], index: 6, kind: input, shape index: {}]
  %s7 = inlined_call_operand.vmem [shape: f32[1,32], index: 7, kind: input, shape index: {}]
  %s8 = inlined_call_operand.vmem [shape: f32[1,32], index: 8, kind: input, shape index: {}]
  %s9 = inlined_call_operand.vmem [shape: bf16[128,64], index: 9, kind: input, shape index: {}]
  %s10 = inlined_call_operand.vmem [shape: f32[1,16], index: 10, kind: input, shape index: {}]
  %s11 = inlined_call_operand.hbm [shape: f32[2,16], index: 11, kind: output, shape index: {}]
  %s12 = sld [smem:[#allocation0]]
  $region58: #{encoder_forward.1} parent=0
    _
  %s14 = ssub.s32 1, %s12
  %s15 = scalar_select 0, %s14, %s12
  $region1: #{encoder_forward.1} parent=0
    #allocation6 [shape = 'u8[131072]{0}', space=vmem, size = 0x20000, scoped, tag = 'input window, operand 6, single buffered']
    #allocation7 [shape = 's32[1]{0}', space=sflag, size = 0x4, scoped, tag = 'scoped memory for encoder_forward.1']
    #allocation8 [shape = 's32[1]{0}', space=sflag, size = 0x4, scoped, tag = 'scoped memory for encoder_forward.1']
    #allocation9 [shape = 'u8[1024]{0}', space=vmem, size = 0x400, scoped, tag = 'output window, operand 0, single buffered']
    %16 = vsyncpa [#allocation7], 0
    %17 = vsyncpa [#allocation8], 0
    // Predicated region
    $region2: #{encoder_forward.1} parent=1 // pred_check
      _
    $region3: #{encoder_forward.1} parent=1 // pred_check_branch
      %19 = sbr.rel (0) target = $region5
    $region4: #{encoder_forward.1} parent=1 // pred_region
      _
    $region5: #{encoder_forward.1} parent=1 // pred_fallthru
      _
    // Predicated region
    $region6: #{encoder_forward.1} parent=1 // pred_check
      _
    $region7: #{encoder_forward.1} parent=1 // pred_check_branch
      %21 = sbr.rel (0) target = $region9
    $region8: #{encoder_forward.1} parent=1 // pred_region
      _
    $region9: #{encoder_forward.1} parent=1 // pred_fallthru
      _
    // Predicated region
    $region10: #{encoder_forward.1} parent=1 // pred_check
      _
    $region11: #{encoder_forward.1} parent=1 // pred_check_branch
      %23 = sbr.rel (0) target = $region13
    $region12: #{encoder_forward.1} parent=1 // pred_region
      _
    $region13: #{encoder_forward.1} parent=1 // pred_fallthru
      _
    // Predicated region
    $region14: #{encoder_forward.1} parent=1 // pred_check
      _
    $region15: #{encoder_forward.1} parent=1 // pred_check_branch
      %25 = sbr.rel (0) target = $region17
    $region16: #{encoder_forward.1} parent=1 // pred_region
      _
    $region17: #{encoder_forward.1} parent=1 // pred_fallthru
      _
    // Predicated region
    $region18: #{encoder_forward.1} parent=1 // pred_check
      _
    $region19: #{encoder_forward.1} parent=1 // pred_check_branch
      %27 = sbr.rel (0) target = $region21
    $region20: #{encoder_forward.1} parent=1 // pred_region
      _
    $region21: #{encoder_forward.1} parent=1 // pred_fallthru
      _
    // Predicated region
    $region22: #{encoder_forward.1} parent=1 // pred_check
      _
    $region23: #{encoder_forward.1} parent=1 // pred_check_branch
      %29 = sbr.rel (0) target = $region25
    $region24: #{encoder_forward.1} parent=1 // pred_region
      _
    $region25: #{encoder_forward.1} parent=1 // pred_fallthru
      _
    // Predicated region
    $region26: #{encoder_forward.1} parent=1 // pred_check
      _
    $region27: #{encoder_forward.1} parent=1 // pred_check_branch
      %31 = sbr.rel (0) target = $region29
    $region28: #{encoder_forward.1} parent=1 // pred_region
      %33 = vsyncadd [#allocation7], 0
      %s34 = sshll.u32 %s6, 4
      %s35 = int_to_ptr.hbm [resolvable:$true] %s34
      %s36 = sshll.u32 [#allocation6], 4
      %s37 = int_to_ptr.vmem [resolvable:$true] %s36
      %42 = dma.hbm_to_vmem [thread:$0]  %s35, 4096, %s37, [#allocation7], 256, 256, 16
    $region29: #{encoder_forward.1} parent=1 // pred_fallthru
      _
    // Predicated region
    $region30: #{encoder_forward.1} parent=1 // pred_check
      _
    $region31: #{encoder_forward.1} parent=1 // pred_check_branch
      %44 = sbr.rel (0) target = $region33
    $region32: #{encoder_forward.1} parent=1 // pred_region
      _
    $region33: #{encoder_forward.1} parent=1 // pred_fallthru
      _
    // Predicated region
    $region34: #{encoder_forward.1} parent=1 // pred_check
      _
    $region35: #{encoder_forward.1} parent=1 // pred_check_branch
      %46 = sbr.rel (0) target = $region37
    $region36: #{encoder_forward.1} parent=1 // pred_region
      _
    $region37: #{encoder_forward.1} parent=1 // pred_fallthru
      _
    // Predicated region
    $region38: #{encoder_forward.1} parent=1 // pred_check
      _
    $region39: #{encoder_forward.1} parent=1 // pred_check_branch
      %48 = sbr.rel (0) target = $region41
    $region40: #{encoder_forward.1} parent=1 // pred_region
      _
    $region41: #{encoder_forward.1} parent=1 // pred_fallthru
      _
    // Predicated region
    $region42: #{encoder_forward.1} parent=1 // pred_check
      _
    $region43: #{encoder_forward.1} parent=1 // pred_check_branch
      %50 = sbr.rel (0) target = $region45
    $region44: #{encoder_forward.1} parent=1 // pred_region
      _
    $region45: #{encoder_forward.1} parent=1 // pred_fallthru
      _
    // Predicated region
    $region46: #{encoder_forward.1} parent=1 // pred_check
      _
    $region47: #{encoder_forward.1} parent=1 // pred_check_branch
      %52 = sbr.rel (0) target = $region49
    $region48: #{encoder_forward.1} parent=1 // pred_region
      %54 = dma.done [#allocation7], 4096
    $region49: #{encoder_forward.1} parent=1 // pred_fallthru
      _
    %56 = vst [vmem:[#allocation2] sm:$0xff] 0.0
    %57 = vst [vmem:[#allocation2 + $0x8] sm:$0xff] 0.0
    %58 = vst [vmem:[#allocation2 + $0x10] sm:$0xff] 0.0
    %59 = vst [vmem:[#allocation2 + $0x18] sm:$0xff] 0.0
    %60 = vst [vmem:[#allocation2 + $0x20] sm:$0xf] 0.0
    %61 = vst [vmem:[#allocation3] sm:$0xff] 0.0
    %62 = vst [vmem:[#allocation3 + $0x8] sm:$0xff] 0.0
    %63 = vst [vmem:[#allocation3 + $0x10] sm:$0xf] 0.0
    %v64 = vld [vmem:[%s0] sm:$0xf]
    %v65 = vpack.c.bf16 %v64, %v64
    %v66 = vld [vmem:[%s1] sm:$0xff]
    %v67 = vld [vmem:[%s1 + $0x8] sm:$0xff]
    %v68 = vld [vmem:[%s1 + $0x10] sm:$0xff]
    %v69 = vld [vmem:[%s1 + $0x18] sm:$0xff]
    %v70 = vld [vmem:[%s1 + $0x20] sm:$0xff]
    %v71 = vld [vmem:[%s1 + $0x28] sm:$0xff]
    %v72 = vld [vmem:[%s1 + $0x30] sm:$0xff]
    %v73 = vld [vmem:[%s1 + $0x38] sm:$0xff]
    %v82 = vunpack.c.l.b16 %v66
    %v83 = vunpack.c.h.b16 %v66
    %v84 = vunpack.c.l.b16 %v67
    %v85 = vunpack.c.h.b16 %v67
    %v86 = vunpack.c.l.b16 %v68
    %v87 = vunpack.c.h.b16 %v68
    %v88 = vunpack.c.l.b16 %v69
    %v89 = vunpack.c.h.b16 %v69
    %v90 = vunpack.c.l.b16 %v70
    %v91 = vunpack.c.h.b16 %v70
    %v92 = vunpack.c.l.b16 %v71
    %v93 = vunpack.c.h.b16 %v71
    %v94 = vunpack.c.l.b16 %v72
    %v95 = vunpack.c.h.b16 %v72
    %v96 = vunpack.c.l.b16 %v73
    %v97 = vunpack.c.h.b16 %v73
    %v98 = vpack.c.b16 %v86, %v82
    %v99 = vpack.c.b16 %v87, %v83
    %v100 = vpack.c.b16 %v88, %v84
    %v101 = vpack.c.b16 %v89, %v85
    %v102 = vpack.c.b16 %v94, %v90
    %v103 = vpack.c.b16 %v95, %v91
    %v104 = vpack.c.b16 %v96, %v92
    %v105 = vpack.c.b16 %v97, %v93
    %vm114 = vcmask 261120
    %v116 = vsel %vm114, %v65, 0
    %118 = vmatpush.bf16.msra.mxu0 0
    %119 = vmatpush.bf16.msra.mxu0 0
    %120 = vmatpush.bf16.msra.mxu0 0
    %121 = vmatpush.bf16.msra.mxu0 0
    %122 = vmatpush.bf16.msra.mxu0 0
    %123 = vmatpush.bf16.msra.mxu0 0
    %124 = vmatpush.bf16.msra.mxu0 %v102
    %125 = vmatpush.bf16.msra.mxu0 %v98
    %126 = vmatmul.bf16.gmra.mxu0 %v116
    %v127 = vpop.f32.mrf.mxu0
    %v128 = vadd.f32 0.0, %v127
    %v129 = vpop.f32.mrf.mxu0
    %130 = vdwg.mxu0
    %131 = vmatpush.bf16.msra.mxu0 0
    %132 = vmatpush.bf16.msra.mxu0 0
    %133 = vmatpush.bf16.msra.mxu0 0
    %134 = vmatpush.bf16.msra.mxu0 0
    %135 = vmatpush.bf16.msra.mxu0 0
    %136 = vmatpush.bf16.msra.mxu0 0
    %137 = vmatpush.bf16.msra.mxu0 %v103
    %138 = vmatpush.bf16.msra.mxu0 %v99
    %139 = vmatmul.bf16.gmra.mxu0 %v116
    %v140 = vpop.f32.mrf.mxu0
    %v141 = vadd.f32 0.0, %v140
    %v142 = vpop.f32.mrf.mxu0
    %143 = vdwg.mxu0
    %144 = vmatpush.bf16.msra.mxu0 0
    %145 = vmatpush.bf16.msra.mxu0 0
    %146 = vmatpush.bf16.msra.mxu0 0
    %147 = vmatpush.bf16.msra.mxu0 0
    %148 = vmatpush.bf16.msra.mxu0 0
    %149 = vmatpush.bf16.msra.mxu0 0
    %150 = vmatpush.bf16.msra.mxu0 %v104
    %151 = vmatpush.bf16.msra.mxu0 %v100
    %152 = vmatmul.bf16.gmra.mxu0 %v116
    %v153 = vpop.f32.mrf.mxu0
    %v154 = vadd.f32 0.0, %v153
    %v155 = vpop.f32.mrf.mxu0
    %156 = vdwg.mxu0
    %157 = vmatpush.bf16.msra.mxu0 0
    %158 = vmatpush.bf16.msra.mxu0 0
    %159 = vmatpush.bf16.msra.mxu0 0
    %160 = vmatpush.bf16.msra.mxu0 0
    %161 = vmatpush.bf16.msra.mxu0 0
    %162 = vmatpush.bf16.msra.mxu0 0
    %163 = vmatpush.bf16.msra.mxu0 %v105
    %164 = vmatpush.bf16.msra.mxu0 %v101
    %165 = vmatmul.bf16.gmra.mxu0 %v116
    %v166 = vpop.f32.mrf.mxu0
    %v167 = vadd.f32 0.0, %v166
    %v168 = vpop.f32.mrf.mxu0
    %169 = vdwg.mxu0
    %v171 = vrot.slane %v141, 1
    %v173 = vadd.f32 %v128, %v171
    %v175 = vrot.slane %v154, 2
    %v177 = vadd.f32 %v173, %v175
    %v179 = vrot.slane %v167, 3
    %v181 = vadd.f32 %v177, %v179
    %v182 = vld [vmem:[%s2] sm:$0x1]
    %v183 = vadd.f32 %v181, %v182
    %vm184 = vcmp.gt.f32.partialorder %v183, 0.0
    %v185 = vmul.f32 %v183, 0.2
    %v186 = vsel %vm184, %v183, %v185
    %187 = vst [vmem:[#allocation2 + $0x1] sm:$0x1] %v186
    %v188 = vld [vmem:[%s0 + $0x2] sm:$0xf]
    %v189 = vpack.c.bf16 %v188, %v188
    %v190 = vld [vmem:[%s1] sm:$0xff]
    %v191 = vld [vmem:[%s1 + $0x8] sm:$0xff]
    %v192 = vld [vmem:[%s1 + $0x10] sm:$0xff]
    %v193 = vld [vmem:[%s1 + $0x18] sm:$0xff]
    %v194 = vld [vmem:[%s1 + $0x20] sm:$0xff]
    %v195 = vld [vmem:[%s1 + $0x28] sm:$0xff]
    %v196 = vld [vmem:[%s1 + $0x30] sm:$0xff]
    %v197 = vld [vmem:[%s1 + $0x38] sm:$0xff]
    %v206 = vunpack.c.l.b16 %v190
    %v207 = vunpack.c.h.b16 %v190
    %v208 = vunpack.c.l.b16 %v191
    %v209 = vunpack.c.h.b16 %v191
    %v210 = vunpack.c.l.b16 %v192
    %v211 = vunpack.c.h.b16 %v192
    %v212 = vunpack.c.l.b16 %v193
    %v213 = vunpack.c.h.b16 %v193
    %v214 = vunpack.c.l.b16 %v194
    %v215 = vunpack.c.h.b16 %v194
    %v216 = vunpack.c.l.b16 %v195
    %v217 = vunpack.c.h.b16 %v195
    %v218 = vunpack.c.l.b16 %v196
    %v219 = vunpack.c.h.b16 %v196
    %v220 = vunpack.c.l.b16 %v197
    %v221 = vunpack.c.h.b16 %v197
    %v222 = vpack.c.b16 %v210, %v206
    %v223 = vpack.c.b16 %v211, %v207
    %v224 = vpack.c.b16 %v212, %v208
    %v225 = vpack.c.b16 %v213, %v209
    %v226 = vpack.c.b16 %v218, %v214
    %v227 = vpack.c.b16 %v219, %v215
    %v228 = vpack.c.b16 %v220, %v216
    %v229 = vpack.c.b16 %v221, %v217
    %v239 = vsel %vm114, %v189, 0
    %241 = vmatpush.bf16.msra.mxu0 0
    %242 = vmatpush.bf16.msra.mxu0 0
    %243 = vmatpush.bf16.msra.mxu0 0
    %244 = vmatpush.bf16.msra.mxu0 0
    %245 = vmatpush.bf16.msra.mxu0 0
    %246 = vmatpush.bf16.msra.mxu0 0
    %247 = vmatpush.bf16.msra.mxu0 %v226
    %248 = vmatpush.bf16.msra.mxu0 %v222
    %249 = vmatmul.bf16.gmra.mxu0 %v239
    %v250 = vpop.f32.mrf.mxu0
    %v251 = vadd.f32 0.0, %v250
    %v252 = vpop.f32.mrf.mxu0
    %253 = vdwg.mxu0
    %254 = vmatpush.bf16.msra.mxu0 0
    %255 = vmatpush.bf16.msra.mxu0 0
    %256 = vmatpush.bf16.msra.mxu0 0
    %257 = vmatpush.bf16.msra.mxu0 0
    %258 = vmatpush.bf16.msra.mxu0 0
    %259 = vmatpush.bf16.msra.mxu0 0
    %260 = vmatpush.bf16.msra.mxu0 %v227
    %261 = vmatpush.bf16.msra.mxu0 %v223
    %262 = vmatmul.bf16.gmra.mxu0 %v239
    %v263 = vpop.f32.mrf.mxu0
    %v264 = vadd.f32 0.0, %v263
    %v265 = vpop.f32.mrf.mxu0
    %266 = vdwg.mxu0
    %267 = vmatpush.bf16.msra.mxu0 0
    %268 = vmatpush.bf16.msra.mxu0 0
    %269 = vmatpush.bf16.msra.mxu0 0
    %270 = vmatpush.bf16.msra.mxu0 0
    %271 = vmatpush.bf16.msra.mxu0 0
    %272 = vmatpush.bf16.msra.mxu0 0
    %273 = vmatpush.bf16.msra.mxu0 %v228
    %274 = vmatpush.bf16.msra.mxu0 %v224
    %275 = vmatmul.bf16.gmra.mxu0 %v239
    %v276 = vpop.f32.mrf.mxu0
    %v277 = vadd.f32 0.0, %v276
    %v278 = vpop.f32.mrf.mxu0
    %279 = vdwg.mxu0
    %280 = vmatpush.bf16.msra.mxu0 0
    %281 = vmatpush.bf16.msra.mxu0 0
    %282 = vmatpush.bf16.msra.mxu0 0
    %283 = vmatpush.bf16.msra.mxu0 0
    %284 = vmatpush.bf16.msra.mxu0 0
    %285 = vmatpush.bf16.msra.mxu0 0
    %286 = vmatpush.bf16.msra.mxu0 %v229
    %287 = vmatpush.bf16.msra.mxu0 %v225
    %288 = vmatmul.bf16.gmra.mxu0 %v239
    %v289 = vpop.f32.mrf.mxu0
    %v290 = vadd.f32 0.0, %v289
    %v291 = vpop.f32.mrf.mxu0
    %292 = vdwg.mxu0
    %v294 = vrot.slane %v264, 1
    %v296 = vadd.f32 %v251, %v294
    %v298 = vrot.slane %v277, 2
    %v300 = vadd.f32 %v296, %v298
    %v302 = vrot.slane %v290, 3
    %v304 = vadd.f32 %v300, %v302
    %v305 = vld [vmem:[%s2] sm:$0x1]
    %v306 = vadd.f32 %v304, %v305
    %vm307 = vcmp.gt.f32.partialorder %v306, 0.0
    %v308 = vmul.f32 %v306, 0.2
    %v309 = vsel %vm307, %v306, %v308
    %310 = vst [vmem:[#allocation2 + $0x2] sm:$0x1] %v309
    %v311 = vld [vmem:[%s0 + $0x4] sm:$0xf]
    %v312 = vpack.c.bf16 %v311, %v311
    %v313 = vld [vmem:[%s1] sm:$0xff]
    %v314 = vld [vmem:[%s1 + $0x8] sm:$0xff]
    %v315 = vld [vmem:[%s1 + $0x10] sm:$0xff]
    %v316 = vld [vmem:[%s1 + $0x18] sm:$0xff]
    %v317 = vld [vmem:[%s1 + $0x20] sm:$0xff]
    %v318 = vld [vmem:[%s1 + $0x28] sm:$0xff]
    %v319 = vld [vmem:[%s1 + $0x30] sm:$0xff]
    %v320 = vld [vmem:[%s1 + $0x38] sm:$0xff]
    %v329 = vunpack.c.l.b16 %v313
    %v330 = vunpack.c.h.b16 %v313
    %v331 = vunpack.c.l.b16 %v314
    %v332 = vunpack.c.h.b16 %v314
    %v333 = vunpack.c.l.b16 %v315
    %v334 = vunpack.c.h.b16 %v315
    %v335 = vunpack.c.l.b16 %v316
    %v336 = vunpack.c.h.b16 %v316
    %v337 = vunpack.c.l.b16 %v317
    %v338 = vunpack.c.h.b16 %v317
    %v339 = vunpack.c.l.b16 %v318
    %v340 = vunpack.c.h.b16 %v318
    %v341 = vunpack.c.l.b16 %v319
    %v342 = vunpack.c.h.b16 %v319
    %v343 = vunpack.c.l.b16 %v320
    %v344 = vunpack.c.h.b16 %v320
    %v345 = vpack.c.b16 %v333, %v329
    %v346 = vpack.c.b16 %v334, %v330
    %v347 = vpack.c.b16 %v335, %v331
    %v348 = vpack.c.b16 %v336, %v332
    %v349 = vpack.c.b16 %v341, %v337
    %v350 = vpack.c.b16 %v342, %v338
    %v351 = vpack.c.b16 %v343, %v339
    %v352 = vpack.c.b16 %v344, %v340
    %v362 = vsel %vm114, %v312, 0
    %364 = vmatpush.bf16.msra.mxu0 0
    %365 = vmatpush.bf16.msra.mxu0 0
    %366 = vmatpush.bf16.msra.mxu0 0
    %367 = vmatpush.bf16.msra.mxu0 0
    %368 = vmatpush.bf16.msra.mxu0 0
    %369 = vmatpush.bf16.msra.mxu0 0
    %370 = vmatpush.bf16.msra.mxu0 %v349
    %371 = vmatpush.bf16.msra.mxu0 %v345
    %372 = vmatmul.bf16.gmra.mxu0 %v362
    %v373 = vpop.f32.mrf.mxu0
    %v374 = vadd.f32 0.0, %v373
    %v375 = vpop.f32.mrf.mxu0
    %376 = vdwg.mxu0
    %377 = vmatpush.bf16.msra.mxu0 0
    %378 = vmatpush.bf16.msra.mxu0 0
    %379 = vmatpush.bf16.msra.mxu0 0
    %380 = vmatpush.bf16.msra.mxu0 0
    %381 = vmatpush.bf16.msra.mxu0 0
    %382 = vmatpush.bf16.msra.mxu0 0
    %383 = vmatpush.bf16.msra.mxu0 %v350
    %384 = vmatpush.bf16.msra.mxu0 %v346
    %385 = vmatmul.bf16.gmra.mxu0 %v362
    %v386 = vpop.f32.mrf.mxu0
    %v387 = vadd.f32 0.0, %v386
    %v388 = vpop.f32.mrf.mxu0
    %389 = vdwg.mxu0
    %390 = vmatpush.bf16.msra.mxu0 0
    %391 = vmatpush.bf16.msra.mxu0 0
    %392 = vmatpush.bf16.msra.mxu0 0
    %393 = vmatpush.bf16.msra.mxu0 0
    %394 = vmatpush.bf16.msra.mxu0 0
    %395 = vmatpush.bf16.msra.mxu0 0
    %396 = vmatpush.bf16.msra.mxu0 %v351
    %397 = vmatpush.bf16.msra.mxu0 %v347
    %398 = vmatmul.bf16.gmra.mxu0 %v362
    %v399 = vpop.f32.mrf.mxu0
    %v400 = vadd.f32 0.0, %v399
    %v401 = vpop.f32.mrf.mxu0
    %402 = vdwg.mxu0
    %403 = vmatpush.bf16.msra.mxu0 0
    %404 = vmatpush.bf16.msra.mxu0 0
    %405 = vmatpush.bf16.msra.mxu0 0
    %406 = vmatpush.bf16.msra.mxu0 0
    %407 = vmatpush.bf16.msra.mxu0 0
    %408 = vmatpush.bf16.msra.mxu0 0
    %409 = vmatpush.bf16.msra.mxu0 %v352
    %410 = vmatpush.bf16.msra.mxu0 %v348
    %411 = vmatmul.bf16.gmra.mxu0 %v362
    %v412 = vpop.f32.mrf.mxu0
    %v413 = vadd.f32 0.0, %v412
    %v414 = vpop.f32.mrf.mxu0
    %415 = vdwg.mxu0
    %v417 = vrot.slane %v387, 1
    %v419 = vadd.f32 %v374, %v417
    %v421 = vrot.slane %v400, 2
    %v423 = vadd.f32 %v419, %v421
    %v425 = vrot.slane %v413, 3
    %v427 = vadd.f32 %v423, %v425
    %v428 = vld [vmem:[%s2] sm:$0x1]
    %v429 = vadd.f32 %v427, %v428
    %vm430 = vcmp.gt.f32.partialorder %v429, 0.0
    %v431 = vmul.f32 %v429, 0.2
    %v432 = vsel %vm430, %v429, %v431
    %433 = vst [vmem:[#allocation2 + $0x3] sm:$0x1] %v432
    %v434 = vld [vmem:[%s0 + $0x6] sm:$0xf]
    %v435 = vpack.c.bf16 %v434, %v434
    %v436 = vld [vmem:[%s1] sm:$0xff]
    %v437 = vld [vmem:[%s1 + $0x8] sm:$0xff]
    %v438 = vld [vmem:[%s1 + $0x10] sm:$0xff]
    %v439 = vld [vmem:[%s1 + $0x18] sm:$0xff]
    %v440 = vld [vmem:[%s1 + $0x20] sm:$0xff]
    %v441 = vld [vmem:[%s1 + $0x28] sm:$0xff]
    %v442 = vld [vmem:[%s1 + $0x30] sm:$0xff]
    %v443 = vld [vmem:[%s1 + $0x38] sm:$0xff]
    %v452 = vunpack.c.l.b16 %v436
    %v453 = vunpack.c.h.b16 %v436
    %v454 = vunpack.c.l.b16 %v437
    %v455 = vunpack.c.h.b16 %v437
    %v456 = vunpack.c.l.b16 %v438
    %v457 = vunpack.c.h.b16 %v438
    %v458 = vunpack.c.l.b16 %v439
    %v459 = vunpack.c.h.b16 %v439
    %v460 = vunpack.c.l.b16 %v440
    %v461 = vunpack.c.h.b16 %v440
    %v462 = vunpack.c.l.b16 %v441
    %v463 = vunpack.c.h.b16 %v441
    %v464 = vunpack.c.l.b16 %v442
    %v465 = vunpack.c.h.b16 %v442
    %v466 = vunpack.c.l.b16 %v443
    %v467 = vunpack.c.h.b16 %v443
    %v468 = vpack.c.b16 %v456, %v452
    %v469 = vpack.c.b16 %v457, %v453
    %v470 = vpack.c.b16 %v458, %v454
    %v471 = vpack.c.b16 %v459, %v455
    %v472 = vpack.c.b16 %v464, %v460
    %v473 = vpack.c.b16 %v465, %v461
    %v474 = vpack.c.b16 %v466, %v462
    %v475 = vpack.c.b16 %v467, %v463
    %v485 = vsel %vm114, %v435, 0
    %487 = vmatpush.bf16.msra.mxu0 0
    %488 = vmatpush.bf16.msra.mxu0 0
    %489 = vmatpush.bf16.msra.mxu0 0
    %490 = vmatpush.bf16.msra.mxu0 0
    %491 = vmatpush.bf16.msra.mxu0 0
    %492 = vmatpush.bf16.msra.mxu0 0
    %493 = vmatpush.bf16.msra.mxu0 %v472
    %494 = vmatpush.bf16.msra.mxu0 %v468
    %495 = vmatmul.bf16.gmra.mxu0 %v485
    %v496 = vpop.f32.mrf.mxu0
    %v497 = vadd.f32 0.0, %v496
    %v498 = vpop.f32.mrf.mxu0
    %499 = vdwg.mxu0
    %500 = vmatpush.bf16.msra.mxu0 0
    %501 = vmatpush.bf16.msra.mxu0 0
    %502 = vmatpush.bf16.msra.mxu0 0
    %503 = vmatpush.bf16.msra.mxu0 0
    %504 = vmatpush.bf16.msra.mxu0 0
    %505 = vmatpush.bf16.msra.mxu0 0
    %506 = vmatpush.bf16.msra.mxu0 %v473
    %507 = vmatpush.bf16.msra.mxu0 %v469
    %508 = vmatmul.bf16.gmra.mxu0 %v485
    %v509 = vpop.f32.mrf.mxu0
    %v510 = vadd.f32 0.0, %v509
    %v511 = vpop.f32.mrf.mxu0
    %512 = vdwg.mxu0
    %513 = vmatpush.bf16.msra.mxu0 0
    %514 = vmatpush.bf16.msra.mxu0 0
    %515 = vmatpush.bf16.msra.mxu0 0
    %516 = vmatpush.bf16.msra.mxu0 0
    %517 = vmatpush.bf16.msra.mxu0 0
    %518 = vmatpush.bf16.msra.mxu0 0
    %519 = vmatpush.bf16.msra.mxu0 %v474
    %520 = vmatpush.bf16.msra.mxu0 %v470
    %521 = vmatmul.bf16.gmra.mxu0 %v485
    %v522 = vpop.f32.mrf.mxu0
    %v523 = vadd.f32 0.0, %v522
    %v524 = vpop.f32.mrf.mxu0
    %525 = vdwg.mxu0
    %526 = vmatpush.bf16.msra.mxu0 0
    %527 = vmatpush.bf16.msra.mxu0 0
    %528 = vmatpush.bf16.msra.mxu0 0
    %529 = vmatpush.bf16.msra.mxu0 0
    %530 = vmatpush.bf16.msra.mxu0 0
    %531 = vmatpush.bf16.msra.mxu0 0
    %532 = vmatpush.bf16.msra.mxu0 %v475
    %533 = vmatpush.bf16.msra.mxu0 %v471
    %534 = vmatmul.bf16.gmra.mxu0 %v485
    %v535 = vpop.f32.mrf.mxu0
    %v536 = vadd.f32 0.0, %v535
    %v537 = vpop.f32.mrf.mxu0
    %538 = vdwg.mxu0
    %v540 = vrot.slane %v510, 1
    %v542 = vadd.f32 %v497, %v540
    %v544 = vrot.slane %v523, 2
    %v546 = vadd.f32 %v542, %v544
    %v548 = vrot.slane %v536, 3
    %v550 = vadd.f32 %v546, %v548
    %v551 = vld [vmem:[%s2] sm:$0x1]
    %v552 = vadd.f32 %v550, %v551
    %vm553 = vcmp.gt.f32.partialorder %v552, 0.0
    %v554 = vmul.f32 %v552, 0.2
    %v555 = vsel %vm553, %v552, %v554
    %556 = vst [vmem:[#allocation2 + $0x4] sm:$0x1] %v555
    %v557 = vld [vmem:[%s0 + $0x8] sm:$0xf]
    %v558 = vpack.c.bf16 %v557, %v557
    %v559 = vld [vmem:[%s1] sm:$0xff]
    %v560 = vld [vmem:[%s1 + $0x8] sm:$0xff]
    %v561 = vld [vmem:[%s1 + $0x10] sm:$0xff]
    %v562 = vld [vmem:[%s1 + $0x18] sm:$0xff]
    %v563 = vld [vmem:[%s1 + $0x20] sm:$0xff]
    %v564 = vld [vmem:[%s1 + $0x28] sm:$0xff]
    %v565 = vld [vmem:[%s1 + $0x30] sm:$0xff]
    %v566 = vld [vmem:[%s1 + $0x38] sm:$0xff]
    %v575 = vunpack.c.l.b16 %v559
    %v576 = vunpack.c.h.b16 %v559
    %v577 = vunpack.c.l.b16 %v560
    %v578 = vunpack.c.h.b16 %v560
    %v579 = vunpack.c.l.b16 %v561
    %v580 = vunpack.c.h.b16 %v561
    %v581 = vunpack.c.l.b16 %v562
    %v582 = vunpack.c.h.b16 %v562
    %v583 = vunpack.c.l.b16 %v563
    %v584 = vunpack.c.h.b16 %v563
    %v585 = vunpack.c.l.b16 %v564
    %v586 = vunpack.c.h.b16 %v564
    %v587 = vunpack.c.l.b16 %v565
    %v588 = vunpack.c.h.b16 %v565
    %v589 = vunpack.c.l.b16 %v566
    %v590 = vunpack.c.h.b16 %v566
    %v591 = vpack.c.b16 %v579, %v575
    %v592 = vpack.c.b16 %v580, %v576
    %v593 = vpack.c.b16 %v581, %v577
    %v594 = vpack.c.b16 %v582, %v578
    %v595 = vpack.c.b16 %v587, %v583
    %v596 = vpack.c.b16 %v588, %v584
    %v597 = vpack.c.b16 %v589, %v585
    %v598 = vpack.c.b16 %v590, %v586
    %v608 = vsel %vm114, %v558, 0
    %610 = vmatpush.bf16.msra.mxu0 0
    %611 = vmatpush.bf16.msra.mxu0 0
    %612 = vmatpush.bf16.msra.mxu0 0
    %613 = vmatpush.bf16.msra.mxu0 0
    %614 = vmatpush.bf16.msra.mxu0 0
    %615 = vmatpush.bf16.msra.mxu0 0
    %616 = vmatpush.bf16.msra.mxu0 %v595
    %617 = vmatpush.bf16.msra.mxu0 %v591
    %618 = vmatmul.bf16.gmra.mxu0 %v608
    %v619 = vpop.f32.mrf.mxu0
    %v620 = vadd.f32 0.0, %v619
    %v621 = vpop.f32.mrf.mxu0
    %622 = vdwg.mxu0
    %623 = vmatpush.bf16.msra.mxu0 0
    %624 = vmatpush.bf16.msra.mxu0 0
    %625 = vmatpush.bf16.msra.mxu0 0
    %626 = vmatpush.bf16.msra.mxu0 0
    %627 = vmatpush.bf16.msra.mxu0 0
    %628 = vmatpush.bf16.msra.mxu0 0
    %629 = vmatpush.bf16.msra.mxu0 %v596
    %630 = vmatpush.bf16.msra.mxu0 %v592
    %631 = vmatmul.bf16.gmra.mxu0 %v608
    %v632 = vpop.f32.mrf.mxu0
    %v633 = vadd.f32 0.0, %v632
    %v634 = vpop.f32.mrf.mxu0
    %635 = vdwg.mxu0
    %636 = vmatpush.bf16.msra.mxu0 0
    %637 = vmatpush.bf16.msra.mxu0 0
    %638 = vmatpush.bf16.msra.mxu0 0
    %639 = vmatpush.bf16.msra.mxu0 0
    %640 = vmatpush.bf16.msra.mxu0 0
    %641 = vmatpush.bf16.msra.mxu0 0
    %642 = vmatpush.bf16.msra.mxu0 %v597
    %643 = vmatpush.bf16.msra.mxu0 %v593
    %644 = vmatmul.bf16.gmra.mxu0 %v608
    %v645 = vpop.f32.mrf.mxu0
    %v646 = vadd.f32 0.0, %v645
    %v647 = vpop.f32.mrf.mxu0
    %648 = vdwg.mxu0
    %649 = vmatpush.bf16.msra.mxu0 0
    %650 = vmatpush.bf16.msra.mxu0 0
    %651 = vmatpush.bf16.msra.mxu0 0
    %652 = vmatpush.bf16.msra.mxu0 0
    %653 = vmatpush.bf16.msra.mxu0 0
    %654 = vmatpush.bf16.msra.mxu0 0
    %655 = vmatpush.bf16.msra.mxu0 %v598
    %656 = vmatpush.bf16.msra.mxu0 %v594
    %657 = vmatmul.bf16.gmra.mxu0 %v608
    %v658 = vpop.f32.mrf.mxu0
    %v659 = vadd.f32 0.0, %v658
    %v660 = vpop.f32.mrf.mxu0
    %661 = vdwg.mxu0
    %v663 = vrot.slane %v633, 1
    %v665 = vadd.f32 %v620, %v663
    %v667 = vrot.slane %v646, 2
    %v669 = vadd.f32 %v665, %v667
    %v671 = vrot.slane %v659, 3
    %v673 = vadd.f32 %v669, %v671
    %v674 = vld [vmem:[%s2] sm:$0x1]
    %v675 = vadd.f32 %v673, %v674
    %vm676 = vcmp.gt.f32.partialorder %v675, 0.0
    %v677 = vmul.f32 %v675, 0.2
    %v678 = vsel %vm676, %v675, %v677
    %679 = vst [vmem:[#allocation2 + $0x5] sm:$0x1] %v678
    %v680 = vld [vmem:[%s0 + $0xa] sm:$0xf]
    %v681 = vpack.c.bf16 %v680, %v680
    %v682 = vld [vmem:[%s1] sm:$0xff]
    %v683 = vld [vmem:[%s1 + $0x8] sm:$0xff]
    %v684 = vld [vmem:[%s1 + $0x10] sm:$0xff]
    %v685 = vld [vmem:[%s1 + $0x18] sm:$0xff]
    %v686 = vld [vmem:[%s1 + $0x20] sm:$0xff]
    %v687 = vld [vmem:[%s1 + $0x28] sm:$0xff]
    %v688 = vld [vmem:[%s1 + $0x30] sm:$0xff]
    %v689 = vld [vmem:[%s1 + $0x38] sm:$0xff]
    %v698 = vunpack.c.l.b16 %v682
    %v699 = vunpack.c.h.b16 %v682
    %v700 = vunpack.c.l.b16 %v683
    %v701 = vunpack.c.h.b16 %v683
    %v702 = vunpack.c.l.b16 %v684
    %v703 = vunpack.c.h.b16 %v684
    %v704 = vunpack.c.l.b16 %v685
    %v705 = vunpack.c.h.b16 %v685
    %v706 = vunpack.c.l.b16 %v686
    %v707 = vunpack.c.h.b16 %v686
    %v708 = vunpack.c.l.b16 %v687
    %v709 = vunpack.c.h.b16 %v687
    %v710 = vunpack.c.l.b16 %v688
    %v711 = vunpack.c.h.b16 %v688
    %v712 = vunpack.c.l.b16 %v689
    %v713 = vunpack.c.h.b16 %v689
    %v714 = vpack.c.b16 %v702, %v698
    %v715 = vpack.c.b16 %v703, %v699
    %v716 = vpack.c.b16 %v704, %v700
    %v717 = vpack.c.b16 %v705, %v701
    %v718 = vpack.c.b16 %v710, %v706
    %v719 = vpack.c.b16 %v711, %v707
    %v720 = vpack.c.b16 %v712, %v708
    %v721 = vpack.c.b16 %v713, %v709
    %v731 = vsel %vm114, %v681, 0
    %733 = vmatpush.bf16.msra.mxu0 0
    %734 = vmatpush.bf16.msra.mxu0 0
    %735 = vmatpush.bf16.msra.mxu0 0
    %736 = vmatpush.bf16.msra.mxu0 0
    %737 = vmatpush.bf16.msra.mxu0 0
    %738 = vmatpush.bf16.msra.mxu0 0
    %739 = vmatpush.bf16.msra.mxu0 %v718
    %740 = vmatpush.bf16.msra.mxu0 %v714
    %741 = vmatmul.bf16.gmra.mxu0 %v731
    %v742 = vpop.f32.mrf.mxu0
    %v743 = vadd.f32 0.0, %v742
    %v744 = vpop.f32.mrf.mxu0
    %745 = vdwg.mxu0
    %746 = vmatpush.bf16.msra.mxu0 0
    %747 = vmatpush.bf16.msra.mxu0 0
    %748 = vmatpush.bf16.msra.mxu0 0
    %749 = vmatpush.bf16.msra.mxu0 0
    %750 = vmatpush.bf16.msra.mxu0 0
    %751 = vmatpush.bf16.msra.mxu0 0
    %752 = vmatpush.bf16.msra.mxu0 %v719
    %753 = vmatpush.bf16.msra.mxu0 %v715
    %754 = vmatmul.bf16.gmra.mxu0 %v731
    %v755 = vpop.f32.mrf.mxu0
    %v756 = vadd.f32 0.0, %v755
    %v757 = vpop.f32.mrf.mxu0
    %758 = vdwg.mxu0
    %759 = vmatpush.bf16.msra.mxu0 0
    %760 = vmatpush.bf16.msra.mxu0 0
    %761 = vmatpush.bf16.msra.mxu0 0
    %762 = vmatpush.bf16.msra.mxu0 0
    %763 = vmatpush.bf16.msra.mxu0 0
    %764 = vmatpush.bf16.msra.mxu0 0
    %765 = vmatpush.bf16.msra.mxu0 %v720
    %766 = vmatpush.bf16.msra.mxu0 %v716
    %767 = vmatmul.bf16.gmra.mxu0 %v731
    %v768 = vpop.f32.mrf.mxu0
    %v769 = vadd.f32 0.0, %v768
    %v770 = vpop.f32.mrf.mxu0
    %771 = vdwg.mxu0
    %772 = vmatpush.bf16.msra.mxu0 0
    %773 = vmatpush.bf16.msra.mxu0 0
    %774 = vmatpush.bf16.msra.mxu0 0
    %775 = vmatpush.bf16.msra.mxu0 0
    %776 = vmatpush.bf16.msra.mxu0 0
    %777 = vmatpush.bf16.msra.mxu0 0
    %778 = vmatpush.bf16.msra.mxu0 %v721
    %779 = vmatpush.bf16.msra.mxu0 %v717
    %780 = vmatmul.bf16.gmra.mxu0 %v731
    %v781 = vpop.f32.mrf.mxu0
    %v782 = vadd.f32 0.0, %v781
    %v783 = vpop.f32.mrf.mxu0
    %784 = vdwg.mxu0
    %v786 = vrot.slane %v756, 1
    %v788 = vadd.f32 %v743, %v786
    %v790 = vrot.slane %v769, 2
    %v792 = vadd.f32 %v788, %v790
    %v794 = vrot.slane %v782, 3
    %v796 = vadd.f32 %v792, %v794
    %v797 = vld [vmem:[%s2] sm:$0x1]
    %v798 = vadd.f32 %v796, %v797
    %vm799 = vcmp.gt.f32.partialorder %v798, 0.0
    %v800 = vmul.f32 %v798, 0.2
    %v801 = vsel %vm799, %v798, %v800
    %802 = vst [vmem:[#allocation2 + $0x6] sm:$0x1] %v801
    %v803 = vld [vmem:[%s0 + $0xc] sm:$0xf]
    %v804 = vpack.c.bf16 %v803, %v803
    %v805 = vld [vmem:[%s1] sm:$0xff]
    %v806 = vld [vmem:[%s1 + $0x8] sm:$0xff]
    %v807 = vld [vmem:[%s1 + $0x10] sm:$0xff]
    %v808 = vld [vmem:[%s1 + $0x18] sm:$0xff]
    %v809 = vld [vmem:[%s1 + $0x20] sm:$0xff]
    %v810 = vld [vmem:[%s1 + $0x28] sm:$0xff]
    %v811 = vld [vmem:[%s1 + $0x30] sm:$0xff]
    %v812 = vld [vmem:[%s1 + $0x38] sm:$0xff]
    %v821 = vunpack.c.l.b16 %v805
    %v822 = vunpack.c.h.b16 %v805
    %v823 = vunpack.c.l.b16 %v806
    %v824 = vunpack.c.h.b16 %v806
    %v825 = vunpack.c.l.b16 %v807
    %v826 = vunpack.c.h.b16 %v807
    %v827 = vunpack.c.l.b16 %v808
    %v828 = vunpack.c.h.b16 %v808
    %v829 = vunpack.c.l.b16 %v809
    %v830 = vunpack.c.h.b16 %v809
    %v831 = vunpack.c.l.b16 %v810
    %v832 = vunpack.c.h.b16 %v810
    %v833 = vunpack.c.l.b16 %v811
    %v834 = vunpack.c.h.b16 %v811
    %v835 = vunpack.c.l.b16 %v812
    %v836 = vunpack.c.h.b16 %v812
    %v837 = vpack.c.b16 %v825, %v821
    %v838 = vpack.c.b16 %v826, %v822
    %v839 = vpack.c.b16 %v827, %v823
    %v840 = vpack.c.b16 %v828, %v824
    %v841 = vpack.c.b16 %v833, %v829
    %v842 = vpack.c.b16 %v834, %v830
    %v843 = vpack.c.b16 %v835, %v831
    %v844 = vpack.c.b16 %v836, %v832
    %v854 = vsel %vm114, %v804, 0
    %856 = vmatpush.bf16.msra.mxu0 0
    %857 = vmatpush.bf16.msra.mxu0 0
    %858 = vmatpush.bf16.msra.mxu0 0
    %859 = vmatpush.bf16.msra.mxu0 0
    %860 = vmatpush.bf16.msra.mxu0 0
    %861 = vmatpush.bf16.msra.mxu0 0
    %862 = vmatpush.bf16.msra.mxu0 %v841
    %863 = vmatpush.bf16.msra.mxu0 %v837
    %864 = vmatmul.bf16.gmra.mxu0 %v854
    %v865 = vpop.f32.mrf.mxu0
    %v866 = vadd.f32 0.0, %v865
    %v867 = vpop.f32.mrf.mxu0
    %868 = vdwg.mxu0
    %869 = vmatpush.bf16.msra.mxu0 0
    %870 = vmatpush.bf16.msra.mxu0 0
    %871 = vmatpush.bf16.msra.mxu0 0
    %872 = vmatpush.bf16.msra.mxu0 0
    %873 = vmatpush.bf16.msra.mxu0 0
    %874 = vmatpush.bf16.msra.mxu0 0
    %875 = vmatpush.bf16.msra.mxu0 %v842
    %876 = vmatpush.bf16.msra.mxu0 %v838
    %877 = vmatmul.bf16.gmra.mxu0 %v854
    %v878 = vpop.f32.mrf.mxu0
    %v879 = vadd.f32 0.0, %v878
    %v880 = vpop.f32.mrf.mxu0
    %881 = vdwg.mxu0
    %882 = vmatpush.bf16.msra.mxu0 0
    %883 = vmatpush.bf16.msra.mxu0 0
    %884 = vmatpush.bf16.msra.mxu0 0
    %885 = vmatpush.bf16.msra.mxu0 0
    %886 = vmatpush.bf16.msra.mxu0 0
    %887 = vmatpush.bf16.msra.mxu0 0
    %888 = vmatpush.bf16.msra.mxu0 %v843
    %889 = vmatpush.bf16.msra.mxu0 %v839
    %890 = vmatmul.bf16.gmra.mxu0 %v854
    %v891 = vpop.f32.mrf.mxu0
    %v892 = vadd.f32 0.0, %v891
    %v893 = vpop.f32.mrf.mxu0
    %894 = vdwg.mxu0
    %895 = vmatpush.bf16.msra.mxu0 0
    %896 = vmatpush.bf16.msra.mxu0 0
    %897 = vmatpush.bf16.msra.mxu0 0
    %898 = vmatpush.bf16.msra.mxu0 0
    %899 = vmatpush.bf16.msra.mxu0 0
    %900 = vmatpush.bf16.msra.mxu0 0
    %901 = vmatpush.bf16.msra.mxu0 %v844
    %902 = vmatpush.bf16.msra.mxu0 %v840
    %903 = vmatmul.bf16.gmra.mxu0 %v854
    %v904 = vpop.f32.mrf.mxu0
    %v905 = vadd.f32 0.0, %v904
    %v906 = vpop.f32.mrf.mxu0
    %907 = vdwg.mxu0
    %v909 = vrot.slane %v879, 1
    %v911 = vadd.f32 %v866, %v909
    %v913 = vrot.slane %v892, 2
    %v915 = vadd.f32 %v911, %v913
    %v917 = vrot.slane %v905, 3
    %v919 = vadd.f32 %v915, %v917
    %v920 = vld [vmem:[%s2] sm:$0x1]
    %v921 = vadd.f32 %v919, %v920
    %vm922 = vcmp.gt.f32.partialorder %v921, 0.0
    %v923 = vmul.f32 %v921, 0.2
    %v924 = vsel %vm922, %v921, %v923
    %925 = vst [vmem:[#allocation2 + $0x7] sm:$0x1] %v924
    %v926 = vld [vmem:[%s0 + $0xe] sm:$0xf]
    %v927 = vpack.c.bf16 %v926, %v926
    %v928 = vld [vmem:[%s1] sm:$0xff]
    %v929 = vld [vmem:[%s1 + $0x8] sm:$0xff]
    %v930 = vld [vmem:[%s1 + $0x10] sm:$0xff]
    %v931 = vld [vmem:[%s1 + $0x18] sm:$0xff]
    %v932 = vld [vmem:[%s1 + $0x20] sm:$0xff]
    %v933 = vld [vmem:[%s1 + $0x28] sm:$0xff]
    %v934 = vld [vmem:[%s1 + $0x30] sm:$0xff]
    %v935 = vld [vmem:[%s1 + $0x38] sm:$0xff]
    %v944 = vunpack.c.l.b16 %v928
    %v945 = vunpack.c.h.b16 %v928
    %v946 = vunpack.c.l.b16 %v929
    %v947 = vunpack.c.h.b16 %v929
    %v948 = vunpack.c.l.b16 %v930
    %v949 = vunpack.c.h.b16 %v930
    %v950 = vunpack.c.l.b16 %v931
    %v951 = vunpack.c.h.b16 %v931
    %v952 = vunpack.c.l.b16 %v932
    %v953 = vunpack.c.h.b16 %v932
    %v954 = vunpack.c.l.b16 %v933
    %v955 = vunpack.c.h.b16 %v933
    %v956 = vunpack.c.l.b16 %v934
    %v957 = vunpack.c.h.b16 %v934
    %v958 = vunpack.c.l.b16 %v935
    %v959 = vunpack.c.h.b16 %v935
    %v960 = vpack.c.b16 %v948, %v944
    %v961 = vpack.c.b16 %v949, %v945
    %v962 = vpack.c.b16 %v950, %v946
    %v963 = vpack.c.b16 %v951, %v947
    %v964 = vpack.c.b16 %v956, %v952
    %v965 = vpack.c.b16 %v957, %v953
    %v966 = vpack.c.b16 %v958, %v954
    %v967 = vpack.c.b16 %v959, %v955
    %v977 = vsel %vm114, %v927, 0
    %979 = vmatpush.bf16.msra.mxu0 0
    %980 = vmatpush.bf16.msra.mxu0 0
    %981 = vmatpush.bf16.msra.mxu0 0
    %982 = vmatpush.bf16.msra.mxu0 0
    %983 = vmatpush.bf16.msra.mxu0 0
    %984 = vmatpush.bf16.msra.mxu0 0
    %985 = vmatpush.bf16.msra.mxu0 %v964
    %986 = vmatpush.bf16.msra.mxu0 %v960
    %987 = vmatmul.bf16.gmra.mxu0 %v977
    %v988 = vpop.f32.mrf.mxu0
    %v989 = vadd.f32 0.0, %v988
    %v990 = vpop.f32.mrf.mxu0
    %991 = vdwg.mxu0
    %992 = vmatpush.bf16.msra.mxu0 0
    %993 = vmatpush.bf16.msra.mxu0 0
    %994 = vmatpush.bf16.msra.mxu0 0
    %995 = vmatpush.bf16.msra.mxu0 0
    %996 = vmatpush.bf16.msra.mxu0 0
    %997 = vmatpush.bf16.msra.mxu0 0
    %998 = vmatpush.bf16.msra.mxu0 %v965
    %999 = vmatpush.bf16.msra.mxu0 %v961
    %1000 = vmatmul.bf16.gmra.mxu0 %v977
    %v1001 = vpop.f32.mrf.mxu0
    %v1002 = vadd.f32 0.0, %v1001
    %v1003 = vpop.f32.mrf.mxu0
    %1004 = vdwg.mxu0
    %1005 = vmatpush.bf16.msra.mxu0 0
    %1006 = vmatpush.bf16.msra.mxu0 0
    %1007 = vmatpush.bf16.msra.mxu0 0
    %1008 = vmatpush.bf16.msra.mxu0 0
    %1009 = vmatpush.bf16.msra.mxu0 0
    %1010 = vmatpush.bf16.msra.mxu0 0
    %1011 = vmatpush.bf16.msra.mxu0 %v966
    %1012 = vmatpush.bf16.msra.mxu0 %v962
    %1013 = vmatmul.bf16.gmra.mxu0 %v977
    %v1014 = vpop.f32.mrf.mxu0
    %v1015 = vadd.f32 0.0, %v1014
    %v1016 = vpop.f32.mrf.mxu0
    %1017 = vdwg.mxu0
    %1018 = vmatpush.bf16.msra.mxu0 0
    %1019 = vmatpush.bf16.msra.mxu0 0
    %1020 = vmatpush.bf16.msra.mxu0 0
    %1021 = vmatpush.bf16.msra.mxu0 0
    %1022 = vmatpush.bf16.msra.mxu0 0
    %1023 = vmatpush.bf16.msra.mxu0 0
    %1024 = vmatpush.bf16.msra.mxu0 %v967
    %1025 = vmatpush.bf16.msra.mxu0 %v963
    %1026 = vmatmul.bf16.gmra.mxu0 %v977
    %v1027 = vpop.f32.mrf.mxu0
    %v1028 = vadd.f32 0.0, %v1027
    %v1029 = vpop.f32.mrf.mxu0
    %1030 = vdwg.mxu0
    %v1032 = vrot.slane %v1002, 1
    %v1034 = vadd.f32 %v989, %v1032
    %v1036 = vrot.slane %v1015, 2
    %v1038 = vadd.f32 %v1034, %v1036
    %v1040 = vrot.slane %v1028, 3
    %v1042 = vadd.f32 %v1038, %v1040
    %v1043 = vld [vmem:[%s2] sm:$0x1]
    %v1044 = vadd.f32 %v1042, %v1043
    %vm1045 = vcmp.gt.f32.partialorder %v1044, 0.0
    %v1046 = vmul.f32 %v1044, 0.2
    %v1047 = vsel %vm1045, %v1044, %v1046
    %1048 = vst [vmem:[#allocation2 + $0x8] sm:$0x1] %v1047
    %v1049 = vld [vmem:[%s0 + $0x10] sm:$0xf]
    %v1050 = vpack.c.bf16 %v1049, %v1049
    %v1051 = vld [vmem:[%s1] sm:$0xff]
    %v1052 = vld [vmem:[%s1 + $0x8] sm:$0xff]
    %v1053 = vld [vmem:[%s1 + $0x10] sm:$0xff]
    %v1054 = vld [vmem:[%s1 + $0x18] sm:$0xff]
    %v1055 = vld [vmem:[%s1 + $0x20] sm:$0xff]
    %v1056 = vld [vmem:[%s1 + $0x28] sm:$0xff]
    %v1057 = vld [vmem:[%s1 + $0x30] sm:$0xff]
    %v1058 = vld [vmem:[%s1 + $0x38] sm:$0xff]
    %v1067 = vunpack.c.l.b16 %v1051
    %v1068 = vunpack.c.h.b16 %v1051
    %v1069 = vunpack.c.l.b16 %v1052
    %v1070 = vunpack.c.h.b16 %v1052
    %v1071 = vunpack.c.l.b16 %v1053
    %v1072 = vunpack.c.h.b16 %v1053
    %v1073 = vunpack.c.l.b16 %v1054
    %v1074 = vunpack.c.h.b16 %v1054
    %v1075 = vunpack.c.l.b16 %v1055
    %v1076 = vunpack.c.h.b16 %v1055
    %v1077 = vunpack.c.l.b16 %v1056
    %v1078 = vunpack.c.h.b16 %v1056
    %v1079 = vunpack.c.l.b16 %v1057
    %v1080 = vunpack.c.h.b16 %v1057
    %v1081 = vunpack.c.l.b16 %v1058
    %v1082 = vunpack.c.h.b16 %v1058
    %v1083 = vpack.c.b16 %v1071, %v1067
    %v1084 = vpack.c.b16 %v1072, %v1068
    %v1085 = vpack.c.b16 %v1073, %v1069
    %v1086 = vpack.c.b16 %v1074, %v1070
    %v1087 = vpack.c.b16 %v1079, %v1075
    %v1088 = vpack.c.b16 %v1080, %v1076
    %v1089 = vpack.c.b16 %v1081, %v1077
    %v1090 = vpack.c.b16 %v1082, %v1078
    %v1100 = vsel %vm114, %v1050, 0
    %1102 = vmatpush.bf16.msra.mxu0 0
    %1103 = vmatpush.bf16.msra.mxu0 0
    %1104 = vmatpush.bf16.msra.mxu0 0
    %1105 = vmatpush.bf16.msra.mxu0 0
    %1106 = vmatpush.bf16.msra.mxu0 0
    %1107 = vmatpush.bf16.msra.mxu0 0
    %1108 = vmatpush.bf16.msra.mxu0 %v1087
    %1109 = vmatpush.bf16.msra.mxu0 %v1083
    %1110 = vmatmul.bf16.gmra.mxu0 %v1100
    %v1111 = vpop.f32.mrf.mxu0
    %v1112 = vadd.f32 0.0, %v1111
    %v1113 = vpop.f32.mrf.mxu0
    %1114 = vdwg.mxu0
    %1115 = vmatpush.bf16.msra.mxu0 0
    %1116 = vmatpush.bf16.msra.mxu0 0
    %1117 = vmatpush.bf16.msra.mxu0 0
    %1118 = vmatpush.bf16.msra.mxu0 0
    %1119 = vmatpush.bf16.msra.mxu0 0
    %1120 = vmatpush.bf16.msra.mxu0 0
    %1121 = vmatpush.bf16.msra.mxu0 %v1088
    %1122 = vmatpush.bf16.msra.mxu0 %v1084
    %1123 = vmatmul.bf16.gmra.mxu0 %v1100
    %v1124 = vpop.f32.mrf.mxu0
    %v1125 = vadd.f32 0.0, %v1124
    %v1126 = vpop.f32.mrf.mxu0
    %1127 = vdwg.mxu0
    %1128 = vmatpush.bf16.msra.mxu0 0
    %1129 = vmatpush.bf16.msra.mxu0 0
    %1130 = vmatpush.bf16.msra.mxu0 0
    %1131 = vmatpush.bf16.msra.mxu0 0
    %1132 = vmatpush.bf16.msra.mxu0 0
    %1133 = vmatpush.bf16.msra.mxu0 0
    %1134 = vmatpush.bf16.msra.mxu0 %v1089
    %1135 = vmatpush.bf16.msra.mxu0 %v1085
    %1136 = vmatmul.bf16.gmra.mxu0 %v1100
    %v1137 = vpop.f32.mrf.mxu0
    %v1138 = vadd.f32 0.0, %v1137
    %v1139 = vpop.f32.mrf.mxu0
    %1140 = vdwg.mxu0
    %1141 = vmatpush.bf16.msra.mxu0 0
    %1142 = vmatpush.bf16.msra.mxu0 0
    %1143 = vmatpush.bf16.msra.mxu0 0
    %1144 = vmatpush.bf16.msra.mxu0 0
    %1145 = vmatpush.bf16.msra.mxu0 0
    %1146 = vmatpush.bf16.msra.mxu0 0
    %1147 = vmatpush.bf16.msra.mxu0 %v1090
    %1148 = vmatpush.bf16.msra.mxu0 %v1086
    %1149 = vmatmul.bf16.gmra.mxu0 %v1100
    %v1150 = vpop.f32.mrf.mxu0
    %v1151 = vadd.f32 0.0, %v1150
    %v1152 = vpop.f32.mrf.mxu0
    %1153 = vdwg.mxu0
    %v1155 = vrot.slane %v1125, 1
    %v1157 = vadd.f32 %v1112, %v1155
    %v1159 = vrot.slane %v1138, 2
    %v1161 = vadd.f32 %v1157, %v1159
    %v1163 = vrot.slane %v1151, 3
    %v1165 = vadd.f32 %v1161, %v1163
    %v1166 = vld [vmem:[%s2] sm:$0x1]
    %v1167 = vadd.f32 %v1165, %v1166
    %vm1168 = vcmp.gt.f32.partialorder %v1167, 0.0
    %v1169 = vmul.f32 %v1167, 0.2
    %v1170 = vsel %vm1168, %v1167, %v1169
    %1171 = vst [vmem:[#allocation2 + $0x9] sm:$0x1] %v1170
    %v1172 = vld [vmem:[%s0 + $0x12] sm:$0xf]
    %v1173 = vpack.c.bf16 %v1172, %v1172
    %v1174 = vld [vmem:[%s1] sm:$0xff]
    %v1175 = vld [vmem:[%s1 + $0x8] sm:$0xff]
    %v1176 = vld [vmem:[%s1 + $0x10] sm:$0xff]
    %v1177 = vld [vmem:[%s1 + $0x18] sm:$0xff]
    %v1178 = vld [vmem:[%s1 + $0x20] sm:$0xff]
    %v1179 = vld [vmem:[%s1 + $0x28] sm:$0xff]
    %v1180 = vld [vmem:[%s1 + $0x30] sm:$0xff]
    %v1181 = vld [vmem:[%s1 + $0x38] sm:$0xff]
    %v1190 = vunpack.c.l.b16 %v1174
    %v1191 = vunpack.c.h.b16 %v1174
    %v1192 = vunpack.c.l.b16 %v1175
    %v1193 = vunpack.c.h.b16 %v1175
    %v1194 = vunpack.c.l.b16 %v1176
    %v1195 = vunpack.c.h.b16 %v1176
    %v1196 = vunpack.c.l.b16 %v1177
    %v1197 = vunpack.c.h.b16 %v1177
    %v1198 = vunpack.c.l.b16 %v1178
    %v1199 = vunpack.c.h.b16 %v1178
    %v1200 = vunpack.c.l.b16 %v1179
    %v1201 = vunpack.c.h.b16 %v1179
    %v1202 = vunpack.c.l.b16 %v1180
    %v1203 = vunpack.c.h.b16 %v1180
    %v1204 = vunpack.c.l.b16 %v1181
    %v1205 = vunpack.c.h.b16 %v1181
    %v1206 = vpack.c.b16 %v1194, %v1190
    %v1207 = vpack.c.b16 %v1195, %v1191
    %v1208 = vpack.c.b16 %v1196, %v1192
    %v1209 = vpack.c.b16 %v1197, %v1193
    %v1210 = vpack.c.b16 %v1202, %v1198
    %v1211 = vpack.c.b16 %v1203, %v1199
    %v1212 = vpack.c.b16 %v1204, %v1200
    %v1213 = vpack.c.b16 %v1205, %v1201
    %v1223 = vsel %vm114, %v1173, 0
    %1225 = vmatpush.bf16.msra.mxu0 0
    %1226 = vmatpush.bf16.msra.mxu0 0
    %1227 = vmatpush.bf16.msra.mxu0 0
    %1228 = vmatpush.bf16.msra.mxu0 0
    %1229 = vmatpush.bf16.msra.mxu0 0
    %1230 = vmatpush.bf16.msra.mxu0 0
    %1231 = vmatpush.bf16.msra.mxu0 %v1210
    %1232 = vmatpush.bf16.msra.mxu0 %v1206
    %1233 = vmatmul.bf16.gmra.mxu0 %v1223
    %v1234 = vpop.f32.mrf.mxu0
    %v1235 = vadd.f32 0.0, %v1234
    %v1236 = vpop.f32.mrf.mxu0
    %1237 = vdwg.mxu0
    %1238 = vmatpush.bf16.msra.mxu0 0
    %1239 = vmatpush.bf16.msra.mxu0 0
    %1240 = vmatpush.bf16.msra.mxu0 0
    %1241 = vmatpush.bf16.msra.mxu0 0
    %1242 = vmatpush.bf16.msra.mxu0 0
    %1243 = vmatpush.bf16.msra.mxu0 0
    %1244 = vmatpush.bf16.msra.mxu0 %v1211
    %1245 = vmatpush.bf16.msra.mxu0 %v1207
    %1246 = vmatmul.bf16.gmra.mxu0 %v1223
    %v1247 = vpop.f32.mrf.mxu0
    %v1248 = vadd.f32 0.0, %v1247
    %v1249 = vpop.f32.mrf.mxu0
    %1250 = vdwg.mxu0
    %1251 = vmatpush.bf16.msra.mxu0 0
    %1252 = vmatpush.bf16.msra.mxu0 0
    %1253 = vmatpush.bf16.msra.mxu0 0
    %1254 = vmatpush.bf16.msra.mxu0 0
    %1255 = vmatpush.bf16.msra.mxu0 0
    %1256 = vmatpush.bf16.msra.mxu0 0
    %1257 = vmatpush.bf16.msra.mxu0 %v1212
    %1258 = vmatpush.bf16.msra.mxu0 %v1208
    %1259 = vmatmul.bf16.gmra.mxu0 %v1223
    %v1260 = vpop.f32.mrf.mxu0
    %v1261 = vadd.f32 0.0, %v1260
    %v1262 = vpop.f32.mrf.mxu0
    %1263 = vdwg.mxu0
    %1264 = vmatpush.bf16.msra.mxu0 0
    %1265 = vmatpush.bf16.msra.mxu0 0
    %1266 = vmatpush.bf16.msra.mxu0 0
    %1267 = vmatpush.bf16.msra.mxu0 0
    %1268 = vmatpush.bf16.msra.mxu0 0
    %1269 = vmatpush.bf16.msra.mxu0 0
    %1270 = vmatpush.bf16.msra.mxu0 %v1213
    %1271 = vmatpush.bf16.msra.mxu0 %v1209
    %1272 = vmatmul.bf16.gmra.mxu0 %v1223
    %v1273 = vpop.f32.mrf.mxu0
    %v1274 = vadd.f32 0.0, %v1273
    %v1275 = vpop.f32.mrf.mxu0
    %1276 = vdwg.mxu0
    %v1278 = vrot.slane %v1248, 1
    %v1280 = vadd.f32 %v1235, %v1278
    %v1282 = vrot.slane %v1261, 2
    %v1284 = vadd.f32 %v1280, %v1282
    %v1286 = vrot.slane %v1274, 3
    %v1288 = vadd.f32 %v1284, %v1286
    %v1289 = vld [vmem:[%s2] sm:$0x1]
    %v1290 = vadd.f32 %v1288, %v1289
    %vm1291 = vcmp.gt.f32.partialorder %v1290, 0.0
    %v1292 = vmul.f32 %v1290, 0.2
    %v1293 = vsel %vm1291, %v1290, %v1292
    %1294 = vst [vmem:[#allocation2 + $0xa] sm:$0x1] %v1293
    %v1295 = vld [vmem:[%s0 + $0x14] sm:$0xf]
    %v1296 = vpack.c.bf16 %v1295, %v1295
    %v1297 = vld [vmem:[%s1] sm:$0xff]
    %v1298 = vld [vmem:[%s1 + $0x8] sm:$0xff]
    %v1299 = vld [vmem:[%s1 + $0x10] sm:$0xff]
    %v1300 = vld [vmem:[%s1 + $0x18] sm:$0xff]
    %v1301 = vld [vmem:[%s1 + $0x20] sm:$0xff]
    %v1302 = vld [vmem:[%s1 + $0x28] sm:$0xff]
    %v1303 = vld [vmem:[%s1 + $0x30] sm:$0xff]
    %v1304 = vld [vmem:[%s1 + $0x38] sm:$0xff]
    %v1313 = vunpack.c.l.b16 %v1297
    %v1314 = vunpack.c.h.b16 %v1297
    %v1315 = vunpack.c.l.b16 %v1298
    %v1316 = vunpack.c.h.b16 %v1298
    %v1317 = vunpack.c.l.b16 %v1299
    %v1318 = vunpack.c.h.b16 %v1299
    %v1319 = vunpack.c.l.b16 %v1300
    %v1320 = vunpack.c.h.b16 %v1300
    %v1321 = vunpack.c.l.b16 %v1301
    %v1322 = vunpack.c.h.b16 %v1301
    %v1323 = vunpack.c.l.b16 %v1302
    %v1324 = vunpack.c.h.b16 %v1302
    %v1325 = vunpack.c.l.b16 %v1303
    %v1326 = vunpack.c.h.b16 %v1303
    %v1327 = vunpack.c.l.b16 %v1304
    %v1328 = vunpack.c.h.b16 %v1304
    %v1329 = vpack.c.b16 %v1317, %v1313
    %v1330 = vpack.c.b16 %v1318, %v1314
    %v1331 = vpack.c.b16 %v1319, %v1315
    %v1332 = vpack.c.b16 %v1320, %v1316
    %v1333 = vpack.c.b16 %v1325, %v1321
    %v1334 = vpack.c.b16 %v1326, %v1322
    %v1335 = vpack.c.b16 %v1327, %v1323
    %v1336 = vpack.c.b16 %v1328, %v1324
    %v1346 = vsel %vm114, %v1296, 0
    %1348 = vmatpush.bf16.msra.mxu0 0
    %1349 = vmatpush.bf16.msra.mxu0 0
    %1350 = vmatpush.bf16.msra.mxu0 0
    %1351 = vmatpush.bf16.msra.mxu0 0
    %1352 = vmatpush.bf16.msra.mxu0 0
    %1353 = vmatpush.bf16.msra.mxu0 0
    %1354 = vmatpush.bf16.msra.mxu0 %v1333
    %1355 = vmatpush.bf16.msra.mxu0 %v1329
    %1356 = vmatmul.bf16.gmra.mxu0 %v1346
    %v1357 = vpop.f32.mrf.mxu0
    %v1358 = vadd.f32 0.0, %v1357
    %v1359 = vpop.f32.mrf.mxu0
    %1360 = vdwg.mxu0
    %1361 = vmatpush.bf16.msra.mxu0 0
    %1362 = vmatpush.bf16.msra.mxu0 0
    %1363 = vmatpush.bf16.msra.mxu0 0
    %1364 = vmatpush.bf16.msra.mxu0 0
    %1365 = vmatpush.bf16.msra.mxu0 0
    %1366 = vmatpush.bf16.msra.mxu0 0
    %1367 = vmatpush.bf16.msra.mxu0 %v1334
    %1368 = vmatpush.bf16.msra.mxu0 %v1330
    %1369 = vmatmul.bf16.gmra.mxu0 %v1346
    %v1370 = vpop.f32.mrf.mxu0
    %v1371 = vadd.f32 0.0, %v1370
    %v1372 = vpop.f32.mrf.mxu0
    %1373 = vdwg.mxu0
    %1374 = vmatpush.bf16.msra.mxu0 0
    %1375 = vmatpush.bf16.msra.mxu0 0
    %1376 = vmatpush.bf16.msra.mxu0 0
    %1377 = vmatpush.bf16.msra.mxu0 0
    %1378 = vmatpush.bf16.msra.mxu0 0
    %1379 = vmatpush.bf16.msra.mxu0 0
    %1380 = vmatpush.bf16.msra.mxu0 %v1335
    %1381 = vmatpush.bf16.msra.mxu0 %v1331
    %1382 = vmatmul.bf16.gmra.mxu0 %v1346
    %v1383 = vpop.f32.mrf.mxu0
    %v1384 = vadd.f32 0.0, %v1383
    %v1385 = vpop.f32.mrf.mxu0
    %1386 = vdwg.mxu0
    %1387 = vmatpush.bf16.msra.mxu0 0
    %1388 = vmatpush.bf16.msra.mxu0 0
    %1389 = vmatpush.bf16.msra.mxu0 0
    %1390 = vmatpush.bf16.msra.mxu0 0
    %1391 = vmatpush.bf16.msra.mxu0 0
    %1392 = vmatpush.bf16.msra.mxu0 0
    %1393 = vmatpush.bf16.msra.mxu0 %v1336
    %1394 = vmatpush.bf16.msra.mxu0 %v1332
    %1395 = vmatmul.bf16.gmra.mxu0 %v1346
    %v1396 = vpop.f32.mrf.mxu0
    %v1397 = vadd.f32 0.0, %v1396
    %v1398 = vpop.f32.mrf.mxu0
    %1399 = vdwg.mxu0
    %v1401 = vrot.slane %v1371, 1
    %v1403 = vadd.f32 %v1358, %v1401
    %v1405 = vrot.slane %v1384, 2
    %v1407 = vadd.f32 %v1403, %v1405
    %v1409 = vrot.slane %v1397, 3
    %v1411 = vadd.f32 %v1407, %v1409
    %v1412 = vld [vmem:[%s2] sm:$0x1]
    %v1413 = vadd.f32 %v1411, %v1412
    %vm1414 = vcmp.gt.f32.partialorder %v1413, 0.0
    %v1415 = vmul.f32 %v1413, 0.2
    %v1416 = vsel %vm1414, %v1413, %v1415
    %1417 = vst [vmem:[#allocation2 + $0xb] sm:$0x1] %v1416
    %v1418 = vld [vmem:[%s0 + $0x16] sm:$0xf]
    %v1419 = vpack.c.bf16 %v1418, %v1418
    %v1420 = vld [vmem:[%s1] sm:$0xff]
    %v1421 = vld [vmem:[%s1 + $0x8] sm:$0xff]
    %v1422 = vld [vmem:[%s1 + $0x10] sm:$0xff]
    %v1423 = vld [vmem:[%s1 + $0x18] sm:$0xff]
    %v1424 = vld [vmem:[%s1 + $0x20] sm:$0xff]
    %v1425 = vld [vmem:[%s1 + $0x28] sm:$0xff]
    %v1426 = vld [vmem:[%s1 + $0x30] sm:$0xff]
    %v1427 = vld [vmem:[%s1 + $0x38] sm:$0xff]
    %v1436 = vunpack.c.l.b16 %v1420
    %v1437 = vunpack.c.h.b16 %v1420
    %v1438 = vunpack.c.l.b16 %v1421
    %v1439 = vunpack.c.h.b16 %v1421
    %v1440 = vunpack.c.l.b16 %v1422
    %v1441 = vunpack.c.h.b16 %v1422
    %v1442 = vunpack.c.l.b16 %v1423
    %v1443 = vunpack.c.h.b16 %v1423
    %v1444 = vunpack.c.l.b16 %v1424
    %v1445 = vunpack.c.h.b16 %v1424
    %v1446 = vunpack.c.l.b16 %v1425
    %v1447 = vunpack.c.h.b16 %v1425
    %v1448 = vunpack.c.l.b16 %v1426
    %v1449 = vunpack.c.h.b16 %v1426
    %v1450 = vunpack.c.l.b16 %v1427
    %v1451 = vunpack.c.h.b16 %v1427
    %v1452 = vpack.c.b16 %v1440, %v1436
    %v1453 = vpack.c.b16 %v1441, %v1437
    %v1454 = vpack.c.b16 %v1442, %v1438
    %v1455 = vpack.c.b16 %v1443, %v1439
    %v1456 = vpack.c.b16 %v1448, %v1444
    %v1457 = vpack.c.b16 %v1449, %v1445
    %v1458 = vpack.c.b16 %v1450, %v1446
    %v1459 = vpack.c.b16 %v1451, %v1447
    %v1469 = vsel %vm114, %v1419, 0
    %1471 = vmatpush.bf16.msra.mxu0 0
    %1472 = vmatpush.bf16.msra.mxu0 0
    %1473 = vmatpush.bf16.msra.mxu0 0
    %1474 = vmatpush.bf16.msra.mxu0 0
    %1475 = vmatpush.bf16.msra.mxu0 0
    %1476 = vmatpush.bf16.msra.mxu0 0
    %1477 = vmatpush.bf16.msra.mxu0 %v1456
    %1478 = vmatpush.bf16.msra.mxu0 %v1452
    %1479 = vmatmul.bf16.gmra.mxu0 %v1469
    %v1480 = vpop.f32.mrf.mxu0
    %v1481 = vadd.f32 0.0, %v1480
    %v1482 = vpop.f32.mrf.mxu0
    %1483 = vdwg.mxu0
    %1484 = vmatpush.bf16.msra.mxu0 0
    %1485 = vmatpush.bf16.msra.mxu0 0
    %1486 = vmatpush.bf16.msra.mxu0 0
    %1487 = vmatpush.bf16.msra.mxu0 0
    %1488 = vmatpush.bf16.msra.mxu0 0
    %1489 = vmatpush.bf16.msra.mxu0 0
    %1490 = vmatpush.bf16.msra.mxu0 %v1457
    %1491 = vmatpush.bf16.msra.mxu0 %v1453
    %1492 = vmatmul.bf16.gmra.mxu0 %v1469
    %v1493 = vpop.f32.mrf.mxu0
    %v1494 = vadd.f32 0.0, %v1493
    %v1495 = vpop.f32.mrf.mxu0
    %1496 = vdwg.mxu0
    %1497 = vmatpush.bf16.msra.mxu0 0
    %1498 = vmatpush.bf16.msra.mxu0 0
    %1499 = vmatpush.bf16.msra.mxu0 0
    %1500 = vmatpush.bf16.msra.mxu0 0
    %1501 = vmatpush.bf16.msra.mxu0 0
    %1502 = vmatpush.bf16.msra.mxu0 0
    %1503 = vmatpush.bf16.msra.mxu0 %v1458
    %1504 = vmatpush.bf16.msra.mxu0 %v1454
    %1505 = vmatmul.bf16.gmra.mxu0 %v1469
    %v1506 = vpop.f32.mrf.mxu0
    %v1507 = vadd.f32 0.0, %v1506
    %v1508 = vpop.f32.mrf.mxu0
    %1509 = vdwg.mxu0
    %1510 = vmatpush.bf16.msra.mxu0 0
    %1511 = vmatpush.bf16.msra.mxu0 0
    %1512 = vmatpush.bf16.msra.mxu0 0
    %1513 = vmatpush.bf16.msra.mxu0 0
    %1514 = vmatpush.bf16.msra.mxu0 0
    %1515 = vmatpush.bf16.msra.mxu0 0
    %1516 = vmatpush.bf16.msra.mxu0 %v1459
    %1517 = vmatpush.bf16.msra.mxu0 %v1455
    %1518 = vmatmul.bf16.gmra.mxu0 %v1469
    %v1519 = vpop.f32.mrf.mxu0
    %v1520 = vadd.f32 0.0, %v1519
    %v1521 = vpop.f32.mrf.mxu0
    %1522 = vdwg.mxu0
    %v1524 = vrot.slane %v1494, 1
    %v1526 = vadd.f32 %v1481, %v1524
    %v1528 = vrot.slane %v1507, 2
    %v1530 = vadd.f32 %v1526, %v1528
    %v1532 = vrot.slane %v1520, 3
    %v1534 = vadd.f32 %v1530, %v1532
    %v1535 = vld [vmem:[%s2] sm:$0x1]
    %v1536 = vadd.f32 %v1534, %v1535
    %vm1537 = vcmp.gt.f32.partialorder %v1536, 0.0
    %v1538 = vmul.f32 %v1536, 0.2
    %v1539 = vsel %vm1537, %v1536, %v1538
    %1540 = vst [vmem:[#allocation2 + $0xc] sm:$0x1] %v1539
    %v1541 = vld [vmem:[%s0 + $0x18] sm:$0xf]
    %v1542 = vpack.c.bf16 %v1541, %v1541
    %v1543 = vld [vmem:[%s1] sm:$0xff]
    %v1544 = vld [vmem:[%s1 + $0x8] sm:$0xff]
    %v1545 = vld [vmem:[%s1 + $0x10] sm:$0xff]
    %v1546 = vld [vmem:[%s1 + $0x18] sm:$0xff]
    %v1547 = vld [vmem:[%s1 + $0x20] sm:$0xff]
    %v1548 = vld [vmem:[%s1 + $0x28] sm:$0xff]
    %v1549 = vld [vmem:[%s1 + $0x30] sm:$0xff]
    %v1550 = vld [vmem:[%s1 + $0x38] sm:$0xff]
    %v1559 = vunpack.c.l.b16 %v1543
    %v1560 = vunpack.c.h.b16 %v1543
    %v1561 = vunpack.c.l.b16 %v1544
    %v1562 = vunpack.c.h.b16 %v1544
    %v1563 = vunpack.c.l.b16 %v1545
    %v1564 = vunpack.c.h.b16 %v1545
    %v1565 = vunpack.c.l.b16 %v1546
    %v1566 = vunpack.c.h.b16 %v1546
    %v1567 = vunpack.c.l.b16 %v1547
    %v1568 = vunpack.c.h.b16 %v1547
    %v1569 = vunpack.c.l.b16 %v1548
    %v1570 = vunpack.c.h.b16 %v1548
    %v1571 = vunpack.c.l.b16 %v1549
    %v1572 = vunpack.c.h.b16 %v1549
    %v1573 = vunpack.c.l.b16 %v1550
    %v1574 = vunpack.c.h.b16 %v1550
    %v1575 = vpack.c.b16 %v1563, %v1559
    %v1576 = vpack.c.b16 %v1564, %v1560
    %v1577 = vpack.c.b16 %v1565, %v1561
    %v1578 = vpack.c.b16 %v1566, %v1562
    %v1579 = vpack.c.b16 %v1571, %v1567
    %v1580 = vpack.c.b16 %v1572, %v1568
    %v1581 = vpack.c.b16 %v1573, %v1569
    %v1582 = vpack.c.b16 %v1574, %v1570
    %v1592 = vsel %vm114, %v1542, 0
    %1594 = vmatpush.bf16.msra.mxu0 0
    %1595 = vmatpush.bf16.msra.mxu0 0
    %1596 = vmatpush.bf16.msra.mxu0 0
    %1597 = vmatpush.bf16.msra.mxu0 0
    %1598 = vmatpush.bf16.msra.mxu0 0
    %1599 = vmatpush.bf16.msra.mxu0 0
    %1600 = vmatpush.bf16.msra.mxu0 %v1579
    %1601 = vmatpush.bf16.msra.mxu0 %v1575
    %1602 = vmatmul.bf16.gmra.mxu0 %v1592
    %v1603 = vpop.f32.mrf.mxu0
    %v1604 = vadd.f32 0.0, %v1603
    %v1605 = vpop.f32.mrf.mxu0
    %1606 = vdwg.mxu0
    %1607 = vmatpush.bf16.msra.mxu0 0
    %1608 = vmatpush.bf16.msra.mxu0 0
    %1609 = vmatpush.bf16.msra.mxu0 0
    %1610 = vmatpush.bf16.msra.mxu0 0
    %1611 = vmatpush.bf16.msra.mxu0 0
    %1612 = vmatpush.bf16.msra.mxu0 0
    %1613 = vmatpush.bf16.msra.mxu0 %v1580
    %1614 = vmatpush.bf16.msra.mxu0 %v1576
    %1615 = vmatmul.bf16.gmra.mxu0 %v1592
    %v1616 = vpop.f32.mrf.mxu0
    %v1617 = vadd.f32 0.0, %v1616
    %v1618 = vpop.f32.mrf.mxu0
    %1619 = vdwg.mxu0
    %1620 = vmatpush.bf16.msra.mxu0 0
    %1621 = vmatpush.bf16.msra.mxu0 0
    %1622 = vmatpush.bf16.msra.mxu0 0
    %1623 = vmatpush.bf16.msra.mxu0 0
    %1624 = vmatpush.bf16.msra.mxu0 0
    %1625 = vmatpush.bf16.msra.mxu0 0
    %1626 = vmatpush.bf16.msra.mxu0 %v1581
    %1627 = vmatpush.bf16.msra.mxu0 %v1577
    %1628 = vmatmul.bf16.gmra.mxu0 %v1592
    %v1629 = vpop.f32.mrf.mxu0
    %v1630 = vadd.f32 0.0, %v1629
    %v1631 = vpop.f32.mrf.mxu0
    %1632 = vdwg.mxu0
    %1633 = vmatpush.bf16.msra.mxu0 0
    %1634 = vmatpush.bf16.msra.mxu0 0
    %1635 = vmatpush.bf16.msra.mxu0 0
    %1636 = vmatpush.bf16.msra.mxu0 0
    %1637 = vmatpush.bf16.msra.mxu0 0
    %1638 = vmatpush.bf16.msra.mxu0 0
    %1639 = vmatpush.bf16.msra.mxu0 %v1582
    %1640 = vmatpush.bf16.msra.mxu0 %v1578
    %1641 = vmatmul.bf16.gmra.mxu0 %v1592
    %v1642 = vpop.f32.mrf.mxu0
    %v1643 = vadd.f32 0.0, %v1642
    %v1644 = vpop.f32.mrf.mxu0
    %1645 = vdwg.mxu0
    %v1647 = vrot.slane %v1617, 1
    %v1649 = vadd.f32 %v1604, %v1647
    %v1651 = vrot.slane %v1630, 2
    %v1653 = vadd.f32 %v1649, %v1651
    %v1655 = vrot.slane %v1643, 3
    %v1657 = vadd.f32 %v1653, %v1655
    %v1658 = vld [vmem:[%s2] sm:$0x1]
    %v1659 = vadd.f32 %v1657, %v1658
    %vm1660 = vcmp.gt.f32.partialorder %v1659, 0.0
    %v1661 = vmul.f32 %v1659, 0.2
    %v1662 = vsel %vm1660, %v1659, %v1661
    %1663 = vst [vmem:[#allocation2 + $0xd] sm:$0x1] %v1662
    %v1664 = vld [vmem:[%s0 + $0x1a] sm:$0xf]
    %v1665 = vpack.c.bf16 %v1664, %v1664
    %v1666 = vld [vmem:[%s1] sm:$0xff]
    %v1667 = vld [vmem:[%s1 + $0x8] sm:$0xff]
    %v1668 = vld [vmem:[%s1 + $0x10] sm:$0xff]
    %v1669 = vld [vmem:[%s1 + $0x18] sm:$0xff]
    %v1670 = vld [vmem:[%s1 + $0x20] sm:$0xff]
    %v1671 = vld [vmem:[%s1 + $0x28] sm:$0xff]
    %v1672 = vld [vmem:[%s1 + $0x30] sm:$0xff]
    %v1673 = vld [vmem:[%s1 + $0x38] sm:$0xff]
    %v1682 = vunpack.c.l.b16 %v1666
    %v1683 = vunpack.c.h.b16 %v1666
    %v1684 = vunpack.c.l.b16 %v1667
    %v1685 = vunpack.c.h.b16 %v1667
    %v1686 = vunpack.c.l.b16 %v1668
    %v1687 = vunpack.c.h.b16 %v1668
    %v1688 = vunpack.c.l.b16 %v1669
    %v1689 = vunpack.c.h.b16 %v1669
    %v1690 = vunpack.c.l.b16 %v1670
    %v1691 = vunpack.c.h.b16 %v1670
    %v1692 = vunpack.c.l.b16 %v1671
    %v1693 = vunpack.c.h.b16 %v1671
    %v1694 = vunpack.c.l.b16 %v1672
    %v1695 = vunpack.c.h.b16 %v1672
    %v1696 = vunpack.c.l.b16 %v1673
    %v1697 = vunpack.c.h.b16 %v1673
    %v1698 = vpack.c.b16 %v1686, %v1682
    %v1699 = vpack.c.b16 %v1687, %v1683
    %v1700 = vpack.c.b16 %v1688, %v1684
    %v1701 = vpack.c.b16 %v1689, %v1685
    %v1702 = vpack.c.b16 %v1694, %v1690
    %v1703 = vpack.c.b16 %v1695, %v1691
    %v1704 = vpack.c.b16 %v1696, %v1692
    %v1705 = vpack.c.b16 %v1697, %v1693
    %v1715 = vsel %vm114, %v1665, 0
    %1717 = vmatpush.bf16.msra.mxu0 0
    %1718 = vmatpush.bf16.msra.mxu0 0
    %1719 = vmatpush.bf16.msra.mxu0 0
    %1720 = vmatpush.bf16.msra.mxu0 0
    %1721 = vmatpush.bf16.msra.mxu0 0
    %1722 = vmatpush.bf16.msra.mxu0 0
    %1723 = vmatpush.bf16.msra.mxu0 %v1702
    %1724 = vmatpush.bf16.msra.mxu0 %v1698
    %1725 = vmatmul.bf16.gmra.mxu0 %v1715
    %v1726 = vpop.f32.mrf.mxu0
    %v1727 = vadd.f32 0.0, %v1726
    %v1728 = vpop.f32.mrf.mxu0
    %1729 = vdwg.mxu0
    %1730 = vmatpush.bf16.msra.mxu0 0
    %1731 = vmatpush.bf16.msra.mxu0 0
    %1732 = vmatpush.bf16.msra.mxu0 0
    %1733 = vmatpush.bf16.msra.mxu0 0
    %1734 = vmatpush.bf16.msra.mxu0 0
    %1735 = vmatpush.bf16.msra.mxu0 0
    %1736 = vmatpush.bf16.msra.mxu0 %v1703
    %1737 = vmatpush.bf16.msra.mxu0 %v1699
    %1738 = vmatmul.bf16.gmra.mxu0 %v1715
    %v1739 = vpop.f32.mrf.mxu0
    %v1740 = vadd.f32 0.0, %v1739
    %v1741 = vpop.f32.mrf.mxu0
    %1742 = vdwg.mxu0
    %1743 = vmatpush.bf16.msra.mxu0 0
    %1744 = vmatpush.bf16.msra.mxu0 0
    %1745 = vmatpush.bf16.msra.mxu0 0
    %1746 = vmatpush.bf16.msra.mxu0 0
    %1747 = vmatpush.bf16.msra.mxu0 0
    %1748 = vmatpush.bf16.msra.mxu0 0
    %1749 = vmatpush.bf16.msra.mxu0 %v1704
    %1750 = vmatpush.bf16.msra.mxu0 %v1700
    %1751 = vmatmul.bf16.gmra.mxu0 %v1715
    %v1752 = vpop.f32.mrf.mxu0
    %v1753 = vadd.f32 0.0, %v1752
    %v1754 = vpop.f32.mrf.mxu0
    %1755 = vdwg.mxu0
    %1756 = vmatpush.bf16.msra.mxu0 0
    %1757 = vmatpush.bf16.msra.mxu0 0
    %1758 = vmatpush.bf16.msra.mxu0 0
    %1759 = vmatpush.bf16.msra.mxu0 0
    %1760 = vmatpush.bf16.msra.mxu0 0
    %1761 = vmatpush.bf16.msra.mxu0 0
    %1762 = vmatpush.bf16.msra.mxu0 %v1705
    %1763 = vmatpush.bf16.msra.mxu0 %v1701
    %1764 = vmatmul.bf16.gmra.mxu0 %v1715
    %v1765 = vpop.f32.mrf.mxu0
    %v1766 = vadd.f32 0.0, %v1765
    %v1767 = vpop.f32.mrf.mxu0
    %1768 = vdwg.mxu0
    %v1770 = vrot.slane %v1740, 1
    %v1772 = vadd.f32 %v1727, %v1770
    %v1774 = vrot.slane %v1753, 2
    %v1776 = vadd.f32 %v1772, %v1774
    %v1778 = vrot.slane %v1766, 3
    %v1780 = vadd.f32 %v1776, %v1778
    %v1781 = vld [vmem:[%s2] sm:$0x1]
    %v1782 = vadd.f32 %v1780, %v1781
    %vm1783 = vcmp.gt.f32.partialorder %v1782, 0.0
    %v1784 = vmul.f32 %v1782, 0.2
    %v1785 = vsel %vm1783, %v1782, %v1784
    %1786 = vst [vmem:[#allocation2 + $0xe] sm:$0x1] %v1785
    %v1787 = vld [vmem:[%s0 + $0x1c] sm:$0xf]
    %v1788 = vpack.c.bf16 %v1787, %v1787
    %v1789 = vld [vmem:[%s1] sm:$0xff]
    %v1790 = vld [vmem:[%s1 + $0x8] sm:$0xff]
    %v1791 = vld [vmem:[%s1 + $0x10] sm:$0xff]
    %v1792 = vld [vmem:[%s1 + $0x18] sm:$0xff]
    %v1793 = vld [vmem:[%s1 + $0x20] sm:$0xff]
    %v1794 = vld [vmem:[%s1 + $0x28] sm:$0xff]
    %v1795 = vld [vmem:[%s1 + $0x30] sm:$0xff]
    %v1796 = vld [vmem:[%s1 + $0x38] sm:$0xff]
    %v1805 = vunpack.c.l.b16 %v1789
    %v1806 = vunpack.c.h.b16 %v1789
    %v1807 = vunpack.c.l.b16 %v1790
    %v1808 = vunpack.c.h.b16 %v1790
    %v1809 = vunpack.c.l.b16 %v1791
    %v1810 = vunpack.c.h.b16 %v1791
    %v1811 = vunpack.c.l.b16 %v1792
    %v1812 = vunpack.c.h.b16 %v1792
    %v1813 = vunpack.c.l.b16 %v1793
    %v1814 = vunpack.c.h.b16 %v1793
    %v1815 = vunpack.c.l.b16 %v1794
    %v1816 = vunpack.c.h.b16 %v1794
    %v1817 = vunpack.c.l.b16 %v1795
    %v1818 = vunpack.c.h.b16 %v1795
    %v1819 = vunpack.c.l.b16 %v1796
    %v1820 = vunpack.c.h.b16 %v1796
    %v1821 = vpack.c.b16 %v1809, %v1805
    %v1822 = vpack.c.b16 %v1810, %v1806
    %v1823 = vpack.c.b16 %v1811, %v1807
    %v1824 = vpack.c.b16 %v1812, %v1808
    %v1825 = vpack.c.b16 %v1817, %v1813
    %v1826 = vpack.c.b16 %v1818, %v1814
    %v1827 = vpack.c.b16 %v1819, %v1815
    %v1828 = vpack.c.b16 %v1820, %v1816
    %v1838 = vsel %vm114, %v1788, 0
    %1840 = vmatpush.bf16.msra.mxu0 0
    %1841 = vmatpush.bf16.msra.mxu0 0
    %1842 = vmatpush.bf16.msra.mxu0 0
    %1843 = vmatpush.bf16.msra.mxu0 0
    %1844 = vmatpush.bf16.msra.mxu0 0
    %1845 = vmatpush.bf16.msra.mxu0 0
    %1846 = vmatpush.bf16.msra.mxu0 %v1825
    %1847 = vmatpush.bf16.msra.mxu0 %v1821
    %1848 = vmatmul.bf16.gmra.mxu0 %v1838
    %v1849 = vpop.f32.mrf.mxu0
    %v1850 = vadd.f32 0.0, %v1849
    %v1851 = vpop.f32.mrf.mxu0
    %1852 = vdwg.mxu0
    %1853 = vmatpush.bf16.msra.mxu0 0
    %1854 = vmatpush.bf16.msra.mxu0 0
    %1855 = vmatpush.bf16.msra.mxu0 0
    %1856 = vmatpush.bf16.msra.mxu0 0
    %1857 = vmatpush.bf16.msra.mxu0 0
    %1858 = vmatpush.bf16.msra.mxu0 0
    %1859 = vmatpush.bf16.msra.mxu0 %v1826
    %1860 = vmatpush.bf16.msra.mxu0 %v1822
    %1861 = vmatmul.bf16.gmra.mxu0 %v1838
    %v1862 = vpop.f32.mrf.mxu0
    %v1863 = vadd.f32 0.0, %v1862
    %v1864 = vpop.f32.mrf.mxu0
    %1865 = vdwg.mxu0
    %1866 = vmatpush.bf16.msra.mxu0 0
    %1867 = vmatpush.bf16.msra.mxu0 0
    %1868 = vmatpush.bf16.msra.mxu0 0
    %1869 = vmatpush.bf16.msra.mxu0 0
    %1870 = vmatpush.bf16.msra.mxu0 0
    %1871 = vmatpush.bf16.msra.mxu0 0
    %1872 = vmatpush.bf16.msra.mxu0 %v1827
    %1873 = vmatpush.bf16.msra.mxu0 %v1823
    %1874 = vmatmul.bf16.gmra.mxu0 %v1838
    %v1875 = vpop.f32.mrf.mxu0
    %v1876 = vadd.f32 0.0, %v1875
    %v1877 = vpop.f32.mrf.mxu0
    %1878 = vdwg.mxu0
    %1879 = vmatpush.bf16.msra.mxu0 0
    %1880 = vmatpush.bf16.msra.mxu0 0
    %1881 = vmatpush.bf16.msra.mxu0 0
    %1882 = vmatpush.bf16.msra.mxu0 0
    %1883 = vmatpush.bf16.msra.mxu0 0
    %1884 = vmatpush.bf16.msra.mxu0 0
    %1885 = vmatpush.bf16.msra.mxu0 %v1828
    %1886 = vmatpush.bf16.msra.mxu0 %v1824
    %1887 = vmatmul.bf16.gmra.mxu0 %v1838
    %v1888 = vpop.f32.mrf.mxu0
    %v1889 = vadd.f32 0.0, %v1888
    %v1890 = vpop.f32.mrf.mxu0
    %1891 = vdwg.mxu0
    %v1893 = vrot.slane %v1863, 1
    %v1895 = vadd.f32 %v1850, %v1893
    %v1897 = vrot.slane %v1876, 2
    %v1899 = vadd.f32 %v1895, %v1897
    %v1901 = vrot.slane %v1889, 3
    %v1903 = vadd.f32 %v1899, %v1901
    %v1904 = vld [vmem:[%s2] sm:$0x1]
    %v1905 = vadd.f32 %v1903, %v1904
    %vm1906 = vcmp.gt.f32.partialorder %v1905, 0.0
    %v1907 = vmul.f32 %v1905, 0.2
    %v1908 = vsel %vm1906, %v1905, %v1907
    %1909 = vst [vmem:[#allocation2 + $0xf] sm:$0x1] %v1908
    %v1910 = vld [vmem:[%s0 + $0x1e] sm:$0xf]
    %v1911 = vpack.c.bf16 %v1910, %v1910
    %v1912 = vld [vmem:[%s1] sm:$0xff]
    %v1913 = vld [vmem:[%s1 + $0x8] sm:$0xff]
    %v1914 = vld [vmem:[%s1 + $0x10] sm:$0xff]
    %v1915 = vld [vmem:[%s1 + $0x18] sm:$0xff]
    %v1916 = vld [vmem:[%s1 + $0x20] sm:$0xff]
    %v1917 = vld [vmem:[%s1 + $0x28] sm:$0xff]
    %v1918 = vld [vmem:[%s1 + $0x30] sm:$0xff]
    %v1919 = vld [vmem:[%s1 + $0x38] sm:$0xff]
    %v1928 = vunpack.c.l.b16 %v1912
    %v1929 = vunpack.c.h.b16 %v1912
    %v1930 = vunpack.c.l.b16 %v1913
    %v1931 = vunpack.c.h.b16 %v1913
    %v1932 = vunpack.c.l.b16 %v1914
    %v1933 = vunpack.c.h.b16 %v1914
    %v1934 = vunpack.c.l.b16 %v1915
    %v1935 = vunpack.c.h.b16 %v1915
    %v1936 = vunpack.c.l.b16 %v1916
    %v1937 = vunpack.c.h.b16 %v1916
    %v1938 = vunpack.c.l.b16 %v1917
    %v1939 = vunpack.c.h.b16 %v1917
    %v1940 = vunpack.c.l.b16 %v1918
    %v1941 = vunpack.c.h.b16 %v1918
    %v1942 = vunpack.c.l.b16 %v1919
    %v1943 = vunpack.c.h.b16 %v1919
    %v1944 = vpack.c.b16 %v1932, %v1928
    %v1945 = vpack.c.b16 %v1933, %v1929
    %v1946 = vpack.c.b16 %v1934, %v1930
    %v1947 = vpack.c.b16 %v1935, %v1931
    %v1948 = vpack.c.b16 %v1940, %v1936
    %v1949 = vpack.c.b16 %v1941, %v1937
    %v1950 = vpack.c.b16 %v1942, %v1938
    %v1951 = vpack.c.b16 %v1943, %v1939
    %v1961 = vsel %vm114, %v1911, 0
    %1963 = vmatpush.bf16.msra.mxu0 0
    %1964 = vmatpush.bf16.msra.mxu0 0
    %1965 = vmatpush.bf16.msra.mxu0 0
    %1966 = vmatpush.bf16.msra.mxu0 0
    %1967 = vmatpush.bf16.msra.mxu0 0
    %1968 = vmatpush.bf16.msra.mxu0 0
    %1969 = vmatpush.bf16.msra.mxu0 %v1948
    %1970 = vmatpush.bf16.msra.mxu0 %v1944
    %1971 = vmatmul.bf16.gmra.mxu0 %v1961
    %v1972 = vpop.f32.mrf.mxu0
    %v1973 = vadd.f32 0.0, %v1972
    %v1974 = vpop.f32.mrf.mxu0
    %1975 = vdwg.mxu0
    %1976 = vmatpush.bf16.msra.mxu0 0
    %1977 = vmatpush.bf16.msra.mxu0 0
    %1978 = vmatpush.bf16.msra.mxu0 0
    %1979 = vmatpush.bf16.msra.mxu0 0
    %1980 = vmatpush.bf16.msra.mxu0 0
    %1981 = vmatpush.bf16.msra.mxu0 0
    %1982 = vmatpush.bf16.msra.mxu0 %v1949
    %1983 = vmatpush.bf16.msra.mxu0 %v1945
    %1984 = vmatmul.bf16.gmra.mxu0 %v1961
    %v1985 = vpop.f32.mrf.mxu0
    %v1986 = vadd.f32 0.0, %v1985
    %v1987 = vpop.f32.mrf.mxu0
    %1988 = vdwg.mxu0
    %1989 = vmatpush.bf16.msra.mxu0 0
    %1990 = vmatpush.bf16.msra.mxu0 0
    %1991 = vmatpush.bf16.msra.mxu0 0
    %1992 = vmatpush.bf16.msra.mxu0 0
    %1993 = vmatpush.bf16.msra.mxu0 0
    %1994 = vmatpush.bf16.msra.mxu0 0
    %1995 = vmatpush.bf16.msra.mxu0 %v1950
    %1996 = vmatpush.bf16.msra.mxu0 %v1946
    %1997 = vmatmul.bf16.gmra.mxu0 %v1961
    %v1998 = vpop.f32.mrf.mxu0
    %v1999 = vadd.f32 0.0, %v1998
    %v2000 = vpop.f32.mrf.mxu0
    %2001 = vdwg.mxu0
    %2002 = vmatpush.bf16.msra.mxu0 0
    %2003 = vmatpush.bf16.msra.mxu0 0
    %2004 = vmatpush.bf16.msra.mxu0 0
    %2005 = vmatpush.bf16.msra.mxu0 0
    %2006 = vmatpush.bf16.msra.mxu0 0
    %2007 = vmatpush.bf16.msra.mxu0 0
    %2008 = vmatpush.bf16.msra.mxu0 %v1951
    %2009 = vmatpush.bf16.msra.mxu0 %v1947
    %2010 = vmatmul.bf16.gmra.mxu0 %v1961
    %v2011 = vpop.f32.mrf.mxu0
    %v2012 = vadd.f32 0.0, %v2011
    %v2013 = vpop.f32.mrf.mxu0
    %2014 = vdwg.mxu0
    %v2016 = vrot.slane %v1986, 1
    %v2018 = vadd.f32 %v1973, %v2016
    %v2020 = vrot.slane %v1999, 2
    %v2022 = vadd.f32 %v2018, %v2020
    %v2024 = vrot.slane %v2012, 3
    %v2026 = vadd.f32 %v2022, %v2024
    %v2027 = vld [vmem:[%s2] sm:$0x1]
    %v2028 = vadd.f32 %v2026, %v2027
    %vm2029 = vcmp.gt.f32.partialorder %v2028, 0.0
    %v2030 = vmul.f32 %v2028, 0.2
    %v2031 = vsel %vm2029, %v2028, %v2030
    %2032 = vst [vmem:[#allocation2 + $0x10] sm:$0x1] %v2031
    %v2033 = vld [vmem:[%s0 + $0x22] sm:$0xf]
    %v2034 = vpack.c.bf16 %v2033, %v2033
    %v2035 = vld [vmem:[%s1] sm:$0xff]
    %v2036 = vld [vmem:[%s1 + $0x8] sm:$0xff]
    %v2037 = vld [vmem:[%s1 + $0x10] sm:$0xff]
    %v2038 = vld [vmem:[%s1 + $0x18] sm:$0xff]
    %v2039 = vld [vmem:[%s1 + $0x20] sm:$0xff]
    %v2040 = vld [vmem:[%s1 + $0x28] sm:$0xff]
    %v2041 = vld [vmem:[%s1 + $0x30] sm:$0xff]
    %v2042 = vld [vmem:[%s1 + $0x38] sm:$0xff]
    %v2051 = vunpack.c.l.b16 %v2035
    %v2052 = vunpack.c.h.b16 %v2035
    %v2053 = vunpack.c.l.b16 %v2036
    %v2054 = vunpack.c.h.b16 %v2036
    %v2055 = vunpack.c.l.b16 %v2037
    %v2056 = vunpack.c.h.b16 %v2037
    %v2057 = vunpack.c.l.b16 %v2038
    %v2058 = vunpack.c.h.b16 %v2038
    %v2059 = vunpack.c.l.b16 %v2039
    %v2060 = vunpack.c.h.b16 %v2039
    %v2061 = vunpack.c.l.b16 %v2040
    %v2062 = vunpack.c.h.b16 %v2040
    %v2063 = vunpack.c.l.b16 %v2041
    %v2064 = vunpack.c.h.b16 %v2041
    %v2065 = vunpack.c.l.b16 %v2042
    %v2066 = vunpack.c.h.b16 %v2042
    %v2067 = vpack.c.b16 %v2055, %v2051
    %v2068 = vpack.c.b16 %v2056, %v2052
    %v2069 = vpack.c.b16 %v2057, %v2053
    %v2070 = vpack.c.b16 %v2058, %v2054
    %v2071 = vpack.c.b16 %v2063, %v2059
    %v2072 = vpack.c.b16 %v2064, %v2060
    %v2073 = vpack.c.b16 %v2065, %v2061
    %v2074 = vpack.c.b16 %v2066, %v2062
    %v2084 = vsel %vm114, %v2034, 0
    %2086 = vmatpush.bf16.msra.mxu0 0
    %2087 = vmatpush.bf16.msra.mxu0 0
    %2088 = vmatpush.bf16.msra.mxu0 0
    %2089 = vmatpush.bf16.msra.mxu0 0
    %2090 = vmatpush.bf16.msra.mxu0 0
    %2091 = vmatpush.bf16.msra.mxu0 0
    %2092 = vmatpush.bf16.msra.mxu0 %v2071
    %2093 = vmatpush.bf16.msra.mxu0 %v2067
    %2094 = vmatmul.bf16.gmra.mxu0 %v2084
    %v2095 = vpop.f32.mrf.mxu0
    %v2096 = vadd.f32 0.0, %v2095
    %v2097 = vpop.f32.mrf.mxu0
    %2098 = vdwg.mxu0
    %2099 = vmatpush.bf16.msra.mxu0 0
    %2100 = vmatpush.bf16.msra.mxu0 0
    %2101 = vmatpush.bf16.msra.mxu0 0
    %2102 = vmatpush.bf16.msra.mxu0 0
    %2103 = vmatpush.bf16.msra.mxu0 0
    %2104 = vmatpush.bf16.msra.mxu0 0
    %2105 = vmatpush.bf16.msra.mxu0 %v2072
    %2106 = vmatpush.bf16.msra.mxu0 %v2068
    %2107 = vmatmul.bf16.gmra.mxu0 %v2084
    %v2108 = vpop.f32.mrf.mxu0
    %v2109 = vadd.f32 0.0, %v2108
    %v2110 = vpop.f32.mrf.mxu0
    %2111 = vdwg.mxu0
    %2112 = vmatpush.bf16.msra.mxu0 0
    %2113 = vmatpush.bf16.msra.mxu0 0
    %2114 = vmatpush.bf16.msra.mxu0 0
    %2115 = vmatpush.bf16.msra.mxu0 0
    %2116 = vmatpush.bf16.msra.mxu0 0
    %2117 = vmatpush.bf16.msra.mxu0 0
    %2118 = vmatpush.bf16.msra.mxu0 %v2073
    %2119 = vmatpush.bf16.msra.mxu0 %v2069
    %2120 = vmatmul.bf16.gmra.mxu0 %v2084
    %v2121 = vpop.f32.mrf.mxu0
    %v2122 = vadd.f32 0.0, %v2121
    %v2123 = vpop.f32.mrf.mxu0
    %2124 = vdwg.mxu0
    %2125 = vmatpush.bf16.msra.mxu0 0
    %2126 = vmatpush.bf16.msra.mxu0 0
    %2127 = vmatpush.bf16.msra.mxu0 0
    %2128 = vmatpush.bf16.msra.mxu0 0
    %2129 = vmatpush.bf16.msra.mxu0 0
    %2130 = vmatpush.bf16.msra.mxu0 0
    %2131 = vmatpush.bf16.msra.mxu0 %v2074
    %2132 = vmatpush.bf16.msra.mxu0 %v2070
    %2133 = vmatmul.bf16.gmra.mxu0 %v2084
    %v2134 = vpop.f32.mrf.mxu0
    %v2135 = vadd.f32 0.0, %v2134
    %v2136 = vpop.f32.mrf.mxu0
    %2137 = vdwg.mxu0
    %v2139 = vrot.slane %v2109, 1
    %v2141 = vadd.f32 %v2096, %v2139
    %v2143 = vrot.slane %v2122, 2
    %v2145 = vadd.f32 %v2141, %v2143
    %v2147 = vrot.slane %v2135, 3
    %v2149 = vadd.f32 %v2145, %v2147
    %v2150 = vld [vmem:[%s2] sm:$0x1]
    %v2151 = vadd.f32 %v2149, %v2150
    %vm2152 = vcmp.gt.f32.partialorder %v2151, 0.0
    %v2153 = vmul.f32 %v2151, 0.2
    %v2154 = vsel %vm2152, %v2151, %v2153
    %2155 = vst [vmem:[#allocation2 + $0x13] sm:$0x1] %v2154
    %v2156 = vld [vmem:[%s0 + $0x24] sm:$0xf]
    %v2157 = vpack.c.bf16 %v2156, %v2156
    %v2158 = vld [vmem:[%s1] sm:$0xff]
    %v2159 = vld [vmem:[%s1 + $0x8] sm:$0xff]
    %v2160 = vld [vmem:[%s1 + $0x10] sm:$0xff]
    %v2161 = vld [vmem:[%s1 + $0x18] sm:$0xff]
    %v2162 = vld [vmem:[%s1 + $0x20] sm:$0xff]
    %v2163 = vld [vmem:[%s1 + $0x28] sm:$0xff]
    %v2164 = vld [vmem:[%s1 + $0x30] sm:$0xff]
    %v2165 = vld [vmem:[%s1 + $0x38] sm:$0xff]
    %v2174 = vunpack.c.l.b16 %v2158
    %v2175 = vunpack.c.h.b16 %v2158
    %v2176 = vunpack.c.l.b16 %v2159
    %v2177 = vunpack.c.h.b16 %v2159
    %v2178 = vunpack.c.l.b16 %v2160
    %v2179 = vunpack.c.h.b16 %v2160
    %v2180 = vunpack.c.l.b16 %v2161
    %v2181 = vunpack.c.h.b16 %v2161
    %v2182 = vunpack.c.l.b16 %v2162
    %v2183 = vunpack.c.h.b16 %v2162
    %v2184 = vunpack.c.l.b16 %v2163
    %v2185 = vunpack.c.h.b16 %v2163
    %v2186 = vunpack.c.l.b16 %v2164
    %v2187 = vunpack.c.h.b16 %v2164
    %v2188 = vunpack.c.l.b16 %v2165
    %v2189 = vunpack.c.h.b16 %v2165
    %v2190 = vpack.c.b16 %v2178, %v2174
    %v2191 = vpack.c.b16 %v2179, %v2175
    %v2192 = vpack.c.b16 %v2180, %v2176
    %v2193 = vpack.c.b16 %v2181, %v2177
    %v2194 = vpack.c.b16 %v2186, %v2182
    %v2195 = vpack.c.b16 %v2187, %v2183
    %v2196 = vpack.c.b16 %v2188, %v2184
    %v2197 = vpack.c.b16 %v2189, %v2185
    %v2207 = vsel %vm114, %v2157, 0
    %2209 = vmatpush.bf16.msra.mxu0 0
    %2210 = vmatpush.bf16.msra.mxu0 0
    %2211 = vmatpush.bf16.msra.mxu0 0
    %2212 = vmatpush.bf16.msra.mxu0 0
    %2213 = vmatpush.bf16.msra.mxu0 0
    %2214 = vmatpush.bf16.msra.mxu0 0
    %2215 = vmatpush.bf16.msra.mxu0 %v2194
    %2216 = vmatpush.bf16.msra.mxu0 %v2190
    %2217 = vmatmul.bf16.gmra.mxu0 %v2207
    %v2218 = vpop.f32.mrf.mxu0
    %v2219 = vadd.f32 0.0, %v2218
    %v2220 = vpop.f32.mrf.mxu0
    %2221 = vdwg.mxu0
    %2222 = vmatpush.bf16.msra.mxu0 0
    %2223 = vmatpush.bf16.msra.mxu0 0
    %2224 = vmatpush.bf16.msra.mxu0 0
    %2225 = vmatpush.bf16.msra.mxu0 0
    %2226 = vmatpush.bf16.msra.mxu0 0
    %2227 = vmatpush.bf16.msra.mxu0 0
    %2228 = vmatpush.bf16.msra.mxu0 %v2195
    %2229 = vmatpush.bf16.msra.mxu0 %v2191
    %2230 = vmatmul.bf16.gmra.mxu0 %v2207
    %v2231 = vpop.f32.mrf.mxu0
    %v2232 = vadd.f32 0.0, %v2231
    %v2233 = vpop.f32.mrf.mxu0
    %2234 = vdwg.mxu0
    %2235 = vmatpush.bf16.msra.mxu0 0
    %2236 = vmatpush.bf16.msra.mxu0 0
    %2237 = vmatpush.bf16.msra.mxu0 0
    %2238 = vmatpush.bf16.msra.mxu0 0
    %2239 = vmatpush.bf16.msra.mxu0 0
    %2240 = vmatpush.bf16.msra.mxu0 0
    %2241 = vmatpush.bf16.msra.mxu0 %v2196
    %2242 = vmatpush.bf16.msra.mxu0 %v2192
    %2243 = vmatmul.bf16.gmra.mxu0 %v2207
    %v2244 = vpop.f32.mrf.mxu0
    %v2245 = vadd.f32 0.0, %v2244
    %v2246 = vpop.f32.mrf.mxu0
    %2247 = vdwg.mxu0
    %2248 = vmatpush.bf16.msra.mxu0 0
    %2249 = vmatpush.bf16.msra.mxu0 0
    %2250 = vmatpush.bf16.msra.mxu0 0
    %2251 = vmatpush.bf16.msra.mxu0 0
    %2252 = vmatpush.bf16.msra.mxu0 0
    %2253 = vmatpush.bf16.msra.mxu0 0
    %2254 = vmatpush.bf16.msra.mxu0 %v2197
    %2255 = vmatpush.bf16.msra.mxu0 %v2193
    %2256 = vmatmul.bf16.gmra.mxu0 %v2207
    %v2257 = vpop.f32.mrf.mxu0
    %v2258 = vadd.f32 0.0, %v2257
    %v2259 = vpop.f32.mrf.mxu0
    %2260 = vdwg.mxu0
    %v2262 = vrot.slane %v2232, 1
    %v2264 = vadd.f32 %v2219, %v2262
    %v2266 = vrot.slane %v2245, 2
    %v2268 = vadd.f32 %v2264, %v2266
    %v2270 = vrot.slane %v2258, 3
    %v2272 = vadd.f32 %v2268, %v2270
    %v2273 = vld [vmem:[%s2] sm:$0x1]
    %v2274 = vadd.f32 %v2272, %v2273
    %vm2275 = vcmp.gt.f32.partialorder %v2274, 0.0
    %v2276 = vmul.f32 %v2274, 0.2
    %v2277 = vsel %vm2275, %v2274, %v2276
    %2278 = vst [vmem:[#allocation2 + $0x14] sm:$0x1] %v2277
    %v2279 = vld [vmem:[%s0 + $0x26] sm:$0xf]
    %v2280 = vpack.c.bf16 %v2279, %v2279
    %v2281 = vld [vmem:[%s1] sm:$0xff]
    %v2282 = vld [vmem:[%s1 + $0x8] sm:$0xff]
    %v2283 = vld [vmem:[%s1 + $0x10] sm:$0xff]
    %v2284 = vld [vmem:[%s1 + $0x18] sm:$0xff]
    %v2285 = vld [vmem:[%s1 + $0x20] sm:$0xff]
    %v2286 = vld [vmem:[%s1 + $0x28] sm:$0xff]
    %v2287 = vld [vmem:[%s1 + $0x30] sm:$0xff]
    %v2288 = vld [vmem:[%s1 + $0x38] sm:$0xff]
    %v2297 = vunpack.c.l.b16 %v2281
    %v2298 = vunpack.c.h.b16 %v2281
    %v2299 = vunpack.c.l.b16 %v2282
    %v2300 = vunpack.c.h.b16 %v2282
    %v2301 = vunpack.c.l.b16 %v2283
    %v2302 = vunpack.c.h.b16 %v2283
    %v2303 = vunpack.c.l.b16 %v2284
    %v2304 = vunpack.c.h.b16 %v2284
    %v2305 = vunpack.c.l.b16 %v2285
    %v2306 = vunpack.c.h.b16 %v2285
    %v2307 = vunpack.c.l.b16 %v2286
    %v2308 = vunpack.c.h.b16 %v2286
    %v2309 = vunpack.c.l.b16 %v2287
    %v2310 = vunpack.c.h.b16 %v2287
    %v2311 = vunpack.c.l.b16 %v2288
    %v2312 = vunpack.c.h.b16 %v2288
    %v2313 = vpack.c.b16 %v2301, %v2297
    %v2314 = vpack.c.b16 %v2302, %v2298
    %v2315 = vpack.c.b16 %v2303, %v2299
    %v2316 = vpack.c.b16 %v2304, %v2300
    %v2317 = vpack.c.b16 %v2309, %v2305
    %v2318 = vpack.c.b16 %v2310, %v2306
    %v2319 = vpack.c.b16 %v2311, %v2307
    %v2320 = vpack.c.b16 %v2312, %v2308
    %v2330 = vsel %vm114, %v2280, 0
    %2332 = vmatpush.bf16.msra.mxu0 0
    %2333 = vmatpush.bf16.msra.mxu0 0
    %2334 = vmatpush.bf16.msra.mxu0 0
    %2335 = vmatpush.bf16.msra.mxu0 0
    %2336 = vmatpush.bf16.msra.mxu0 0
    %2337 = vmatpush.bf16.msra.mxu0 0
    %2338 = vmatpush.bf16.msra.mxu0 %v2317
    %2339 = vmatpush.bf16.msra.mxu0 %v2313
    %2340 = vmatmul.bf16.gmra.mxu0 %v2330
    %v2341 = vpop.f32.mrf.mxu0
    %v2342 = vadd.f32 0.0, %v2341
    %v2343 = vpop.f32.mrf.mxu0
    %2344 = vdwg.mxu0
    %2345 = vmatpush.bf16.msra.mxu0 0
    %2346 = vmatpush.bf16.msra.mxu0 0
    %2347 = vmatpush.bf16.msra.mxu0 0
    %2348 = vmatpush.bf16.msra.mxu0 0
    %2349 = vmatpush.bf16.msra.mxu0 0
    %2350 = vmatpush.bf16.msra.mxu0 0
    %2351 = vmatpush.bf16.msra.mxu0 %v2318
    %2352 = vmatpush.bf16.msra.mxu0 %v2314
    %2353 = vmatmul.bf16.gmra.mxu0 %v2330
    %v2354 = vpop.f32.mrf.mxu0
    %v2355 = vadd.f32 0.0, %v2354
    %v2356 = vpop.f32.mrf.mxu0
    %2357 = vdwg.mxu0
    %2358 = vmatpush.bf16.msra.mxu0 0
    %2359 = vmatpush.bf16.msra.mxu0 0
    %2360 = vmatpush.bf16.msra.mxu0 0
    %2361 = vmatpush.bf16.msra.mxu0 0
    %2362 = vmatpush.bf16.msra.mxu0 0
    %2363 = vmatpush.bf16.msra.mxu0 0
    %2364 = vmatpush.bf16.msra.mxu0 %v2319
    %2365 = vmatpush.bf16.msra.mxu0 %v2315
    %2366 = vmatmul.bf16.gmra.mxu0 %v2330
    %v2367 = vpop.f32.mrf.mxu0
    %v2368 = vadd.f32 0.0, %v2367
    %v2369 = vpop.f32.mrf.mxu0
    %2370 = vdwg.mxu0
    %2371 = vmatpush.bf16.msra.mxu0 0
    %2372 = vmatpush.bf16.msra.mxu0 0
    %2373 = vmatpush.bf16.msra.mxu0 0
    %2374 = vmatpush.bf16.msra.mxu0 0
    %2375 = vmatpush.bf16.msra.mxu0 0
    %2376 = vmatpush.bf16.msra.mxu0 0
    %2377 = vmatpush.bf16.msra.mxu0 %v2320
    %2378 = vmatpush.bf16.msra.mxu0 %v2316
    %2379 = vmatmul.bf16.gmra.mxu0 %v2330
    %v2380 = vpop.f32.mrf.mxu0
    %v2381 = vadd.f32 0.0, %v2380
    %v2382 = vpop.f32.mrf.mxu0
    %2383 = vdwg.mxu0
    %v2385 = vrot.slane %v2355, 1
    %v2387 = vadd.f32 %v2342, %v2385
    %v2389 = vrot.slane %v2368, 2
    %v2391 = vadd.f32 %v2387, %v2389
    %v2393 = vrot.slane %v2381, 3
    %v2395 = vadd.f32 %v2391, %v2393
    %v2396 = vld [vmem:[%s2] sm:$0x1]
    %v2397 = vadd.f32 %v2395, %v2396
    %vm2398 = vcmp.gt.f32.partialorder %v2397, 0.0
    %v2399 = vmul.f32 %v2397, 0.2
    %v2400 = vsel %vm2398, %v2397, %v2399
    %2401 = vst [vmem:[#allocation2 + $0x15] sm:$0x1] %v2400
    %v2402 = vld [vmem:[%s0 + $0x28] sm:$0xf]
    %v2403 = vpack.c.bf16 %v2402, %v2402
    %v2404 = vld [vmem:[%s1] sm:$0xff]
    %v2405 = vld [vmem:[%s1 + $0x8] sm:$0xff]
    %v2406 = vld [vmem:[%s1 + $0x10] sm:$0xff]
    %v2407 = vld [vmem:[%s1 + $0x18] sm:$0xff]
    %v2408 = vld [vmem:[%s1 + $0x20] sm:$0xff]
    %v2409 = vld [vmem:[%s1 + $0x28] sm:$0xff]
    %v2410 = vld [vmem:[%s1 + $0x30] sm:$0xff]
    %v2411 = vld [vmem:[%s1 + $0x38] sm:$0xff]
    %v2420 = vunpack.c.l.b16 %v2404
    %v2421 = vunpack.c.h.b16 %v2404
    %v2422 = vunpack.c.l.b16 %v2405
    %v2423 = vunpack.c.h.b16 %v2405
    %v2424 = vunpack.c.l.b16 %v2406
    %v2425 = vunpack.c.h.b16 %v2406
    %v2426 = vunpack.c.l.b16 %v2407
    %v2427 = vunpack.c.h.b16 %v2407
    %v2428 = vunpack.c.l.b16 %v2408
    %v2429 = vunpack.c.h.b16 %v2408
    %v2430 = vunpack.c.l.b16 %v2409
    %v2431 = vunpack.c.h.b16 %v2409
    %v2432 = vunpack.c.l.b16 %v2410
    %v2433 = vunpack.c.h.b16 %v2410
    %v2434 = vunpack.c.l.b16 %v2411
    %v2435 = vunpack.c.h.b16 %v2411
    %v2436 = vpack.c.b16 %v2424, %v2420
    %v2437 = vpack.c.b16 %v2425, %v2421
    %v2438 = vpack.c.b16 %v2426, %v2422
    %v2439 = vpack.c.b16 %v2427, %v2423
    %v2440 = vpack.c.b16 %v2432, %v2428
    %v2441 = vpack.c.b16 %v2433, %v2429
    %v2442 = vpack.c.b16 %v2434, %v2430
    %v2443 = vpack.c.b16 %v2435, %v2431
    %v2453 = vsel %vm114, %v2403, 0
    %2455 = vmatpush.bf16.msra.mxu0 0
    %2456 = vmatpush.bf16.msra.mxu0 0
    %2457 = vmatpush.bf16.msra.mxu0 0
    %2458 = vmatpush.bf16.msra.mxu0 0
    %2459 = vmatpush.bf16.msra.mxu0 0
    %2460 = vmatpush.bf16.msra.mxu0 0
    %2461 = vmatpush.bf16.msra.mxu0 %v2440
    %2462 = vmatpush.bf16.msra.mxu0 %v2436
    %2463 = vmatmul.bf16.gmra.mxu0 %v2453
    %v2464 = vpop.f32.mrf.mxu0
    %v2465 = vadd.f32 0.0, %v2464
    %v2466 = vpop.f32.mrf.mxu0
    %2467 = vdwg.mxu0
    %2468 = vmatpush.bf16.msra.mxu0 0
    %2469 = vmatpush.bf16.msra.mxu0 0
    %2470 = vmatpush.bf16.msra.mxu0 0
    %2471 = vmatpush.bf16.msra.mxu0 0
    %2472 = vmatpush.bf16.msra.mxu0 0
    %2473 = vmatpush.bf16.msra.mxu0 0
    %2474 = vmatpush.bf16.msra.mxu0 %v2441
    %2475 = vmatpush.bf16.msra.mxu0 %v2437
    %2476 = vmatmul.bf16.gmra.mxu0 %v2453
    %v2477 = vpop.f32.mrf.mxu0
    %v2478 = vadd.f32 0.0, %v2477
    %v2479 = vpop.f32.mrf.mxu0
    %2480 = vdwg.mxu0
    %2481 = vmatpush.bf16.msra.mxu0 0
    %2482 = vmatpush.bf16.msra.mxu0 0
    %2483 = vmatpush.bf16.msra.mxu0 0
    %2484 = vmatpush.bf16.msra.mxu0 0
    %2485 = vmatpush.bf16.msra.mxu0 0
    %2486 = vmatpush.bf16.msra.mxu0 0
    %2487 = vmatpush.bf16.msra.mxu0 %v2442
    %2488 = vmatpush.bf16.msra.mxu0 %v2438
    %2489 = vmatmul.bf16.gmra.mxu0 %v2453
    %v2490 = vpop.f32.mrf.mxu0
    %v2491 = vadd.f32 0.0, %v2490
    %v2492 = vpop.f32.mrf.mxu0
    %2493 = vdwg.mxu0
    %2494 = vmatpush.bf16.msra.mxu0 0
    %2495 = vmatpush.bf16.msra.mxu0 0
    %2496 = vmatpush.bf16.msra.mxu0 0
    %2497 = vmatpush.bf16.msra.mxu0 0
    %2498 = vmatpush.bf16.msra.mxu0 0
    %2499 = vmatpush.bf16.msra.mxu0 0
    %2500 = vmatpush.bf16.msra.mxu0 %v2443
    %2501 = vmatpush.bf16.msra.mxu0 %v2439
    %2502 = vmatmul.bf16.gmra.mxu0 %v2453
    %v2503 = vpop.f32.mrf.mxu0
    %v2504 = vadd.f32 0.0, %v2503
    %v2505 = vpop.f32.mrf.mxu0
    %2506 = vdwg.mxu0
    %v2508 = vrot.slane %v2478, 1
    %v2510 = vadd.f32 %v2465, %v2508
    %v2512 = vrot.slane %v2491, 2
    %v2514 = vadd.f32 %v2510, %v2512
    %v2516 = vrot.slane %v2504, 3
    %v2518 = vadd.f32 %v2514, %v2516
    %v2519 = vld [vmem:[%s2] sm:$0x1]
    %v2520 = vadd.f32 %v2518, %v2519
    %vm2521 = vcmp.gt.f32.partialorder %v2520, 0.0
    %v2522 = vmul.f32 %v2520, 0.2
    %v2523 = vsel %vm2521, %v2520, %v2522
    %2524 = vst [vmem:[#allocation2 + $0x16] sm:$0x1] %v2523
    %v2525 = vld [vmem:[%s0 + $0x2a] sm:$0xf]
    %v2526 = vpack.c.bf16 %v2525, %v2525
    %v2527 = vld [vmem:[%s1] sm:$0xff]
    %v2528 = vld [vmem:[%s1 + $0x8] sm:$0xff]
    %v2529 = vld [vmem:[%s1 + $0x10] sm:$0xff]
    %v2530 = vld [vmem:[%s1 + $0x18] sm:$0xff]
    %v2531 = vld [vmem:[%s1 + $0x20] sm:$0xff]
    %v2532 = vld [vmem:[%s1 + $0x28] sm:$0xff]
    %v2533 = vld [vmem:[%s1 + $0x30] sm:$0xff]
    %v2534 = vld [vmem:[%s1 + $0x38] sm:$0xff]
    %v2543 = vunpack.c.l.b16 %v2527
    %v2544 = vunpack.c.h.b16 %v2527
    %v2545 = vunpack.c.l.b16 %v2528
    %v2546 = vunpack.c.h.b16 %v2528
    %v2547 = vunpack.c.l.b16 %v2529
    %v2548 = vunpack.c.h.b16 %v2529
    %v2549 = vunpack.c.l.b16 %v2530
    %v2550 = vunpack.c.h.b16 %v2530
    %v2551 = vunpack.c.l.b16 %v2531
    %v2552 = vunpack.c.h.b16 %v2531
    %v2553 = vunpack.c.l.b16 %v2532
    %v2554 = vunpack.c.h.b16 %v2532
    %v2555 = vunpack.c.l.b16 %v2533
    %v2556 = vunpack.c.h.b16 %v2533
    %v2557 = vunpack.c.l.b16 %v2534
    %v2558 = vunpack.c.h.b16 %v2534
    %v2559 = vpack.c.b16 %v2547, %v2543
    %v2560 = vpack.c.b16 %v2548, %v2544
    %v2561 = vpack.c.b16 %v2549, %v2545
    %v2562 = vpack.c.b16 %v2550, %v2546
    %v2563 = vpack.c.b16 %v2555, %v2551
    %v2564 = vpack.c.b16 %v2556, %v2552
    %v2565 = vpack.c.b16 %v2557, %v2553
    %v2566 = vpack.c.b16 %v2558, %v2554
    %v2576 = vsel %vm114, %v2526, 0
    %2578 = vmatpush.bf16.msra.mxu0 0
    %2579 = vmatpush.bf16.msra.mxu0 0
    %2580 = vmatpush.bf16.msra.mxu0 0
    %2581 = vmatpush.bf16.msra.mxu0 0
    %2582 = vmatpush.bf16.msra.mxu0 0
    %2583 = vmatpush.bf16.msra.mxu0 0
    %2584 = vmatpush.bf16.msra.mxu0 %v2563
    %2585 = vmatpush.bf16.msra.mxu0 %v2559
    %2586 = vmatmul.bf16.gmra.mxu0 %v2576
    %v2587 = vpop.f32.mrf.mxu0
    %v2588 = vadd.f32 0.0, %v2587
    %v2589 = vpop.f32.mrf.mxu0
    %2590 = vdwg.mxu0
    %2591 = vmatpush.bf16.msra.mxu0 0
    %2592 = vmatpush.bf16.msra.mxu0 0
    %2593 = vmatpush.bf16.msra.mxu0 0
    %2594 = vmatpush.bf16.msra.mxu0 0
    %2595 = vmatpush.bf16.msra.mxu0 0
    %2596 = vmatpush.bf16.msra.mxu0 0
    %2597 = vmatpush.bf16.msra.mxu0 %v2564
    %2598 = vmatpush.bf16.msra.mxu0 %v2560
    %2599 = vmatmul.bf16.gmra.mxu0 %v2576
    %v2600 = vpop.f32.mrf.mxu0
    %v2601 = vadd.f32 0.0, %v2600
    %v2602 = vpop.f32.mrf.mxu0
    %2603 = vdwg.mxu0
    %2604 = vmatpush.bf16.msra.mxu0 0
    %2605 = vmatpush.bf16.msra.mxu0 0
    %2606 = vmatpush.bf16.msra.mxu0 0
    %2607 = vmatpush.bf16.msra.mxu0 0
    %2608 = vmatpush.bf16.msra.mxu0 0
    %2609 = vmatpush.bf16.msra.mxu0 0
    %2610 = vmatpush.bf16.msra.mxu0 %v2565
    %2611 = vmatpush.bf16.msra.mxu0 %v2561
    %2612 = vmatmul.bf16.gmra.mxu0 %v2576
    %v2613 = vpop.f32.mrf.mxu0
    %v2614 = vadd.f32 0.0, %v2613
    %v2615 = vpop.f32.mrf.mxu0
    %2616 = vdwg.mxu0
    %2617 = vmatpush.bf16.msra.mxu0 0
    %2618 = vmatpush.bf16.msra.mxu0 0
    %2619 = vmatpush.bf16.msra.mxu0 0
    %2620 = vmatpush.bf16.msra.mxu0 0
    %2621 = vmatpush.bf16.msra.mxu0 0
    %2622 = vmatpush.bf16.msra.mxu0 0
    %2623 = vmatpush.bf16.msra.mxu0 %v2566
    %2624 = vmatpush.bf16.msra.mxu0 %v2562
    %2625 = vmatmul.bf16.gmra.mxu0 %v2576
    %v2626 = vpop.f32.mrf.mxu0
    %v2627 = vadd.f32 0.0, %v2626
    %v2628 = vpop.f32.mrf.mxu0
    %2629 = vdwg.mxu0
    %v2631 = vrot.slane %v2601, 1
    %v2633 = vadd.f32 %v2588, %v2631
    %v2635 = vrot.slane %v2614, 2
    %v2637 = vadd.f32 %v2633, %v2635
    %v2639 = vrot.slane %v2627, 3
    %v2641 = vadd.f32 %v2637, %v2639
    %v2642 = vld [vmem:[%s2] sm:$0x1]
    %v2643 = vadd.f32 %v2641, %v2642
    %vm2644 = vcmp.gt.f32.partialorder %v2643, 0.0
    %v2645 = vmul.f32 %v2643, 0.2
    %v2646 = vsel %vm2644, %v2643, %v2645
    %2647 = vst [vmem:[#allocation2 + $0x17] sm:$0x1] %v2646
    %v2648 = vld [vmem:[%s0 + $0x2c] sm:$0xf]
    %v2649 = vpack.c.bf16 %v2648, %v2648
    %v2650 = vld [vmem:[%s1] sm:$0xff]
    %v2651 = vld [vmem:[%s1 + $0x8] sm:$0xff]
    %v2652 = vld [vmem:[%s1 + $0x10] sm:$0xff]
    %v2653 = vld [vmem:[%s1 + $0x18] sm:$0xff]
    %v2654 = vld [vmem:[%s1 + $0x20] sm:$0xff]
    %v2655 = vld [vmem:[%s1 + $0x28] sm:$0xff]
    %v2656 = vld [vmem:[%s1 + $0x30] sm:$0xff]
    %v2657 = vld [vmem:[%s1 + $0x38] sm:$0xff]
    %v2666 = vunpack.c.l.b16 %v2650
    %v2667 = vunpack.c.h.b16 %v2650
    %v2668 = vunpack.c.l.b16 %v2651
    %v2669 = vunpack.c.h.b16 %v2651
    %v2670 = vunpack.c.l.b16 %v2652
    %v2671 = vunpack.c.h.b16 %v2652
    %v2672 = vunpack.c.l.b16 %v2653
    %v2673 = vunpack.c.h.b16 %v2653
    %v2674 = vunpack.c.l.b16 %v2654
    %v2675 = vunpack.c.h.b16 %v2654
    %v2676 = vunpack.c.l.b16 %v2655
    %v2677 = vunpack.c.h.b16 %v2655
    %v2678 = vunpack.c.l.b16 %v2656
    %v2679 = vunpack.c.h.b16 %v2656
    %v2680 = vunpack.c.l.b16 %v2657
    %v2681 = vunpack.c.h.b16 %v2657
    %v2682 = vpack.c.b16 %v2670, %v2666
    %v2683 = vpack.c.b16 %v2671, %v2667
    %v2684 = vpack.c.b16 %v2672, %v2668
    %v2685 = vpack.c.b16 %v2673, %v2669
    %v2686 = vpack.c.b16 %v2678, %v2674
    %v2687 = vpack.c.b16 %v2679, %v2675
    %v2688 = vpack.c.b16 %v2680, %v2676
    %v2689 = vpack.c.b16 %v2681, %v2677
    %v2699 = vsel %vm114, %v2649, 0
    %2701 = vmatpush.bf16.msra.mxu0 0
    %2702 = vmatpush.bf16.msra.mxu0 0
    %2703 = vmatpush.bf16.msra.mxu0 0
    %2704 = vmatpush.bf16.msra.mxu0 0
    %2705 = vmatpush.bf16.msra.mxu0 0
    %2706 = vmatpush.bf16.msra.mxu0 0
    %2707 = vmatpush.bf16.msra.mxu0 %v2686
    %2708 = vmatpush.bf16.msra.mxu0 %v2682
    %2709 = vmatmul.bf16.gmra.mxu0 %v2699
    %v2710 = vpop.f32.mrf.mxu0
    %v2711 = vadd.f32 0.0, %v2710
    %v2712 = vpop.f32.mrf.mxu0
    %2713 = vdwg.mxu0
    %2714 = vmatpush.bf16.msra.mxu0 0
    %2715 = vmatpush.bf16.msra.mxu0 0
    %2716 = vmatpush.bf16.msra.mxu0 0
    %2717 = vmatpush.bf16.msra.mxu0 0
    %2718 = vmatpush.bf16.msra.mxu0 0
    %2719 = vmatpush.bf16.msra.mxu0 0
    %2720 = vmatpush.bf16.msra.mxu0 %v2687
    %2721 = vmatpush.bf16.msra.mxu0 %v2683
    %2722 = vmatmul.bf16.gmra.mxu0 %v2699
    %v2723 = vpop.f32.mrf.mxu0
    %v2724 = vadd.f32 0.0, %v2723
    %v2725 = vpop.f32.mrf.mxu0
    %2726 = vdwg.mxu0
    %2727 = vmatpush.bf16.msra.mxu0 0
    %2728 = vmatpush.bf16.msra.mxu0 0
    %2729 = vmatpush.bf16.msra.mxu0 0
    %2730 = vmatpush.bf16.msra.mxu0 0
    %2731 = vmatpush.bf16.msra.mxu0 0
    %2732 = vmatpush.bf16.msra.mxu0 0
    %2733 = vmatpush.bf16.msra.mxu0 %v2688
    %2734 = vmatpush.bf16.msra.mxu0 %v2684
    %2735 = vmatmul.bf16.gmra.mxu0 %v2699
    %v2736 = vpop.f32.mrf.mxu0
    %v2737 = vadd.f32 0.0, %v2736
    %v2738 = vpop.f32.mrf.mxu0
    %2739 = vdwg.mxu0
    %2740 = vmatpush.bf16.msra.mxu0 0
    %2741 = vmatpush.bf16.msra.mxu0 0
    %2742 = vmatpush.bf16.msra.mxu0 0
    %2743 = vmatpush.bf16.msra.mxu0 0
    %2744 = vmatpush.bf16.msra.mxu0 0
    %2745 = vmatpush.bf16.msra.mxu0 0
    %2746 = vmatpush.bf16.msra.mxu0 %v2689
    %2747 = vmatpush.bf16.msra.mxu0 %v2685
    %2748 = vmatmul.bf16.gmra.mxu0 %v2699
    %v2749 = vpop.f32.mrf.mxu0
    %v2750 = vadd.f32 0.0, %v2749
    %v2751 = vpop.f32.mrf.mxu0
    %2752 = vdwg.mxu0
    %v2754 = vrot.slane %v2724, 1
    %v2756 = vadd.f32 %v2711, %v2754
    %v2758 = vrot.slane %v2737, 2
    %v2760 = vadd.f32 %v2756, %v2758
    %v2762 = vrot.slane %v2750, 3
    %v2764 = vadd.f32 %v2760, %v2762
    %v2765 = vld [vmem:[%s2] sm:$0x1]
    %v2766 = vadd.f32 %v2764, %v2765
    %vm2767 = vcmp.gt.f32.partialorder %v2766, 0.0
    %v2768 = vmul.f32 %v2766, 0.2
    %v2769 = vsel %vm2767, %v2766, %v2768
    %2770 = vst [vmem:[#allocation2 + $0x18] sm:$0x1] %v2769
    %v2771 = vld [vmem:[%s0 + $0x2e] sm:$0xf]
    %v2772 = vpack.c.bf16 %v2771, %v2771
    %v2773 = vld [vmem:[%s1] sm:$0xff]
    %v2774 = vld [vmem:[%s1 + $0x8] sm:$0xff]
    %v2775 = vld [vmem:[%s1 + $0x10] sm:$0xff]
    %v2776 = vld [vmem:[%s1 + $0x18] sm:$0xff]
    %v2777 = vld [vmem:[%s1 + $0x20] sm:$0xff]
    %v2778 = vld [vmem:[%s1 + $0x28] sm:$0xff]
    %v2779 = vld [vmem:[%s1 + $0x30] sm:$0xff]
    %v2780 = vld [vmem:[%s1 + $0x38] sm:$0xff]
    %v2789 = vunpack.c.l.b16 %v2773
    %v2790 = vunpack.c.h.b16 %v2773
    %v2791 = vunpack.c.l.b16 %v2774
    %v2792 = vunpack.c.h.b16 %v2774
    %v2793 = vunpack.c.l.b16 %v2775
    %v2794 = vunpack.c.h.b16 %v2775
    %v2795 = vunpack.c.l.b16 %v2776
    %v2796 = vunpack.c.h.b16 %v2776
    %v2797 = vunpack.c.l.b16 %v2777
    %v2798 = vunpack.c.h.b16 %v2777
    %v2799 = vunpack.c.l.b16 %v2778
    %v2800 = vunpack.c.h.b16 %v2778
    %v2801 = vunpack.c.l.b16 %v2779
    %v2802 = vunpack.c.h.b16 %v2779
    %v2803 = vunpack.c.l.b16 %v2780
    %v2804 = vunpack.c.h.b16 %v2780
    %v2805 = vpack.c.b16 %v2793, %v2789
    %v2806 = vpack.c.b16 %v2794, %v2790
    %v2807 = vpack.c.b16 %v2795, %v2791
    %v2808 = vpack.c.b16 %v2796, %v2792
    %v2809 = vpack.c.b16 %v2801, %v2797
    %v2810 = vpack.c.b16 %v2802, %v2798
    %v2811 = vpack.c.b16 %v2803, %v2799
    %v2812 = vpack.c.b16 %v2804, %v2800
    %v2822 = vsel %vm114, %v2772, 0
    %2824 = vmatpush.bf16.msra.mxu0 0
    %2825 = vmatpush.bf16.msra.mxu0 0
    %2826 = vmatpush.bf16.msra.mxu0 0
    %2827 = vmatpush.bf16.msra.mxu0 0
    %2828 = vmatpush.bf16.msra.mxu0 0
    %2829 = vmatpush.bf16.msra.mxu0 0
    %2830 = vmatpush.bf16.msra.mxu0 %v2809
    %2831 = vmatpush.bf16.msra.mxu0 %v2805
    %2832 = vmatmul.bf16.gmra.mxu0 %v2822
    %v2833 = vpop.f32.mrf.mxu0
    %v2834 = vadd.f32 0.0, %v2833
    %v2835 = vpop.f32.mrf.mxu0
    %2836 = vdwg.mxu0
    %2837 = vmatpush.bf16.msra.mxu0 0
    %2838 = vmatpush.bf16.msra.mxu0 0
    %2839 = vmatpush.bf16.msra.mxu0 0
    %2840 = vmatpush.bf16.msra.mxu0 0
    %2841 = vmatpush.bf16.msra.mxu0 0
    %2842 = vmatpush.bf16.msra.mxu0 0
    %2843 = vmatpush.bf16.msra.mxu0 %v2810
    %2844 = vmatpush.bf16.msra.mxu0 %v2806
    %2845 = vmatmul.bf16.gmra.mxu0 %v2822
    %v2846 = vpop.f32.mrf.mxu0
    %v2847 = vadd.f32 0.0, %v2846
    %v2848 = vpop.f32.mrf.mxu0
    %2849 = vdwg.mxu0
    %2850 = vmatpush.bf16.msra.mxu0 0
    %2851 = vmatpush.bf16.msra.mxu0 0
    %2852 = vmatpush.bf16.msra.mxu0 0
    %2853 = vmatpush.bf16.msra.mxu0 0
    %2854 = vmatpush.bf16.msra.mxu0 0
    %2855 = vmatpush.bf16.msra.mxu0 0
    %2856 = vmatpush.bf16.msra.mxu0 %v2811
    %2857 = vmatpush.bf16.msra.mxu0 %v2807
    %2858 = vmatmul.bf16.gmra.mxu0 %v2822
    %v2859 = vpop.f32.mrf.mxu0
    %v2860 = vadd.f32 0.0, %v2859
    %v2861 = vpop.f32.mrf.mxu0
    %2862 = vdwg.mxu0
    %2863 = vmatpush.bf16.msra.mxu0 0
    %2864 = vmatpush.bf16.msra.mxu0 0
    %2865 = vmatpush.bf16.msra.mxu0 0
    %2866 = vmatpush.bf16.msra.mxu0 0
    %2867 = vmatpush.bf16.msra.mxu0 0
    %2868 = vmatpush.bf16.msra.mxu0 0
    %2869 = vmatpush.bf16.msra.mxu0 %v2812
    %2870 = vmatpush.bf16.msra.mxu0 %v2808
    %2871 = vmatmul.bf16.gmra.mxu0 %v2822
    %v2872 = vpop.f32.mrf.mxu0
    %v2873 = vadd.f32 0.0, %v2872
    %v2874 = vpop.f32.mrf.mxu0
    %2875 = vdwg.mxu0
    %v2877 = vrot.slane %v2847, 1
    %v2879 = vadd.f32 %v2834, %v2877
    %v2881 = vrot.slane %v2860, 2
    %v2883 = vadd.f32 %v2879, %v2881
    %v2885 = vrot.slane %v2873, 3
    %v2887 = vadd.f32 %v2883, %v2885
    %v2888 = vld [vmem:[%s2] sm:$0x1]
    %v2889 = vadd.f32 %v2887, %v2888
    %vm2890 = vcmp.gt.f32.partialorder %v2889, 0.0
    %v2891 = vmul.f32 %v2889, 0.2
    %v2892 = vsel %vm2890, %v2889, %v2891
    %2893 = vst [vmem:[#allocation2 + $0x19] sm:$0x1] %v2892
    %v2894 = vld [vmem:[%s0 + $0x30] sm:$0xf]
    %v2895 = vpack.c.bf16 %v2894, %v2894
    %v2896 = vld [vmem:[%s1] sm:$0xff]
    %v2897 = vld [vmem:[%s1 + $0x8] sm:$0xff]
    %v2898 = vld [vmem:[%s1 + $0x10] sm:$0xff]
    %v2899 = vld [vmem:[%s1 + $0x18] sm:$0xff]
    %v2900 = vld [vmem:[%s1 + $0x20] sm:$0xff]
    %v2901 = vld [vmem:[%s1 + $0x28] sm:$0xff]
    %v2902 = vld [vmem:[%s1 + $0x30] sm:$0xff]
    %v2903 = vld [vmem:[%s1 + $0x38] sm:$0xff]
    %v2912 = vunpack.c.l.b16 %v2896
    %v2913 = vunpack.c.h.b16 %v2896
    %v2914 = vunpack.c.l.b16 %v2897
    %v2915 = vunpack.c.h.b16 %v2897
    %v2916 = vunpack.c.l.b16 %v2898
    %v2917 = vunpack.c.h.b16 %v2898
    %v2918 = vunpack.c.l.b16 %v2899
    %v2919 = vunpack.c.h.b16 %v2899
    %v2920 = vunpack.c.l.b16 %v2900
    %v2921 = vunpack.c.h.b16 %v2900
    %v2922 = vunpack.c.l.b16 %v2901
    %v2923 = vunpack.c.h.b16 %v2901
    %v2924 = vunpack.c.l.b16 %v2902
    %v2925 = vunpack.c.h.b16 %v2902
    %v2926 = vunpack.c.l.b16 %v2903
    %v2927 = vunpack.c.h.b16 %v2903
    %v2928 = vpack.c.b16 %v2916, %v2912
    %v2929 = vpack.c.b16 %v2917, %v2913
    %v2930 = vpack.c.b16 %v2918, %v2914
    %v2931 = vpack.c.b16 %v2919, %v2915
    %v2932 = vpack.c.b16 %v2924, %v2920
    %v2933 = vpack.c.b16 %v2925, %v2921
    %v2934 = vpack.c.b16 %v2926, %v2922
    %v2935 = vpack.c.b16 %v2927, %v2923
    %v2945 = vsel %vm114, %v2895, 0
    %2947 = vmatpush.bf16.msra.mxu0 0
    %2948 = vmatpush.bf16.msra.mxu0 0
    %2949 = vmatpush.bf16.msra.mxu0 0
    %2950 = vmatpush.bf16.msra.mxu0 0
    %2951 = vmatpush.bf16.msra.mxu0 0
    %2952 = vmatpush.bf16.msra.mxu0 0
    %2953 = vmatpush.bf16.msra.mxu0 %v2932
    %2954 = vmatpush.bf16.msra.mxu0 %v2928
    %2955 = vmatmul.bf16.gmra.mxu0 %v2945
    %v2956 = vpop.f32.mrf.mxu0
    %v2957 = vadd.f32 0.0, %v2956
    %v2958 = vpop.f32.mrf.mxu0
    %2959 = vdwg.mxu0
    %2960 = vmatpush.bf16.msra.mxu0 0
    %2961 = vmatpush.bf16.msra.mxu0 0
    %2962 = vmatpush.bf16.msra.mxu0 0
    %2963 = vmatpush.bf16.msra.mxu0 0
    %2964 = vmatpush.bf16.msra.mxu0 0
    %2965 = vmatpush.bf16.msra.mxu0 0
    %2966 = vmatpush.bf16.msra.mxu0 %v2933
    %2967 = vmatpush.bf16.msra.mxu0 %v2929
    %2968 = vmatmul.bf16.gmra.mxu0 %v2945
    %v2969 = vpop.f32.mrf.mxu0
    %v2970 = vadd.f32 0.0, %v2969
    %v2971 = vpop.f32.mrf.mxu0
    %2972 = vdwg.mxu0
    %2973 = vmatpush.bf16.msra.mxu0 0
    %2974 = vmatpush.bf16.msra.mxu0 0
    %2975 = vmatpush.bf16.msra.mxu0 0
    %2976 = vmatpush.bf16.msra.mxu0 0
    %2977 = vmatpush.bf16.msra.mxu0 0
    %2978 = vmatpush.bf16.msra.mxu0 0
    %2979 = vmatpush.bf16.msra.mxu0 %v2934
    %2980 = vmatpush.bf16.msra.mxu0 %v2930
    %2981 = vmatmul.bf16.gmra.mxu0 %v2945
    %v2982 = vpop.f32.mrf.mxu0
    %v2983 = vadd.f32 0.0, %v2982
    %v2984 = vpop.f32.mrf.mxu0
    %2985 = vdwg.mxu0
    %2986 = vmatpush.bf16.msra.mxu0 0
    %2987 = vmatpush.bf16.msra.mxu0 0
    %2988 = vmatpush.bf16.msra.mxu0 0
    %2989 = vmatpush.bf16.msra.mxu0 0
    %2990 = vmatpush.bf16.msra.mxu0 0
    %2991 = vmatpush.bf16.msra.mxu0 0
    %2992 = vmatpush.bf16.msra.mxu0 %v2935
    %2993 = vmatpush.bf16.msra.mxu0 %v2931
    %2994 = vmatmul.bf16.gmra.mxu0 %v2945
    %v2995 = vpop.f32.mrf.mxu0
    %v2996 = vadd.f32 0.0, %v2995
    %v2997 = vpop.f32.mrf.mxu0
    %2998 = vdwg.mxu0
    %v3000 = vrot.slane %v2970, 1
    %v3002 = vadd.f32 %v2957, %v3000
    %v3004 = vrot.slane %v2983, 2
    %v3006 = vadd.f32 %v3002, %v3004
    %v3008 = vrot.slane %v2996, 3
    %v3010 = vadd.f32 %v3006, %v3008
    %v3011 = vld [vmem:[%s2] sm:$0x1]
    %v3012 = vadd.f32 %v3010, %v3011
    %vm3013 = vcmp.gt.f32.partialorder %v3012, 0.0
    %v3014 = vmul.f32 %v3012, 0.2
    %v3015 = vsel %vm3013, %v3012, %v3014
    %3016 = vst [vmem:[#allocation2 + $0x1a] sm:$0x1] %v3015
    %v3017 = vld [vmem:[%s0 + $0x32] sm:$0xf]
    %v3018 = vpack.c.bf16 %v3017, %v3017
    %v3019 = vld [vmem:[%s1] sm:$0xff]
    %v3020 = vld [vmem:[%s1 + $0x8] sm:$0xff]
    %v3021 = vld [vmem:[%s1 + $0x10] sm:$0xff]
    %v3022 = vld [vmem:[%s1 + $0x18] sm:$0xff]
    %v3023 = vld [vmem:[%s1 + $0x20] sm:$0xff]
    %v3024 = vld [vmem:[%s1 + $0x28] sm:$0xff]
    %v3025 = vld [vmem:[%s1 + $0x30] sm:$0xff]
    %v3026 = vld [vmem:[%s1 + $0x38] sm:$0xff]
    %v3035 = vunpack.c.l.b16 %v3019
    %v3036 = vunpack.c.h.b16 %v3019
    %v3037 = vunpack.c.l.b16 %v3020
    %v3038 = vunpack.c.h.b16 %v3020
    %v3039 = vunpack.c.l.b16 %v3021
    %v3040 = vunpack.c.h.b16 %v3021
    %v3041 = vunpack.c.l.b16 %v3022
    %v3042 = vunpack.c.h.b16 %v3022
    %v3043 = vunpack.c.l.b16 %v3023
    %v3044 = vunpack.c.h.b16 %v3023
    %v3045 = vunpack.c.l.b16 %v3024
    %v3046 = vunpack.c.h.b16 %v3024
    %v3047 = vunpack.c.l.b16 %v3025
    %v3048 = vunpack.c.h.b16 %v3025
    %v3049 = vunpack.c.l.b16 %v3026
    %v3050 = vunpack.c.h.b16 %v3026
    %v3051 = vpack.c.b16 %v3039, %v3035
    %v3052 = vpack.c.b16 %v3040, %v3036
    %v3053 = vpack.c.b16 %v3041, %v3037
    %v3054 = vpack.c.b16 %v3042, %v3038
    %v3055 = vpack.c.b16 %v3047, %v3043
    %v3056 = vpack.c.b16 %v3048, %v3044
    %v3057 = vpack.c.b16 %v3049, %v3045
    %v3058 = vpack.c.b16 %v3050, %v3046
    %v3068 = vsel %vm114, %v3018, 0
    %3070 = vmatpush.bf16.msra.mxu0 0
    %3071 = vmatpush.bf16.msra.mxu0 0
    %3072 = vmatpush.bf16.msra.mxu0 0
    %3073 = vmatpush.bf16.msra.mxu0 0
    %3074 = vmatpush.bf16.msra.mxu0 0
    %3075 = vmatpush.bf16.msra.mxu0 0
    %3076 = vmatpush.bf16.msra.mxu0 %v3055
    %3077 = vmatpush.bf16.msra.mxu0 %v3051
    %3078 = vmatmul.bf16.gmra.mxu0 %v3068
    %v3079 = vpop.f32.mrf.mxu0
    %v3080 = vadd.f32 0.0, %v3079
    %v3081 = vpop.f32.mrf.mxu0
    %3082 = vdwg.mxu0
    %3083 = vmatpush.bf16.msra.mxu0 0
    %3084 = vmatpush.bf16.msra.mxu0 0
    %3085 = vmatpush.bf16.msra.mxu0 0
    %3086 = vmatpush.bf16.msra.mxu0 0
    %3087 = vmatpush.bf16.msra.mxu0 0
    %3088 = vmatpush.bf16.msra.mxu0 0
    %3089 = vmatpush.bf16.msra.mxu0 %v3056
    %3090 = vmatpush.bf16.msra.mxu0 %v3052
    %3091 = vmatmul.bf16.gmra.mxu0 %v3068
    %v3092 = vpop.f32.mrf.mxu0
    %v3093 = vadd.f32 0.0, %v3092
    %v3094 = vpop.f32.mrf.mxu0
    %3095 = vdwg.mxu0
    %3096 = vmatpush.bf16.msra.mxu0 0
    %3097 = vmatpush.bf16.msra.mxu0 0
    %3098 = vmatpush.bf16.msra.mxu0 0
    %3099 = vmatpush.bf16.msra.mxu0 0
    %3100 = vmatpush.bf16.msra.mxu0 0
    %3101 = vmatpush.bf16.msra.mxu0 0
    %3102 = vmatpush.bf16.msra.mxu0 %v3057
    %3103 = vmatpush.bf16.msra.mxu0 %v3053
    %3104 = vmatmul.bf16.gmra.mxu0 %v3068
    %v3105 = vpop.f32.mrf.mxu0
    %v3106 = vadd.f32 0.0, %v3105
    %v3107 = vpop.f32.mrf.mxu0
    %3108 = vdwg.mxu0
    %3109 = vmatpush.bf16.msra.mxu0 0
    %3110 = vmatpush.bf16.msra.mxu0 0
    %3111 = vmatpush.bf16.msra.mxu0 0
    %3112 = vmatpush.bf16.msra.mxu0 0
    %3113 = vmatpush.bf16.msra.mxu0 0
    %3114 = vmatpush.bf16.msra.mxu0 0
    %3115 = vmatpush.bf16.msra.mxu0 %v3058
    %3116 = vmatpush.bf16.msra.mxu0 %v3054
    %3117 = vmatmul.bf16.gmra.mxu0 %v3068
    %v3118 = vpop.f32.mrf.mxu0
    %v3119 = vadd.f32 0.0, %v3118
    %v3120 = vpop.f32.mrf.mxu0
    %3121 = vdwg.mxu0
    %v3123 = vrot.slane %v3093, 1
    %v3125 = vadd.f32 %v3080, %v3123
    %v3127 = vrot.slane %v3106, 2
    %v3129 = vadd.f32 %v3125, %v3127
    %v3131 = vrot.slane %v3119, 3
    %v3133 = vadd.f32 %v3129, %v3131
    %v3134 = vld [vmem:[%s2] sm:$0x1]
    %v3135 = vadd.f32 %v3133, %v3134
    %vm3136 = vcmp.gt.f32.partialorder %v3135, 0.0
    %v3137 = vmul.f32 %v3135, 0.2
    %v3138 = vsel %vm3136, %v3135, %v3137
    %3139 = vst [vmem:[#allocation2 + $0x1b] sm:$0x1] %v3138
    %v3140 = vld [vmem:[%s0 + $0x34] sm:$0xf]
    %v3141 = vpack.c.bf16 %v3140, %v3140
    %v3142 = vld [vmem:[%s1] sm:$0xff]
    %v3143 = vld [vmem:[%s1 + $0x8] sm:$0xff]
    %v3144 = vld [vmem:[%s1 + $0x10] sm:$0xff]
    %v3145 = vld [vmem:[%s1 + $0x18] sm:$0xff]
    %v3146 = vld [vmem:[%s1 + $0x20] sm:$0xff]
    %v3147 = vld [vmem:[%s1 + $0x28] sm:$0xff]
    %v3148 = vld [vmem:[%s1 + $0x30] sm:$0xff]
    %v3149 = vld [vmem:[%s1 + $0x38] sm:$0xff]
    %v3158 = vunpack.c.l.b16 %v3142
    %v3159 = vunpack.c.h.b16 %v3142
    %v3160 = vunpack.c.l.b16 %v3143
    %v3161 = vunpack.c.h.b16 %v3143
    %v3162 = vunpack.c.l.b16 %v3144
    %v3163 = vunpack.c.h.b16 %v3144
    %v3164 = vunpack.c.l.b16 %v3145
    %v3165 = vunpack.c.h.b16 %v3145
    %v3166 = vunpack.c.l.b16 %v3146
    %v3167 = vunpack.c.h.b16 %v3146
    %v3168 = vunpack.c.l.b16 %v3147
    %v3169 = vunpack.c.h.b16 %v3147
    %v3170 = vunpack.c.l.b16 %v3148
    %v3171 = vunpack.c.h.b16 %v3148
    %v3172 = vunpack.c.l.b16 %v3149
    %v3173 = vunpack.c.h.b16 %v3149
    %v3174 = vpack.c.b16 %v3162, %v3158
    %v3175 = vpack.c.b16 %v3163, %v3159
    %v3176 = vpack.c.b16 %v3164, %v3160
    %v3177 = vpack.c.b16 %v3165, %v3161
    %v3178 = vpack.c.b16 %v3170, %v3166
    %v3179 = vpack.c.b16 %v3171, %v3167
    %v3180 = vpack.c.b16 %v3172, %v3168
    %v3181 = vpack.c.b16 %v3173, %v3169
    %v3191 = vsel %vm114, %v3141, 0
    %3193 = vmatpush.bf16.msra.mxu0 0
    %3194 = vmatpush.bf16.msra.mxu0 0
    %3195 = vmatpush.bf16.msra.mxu0 0
    %3196 = vmatpush.bf16.msra.mxu0 0
    %3197 = vmatpush.bf16.msra.mxu0 0
    %3198 = vmatpush.bf16.msra.mxu0 0
    %3199 = vmatpush.bf16.msra.mxu0 %v3178
    %3200 = vmatpush.bf16.msra.mxu0 %v3174
    %3201 = vmatmul.bf16.gmra.mxu0 %v3191
    %v3202 = vpop.f32.mrf.mxu0
    %v3203 = vadd.f32 0.0, %v3202
    %v3204 = vpop.f32.mrf.mxu0
    %3205 = vdwg.mxu0
    %3206 = vmatpush.bf16.msra.mxu0 0
    %3207 = vmatpush.bf16.msra.mxu0 0
    %3208 = vmatpush.bf16.msra.mxu0 0
    %3209 = vmatpush.bf16.msra.mxu0 0
    %3210 = vmatpush.bf16.msra.mxu0 0
    %3211 = vmatpush.bf16.msra.mxu0 0
    %3212 = vmatpush.bf16.msra.mxu0 %v3179
    %3213 = vmatpush.bf16.msra.mxu0 %v3175
    %3214 = vmatmul.bf16.gmra.mxu0 %v3191
    %v3215 = vpop.f32.mrf.mxu0
    %v3216 = vadd.f32 0.0, %v3215
    %v3217 = vpop.f32.mrf.mxu0
    %3218 = vdwg.mxu0
    %3219 = vmatpush.bf16.msra.mxu0 0
    %3220 = vmatpush.bf16.msra.mxu0 0
    %3221 = vmatpush.bf16.msra.mxu0 0
    %3222 = vmatpush.bf16.msra.mxu0 0
    %3223 = vmatpush.bf16.msra.mxu0 0
    %3224 = vmatpush.bf16.msra.mxu0 0
    %3225 = vmatpush.bf16.msra.mxu0 %v3180
    %3226 = vmatpush.bf16.msra.mxu0 %v3176
    %3227 = vmatmul.bf16.gmra.mxu0 %v3191
    %v3228 = vpop.f32.mrf.mxu0
    %v3229 = vadd.f32 0.0, %v3228
    %v3230 = vpop.f32.mrf.mxu0
    %3231 = vdwg.mxu0
    %3232 = vmatpush.bf16.msra.mxu0 0
    %3233 = vmatpush.bf16.msra.mxu0 0
    %3234 = vmatpush.bf16.msra.mxu0 0
    %3235 = vmatpush.bf16.msra.mxu0 0
    %3236 = vmatpush.bf16.msra.mxu0 0
    %3237 = vmatpush.bf16.msra.mxu0 0
    %3238 = vmatpush.bf16.msra.mxu0 %v3181
    %3239 = vmatpush.bf16.msra.mxu0 %v3177
    %3240 = vmatmul.bf16.gmra.mxu0 %v3191
    %v3241 = vpop.f32.mrf.mxu0
    %v3242 = vadd.f32 0.0, %v3241
    %v3243 = vpop.f32.mrf.mxu0
    %3244 = vdwg.mxu0
    %v3246 = vrot.slane %v3216, 1
    %v3248 = vadd.f32 %v3203, %v3246
    %v3250 = vrot.slane %v3229, 2
    %v3252 = vadd.f32 %v3248, %v3250
    %v3254 = vrot.slane %v3242, 3
    %v3256 = vadd.f32 %v3252, %v3254
    %v3257 = vld [vmem:[%s2] sm:$0x1]
    %v3258 = vadd.f32 %v3256, %v3257
    %vm3259 = vcmp.gt.f32.partialorder %v3258, 0.0
    %v3260 = vmul.f32 %v3258, 0.2
    %v3261 = vsel %vm3259, %v3258, %v3260
    %3262 = vst [vmem:[#allocation2 + $0x1c] sm:$0x1] %v3261
    %v3263 = vld [vmem:[%s0 + $0x36] sm:$0xf]
    %v3264 = vpack.c.bf16 %v3263, %v3263
    %v3265 = vld [vmem:[%s1] sm:$0xff]
    %v3266 = vld [vmem:[%s1 + $0x8] sm:$0xff]
    %v3267 = vld [vmem:[%s1 + $0x10] sm:$0xff]
    %v3268 = vld [vmem:[%s1 + $0x18] sm:$0xff]
    %v3269 = vld [vmem:[%s1 + $0x20] sm:$0xff]
    %v3270 = vld [vmem:[%s1 + $0x28] sm:$0xff]
    %v3271 = vld [vmem:[%s1 + $0x30] sm:$0xff]
    %v3272 = vld [vmem:[%s1 + $0x38] sm:$0xff]
    %v3281 = vunpack.c.l.b16 %v3265
    %v3282 = vunpack.c.h.b16 %v3265
    %v3283 = vunpack.c.l.b16 %v3266
    %v3284 = vunpack.c.h.b16 %v3266
    %v3285 = vunpack.c.l.b16 %v3267
    %v3286 = vunpack.c.h.b16 %v3267
    %v3287 = vunpack.c.l.b16 %v3268
    %v3288 = vunpack.c.h.b16 %v3268
    %v3289 = vunpack.c.l.b16 %v3269
    %v3290 = vunpack.c.h.b16 %v3269
    %v3291 = vunpack.c.l.b16 %v3270
    %v3292 = vunpack.c.h.b16 %v3270
    %v3293 = vunpack.c.l.b16 %v3271
    %v3294 = vunpack.c.h.b16 %v3271
    %v3295 = vunpack.c.l.b16 %v3272
    %v3296 = vunpack.c.h.b16 %v3272
    %v3297 = vpack.c.b16 %v3285, %v3281
    %v3298 = vpack.c.b16 %v3286, %v3282
    %v3299 = vpack.c.b16 %v3287, %v3283
    %v3300 = vpack.c.b16 %v3288, %v3284
    %v3301 = vpack.c.b16 %v3293, %v3289
    %v3302 = vpack.c.b16 %v3294, %v3290
    %v3303 = vpack.c.b16 %v3295, %v3291
    %v3304 = vpack.c.b16 %v3296, %v3292
    %v3314 = vsel %vm114, %v3264, 0
    %3316 = vmatpush.bf16.msra.mxu0 0
    %3317 = vmatpush.bf16.msra.mxu0 0
    %3318 = vmatpush.bf16.msra.mxu0 0
    %3319 = vmatpush.bf16.msra.mxu0 0
    %3320 = vmatpush.bf16.msra.mxu0 0
    %3321 = vmatpush.bf16.msra.mxu0 0
    %3322 = vmatpush.bf16.msra.mxu0 %v3301
    %3323 = vmatpush.bf16.msra.mxu0 %v3297
    %3324 = vmatmul.bf16.gmra.mxu0 %v3314
    %v3325 = vpop.f32.mrf.mxu0
    %v3326 = vadd.f32 0.0, %v3325
    %v3327 = vpop.f32.mrf.mxu0
    %3328 = vdwg.mxu0
    %3329 = vmatpush.bf16.msra.mxu0 0
    %3330 = vmatpush.bf16.msra.mxu0 0
    %3331 = vmatpush.bf16.msra.mxu0 0
    %3332 = vmatpush.bf16.msra.mxu0 0
    %3333 = vmatpush.bf16.msra.mxu0 0
    %3334 = vmatpush.bf16.msra.mxu0 0
    %3335 = vmatpush.bf16.msra.mxu0 %v3302
    %3336 = vmatpush.bf16.msra.mxu0 %v3298
    %3337 = vmatmul.bf16.gmra.mxu0 %v3314
    %v3338 = vpop.f32.mrf.mxu0
    %v3339 = vadd.f32 0.0, %v3338
    %v3340 = vpop.f32.mrf.mxu0
    %3341 = vdwg.mxu0
    %3342 = vmatpush.bf16.msra.mxu0 0
    %3343 = vmatpush.bf16.msra.mxu0 0
    %3344 = vmatpush.bf16.msra.mxu0 0
    %3345 = vmatpush.bf16.msra.mxu0 0
    %3346 = vmatpush.bf16.msra.mxu0 0
    %3347 = vmatpush.bf16.msra.mxu0 0
    %3348 = vmatpush.bf16.msra.mxu0 %v3303
    %3349 = vmatpush.bf16.msra.mxu0 %v3299
    %3350 = vmatmul.bf16.gmra.mxu0 %v3314
    %v3351 = vpop.f32.mrf.mxu0
    %v3352 = vadd.f32 0.0, %v3351
    %v3353 = vpop.f32.mrf.mxu0
    %3354 = vdwg.mxu0
    %3355 = vmatpush.bf16.msra.mxu0 0
    %3356 = vmatpush.bf16.msra.mxu0 0
    %3357 = vmatpush.bf16.msra.mxu0 0
    %3358 = vmatpush.bf16.msra.mxu0 0
    %3359 = vmatpush.bf16.msra.mxu0 0
    %3360 = vmatpush.bf16.msra.mxu0 0
    %3361 = vmatpush.bf16.msra.mxu0 %v3304
    %3362 = vmatpush.bf16.msra.mxu0 %v3300
    %3363 = vmatmul.bf16.gmra.mxu0 %v3314
    %v3364 = vpop.f32.mrf.mxu0
    %v3365 = vadd.f32 0.0, %v3364
    %v3366 = vpop.f32.mrf.mxu0
    %3367 = vdwg.mxu0
    %v3369 = vrot.slane %v3339, 1
    %v3371 = vadd.f32 %v3326, %v3369
    %v3373 = vrot.slane %v3352, 2
    %v3375 = vadd.f32 %v3371, %v3373
    %v3377 = vrot.slane %v3365, 3
    %v3379 = vadd.f32 %v3375, %v3377
    %v3380 = vld [vmem:[%s2] sm:$0x1]
    %v3381 = vadd.f32 %v3379, %v3380
    %vm3382 = vcmp.gt.f32.partialorder %v3381, 0.0
    %v3383 = vmul.f32 %v3381, 0.2
    %v3384 = vsel %vm3382, %v3381, %v3383
    %3385 = vst [vmem:[#allocation2 + $0x1d] sm:$0x1] %v3384
    %v3386 = vld [vmem:[%s0 + $0x38] sm:$0xf]
    %v3387 = vpack.c.bf16 %v3386, %v3386
    %v3388 = vld [vmem:[%s1] sm:$0xff]
    %v3389 = vld [vmem:[%s1 + $0x8] sm:$0xff]
    %v3390 = vld [vmem:[%s1 + $0x10] sm:$0xff]
    %v3391 = vld [vmem:[%s1 + $0x18] sm:$0xff]
    %v3392 = vld [vmem:[%s1 + $0x20] sm:$0xff]
    %v3393 = vld [vmem:[%s1 + $0x28] sm:$0xff]
    %v3394 = vld [vmem:[%s1 + $0x30] sm:$0xff]
    %v3395 = vld [vmem:[%s1 + $0x38] sm:$0xff]
    %v3404 = vunpack.c.l.b16 %v3388
    %v3405 = vunpack.c.h.b16 %v3388
    %v3406 = vunpack.c.l.b16 %v3389
    %v3407 = vunpack.c.h.b16 %v3389
    %v3408 = vunpack.c.l.b16 %v3390
    %v3409 = vunpack.c.h.b16 %v3390
    %v3410 = vunpack.c.l.b16 %v3391
    %v3411 = vunpack.c.h.b16 %v3391
    %v3412 = vunpack.c.l.b16 %v3392
    %v3413 = vunpack.c.h.b16 %v3392
    %v3414 = vunpack.c.l.b16 %v3393
    %v3415 = vunpack.c.h.b16 %v3393
    %v3416 = vunpack.c.l.b16 %v3394
    %v3417 = vunpack.c.h.b16 %v3394
    %v3418 = vunpack.c.l.b16 %v3395
    %v3419 = vunpack.c.h.b16 %v3395
    %v3420 = vpack.c.b16 %v3408, %v3404
    %v3421 = vpack.c.b16 %v3409, %v3405
    %v3422 = vpack.c.b16 %v3410, %v3406
    %v3423 = vpack.c.b16 %v3411, %v3407
    %v3424 = vpack.c.b16 %v3416, %v3412
    %v3425 = vpack.c.b16 %v3417, %v3413
    %v3426 = vpack.c.b16 %v3418, %v3414
    %v3427 = vpack.c.b16 %v3419, %v3415
    %v3437 = vsel %vm114, %v3387, 0
    %3439 = vmatpush.bf16.msra.mxu0 0
    %3440 = vmatpush.bf16.msra.mxu0 0
    %3441 = vmatpush.bf16.msra.mxu0 0
    %3442 = vmatpush.bf16.msra.mxu0 0
    %3443 = vmatpush.bf16.msra.mxu0 0
    %3444 = vmatpush.bf16.msra.mxu0 0
    %3445 = vmatpush.bf16.msra.mxu0 %v3424
    %3446 = vmatpush.bf16.msra.mxu0 %v3420
    %3447 = vmatmul.bf16.gmra.mxu0 %v3437
    %v3448 = vpop.f32.mrf.mxu0
    %v3449 = vadd.f32 0.0, %v3448
    %v3450 = vpop.f32.mrf.mxu0
    %3451 = vdwg.mxu0
    %3452 = vmatpush.bf16.msra.mxu0 0
    %3453 = vmatpush.bf16.msra.mxu0 0
    %3454 = vmatpush.bf16.msra.mxu0 0
    %3455 = vmatpush.bf16.msra.mxu0 0
    %3456 = vmatpush.bf16.msra.mxu0 0
    %3457 = vmatpush.bf16.msra.mxu0 0
    %3458 = vmatpush.bf16.msra.mxu0 %v3425
    %3459 = vmatpush.bf16.msra.mxu0 %v3421
    %3460 = vmatmul.bf16.gmra.mxu0 %v3437
    %v3461 = vpop.f32.mrf.mxu0
    %v3462 = vadd.f32 0.0, %v3461
    %v3463 = vpop.f32.mrf.mxu0
    %3464 = vdwg.mxu0
    %3465 = vmatpush.bf16.msra.mxu0 0
    %3466 = vmatpush.bf16.msra.mxu0 0
    %3467 = vmatpush.bf16.msra.mxu0 0
    %3468 = vmatpush.bf16.msra.mxu0 0
    %3469 = vmatpush.bf16.msra.mxu0 0
    %3470 = vmatpush.bf16.msra.mxu0 0
    %3471 = vmatpush.bf16.msra.mxu0 %v3426
    %3472 = vmatpush.bf16.msra.mxu0 %v3422
    %3473 = vmatmul.bf16.gmra.mxu0 %v3437
    %v3474 = vpop.f32.mrf.mxu0
    %v3475 = vadd.f32 0.0, %v3474
    %v3476 = vpop.f32.mrf.mxu0
    %3477 = vdwg.mxu0
    %3478 = vmatpush.bf16.msra.mxu0 0
    %3479 = vmatpush.bf16.msra.mxu0 0
    %3480 = vmatpush.bf16.msra.mxu0 0
    %3481 = vmatpush.bf16.msra.mxu0 0
    %3482 = vmatpush.bf16.msra.mxu0 0
    %3483 = vmatpush.bf16.msra.mxu0 0
    %3484 = vmatpush.bf16.msra.mxu0 %v3427
    %3485 = vmatpush.bf16.msra.mxu0 %v3423
    %3486 = vmatmul.bf16.gmra.mxu0 %v3437
    %v3487 = vpop.f32.mrf.mxu0
    %v3488 = vadd.f32 0.0, %v3487
    %v3489 = vpop.f32.mrf.mxu0
    %3490 = vdwg.mxu0
    %v3492 = vrot.slane %v3462, 1
    %v3494 = vadd.f32 %v3449, %v3492
    %v3496 = vrot.slane %v3475, 2
    %v3498 = vadd.f32 %v3494, %v3496
    %v3500 = vrot.slane %v3488, 3
    %v3502 = vadd.f32 %v3498, %v3500
    %v3503 = vld [vmem:[%s2] sm:$0x1]
    %v3504 = vadd.f32 %v3502, %v3503
    %vm3505 = vcmp.gt.f32.partialorder %v3504, 0.0
    %v3506 = vmul.f32 %v3504, 0.2
    %v3507 = vsel %vm3505, %v3504, %v3506
    %3508 = vst [vmem:[#allocation2 + $0x1e] sm:$0x1] %v3507
    %v3509 = vld [vmem:[%s0 + $0x3a] sm:$0xf]
    %v3510 = vpack.c.bf16 %v3509, %v3509
    %v3511 = vld [vmem:[%s1] sm:$0xff]
    %v3512 = vld [vmem:[%s1 + $0x8] sm:$0xff]
    %v3513 = vld [vmem:[%s1 + $0x10] sm:$0xff]
    %v3514 = vld [vmem:[%s1 + $0x18] sm:$0xff]
    %v3515 = vld [vmem:[%s1 + $0x20] sm:$0xff]
    %v3516 = vld [vmem:[%s1 + $0x28] sm:$0xff]
    %v3517 = vld [vmem:[%s1 + $0x30] sm:$0xff]
    %v3518 = vld [vmem:[%s1 + $0x38] sm:$0xff]
    %v3527 = vunpack.c.l.b16 %v3511
    %v3528 = vunpack.c.h.b16 %v3511
    %v3529 = vunpack.c.l.b16 %v3512
    %v3530 = vunpack.c.h.b16 %v3512
    %v3531 = vunpack.c.l.b16 %v3513
    %v3532 = vunpack.c.h.b16 %v3513
    %v3533 = vunpack.c.l.b16 %v3514
    %v3534 = vunpack.c.h.b16 %v3514
    %v3535 = vunpack.c.l.b16 %v3515
    %v3536 = vunpack.c.h.b16 %v3515
    %v3537 = vunpack.c.l.b16 %v3516
    %v3538 = vunpack.c.h.b16 %v3516
    %v3539 = vunpack.c.l.b16 %v3517
    %v3540 = vunpack.c.h.b16 %v3517
    %v3541 = vunpack.c.l.b16 %v3518
    %v3542 = vunpack.c.h.b16 %v3518
    %v3543 = vpack.c.b16 %v3531, %v3527
    %v3544 = vpack.c.b16 %v3532, %v3528
    %v3545 = vpack.c.b16 %v3533, %v3529
    %v3546 = vpack.c.b16 %v3534, %v3530
    %v3547 = vpack.c.b16 %v3539, %v3535
    %v3548 = vpack.c.b16 %v3540, %v3536
    %v3549 = vpack.c.b16 %v3541, %v3537
    %v3550 = vpack.c.b16 %v3542, %v3538
    %v3560 = vsel %vm114, %v3510, 0
    %3562 = vmatpush.bf16.msra.mxu0 0
    %3563 = vmatpush.bf16.msra.mxu0 0
    %3564 = vmatpush.bf16.msra.mxu0 0
    %3565 = vmatpush.bf16.msra.mxu0 0
    %3566 = vmatpush.bf16.msra.mxu0 0
    %3567 = vmatpush.bf16.msra.mxu0 0
    %3568 = vmatpush.bf16.msra.mxu0 %v3547
    %3569 = vmatpush.bf16.msra.mxu0 %v3543
    %3570 = vmatmul.bf16.gmra.mxu0 %v3560
    %v3571 = vpop.f32.mrf.mxu0
    %v3572 = vadd.f32 0.0, %v3571
    %v3573 = vpop.f32.mrf.mxu0
    %3574 = vdwg.mxu0
    %3575 = vmatpush.bf16.msra.mxu0 0
    %3576 = vmatpush.bf16.msra.mxu0 0
    %3577 = vmatpush.bf16.msra.mxu0 0
    %3578 = vmatpush.bf16.msra.mxu0 0
    %3579 = vmatpush.bf16.msra.mxu0 0
    %3580 = vmatpush.bf16.msra.mxu0 0
    %3581 = vmatpush.bf16.msra.mxu0 %v3548
    %3582 = vmatpush.bf16.msra.mxu0 %v3544
    %3583 = vmatmul.bf16.gmra.mxu0 %v3560
    %v3584 = vpop.f32.mrf.mxu0
    %v3585 = vadd.f32 0.0, %v3584
    %v3586 = vpop.f32.mrf.mxu0
    %3587 = vdwg.mxu0
    %3588 = vmatpush.bf16.msra.mxu0 0
    %3589 = vmatpush.bf16.msra.mxu0 0
    %3590 = vmatpush.bf16.msra.mxu0 0
    %3591 = vmatpush.bf16.msra.mxu0 0
    %3592 = vmatpush.bf16.msra.mxu0 0
    %3593 = vmatpush.bf16.msra.mxu0 0
    %3594 = vmatpush.bf16.msra.mxu0 %v3549
    %3595 = vmatpush.bf16.msra.mxu0 %v3545
    %3596 = vmatmul.bf16.gmra.mxu0 %v3560
    %v3597 = vpop.f32.mrf.mxu0
    %v3598 = vadd.f32 0.0, %v3597
    %v3599 = vpop.f32.mrf.mxu0
    %3600 = vdwg.mxu0
    %3601 = vmatpush.bf16.msra.mxu0 0
    %3602 = vmatpush.bf16.msra.mxu0 0
    %3603 = vmatpush.bf16.msra.mxu0 0
    %3604 = vmatpush.bf16.msra.mxu0 0
    %3605 = vmatpush.bf16.msra.mxu0 0
    %3606 = vmatpush.bf16.msra.mxu0 0
    %3607 = vmatpush.bf16.msra.mxu0 %v3550
    %3608 = vmatpush.bf16.msra.mxu0 %v3546
    %3609 = vmatmul.bf16.gmra.mxu0 %v3560
    %v3610 = vpop.f32.mrf.mxu0
    %v3611 = vadd.f32 0.0, %v3610
    %v3612 = vpop.f32.mrf.mxu0
    %3613 = vdwg.mxu0
    %v3615 = vrot.slane %v3585, 1
    %v3617 = vadd.f32 %v3572, %v3615
    %v3619 = vrot.slane %v3598, 2
    %v3621 = vadd.f32 %v3617, %v3619
    %v3623 = vrot.slane %v3611, 3
    %v3625 = vadd.f32 %v3621, %v3623
    %v3626 = vld [vmem:[%s2] sm:$0x1]
    %v3627 = vadd.f32 %v3625, %v3626
    %vm3628 = vcmp.gt.f32.partialorder %v3627, 0.0
    %v3629 = vmul.f32 %v3627, 0.2
    %v3630 = vsel %vm3628, %v3627, %v3629
    %3631 = vst [vmem:[#allocation2 + $0x1f] sm:$0x1] %v3630
    %v3632 = vld [vmem:[%s0 + $0x3c] sm:$0xf]
    %v3633 = vpack.c.bf16 %v3632, %v3632
    %v3634 = vld [vmem:[%s1] sm:$0xff]
    %v3635 = vld [vmem:[%s1 + $0x8] sm:$0xff]
    %v3636 = vld [vmem:[%s1 + $0x10] sm:$0xff]
    %v3637 = vld [vmem:[%s1 + $0x18] sm:$0xff]
    %v3638 = vld [vmem:[%s1 + $0x20] sm:$0xff]
    %v3639 = vld [vmem:[%s1 + $0x28] sm:$0xff]
    %v3640 = vld [vmem:[%s1 + $0x30] sm:$0xff]
    %v3641 = vld [vmem:[%s1 + $0x38] sm:$0xff]
    %v3650 = vunpack.c.l.b16 %v3634
    %v3651 = vunpack.c.h.b16 %v3634
    %v3652 = vunpack.c.l.b16 %v3635
    %v3653 = vunpack.c.h.b16 %v3635
    %v3654 = vunpack.c.l.b16 %v3636
    %v3655 = vunpack.c.h.b16 %v3636
    %v3656 = vunpack.c.l.b16 %v3637
    %v3657 = vunpack.c.h.b16 %v3637
    %v3658 = vunpack.c.l.b16 %v3638
    %v3659 = vunpack.c.h.b16 %v3638
    %v3660 = vunpack.c.l.b16 %v3639
    %v3661 = vunpack.c.h.b16 %v3639
    %v3662 = vunpack.c.l.b16 %v3640
    %v3663 = vunpack.c.h.b16 %v3640
    %v3664 = vunpack.c.l.b16 %v3641
    %v3665 = vunpack.c.h.b16 %v3641
    %v3666 = vpack.c.b16 %v3654, %v3650
    %v3667 = vpack.c.b16 %v3655, %v3651
    %v3668 = vpack.c.b16 %v3656, %v3652
    %v3669 = vpack.c.b16 %v3657, %v3653
    %v3670 = vpack.c.b16 %v3662, %v3658
    %v3671 = vpack.c.b16 %v3663, %v3659
    %v3672 = vpack.c.b16 %v3664, %v3660
    %v3673 = vpack.c.b16 %v3665, %v3661
    %v3683 = vsel %vm114, %v3633, 0
    %3685 = vmatpush.bf16.msra.mxu0 0
    %3686 = vmatpush.bf16.msra.mxu0 0
    %3687 = vmatpush.bf16.msra.mxu0 0
    %3688 = vmatpush.bf16.msra.mxu0 0
    %3689 = vmatpush.bf16.msra.mxu0 0
    %3690 = vmatpush.bf16.msra.mxu0 0
    %3691 = vmatpush.bf16.msra.mxu0 %v3670
    %3692 = vmatpush.bf16.msra.mxu0 %v3666
    %3693 = vmatmul.bf16.gmra.mxu0 %v3683
    %v3694 = vpop.f32.mrf.mxu0
    %v3695 = vadd.f32 0.0, %v3694
    %v3696 = vpop.f32.mrf.mxu0
    %3697 = vdwg.mxu0
    %3698 = vmatpush.bf16.msra.mxu0 0
    %3699 = vmatpush.bf16.msra.mxu0 0
    %3700 = vmatpush.bf16.msra.mxu0 0
    %3701 = vmatpush.bf16.msra.mxu0 0
    %3702 = vmatpush.bf16.msra.mxu0 0
    %3703 = vmatpush.bf16.msra.mxu0 0
    %3704 = vmatpush.bf16.msra.mxu0 %v3671
    %3705 = vmatpush.bf16.msra.mxu0 %v3667
    %3706 = vmatmul.bf16.gmra.mxu0 %v3683
    %v3707 = vpop.f32.mrf.mxu0
    %v3708 = vadd.f32 0.0, %v3707
    %v3709 = vpop.f32.mrf.mxu0
    %3710 = vdwg.mxu0
    %3711 = vmatpush.bf16.msra.mxu0 0
    %3712 = vmatpush.bf16.msra.mxu0 0
    %3713 = vmatpush.bf16.msra.mxu0 0
    %3714 = vmatpush.bf16.msra.mxu0 0
    %3715 = vmatpush.bf16.msra.mxu0 0
    %3716 = vmatpush.bf16.msra.mxu0 0
    %3717 = vmatpush.bf16.msra.mxu0 %v3672
    %3718 = vmatpush.bf16.msra.mxu0 %v3668
    %3719 = vmatmul.bf16.gmra.mxu0 %v3683
    %v3720 = vpop.f32.mrf.mxu0
    %v3721 = vadd.f32 0.0, %v3720
    %v3722 = vpop.f32.mrf.mxu0
    %3723 = vdwg.mxu0
    %3724 = vmatpush.bf16.msra.mxu0 0
    %3725 = vmatpush.bf16.msra.mxu0 0
    %3726 = vmatpush.bf16.msra.mxu0 0
    %3727 = vmatpush.bf16.msra.mxu0 0
    %3728 = vmatpush.bf16.msra.mxu0 0
    %3729 = vmatpush.bf16.msra.mxu0 0
    %3730 = vmatpush.bf16.msra.mxu0 %v3673
    %3731 = vmatpush.bf16.msra.mxu0 %v3669
    %3732 = vmatmul.bf16.gmra.mxu0 %v3683
    %v3733 = vpop.f32.mrf.mxu0
    %v3734 = vadd.f32 0.0, %v3733
    %v3735 = vpop.f32.mrf.mxu0
    %3736 = vdwg.mxu0
    %v3738 = vrot.slane %v3708, 1
    %v3740 = vadd.f32 %v3695, %v3738
    %v3742 = vrot.slane %v3721, 2
    %v3744 = vadd.f32 %v3740, %v3742
    %v3746 = vrot.slane %v3734, 3
    %v3748 = vadd.f32 %v3744, %v3746
    %v3749 = vld [vmem:[%s2] sm:$0x1]
    %v3750 = vadd.f32 %v3748, %v3749
    %vm3751 = vcmp.gt.f32.partialorder %v3750, 0.0
    %v3752 = vmul.f32 %v3750, 0.2
    %v3753 = vsel %vm3751, %v3750, %v3752
    %3754 = vst [vmem:[#allocation2 + $0x20] sm:$0x1] %v3753
    %v3755 = vld [vmem:[%s0 + $0x3e] sm:$0xf]
    %v3756 = vpack.c.bf16 %v3755, %v3755
    %v3757 = vld [vmem:[%s1] sm:$0xff]
    %v3758 = vld [vmem:[%s1 + $0x8] sm:$0xff]
    %v3759 = vld [vmem:[%s1 + $0x10] sm:$0xff]
    %v3760 = vld [vmem:[%s1 + $0x18] sm:$0xff]
    %v3761 = vld [vmem:[%s1 + $0x20] sm:$0xff]
    %v3762 = vld [vmem:[%s1 + $0x28] sm:$0xff]
    %v3763 = vld [vmem:[%s1 + $0x30] sm:$0xff]
    %v3764 = vld [vmem:[%s1 + $0x38] sm:$0xff]
    %v3773 = vunpack.c.l.b16 %v3757
    %v3774 = vunpack.c.h.b16 %v3757
    %v3775 = vunpack.c.l.b16 %v3758
    %v3776 = vunpack.c.h.b16 %v3758
    %v3777 = vunpack.c.l.b16 %v3759
    %v3778 = vunpack.c.h.b16 %v3759
    %v3779 = vunpack.c.l.b16 %v3760
    %v3780 = vunpack.c.h.b16 %v3760
    %v3781 = vunpack.c.l.b16 %v3761
    %v3782 = vunpack.c.h.b16 %v3761
    %v3783 = vunpack.c.l.b16 %v3762
    %v3784 = vunpack.c.h.b16 %v3762
    %v3785 = vunpack.c.l.b16 %v3763
    %v3786 = vunpack.c.h.b16 %v3763
    %v3787 = vunpack.c.l.b16 %v3764
    %v3788 = vunpack.c.h.b16 %v3764
    %v3789 = vpack.c.b16 %v3777, %v3773
    %v3790 = vpack.c.b16 %v3778, %v3774
    %v3791 = vpack.c.b16 %v3779, %v3775
    %v3792 = vpack.c.b16 %v3780, %v3776
    %v3793 = vpack.c.b16 %v3785, %v3781
    %v3794 = vpack.c.b16 %v3786, %v3782
    %v3795 = vpack.c.b16 %v3787, %v3783
    %v3796 = vpack.c.b16 %v3788, %v3784
    %v3806 = vsel %vm114, %v3756, 0
    %3808 = vmatpush.bf16.msra.mxu0 0
    %3809 = vmatpush.bf16.msra.mxu0 0
    %3810 = vmatpush.bf16.msra.mxu0 0
    %3811 = vmatpush.bf16.msra.mxu0 0
    %3812 = vmatpush.bf16.msra.mxu0 0
    %3813 = vmatpush.bf16.msra.mxu0 0
    %3814 = vmatpush.bf16.msra.mxu0 %v3793
    %3815 = vmatpush.bf16.msra.mxu0 %v3789
    %3816 = vmatmul.bf16.gmra.mxu0 %v3806
    %v3817 = vpop.f32.mrf.mxu0
    %v3818 = vadd.f32 0.0, %v3817
    %v3819 = vpop.f32.mrf.mxu0
    %3820 = vdwg.mxu0
    %3821 = vmatpush.bf16.msra.mxu0 0
    %3822 = vmatpush.bf16.msra.mxu0 0
    %3823 = vmatpush.bf16.msra.mxu0 0
    %3824 = vmatpush.bf16.msra.mxu0 0
    %3825 = vmatpush.bf16.msra.mxu0 0
    %3826 = vmatpush.bf16.msra.mxu0 0
    %3827 = vmatpush.bf16.msra.mxu0 %v3794
    %3828 = vmatpush.bf16.msra.mxu0 %v3790
    %3829 = vmatmul.bf16.gmra.mxu0 %v3806
    %v3830 = vpop.f32.mrf.mxu0
    %v3831 = vadd.f32 0.0, %v3830
    %v3832 = vpop.f32.mrf.mxu0
    %3833 = vdwg.mxu0
    %3834 = vmatpush.bf16.msra.mxu0 0
    %3835 = vmatpush.bf16.msra.mxu0 0
    %3836 = vmatpush.bf16.msra.mxu0 0
    %3837 = vmatpush.bf16.msra.mxu0 0
    %3838 = vmatpush.bf16.msra.mxu0 0
    %3839 = vmatpush.bf16.msra.mxu0 0
    %3840 = vmatpush.bf16.msra.mxu0 %v3795
    %3841 = vmatpush.bf16.msra.mxu0 %v3791
    %3842 = vmatmul.bf16.gmra.mxu0 %v3806
    %v3843 = vpop.f32.mrf.mxu0
    %v3844 = vadd.f32 0.0, %v3843
    %v3845 = vpop.f32.mrf.mxu0
    %3846 = vdwg.mxu0
    %3847 = vmatpush.bf16.msra.mxu0 0
    %3848 = vmatpush.bf16.msra.mxu0 0
    %3849 = vmatpush.bf16.msra.mxu0 0
    %3850 = vmatpush.bf16.msra.mxu0 0
    %3851 = vmatpush.bf16.msra.mxu0 0
    %3852 = vmatpush.bf16.msra.mxu0 0
    %3853 = vmatpush.bf16.msra.mxu0 %v3796
    %3854 = vmatpush.bf16.msra.mxu0 %v3792
    %3855 = vmatmul.bf16.gmra.mxu0 %v3806
    %v3856 = vpop.f32.mrf.mxu0
    %v3857 = vadd.f32 0.0, %v3856
    %v3858 = vpop.f32.mrf.mxu0
    %3859 = vdwg.mxu0
    %v3861 = vrot.slane %v3831, 1
    %v3863 = vadd.f32 %v3818, %v3861
    %v3865 = vrot.slane %v3844, 2
    %v3867 = vadd.f32 %v3863, %v3865
    %v3869 = vrot.slane %v3857, 3
    %v3871 = vadd.f32 %v3867, %v3869
    %v3872 = vld [vmem:[%s2] sm:$0x1]
    %v3873 = vadd.f32 %v3871, %v3872
    %vm3874 = vcmp.gt.f32.partialorder %v3873, 0.0
    %v3875 = vmul.f32 %v3873, 0.2
    %v3876 = vsel %vm3874, %v3873, %v3875
    %3877 = vst [vmem:[#allocation2 + $0x21] sm:$0x1] %v3876
    %v3878 = vld [vmem:[%s0 + $0x40] sm:$0xf]
    %v3879 = vpack.c.bf16 %v3878, %v3878
    %v3880 = vld [vmem:[%s1] sm:$0xff]
    %v3881 = vld [vmem:[%s1 + $0x8] sm:$0xff]
    %v3882 = vld [vmem:[%s1 + $0x10] sm:$0xff]
    %v3883 = vld [vmem:[%s1 + $0x18] sm:$0xff]
    %v3884 = vld [vmem:[%s1 + $0x20] sm:$0xff]
    %v3885 = vld [vmem:[%s1 + $0x28] sm:$0xff]
    %v3886 = vld [vmem:[%s1 + $0x30] sm:$0xff]
    %v3887 = vld [vmem:[%s1 + $0x38] sm:$0xff]
    %v3896 = vunpack.c.l.b16 %v3880
    %v3897 = vunpack.c.h.b16 %v3880
    %v3898 = vunpack.c.l.b16 %v3881
    %v3899 = vunpack.c.h.b16 %v3881
    %v3900 = vunpack.c.l.b16 %v3882
    %v3901 = vunpack.c.h.b16 %v3882
    %v3902 = vunpack.c.l.b16 %v3883
    %v3903 = vunpack.c.h.b16 %v3883
    %v3904 = vunpack.c.l.b16 %v3884
    %v3905 = vunpack.c.h.b16 %v3884
    %v3906 = vunpack.c.l.b16 %v3885
    %v3907 = vunpack.c.h.b16 %v3885
    %v3908 = vunpack.c.l.b16 %v3886
    %v3909 = vunpack.c.h.b16 %v3886
    %v3910 = vunpack.c.l.b16 %v3887
    %v3911 = vunpack.c.h.b16 %v3887
    %v3912 = vpack.c.b16 %v3900, %v3896
    %v3913 = vpack.c.b16 %v3901, %v3897
    %v3914 = vpack.c.b16 %v3902, %v3898
    %v3915 = vpack.c.b16 %v3903, %v3899
    %v3916 = vpack.c.b16 %v3908, %v3904
    %v3917 = vpack.c.b16 %v3909, %v3905
    %v3918 = vpack.c.b16 %v3910, %v3906
    %v3919 = vpack.c.b16 %v3911, %v3907
    %v3929 = vsel %vm114, %v3879, 0
    %3931 = vmatpush.bf16.msra.mxu0 0
    %3932 = vmatpush.bf16.msra.mxu0 0
    %3933 = vmatpush.bf16.msra.mxu0 0
    %3934 = vmatpush.bf16.msra.mxu0 0
    %3935 = vmatpush.bf16.msra.mxu0 0
    %3936 = vmatpush.bf16.msra.mxu0 0
    %3937 = vmatpush.bf16.msra.mxu0 %v3916
    %3938 = vmatpush.bf16.msra.mxu0 %v3912
    %3939 = vmatmul.bf16.gmra.mxu0 %v3929
    %v3940 = vpop.f32.mrf.mxu0
    %v3941 = vadd.f32 0.0, %v3940
    %v3942 = vpop.f32.mrf.mxu0
    %3943 = vdwg.mxu0
    %3944 = vmatpush.bf16.msra.mxu0 0
    %3945 = vmatpush.bf16.msra.mxu0 0
    %3946 = vmatpush.bf16.msra.mxu0 0
    %3947 = vmatpush.bf16.msra.mxu0 0
    %3948 = vmatpush.bf16.msra.mxu0 0
    %3949 = vmatpush.bf16.msra.mxu0 0
    %3950 = vmatpush.bf16.msra.mxu0 %v3917
    %3951 = vmatpush.bf16.msra.mxu0 %v3913
    %3952 = vmatmul.bf16.gmra.mxu0 %v3929
    %v3953 = vpop.f32.mrf.mxu0
    %v3954 = vadd.f32 0.0, %v3953
    %v3955 = vpop.f32.mrf.mxu0
    %3956 = vdwg.mxu0
    %3957 = vmatpush.bf16.msra.mxu0 0
    %3958 = vmatpush.bf16.msra.mxu0 0
    %3959 = vmatpush.bf16.msra.mxu0 0
    %3960 = vmatpush.bf16.msra.mxu0 0
    %3961 = vmatpush.bf16.msra.mxu0 0
    %3962 = vmatpush.bf16.msra.mxu0 0
    %3963 = vmatpush.bf16.msra.mxu0 %v3918
    %3964 = vmatpush.bf16.msra.mxu0 %v3914
    %3965 = vmatmul.bf16.gmra.mxu0 %v3929
    %v3966 = vpop.f32.mrf.mxu0
    %v3967 = vadd.f32 0.0, %v3966
    %v3968 = vpop.f32.mrf.mxu0
    %3969 = vdwg.mxu0
    %3970 = vmatpush.bf16.msra.mxu0 0
    %3971 = vmatpush.bf16.msra.mxu0 0
    %3972 = vmatpush.bf16.msra.mxu0 0
    %3973 = vmatpush.bf16.msra.mxu0 0
    %3974 = vmatpush.bf16.msra.mxu0 0
    %3975 = vmatpush.bf16.msra.mxu0 0
    %3976 = vmatpush.bf16.msra.mxu0 %v3919
    %3977 = vmatpush.bf16.msra.mxu0 %v3915
    %3978 = vmatmul.bf16.gmra.mxu0 %v3929
    %v3979 = vpop.f32.mrf.mxu0
    %v3980 = vadd.f32 0.0, %v3979
    %v3981 = vpop.f32.mrf.mxu0
    %3982 = vdwg.mxu0
    %v3984 = vrot.slane %v3954, 1
    %v3986 = vadd.f32 %v3941, %v3984
    %v3988 = vrot.slane %v3967, 2
    %v3990 = vadd.f32 %v3986, %v3988
    %v3992 = vrot.slane %v3980, 3
    %v3994 = vadd.f32 %v3990, %v3992
    %v3995 = vld [vmem:[%s2] sm:$0x1]
    %v3996 = vadd.f32 %v3994, %v3995
    %vm3997 = vcmp.gt.f32.partialorder %v3996, 0.0
    %v3998 = vmul.f32 %v3996, 0.2
    %v3999 = vsel %vm3997, %v3996, %v3998
    %4000 = vst [vmem:[#allocation2 + $0x22] sm:$0x1] %v3999
    %v4001 = vld [vmem:[#allocation2] sm:$0xf]
    %v4002 = vpack.c.bf16 %v4001, %v4001
    %v4003 = vld [vmem:[%s3] sm:$0xff]
    %v4004 = vld [vmem:[%s3 + $0x8] sm:$0xff]
    %v4005 = vld [vmem:[%s3 + $0x10] sm:$0xff]
    %v4006 = vld [vmem:[%s3 + $0x18] sm:$0xff]
    %v4007 = vld [vmem:[%s3 + $0x20] sm:$0xff]
    %v4008 = vld [vmem:[%s3 + $0x28] sm:$0xff]
    %v4009 = vld [vmem:[%s3 + $0x30] sm:$0xff]
    %v4010 = vld [vmem:[%s3 + $0x38] sm:$0xff]
    %v4011 = vld [vmem:[%s3 + $0x40] sm:$0xff]
    %v4012 = vld [vmem:[%s3 + $0x48] sm:$0xff]
    %v4013 = vld [vmem:[%s3 + $0x50] sm:$0xff]
    %v4014 = vld [vmem:[%s3 + $0x58] sm:$0xff]
    %v4015 = vld [vmem:[%s3 + $0x60] sm:$0xff]
    %v4016 = vld [vmem:[%s3 + $0x68] sm:$0xff]
    %v4017 = vld [vmem:[%s3 + $0x70] sm:$0xff]
    %v4018 = vld [vmem:[%s3 + $0x78] sm:$0xff]
    %v4019 = vld [vmem:[%s3 + $0x80] sm:$0xff]
    %v4020 = vld [vmem:[%s3 + $0x88] sm:$0xff]
    %v4021 = vld [vmem:[%s3 + $0x90] sm:$0xff]
    %v4022 = vld [vmem:[%s3 + $0x98] sm:$0xff]
    %v4023 = vld [vmem:[%s3 + $0xa0] sm:$0xff]
    %v4024 = vld [vmem:[%s3 + $0xa8] sm:$0xff]
    %v4025 = vld [vmem:[%s3 + $0xb0] sm:$0xff]
    %v4026 = vld [vmem:[%s3 + $0xb8] sm:$0xff]
    %v4027 = vld [vmem:[%s3 + $0xc0] sm:$0xff]
    %v4028 = vld [vmem:[%s3 + $0xc8] sm:$0xff]
    %v4029 = vld [vmem:[%s3 + $0xd0] sm:$0xff]
    %v4030 = vld [vmem:[%s3 + $0xd8] sm:$0xff]
    %v4031 = vld [vmem:[%s3 + $0xe0] sm:$0xff]
    %v4032 = vld [vmem:[%s3 + $0xe8] sm:$0xff]
    %v4033 = vld [vmem:[%s3 + $0xf0] sm:$0xff]
    %v4034 = vld [vmem:[%s3 + $0xf8] sm:$0xff]
    %v4067 = vunpack.c.l.b16 %v4003
    %v4068 = vunpack.c.h.b16 %v4003
    %v4069 = vunpack.c.l.b16 %v4004
    %v4070 = vunpack.c.h.b16 %v4004
    %v4071 = vunpack.c.l.b16 %v4005
    %v4072 = vunpack.c.h.b16 %v4005
    %v4073 = vunpack.c.l.b16 %v4006
    %v4074 = vunpack.c.h.b16 %v4006
    %v4075 = vunpack.c.l.b16 %v4007
    %v4076 = vunpack.c.h.b16 %v4007
    %v4077 = vunpack.c.l.b16 %v4008
    %v4078 = vunpack.c.h.b16 %v4008
    %v4079 = vunpack.c.l.b16 %v4009
    %v4080 = vunpack.c.h.b16 %v4009
    %v4081 = vunpack.c.l.b16 %v4010
    %v4082 = vunpack.c.h.b16 %v4010
    %v4083 = vunpack.c.l.b16 %v4011
    %v4084 = vunpack.c.h.b16 %v4011
    %v4085 = vunpack.c.l.b16 %v4012
    %v4086 = vunpack.c.h.b16 %v4012
    %v4087 = vunpack.c.l.b16 %v4013
    %v4088 = vunpack.c.h.b16 %v4013
    %v4089 = vunpack.c.l.b16 %v4014
    %v4090 = vunpack.c.h.b16 %v4014
    %v4091 = vunpack.c.l.b16 %v4015
    %v4092 = vunpack.c.h.b16 %v4015
    %v4093 = vunpack.c.l.b16 %v4016
    %v4094 = vunpack.c.h.b16 %v4016
    %v4095 = vunpack.c.l.b16 %v4017
    %v4096 = vunpack.c.h.b16 %v4017
    %v4097 = vunpack.c.l.b16 %v4018
    %v4098 = vunpack.c.h.b16 %v4018
    %v4099 = vunpack.c.l.b16 %v4019
    %v4100 = vunpack.c.h.b16 %v4019
    %v4101 = vunpack.c.l.b16 %v4020
    %v4102 = vunpack.c.h.b16 %v4020
    %v4103 = vunpack.c.l.b16 %v4021
    %v4104 = vunpack.c.h.b16 %v4021
    %v4105 = vunpack.c.l.b16 %v4022
    %v4106 = vunpack.c.h.b16 %v4022
    %v4107 = vunpack.c.l.b16 %v4023
    %v4108 = vunpack.c.h.b16 %v4023
    %v4109 = vunpack.c.l.b16 %v4024
    %v4110 = vunpack.c.h.b16 %v4024
    %v4111 = vunpack.c.l.b16 %v4025
    %v4112 = vunpack.c.h.b16 %v4025
    %v4113 = vunpack.c.l.b16 %v4026
    %v4114 = vunpack.c.h.b16 %v4026
    %v4115 = vunpack.c.l.b16 %v4027
    %v4116 = vunpack.c.h.b16 %v4027
    %v4117 = vunpack.c.l.b16 %v4028
    %v4118 = vunpack.c.h.b16 %v4028
    %v4119 = vunpack.c.l.b16 %v4029
    %v4120 = vunpack.c.h.b16 %v4029
    %v4121 = vunpack.c.l.b16 %v4030
    %v4122 = vunpack.c.h.b16 %v4030
    %v4123 = vunpack.c.l.b16 %v4031
    %v4124 = vunpack.c.h.b16 %v4031
    %v4125 = vunpack.c.l.b16 %v4032
    %v4126 = vunpack.c.h.b16 %v4032
    %v4127 = vunpack.c.l.b16 %v4033
    %v4128 = vunpack.c.h.b16 %v4033
    %v4129 = vunpack.c.l.b16 %v4034
    %v4130 = vunpack.c.h.b16 %v4034
    %v4131 = vpack.c.b16 %v4071, %v4067
    %v4132 = vpack.c.b16 %v4072, %v4068
    %v4133 = vpack.c.b16 %v4073, %v4069
    %v4134 = vpack.c.b16 %v4074, %v4070
    %v4135 = vpack.c.b16 %v4079, %v4075
    %v4136 = vpack.c.b16 %v4080, %v4076
    %v4137 = vpack.c.b16 %v4081, %v4077
    %v4138 = vpack.c.b16 %v4082, %v4078
    %v4139 = vpack.c.b16 %v4087, %v4083
    %v4140 = vpack.c.b16 %v4088, %v4084
    %v4141 = vpack.c.b16 %v4089, %v4085
    %v4142 = vpack.c.b16 %v4090, %v4086
    %v4143 = vpack.c.b16 %v4095, %v4091
    %v4144 = vpack.c.b16 %v4096, %v4092
    %v4145 = vpack.c.b16 %v4097, %v4093
    %v4146 = vpack.c.b16 %v4098, %v4094
    %v4147 = vpack.c.b16 %v4103, %v4099
    %v4148 = vpack.c.b16 %v4104, %v4100
    %v4149 = vpack.c.b16 %v4105, %v4101
    %v4150 = vpack.c.b16 %v4106, %v4102
    %v4151 = vpack.c.b16 %v4111, %v4107
    %v4152 = vpack.c.b16 %v4112, %v4108
    %v4153 = vpack.c.b16 %v4113, %v4109
    %v4154 = vpack.c.b16 %v4114, %v4110
    %v4155 = vpack.c.b16 %v4119, %v4115
    %v4156 = vpack.c.b16 %v4120, %v4116
    %v4157 = vpack.c.b16 %v4121, %v4117
    %v4158 = vpack.c.b16 %v4122, %v4118
    %v4159 = vpack.c.b16 %v4127, %v4123
    %v4160 = vpack.c.b16 %v4128, %v4124
    %v4161 = vpack.c.b16 %v4129, %v4125
    %v4162 = vpack.c.b16 %v4130, %v4126
    %4195 = vmatpush.bf16.msra.mxu0 %v4159
    %4196 = vmatpush.bf16.msra.mxu0 %v4155
    %4197 = vmatpush.bf16.msra.mxu0 %v4151
    %4198 = vmatpush.bf16.msra.mxu0 %v4147
    %4199 = vmatpush.bf16.msra.mxu0 %v4143
    %4200 = vmatpush.bf16.msra.mxu0 %v4139
    %4201 = vmatpush.bf16.msra.mxu0 %v4135
    %4202 = vmatpush.bf16.msra.mxu0 %v4131
    %4203 = vmatmul.bf16.gmra.mxu0 %v4002
    %v4204 = vpop.f32.mrf.mxu0
    %v4205 = vadd.f32 0.0, %v4204
    %v4206 = vpop.f32.mrf.mxu0
    %4207 = vdwg.mxu0
    %4208 = vmatpush.bf16.msra.mxu0 %v4160
    %4209 = vmatpush.bf16.msra.mxu0 %v4156
    %4210 = vmatpush.bf16.msra.mxu0 %v4152
    %4211 = vmatpush.bf16.msra.mxu0 %v4148
    %4212 = vmatpush.bf16.msra.mxu0 %v4144
    %4213 = vmatpush.bf16.msra.mxu0 %v4140
    %4214 = vmatpush.bf16.msra.mxu0 %v4136
    %4215 = vmatpush.bf16.msra.mxu0 %v4132
    %4216 = vmatmul.bf16.gmra.mxu0 %v4002
    %v4217 = vpop.f32.mrf.mxu0
    %v4218 = vadd.f32 0.0, %v4217
    %v4219 = vpop.f32.mrf.mxu0
    %4220 = vdwg.mxu0
    %4221 = vmatpush.bf16.msra.mxu0 %v4161
    %4222 = vmatpush.bf16.msra.mxu0 %v4157
    %4223 = vmatpush.bf16.msra.mxu0 %v4153
    %4224 = vmatpush.bf16.msra.mxu0 %v4149
    %4225 = vmatpush.bf16.msra.mxu0 %v4145
    %4226 = vmatpush.bf16.msra.mxu0 %v4141
    %4227 = vmatpush.bf16.msra.mxu0 %v4137
    %4228 = vmatpush.bf16.msra.mxu0 %v4133
    %4229 = vmatmul.bf16.gmra.mxu0 %v4002
    %v4230 = vpop.f32.mrf.mxu0
    %v4231 = vadd.f32 0.0, %v4230
    %v4232 = vpop.f32.mrf.mxu0
    %4233 = vdwg.mxu0
    %4234 = vmatpush.bf16.msra.mxu0 %v4162
    %4235 = vmatpush.bf16.msra.mxu0 %v4158
    %4236 = vmatpush.bf16.msra.mxu0 %v4154
    %4237 = vmatpush.bf16.msra.mxu0 %v4150
    %4238 = vmatpush.bf16.msra.mxu0 %v4146
    %4239 = vmatpush.bf16.msra.mxu0 %v4142
    %4240 = vmatpush.bf16.msra.mxu0 %v4138
    %4241 = vmatpush.bf16.msra.mxu0 %v4134
    %4242 = vmatmul.bf16.gmra.mxu0 %v4002
    %v4243 = vpop.f32.mrf.mxu0
    %v4244 = vadd.f32 0.0, %v4243
    %v4245 = vpop.f32.mrf.mxu0
    %4246 = vdwg.mxu0
    %v4248 = vrot.slane %v4218, 1
    %v4250 = vadd.f32 %v4205, %v4248
    %v4252 = vrot.slane %v4231, 2
    %v4254 = vadd.f32 %v4250, %v4252
    %v4256 = vrot.slane %v4244, 3
    %v4258 = vadd.f32 %v4254, %v4256
    %4259 = vst [vmem:[#allocation4] sm:$0x1] %v4258
    %v4260 = vld [vmem:[#allocation2 + $0x2] sm:$0xf]
    %v4261 = vpack.c.bf16 %v4260, %v4260
    %v4262 = vld [vmem:[%s3] sm:$0xff]
    %v4263 = vld [vmem:[%s3 + $0x8] sm:$0xff]
    %v4264 = vld [vmem:[%s3 + $0x10] sm:$0xff]
    %v4265 = vld [vmem:[%s3 + $0x18] sm:$0xff]
    %v4266 = vld [vmem:[%s3 + $0x20] sm:$0xff]
    %v4267 = vld [vmem:[%s3 + $0x28] sm:$0xff]
    %v4268 = vld [vmem:[%s3 + $0x30] sm:$0xff]
    %v4269 = vld [vmem:[%s3 + $0x38] sm:$0xff]
    %v4270 = vld [vmem:[%s3 + $0x40] sm:$0xff]
    %v4271 = vld [vmem:[%s3 + $0x48] sm:$0xff]
    %v4272 = vld [vmem:[%s3 + $0x50] sm:$0xff]
    %v4273 = vld [vmem:[%s3 + $0x58] sm:$0xff]
    %v4274 = vld [vmem:[%s3 + $0x60] sm:$0xff]
    %v4275 = vld [vmem:[%s3 + $0x68] sm:$0xff]
    %v4276 = vld [vmem:[%s3 + $0x70] sm:$0xff]
    %v4277 = vld [vmem:[%s3 + $0x78] sm:$0xff]
    %v4278 = vld [vmem:[%s3 + $0x80] sm:$0xff]
    %v4279 = vld [vmem:[%s3 + $0x88] sm:$0xff]
    %v4280 = vld [vmem:[%s3 + $0x90] sm:$0xff]
    %v4281 = vld [vmem:[%s3 + $0x98] sm:$0xff]
    %v4282 = vld [vmem:[%s3 + $0xa0] sm:$0xff]
    %v4283 = vld [vmem:[%s3 + $0xa8] sm:$0xff]
    %v4284 = vld [vmem:[%s3 + $0xb0] sm:$0xff]
    %v4285 = vld [vmem:[%s3 + $0xb8] sm:$0xff]
    %v4286 = vld [vmem:[%s3 + $0xc0] sm:$0xff]
    %v4287 = vld [vmem:[%s3 + $0xc8] sm:$0xff]
    %v4288 = vld [vmem:[%s3 + $0xd0] sm:$0xff]
    %v4289 = vld [vmem:[%s3 + $0xd8] sm:$0xff]
    %v4290 = vld [vmem:[%s3 + $0xe0] sm:$0xff]
    %v4291 = vld [vmem:[%s3 + $0xe8] sm:$0xff]
    %v4292 = vld [vmem:[%s3 + $0xf0] sm:$0xff]
    %v4293 = vld [vmem:[%s3 + $0xf8] sm:$0xff]
    %v4326 = vunpack.c.l.b16 %v4262
    %v4327 = vunpack.c.h.b16 %v4262
    %v4328 = vunpack.c.l.b16 %v4263
    %v4329 = vunpack.c.h.b16 %v4263
    %v4330 = vunpack.c.l.b16 %v4264
    %v4331 = vunpack.c.h.b16 %v4264
    %v4332 = vunpack.c.l.b16 %v4265
    %v4333 = vunpack.c.h.b16 %v4265
    %v4334 = vunpack.c.l.b16 %v4266
    %v4335 = vunpack.c.h.b16 %v4266
    %v4336 = vunpack.c.l.b16 %v4267
    %v4337 = vunpack.c.h.b16 %v4267
    %v4338 = vunpack.c.l.b16 %v4268
    %v4339 = vunpack.c.h.b16 %v4268
    %v4340 = vunpack.c.l.b16 %v4269
    %v4341 = vunpack.c.h.b16 %v4269
    %v4342 = vunpack.c.l.b16 %v4270
    %v4343 = vunpack.c.h.b16 %v4270
    %v4344 = vunpack.c.l.b16 %v4271
    %v4345 = vunpack.c.h.b16 %v4271
    %v4346 = vunpack.c.l.b16 %v4272
    %v4347 = vunpack.c.h.b16 %v4272
    %v4348 = vunpack.c.l.b16 %v4273
    %v4349 = vunpack.c.h.b16 %v4273
    %v4350 = vunpack.c.l.b16 %v4274
    %v4351 = vunpack.c.h.b16 %v4274
    %v4352 = vunpack.c.l.b16 %v4275
    %v4353 = vunpack.c.h.b16 %v4275
    %v4354 = vunpack.c.l.b16 %v4276
    %v4355 = vunpack.c.h.b16 %v4276
    %v4356 = vunpack.c.l.b16 %v4277
    %v4357 = vunpack.c.h.b16 %v4277
    %v4358 = vunpack.c.l.b16 %v4278
    %v4359 = vunpack.c.h.b16 %v4278
    %v4360 = vunpack.c.l.b16 %v4279
    %v4361 = vunpack.c.h.b16 %v4279
    %v4362 = vunpack.c.l.b16 %v4280
    %v4363 = vunpack.c.h.b16 %v4280
    %v4364 = vunpack.c.l.b16 %v4281
    %v4365 = vunpack.c.h.b16 %v4281
    %v4366 = vunpack.c.l.b16 %v4282
    %v4367 = vunpack.c.h.b16 %v4282
    %v4368 = vunpack.c.l.b16 %v4283
    %v4369 = vunpack.c.h.b16 %v4283
    %v4370 = vunpack.c.l.b16 %v4284
    %v4371 = vunpack.c.h.b16 %v4284
    %v4372 = vunpack.c.l.b16 %v4285
    %v4373 = vunpack.c.h.b16 %v4285
    %v4374 = vunpack.c.l.b16 %v4286
    %v4375 = vunpack.c.h.b16 %v4286
    %v4376 = vunpack.c.l.b16 %v4287
    %v4377 = vunpack.c.h.b16 %v4287
    %v4378 = vunpack.c.l.b16 %v4288
    %v4379 = vunpack.c.h.b16 %v4288
    %v4380 = vunpack.c.l.b16 %v4289
    %v4381 = vunpack.c.h.b16 %v4289
    %v4382 = vunpack.c.l.b16 %v4290
    %v4383 = vunpack.c.h.b16 %v4290
    %v4384 = vunpack.c.l.b16 %v4291
    %v4385 = vunpack.c.h.b16 %v4291
    %v4386 = vunpack.c.l.b16 %v4292
    %v4387 = vunpack.c.h.b16 %v4292
    %v4388 = vunpack.c.l.b16 %v4293
    %v4389 = vunpack.c.h.b16 %v4293
    %v4390 = vpack.c.b16 %v4330, %v4326
    %v4391 = vpack.c.b16 %v4331, %v4327
    %v4392 = vpack.c.b16 %v4332, %v4328
    %v4393 = vpack.c.b16 %v4333, %v4329
    %v4394 = vpack.c.b16 %v4338, %v4334
    %v4395 = vpack.c.b16 %v4339, %v4335
    %v4396 = vpack.c.b16 %v4340, %v4336
    %v4397 = vpack.c.b16 %v4341, %v4337
    %v4398 = vpack.c.b16 %v4346, %v4342
    %v4399 = vpack.c.b16 %v4347, %v4343
    %v4400 = vpack.c.b16 %v4348, %v4344
    %v4401 = vpack.c.b16 %v4349, %v4345
    %v4402 = vpack.c.b16 %v4354, %v4350
    %v4403 = vpack.c.b16 %v4355, %v4351
    %v4404 = vpack.c.b16 %v4356, %v4352
    %v4405 = vpack.c.b16 %v4357, %v4353
    %v4406 = vpack.c.b16 %v4362, %v4358
    %v4407 = vpack.c.b16 %v4363, %v4359
    %v4408 = vpack.c.b16 %v4364, %v4360
    %v4409 = vpack.c.b16 %v4365, %v4361
    %v4410 = vpack.c.b16 %v4370, %v4366
    %v4411 = vpack.c.b16 %v4371, %v4367
    %v4412 = vpack.c.b16 %v4372, %v4368
    %v4413 = vpack.c.b16 %v4373, %v4369
    %v4414 = vpack.c.b16 %v4378, %v4374
    %v4415 = vpack.c.b16 %v4379, %v4375
    %v4416 = vpack.c.b16 %v4380, %v4376
    %v4417 = vpack.c.b16 %v4381, %v4377
    %v4418 = vpack.c.b16 %v4386, %v4382
    %v4419 = vpack.c.b16 %v4387, %v4383
    %v4420 = vpack.c.b16 %v4388, %v4384
    %v4421 = vpack.c.b16 %v4389, %v4385
    %4454 = vmatpush.bf16.msra.mxu0 %v4418
    %4455 = vmatpush.bf16.msra.mxu0 %v4414
    %4456 = vmatpush.bf16.msra.mxu0 %v4410
    %4457 = vmatpush.bf16.msra.mxu0 %v4406
    %4458 = vmatpush.bf16.msra.mxu0 %v4402
    %4459 = vmatpush.bf16.msra.mxu0 %v4398
    %4460 = vmatpush.bf16.msra.mxu0 %v4394
    %4461 = vmatpush.bf16.msra.mxu0 %v4390
    %4462 = vmatmul.bf16.gmra.mxu0 %v4261
    %v4463 = vpop.f32.mrf.mxu0
    %v4464 = vadd.f32 0.0, %v4463
    %v4465 = vpop.f32.mrf.mxu0
    %4466 = vdwg.mxu0
    %4467 = vmatpush.bf16.msra.mxu0 %v4419
    %4468 = vmatpush.bf16.msra.mxu0 %v4415
    %4469 = vmatpush.bf16.msra.mxu0 %v4411
    %4470 = vmatpush.bf16.msra.mxu0 %v4407
    %4471 = vmatpush.bf16.msra.mxu0 %v4403
    %4472 = vmatpush.bf16.msra.mxu0 %v4399
    %4473 = vmatpush.bf16.msra.mxu0 %v4395
    %4474 = vmatpush.bf16.msra.mxu0 %v4391
    %4475 = vmatmul.bf16.gmra.mxu0 %v4261
    %v4476 = vpop.f32.mrf.mxu0
    %v4477 = vadd.f32 0.0, %v4476
    %v4478 = vpop.f32.mrf.mxu0
    %4479 = vdwg.mxu0
    %4480 = vmatpush.bf16.msra.mxu0 %v4420
    %4481 = vmatpush.bf16.msra.mxu0 %v4416
    %4482 = vmatpush.bf16.msra.mxu0 %v4412
    %4483 = vmatpush.bf16.msra.mxu0 %v4408
    %4484 = vmatpush.bf16.msra.mxu0 %v4404
    %4485 = vmatpush.bf16.msra.mxu0 %v4400
    %4486 = vmatpush.bf16.msra.mxu0 %v4396
    %4487 = vmatpush.bf16.msra.mxu0 %v4392
    %4488 = vmatmul.bf16.gmra.mxu0 %v4261
    %v4489 = vpop.f32.mrf.mxu0
    %v4490 = vadd.f32 0.0, %v4489
    %v4491 = vpop.f32.mrf.mxu0
    %4492 = vdwg.mxu0
    %4493 = vmatpush.bf16.msra.mxu0 %v4421
    %4494 = vmatpush.bf16.msra.mxu0 %v4417
    %4495 = vmatpush.bf16.msra.mxu0 %v4413
    %4496 = vmatpush.bf16.msra.mxu0 %v4409
    %4497 = vmatpush.bf16.msra.mxu0 %v4405
    %4498 = vmatpush.bf16.msra.mxu0 %v4401
    %4499 = vmatpush.bf16.msra.mxu0 %v4397
    %4500 = vmatpush.bf16.msra.mxu0 %v4393
    %4501 = vmatmul.bf16.gmra.mxu0 %v4261
    %v4502 = vpop.f32.mrf.mxu0
    %v4503 = vadd.f32 0.0, %v4502
    %v4504 = vpop.f32.mrf.mxu0
    %4505 = vdwg.mxu0
    %v4507 = vrot.slane %v4477, 1
    %v4509 = vadd.f32 %v4464, %v4507
    %v4511 = vrot.slane %v4490, 2
    %v4513 = vadd.f32 %v4509, %v4511
    %v4515 = vrot.slane %v4503, 3
    %v4517 = vadd.f32 %v4513, %v4515
    %4518 = vst [vmem:[#allocation4 + $0x1] sm:$0x1] %v4517
    %v4519 = vld [vmem:[#allocation2 + $0x4] sm:$0xf]
    %v4520 = vpack.c.bf16 %v4519, %v4519
    %v4521 = vld [vmem:[%s3] sm:$0xff]
    %v4522 = vld [vmem:[%s3 + $0x8] sm:$0xff]
    %v4523 = vld [vmem:[%s3 + $0x10] sm:$0xff]
    %v4524 = vld [vmem:[%s3 + $0x18] sm:$0xff]
    %v4525 = vld [vmem:[%s3 + $0x20] sm:$0xff]
    %v4526 = vld [vmem:[%s3 + $0x28] sm:$0xff]
    %v4527 = vld [vmem:[%s3 + $0x30] sm:$0xff]
    %v4528 = vld [vmem:[%s3 + $0x38] sm:$0xff]
    %v4529 = vld [vmem:[%s3 + $0x40] sm:$0xff]
    %v4530 = vld [vmem:[%s3 + $0x48] sm:$0xff]
    %v4531 = vld [vmem:[%s3 + $0x50] sm:$0xff]
    %v4532 = vld [vmem:[%s3 + $0x58] sm:$0xff]
    %v4533 = vld [vmem:[%s3 + $0x60] sm:$0xff]
    %v4534 = vld [vmem:[%s3 + $0x68] sm:$0xff]
    %v4535 = vld [vmem:[%s3 + $0x70] sm:$0xff]
    %v4536 = vld [vmem:[%s3 + $0x78] sm:$0xff]
    %v4537 = vld [vmem:[%s3 + $0x80] sm:$0xff]
    %v4538 = vld [vmem:[%s3 + $0x88] sm:$0xff]
    %v4539 = vld [vmem:[%s3 + $0x90] sm:$0xff]
    %v4540 = vld [vmem:[%s3 + $0x98] sm:$0xff]
    %v4541 = vld [vmem:[%s3 + $0xa0] sm:$0xff]
    %v4542 = vld [vmem:[%s3 + $0xa8] sm:$0xff]
    %v4543 = vld [vmem:[%s3 + $0xb0] sm:$0xff]
    %v4544 = vld [vmem:[%s3 + $0xb8] sm:$0xff]
    %v4545 = vld [vmem:[%s3 + $0xc0] sm:$0xff]
    %v4546 = vld [vmem:[%s3 + $0xc8] sm:$0xff]
    %v4547 = vld [vmem:[%s3 + $0xd0] sm:$0xff]
    %v4548 = vld [vmem:[%s3 + $0xd8] sm:$0xff]
    %v4549 = vld [vmem:[%s3 + $0xe0] sm:$0xff]
    %v4550 = vld [vmem:[%s3 + $0xe8] sm:$0xff]
    %v4551 = vld [vmem:[%s3 + $0xf0] sm:$0xff]
    %v4552 = vld [vmem:[%s3 + $0xf8] sm:$0xff]
    %v4585 = vunpack.c.l.b16 %v4521
    %v4586 = vunpack.c.h.b16 %v4521
    %v4587 = vunpack.c.l.b16 %v4522
    %v4588 = vunpack.c.h.b16 %v4522
    %v4589 = vunpack.c.l.b16 %v4523
    %v4590 = vunpack.c.h.b16 %v4523
    %v4591 = vunpack.c.l.b16 %v4524
    %v4592 = vunpack.c.h.b16 %v4524
    %v4593 = vunpack.c.l.b16 %v4525
    %v4594 = vunpack.c.h.b16 %v4525
    %v4595 = vunpack.c.l.b16 %v4526
    %v4596 = vunpack.c.h.b16 %v4526
    %v4597 = vunpack.c.l.b16 %v4527
    %v4598 = vunpack.c.h.b16 %v4527
    %v4599 = vunpack.c.l.b16 %v4528
    %v4600 = vunpack.c.h.b16 %v4528
    %v4601 = vunpack.c.l.b16 %v4529
    %v4602 = vunpack.c.h.b16 %v4529
    %v4603 = vunpack.c.l.b16 %v4530
    %v4604 = vunpack.c.h.b16 %v4530
    %v4605 = vunpack.c.l.b16 %v4531
    %v4606 = vunpack.c.h.b16 %v4531
    %v4607 = vunpack.c.l.b16 %v4532
    %v4608 = vunpack.c.h.b16 %v4532
    %v4609 = vunpack.c.l.b16 %v4533
    %v4610 = vunpack.c.h.b16 %v4533
    %v4611 = vunpack.c.l.b16 %v4534
    %v4612 = vunpack.c.h.b16 %v4534
    %v4613 = vunpack.c.l.b16 %v4535
    %v4614 = vunpack.c.h.b16 %v4535
    %v4615 = vunpack.c.l.b16 %v4536
    %v4616 = vunpack.c.h.b16 %v4536
    %v4617 = vunpack.c.l.b16 %v4537
    %v4618 = vunpack.c.h.b16 %v4537
    %v4619 = vunpack.c.l.b16 %v4538
    %v4620 = vunpack.c.h.b16 %v4538
    %v4621 = vunpack.c.l.b16 %v4539
    %v4622 = vunpack.c.h.b16 %v4539
    %v4623 = vunpack.c.l.b16 %v4540
    %v4624 = vunpack.c.h.b16 %v4540
    %v4625 = vunpack.c.l.b16 %v4541
    %v4626 = vunpack.c.h.b16 %v4541
    %v4627 = vunpack.c.l.b16 %v4542
    %v4628 = vunpack.c.h.b16 %v4542
    %v4629 = vunpack.c.l.b16 %v4543
    %v4630 = vunpack.c.h.b16 %v4543
    %v4631 = vunpack.c.l.b16 %v4544
    %v4632 = vunpack.c.h.b16 %v4544
    %v4633 = vunpack.c.l.b16 %v4545
    %v4634 = vunpack.c.h.b16 %v4545
    %v4635 = vunpack.c.l.b16 %v4546
    %v4636 = vunpack.c.h.b16 %v4546
    %v4637 = vunpack.c.l.b16 %v4547
    %v4638 = vunpack.c.h.b16 %v4547
    %v4639 = vunpack.c.l.b16 %v4548
    %v4640 = vunpack.c.h.b16 %v4548
    %v4641 = vunpack.c.l.b16 %v4549
    %v4642 = vunpack.c.h.b16 %v4549
    %v4643 = vunpack.c.l.b16 %v4550
    %v4644 = vunpack.c.h.b16 %v4550
    %v4645 = vunpack.c.l.b16 %v4551
    %v4646 = vunpack.c.h.b16 %v4551
    %v4647 = vunpack.c.l.b16 %v4552
    %v4648 = vunpack.c.h.b16 %v4552
    %v4649 = vpack.c.b16 %v4589, %v4585
    %v4650 = vpack.c.b16 %v4590, %v4586
    %v4651 = vpack.c.b16 %v4591, %v4587
    %v4652 = vpack.c.b16 %v4592, %v4588
    %v4653 = vpack.c.b16 %v4597, %v4593
    %v4654 = vpack.c.b16 %v4598, %v4594
    %v4655 = vpack.c.b16 %v4599, %v4595
    %v4656 = vpack.c.b16 %v4600, %v4596
    %v4657 = vpack.c.b16 %v4605, %v4601
    %v4658 = vpack.c.b16 %v4606, %v4602
    %v4659 = vpack.c.b16 %v4607, %v4603
    %v4660 = vpack.c.b16 %v4608, %v4604
    %v4661 = vpack.c.b16 %v4613, %v4609
    %v4662 = vpack.c.b16 %v4614, %v4610
    %v4663 = vpack.c.b16 %v4615, %v4611
    %v4664 = vpack.c.b16 %v4616, %v4612
    %v4665 = vpack.c.b16 %v4621, %v4617
    %v4666 = vpack.c.b16 %v4622, %v4618
    %v4667 = vpack.c.b16 %v4623, %v4619
    %v4668 = vpack.c.b16 %v4624, %v4620
    %v4669 = vpack.c.b16 %v4629, %v4625
    %v4670 = vpack.c.b16 %v4630, %v4626
    %v4671 = vpack.c.b16 %v4631, %v4627
    %v4672 = vpack.c.b16 %v4632, %v4628
    %v4673 = vpack.c.b16 %v4637, %v4633
    %v4674 = vpack.c.b16 %v4638, %v4634
    %v4675 = vpack.c.b16 %v4639, %v4635
    %v4676 = vpack.c.b16 %v4640, %v4636
    %v4677 = vpack.c.b16 %v4645, %v4641
    %v4678 = vpack.c.b16 %v4646, %v4642
    %v4679 = vpack.c.b16 %v4647, %v4643
    %v4680 = vpack.c.b16 %v4648, %v4644
    %4713 = vmatpush.bf16.msra.mxu0 %v4677
    %4714 = vmatpush.bf16.msra.mxu0 %v4673
    %4715 = vmatpush.bf16.msra.mxu0 %v4669
    %4716 = vmatpush.bf16.msra.mxu0 %v4665
    %4717 = vmatpush.bf16.msra.mxu0 %v4661
    %4718 = vmatpush.bf16.msra.mxu0 %v4657
    %4719 = vmatpush.bf16.msra.mxu0 %v4653
    %4720 = vmatpush.bf16.msra.mxu0 %v4649
    %4721 = vmatmul.bf16.gmra.mxu0 %v4520
    %v4722 = vpop.f32.mrf.mxu0
    %v4723 = vadd.f32 0.0, %v4722
    %v4724 = vpop.f32.mrf.mxu0
    %4725 = vdwg.mxu0
    %4726 = vmatpush.bf16.msra.mxu0 %v4678
    %4727 = vmatpush.bf16.msra.mxu0 %v4674
    %4728 = vmatpush.bf16.msra.mxu0 %v4670
    %4729 = vmatpush.bf16.msra.mxu0 %v4666
    %4730 = vmatpush.bf16.msra.mxu0 %v4662
    %4731 = vmatpush.bf16.msra.mxu0 %v4658
    %4732 = vmatpush.bf16.msra.mxu0 %v4654
    %4733 = vmatpush.bf16.msra.mxu0 %v4650
    %4734 = vmatmul.bf16.gmra.mxu0 %v4520
    %v4735 = vpop.f32.mrf.mxu0
    %v4736 = vadd.f32 0.0, %v4735
    %v4737 = vpop.f32.mrf.mxu0
    %4738 = vdwg.mxu0
    %4739 = vmatpush.bf16.msra.mxu0 %v4679
    %4740 = vmatpush.bf16.msra.mxu0 %v4675
    %4741 = vmatpush.bf16.msra.mxu0 %v4671
    %4742 = vmatpush.bf16.msra.mxu0 %v4667
    %4743 = vmatpush.bf16.msra.mxu0 %v4663
    %4744 = vmatpush.bf16.msra.mxu0 %v4659
    %4745 = vmatpush.bf16.msra.mxu0 %v4655
    %4746 = vmatpush.bf16.msra.mxu0 %v4651
    %4747 = vmatmul.bf16.gmra.mxu0 %v4520
    %v4748 = vpop.f32.mrf.mxu0
    %v4749 = vadd.f32 0.0, %v4748
    %v4750 = vpop.f32.mrf.mxu0
    %4751 = vdwg.mxu0
    %4752 = vmatpush.bf16.msra.mxu0 %v4680
    %4753 = vmatpush.bf16.msra.mxu0 %v4676
    %4754 = vmatpush.bf16.msra.mxu0 %v4672
    %4755 = vmatpush.bf16.msra.mxu0 %v4668
    %4756 = vmatpush.bf16.msra.mxu0 %v4664
    %4757 = vmatpush.bf16.msra.mxu0 %v4660
    %4758 = vmatpush.bf16.msra.mxu0 %v4656
    %4759 = vmatpush.bf16.msra.mxu0 %v4652
    %4760 = vmatmul.bf16.gmra.mxu0 %v4520
    %v4761 = vpop.f32.mrf.mxu0
    %v4762 = vadd.f32 0.0, %v4761
    %v4763 = vpop.f32.mrf.mxu0
    %4764 = vdwg.mxu0
    %v4766 = vrot.slane %v4736, 1
    %v4768 = vadd.f32 %v4723, %v4766
    %v4770 = vrot.slane %v4749, 2
    %v4772 = vadd.f32 %v4768, %v4770
    %v4774 = vrot.slane %v4762, 3
    %v4776 = vadd.f32 %v4772, %v4774
    %4777 = vst [vmem:[#allocation4 + $0x2] sm:$0x1] %v4776
    %v4778 = vld [vmem:[#allocation2 + $0x6] sm:$0xf]
    %v4779 = vpack.c.bf16 %v4778, %v4778
    %v4780 = vld [vmem:[%s3] sm:$0xff]
    %v4781 = vld [vmem:[%s3 + $0x8] sm:$0xff]
    %v4782 = vld [vmem:[%s3 + $0x10] sm:$0xff]
    %v4783 = vld [vmem:[%s3 + $0x18] sm:$0xff]
    %v4784 = vld [vmem:[%s3 + $0x20] sm:$0xff]
    %v4785 = vld [vmem:[%s3 + $0x28] sm:$0xff]
    %v4786 = vld [vmem:[%s3 + $0x30] sm:$0xff]
    %v4787 = vld [vmem:[%s3 + $0x38] sm:$0xff]
    %v4788 = vld [vmem:[%s3 + $0x40] sm:$0xff]
    %v4789 = vld [vmem:[%s3 + $0x48] sm:$0xff]
    %v4790 = vld [vmem:[%s3 + $0x50] sm:$0xff]
    %v4791 = vld [vmem:[%s3 + $0x58] sm:$0xff]
    %v4792 = vld [vmem:[%s3 + $0x60] sm:$0xff]
    %v4793 = vld [vmem:[%s3 + $0x68] sm:$0xff]
    %v4794 = vld [vmem:[%s3 + $0x70] sm:$0xff]
    %v4795 = vld [vmem:[%s3 + $0x78] sm:$0xff]
    %v4796 = vld [vmem:[%s3 + $0x80] sm:$0xff]
    %v4797 = vld [vmem:[%s3 + $0x88] sm:$0xff]
    %v4798 = vld [vmem:[%s3 + $0x90] sm:$0xff]
    %v4799 = vld [vmem:[%s3 + $0x98] sm:$0xff]
    %v4800 = vld [vmem:[%s3 + $0xa0] sm:$0xff]
    %v4801 = vld [vmem:[%s3 + $0xa8] sm:$0xff]
    %v4802 = vld [vmem:[%s3 + $0xb0] sm:$0xff]
    %v4803 = vld [vmem:[%s3 + $0xb8] sm:$0xff]
    %v4804 = vld [vmem:[%s3 + $0xc0] sm:$0xff]
    %v4805 = vld [vmem:[%s3 + $0xc8] sm:$0xff]
    %v4806 = vld [vmem:[%s3 + $0xd0] sm:$0xff]
    %v4807 = vld [vmem:[%s3 + $0xd8] sm:$0xff]
    %v4808 = vld [vmem:[%s3 + $0xe0] sm:$0xff]
    %v4809 = vld [vmem:[%s3 + $0xe8] sm:$0xff]
    %v4810 = vld [vmem:[%s3 + $0xf0] sm:$0xff]
    %v4811 = vld [vmem:[%s3 + $0xf8] sm:$0xff]
    %v4844 = vunpack.c.l.b16 %v4780
    %v4845 = vunpack.c.h.b16 %v4780
    %v4846 = vunpack.c.l.b16 %v4781
    %v4847 = vunpack.c.h.b16 %v4781
    %v4848 = vunpack.c.l.b16 %v4782
    %v4849 = vunpack.c.h.b16 %v4782
    %v4850 = vunpack.c.l.b16 %v4783
    %v4851 = vunpack.c.h.b16 %v4783
    %v4852 = vunpack.c.l.b16 %v4784
    %v4853 = vunpack.c.h.b16 %v4784
    %v4854 = vunpack.c.l.b16 %v4785
    %v4855 = vunpack.c.h.b16 %v4785
    %v4856 = vunpack.c.l.b16 %v4786
    %v4857 = vunpack.c.h.b16 %v4786
    %v4858 = vunpack.c.l.b16 %v4787
    %v4859 = vunpack.c.h.b16 %v4787
    %v4860 = vunpack.c.l.b16 %v4788
    %v4861 = vunpack.c.h.b16 %v4788
    %v4862 = vunpack.c.l.b16 %v4789
    %v4863 = vunpack.c.h.b16 %v4789
    %v4864 = vunpack.c.l.b16 %v4790
    %v4865 = vunpack.c.h.b16 %v4790
    %v4866 = vunpack.c.l.b16 %v4791
    %v4867 = vunpack.c.h.b16 %v4791
    %v4868 = vunpack.c.l.b16 %v4792
    %v4869 = vunpack.c.h.b16 %v4792
    %v4870 = vunpack.c.l.b16 %v4793
    %v4871 = vunpack.c.h.b16 %v4793
    %v4872 = vunpack.c.l.b16 %v4794
    %v4873 = vunpack.c.h.b16 %v4794
    %v4874 = vunpack.c.l.b16 %v4795
    %v4875 = vunpack.c.h.b16 %v4795
    %v4876 = vunpack.c.l.b16 %v4796
    %v4877 = vunpack.c.h.b16 %v4796
    %v4878 = vunpack.c.l.b16 %v4797
    %v4879 = vunpack.c.h.b16 %v4797
    %v4880 = vunpack.c.l.b16 %v4798
    %v4881 = vunpack.c.h.b16 %v4798
    %v4882 = vunpack.c.l.b16 %v4799
    %v4883 = vunpack.c.h.b16 %v4799
    %v4884 = vunpack.c.l.b16 %v4800
    %v4885 = vunpack.c.h.b16 %v4800
    %v4886 = vunpack.c.l.b16 %v4801
    %v4887 = vunpack.c.h.b16 %v4801
    %v4888 = vunpack.c.l.b16 %v4802
    %v4889 = vunpack.c.h.b16 %v4802
    %v4890 = vunpack.c.l.b16 %v4803
    %v4891 = vunpack.c.h.b16 %v4803
    %v4892 = vunpack.c.l.b16 %v4804
    %v4893 = vunpack.c.h.b16 %v4804
    %v4894 = vunpack.c.l.b16 %v4805
    %v4895 = vunpack.c.h.b16 %v4805
    %v4896 = vunpack.c.l.b16 %v4806
    %v4897 = vunpack.c.h.b16 %v4806
    %v4898 = vunpack.c.l.b16 %v4807
    %v4899 = vunpack.c.h.b16 %v4807
    %v4900 = vunpack.c.l.b16 %v4808
    %v4901 = vunpack.c.h.b16 %v4808
    %v4902 = vunpack.c.l.b16 %v4809
    %v4903 = vunpack.c.h.b16 %v4809
    %v4904 = vunpack.c.l.b16 %v4810
    %v4905 = vunpack.c.h.b16 %v4810
    %v4906 = vunpack.c.l.b16 %v4811
    %v4907 = vunpack.c.h.b16 %v4811
    %v4908 = vpack.c.b16 %v4848, %v4844
    %v4909 = vpack.c.b16 %v4849, %v4845
    %v4910 = vpack.c.b16 %v4850, %v4846
    %v4911 = vpack.c.b16 %v4851, %v4847
    %v4912 = vpack.c.b16 %v4856, %v4852
    %v4913 = vpack.c.b16 %v4857, %v4853
    %v4914 = vpack.c.b16 %v4858, %v4854
    %v4915 = vpack.c.b16 %v4859, %v4855
    %v4916 = vpack.c.b16 %v4864, %v4860
    %v4917 = vpack.c.b16 %v4865, %v4861
    %v4918 = vpack.c.b16 %v4866, %v4862
    %v4919 = vpack.c.b16 %v4867, %v4863
    %v4920 = vpack.c.b16 %v4872, %v4868
    %v4921 = vpack.c.b16 %v4873, %v4869
    %v4922 = vpack.c.b16 %v4874, %v4870
    %v4923 = vpack.c.b16 %v4875, %v4871
    %v4924 = vpack.c.b16 %v4880, %v4876
    %v4925 = vpack.c.b16 %v4881, %v4877
    %v4926 = vpack.c.b16 %v4882, %v4878
    %v4927 = vpack.c.b16 %v4883, %v4879
    %v4928 = vpack.c.b16 %v4888, %v4884
    %v4929 = vpack.c.b16 %v4889, %v4885
    %v4930 = vpack.c.b16 %v4890, %v4886
    %v4931 = vpack.c.b16 %v4891, %v4887
    %v4932 = vpack.c.b16 %v4896, %v4892
    %v4933 = vpack.c.b16 %v4897, %v4893
    %v4934 = vpack.c.b16 %v4898, %v4894
    %v4935 = vpack.c.b16 %v4899, %v4895
    %v4936 = vpack.c.b16 %v4904, %v4900
    %v4937 = vpack.c.b16 %v4905, %v4901
    %v4938 = vpack.c.b16 %v4906, %v4902
    %v4939 = vpack.c.b16 %v4907, %v4903
    %4972 = vmatpush.bf16.msra.mxu0 %v4936
    %4973 = vmatpush.bf16.msra.mxu0 %v4932
    %4974 = vmatpush.bf16.msra.mxu0 %v4928
    %4975 = vmatpush.bf16.msra.mxu0 %v4924
    %4976 = vmatpush.bf16.msra.mxu0 %v4920
    %4977 = vmatpush.bf16.msra.mxu0 %v4916
    %4978 = vmatpush.bf16.msra.mxu0 %v4912
    %4979 = vmatpush.bf16.msra.mxu0 %v4908
    %4980 = vmatmul.bf16.gmra.mxu0 %v4779
    %v4981 = vpop.f32.mrf.mxu0
    %v4982 = vadd.f32 0.0, %v4981
    %v4983 = vpop.f32.mrf.mxu0
    %4984 = vdwg.mxu0
    %4985 = vmatpush.bf16.msra.mxu0 %v4937
    %4986 = vmatpush.bf16.msra.mxu0 %v4933
    %4987 = vmatpush.bf16.msra.mxu0 %v4929
    %4988 = vmatpush.bf16.msra.mxu0 %v4925
    %4989 = vmatpush.bf16.msra.mxu0 %v4921
    %4990 = vmatpush.bf16.msra.mxu0 %v4917
    %4991 = vmatpush.bf16.msra.mxu0 %v4913
    %4992 = vmatpush.bf16.msra.mxu0 %v4909
    %4993 = vmatmul.bf16.gmra.mxu0 %v4779
    %v4994 = vpop.f32.mrf.mxu0
    %v4995 = vadd.f32 0.0, %v4994
    %v4996 = vpop.f32.mrf.mxu0
    %4997 = vdwg.mxu0
    %4998 = vmatpush.bf16.msra.mxu0 %v4938
    %4999 = vmatpush.bf16.msra.mxu0 %v4934
    %5000 = vmatpush.bf16.msra.mxu0 %v4930
    %5001 = vmatpush.bf16.msra.mxu0 %v4926
    %5002 = vmatpush.bf16.msra.mxu0 %v4922
    %5003 = vmatpush.bf16.msra.mxu0 %v4918
    %5004 = vmatpush.bf16.msra.mxu0 %v4914
    %5005 = vmatpush.bf16.msra.mxu0 %v4910
    %5006 = vmatmul.bf16.gmra.mxu0 %v4779
    %v5007 = vpop.f32.mrf.mxu0
    %v5008 = vadd.f32 0.0, %v5007
    %v5009 = vpop.f32.mrf.mxu0
    %5010 = vdwg.mxu0
    %5011 = vmatpush.bf16.msra.mxu0 %v4939
    %5012 = vmatpush.bf16.msra.mxu0 %v4935
    %5013 = vmatpush.bf16.msra.mxu0 %v4931
    %5014 = vmatpush.bf16.msra.mxu0 %v4927
    %5015 = vmatpush.bf16.msra.mxu0 %v4923
    %5016 = vmatpush.bf16.msra.mxu0 %v4919
    %5017 = vmatpush.bf16.msra.mxu0 %v4915
    %5018 = vmatpush.bf16.msra.mxu0 %v4911
    %5019 = vmatmul.bf16.gmra.mxu0 %v4779
    %v5020 = vpop.f32.mrf.mxu0
    %v5021 = vadd.f32 0.0, %v5020
    %v5022 = vpop.f32.mrf.mxu0
    %5023 = vdwg.mxu0
    %v5025 = vrot.slane %v4995, 1
    %v5027 = vadd.f32 %v4982, %v5025
    %v5029 = vrot.slane %v5008, 2
    %v5031 = vadd.f32 %v5027, %v5029
    %v5033 = vrot.slane %v5021, 3
    %v5035 = vadd.f32 %v5031, %v5033
    %5036 = vst [vmem:[#allocation4 + $0x3] sm:$0x1] %v5035
    %v5037 = vld [vmem:[#allocation2 + $0x8] sm:$0xf]
    %v5038 = vpack.c.bf16 %v5037, %v5037
    %v5039 = vld [vmem:[%s3] sm:$0xff]
    %v5040 = vld [vmem:[%s3 + $0x8] sm:$0xff]
    %v5041 = vld [vmem:[%s3 + $0x10] sm:$0xff]
    %v5042 = vld [vmem:[%s3 + $0x18] sm:$0xff]
    %v5043 = vld [vmem:[%s3 + $0x20] sm:$0xff]
    %v5044 = vld [vmem:[%s3 + $0x28] sm:$0xff]
    %v5045 = vld [vmem:[%s3 + $0x30] sm:$0xff]
    %v5046 = vld [vmem:[%s3 + $0x38] sm:$0xff]
    %v5047 = vld [vmem:[%s3 + $0x40] sm:$0xff]
    %v5048 = vld [vmem:[%s3 + $0x48] sm:$0xff]
    %v5049 = vld [vmem:[%s3 + $0x50] sm:$0xff]
    %v5050 = vld [vmem:[%s3 + $0x58] sm:$0xff]
    %v5051 = vld [vmem:[%s3 + $0x60] sm:$0xff]
    %v5052 = vld [vmem:[%s3 + $0x68] sm:$0xff]
    %v5053 = vld [vmem:[%s3 + $0x70] sm:$0xff]
    %v5054 = vld [vmem:[%s3 + $0x78] sm:$0xff]
    %v5055 = vld [vmem:[%s3 + $0x80] sm:$0xff]
    %v5056 = vld [vmem:[%s3 + $0x88] sm:$0xff]
    %v5057 = vld [vmem:[%s3 + $0x90] sm:$0xff]
    %v5058 = vld [vmem:[%s3 + $0x98] sm:$0xff]
    %v5059 = vld [vmem:[%s3 + $0xa0] sm:$0xff]
    %v5060 = vld [vmem:[%s3 + $0xa8] sm:$0xff]
    %v5061 = vld [vmem:[%s3 + $0xb0] sm:$0xff]
    %v5062 = vld [vmem:[%s3 + $0xb8] sm:$0xff]
    %v5063 = vld [vmem:[%s3 + $0xc0] sm:$0xff]
    %v5064 = vld [vmem:[%s3 + $0xc8] sm:$0xff]
    %v5065 = vld [vmem:[%s3 + $0xd0] sm:$0xff]
    %v5066 = vld [vmem:[%s3 + $0xd8] sm:$0xff]
    %v5067 = vld [vmem:[%s3 + $0xe0] sm:$0xff]
    %v5068 = vld [vmem:[%s3 + $0xe8] sm:$0xff]
    %v5069 = vld [vmem:[%s3 + $0xf0] sm:$0xff]
    %v5070 = vld [vmem:[%s3 + $0xf8] sm:$0xff]
    %v5103 = vunpack.c.l.b16 %v5039
    %v5104 = vunpack.c.h.b16 %v5039
    %v5105 = vunpack.c.l.b16 %v5040
    %v5106 = vunpack.c.h.b16 %v5040
    %v5107 = vunpack.c.l.b16 %v5041
    %v5108 = vunpack.c.h.b16 %v5041
    %v5109 = vunpack.c.l.b16 %v5042
    %v5110 = vunpack.c.h.b16 %v5042
    %v5111 = vunpack.c.l.b16 %v5043
    %v5112 = vunpack.c.h.b16 %v5043
    %v5113 = vunpack.c.l.b16 %v5044
    %v5114 = vunpack.c.h.b16 %v5044
    %v5115 = vunpack.c.l.b16 %v5045
    %v5116 = vunpack.c.h.b16 %v5045
    %v5117 = vunpack.c.l.b16 %v5046
    %v5118 = vunpack.c.h.b16 %v5046
    %v5119 = vunpack.c.l.b16 %v5047
    %v5120 = vunpack.c.h.b16 %v5047
    %v5121 = vunpack.c.l.b16 %v5048
    %v5122 = vunpack.c.h.b16 %v5048
    %v5123 = vunpack.c.l.b16 %v5049
    %v5124 = vunpack.c.h.b16 %v5049
    %v5125 = vunpack.c.l.b16 %v5050
    %v5126 = vunpack.c.h.b16 %v5050
    %v5127 = vunpack.c.l.b16 %v5051
    %v5128 = vunpack.c.h.b16 %v5051
    %v5129 = vunpack.c.l.b16 %v5052
    %v5130 = vunpack.c.h.b16 %v5052
    %v5131 = vunpack.c.l.b16 %v5053
    %v5132 = vunpack.c.h.b16 %v5053
    %v5133 = vunpack.c.l.b16 %v5054
    %v5134 = vunpack.c.h.b16 %v5054
    %v5135 = vunpack.c.l.b16 %v5055
    %v5136 = vunpack.c.h.b16 %v5055
    %v5137 = vunpack.c.l.b16 %v5056
    %v5138 = vunpack.c.h.b16 %v5056
    %v5139 = vunpack.c.l.b16 %v5057
    %v5140 = vunpack.c.h.b16 %v5057
    %v5141 = vunpack.c.l.b16 %v5058
    %v5142 = vunpack.c.h.b16 %v5058
    %v5143 = vunpack.c.l.b16 %v5059
    %v5144 = vunpack.c.h.b16 %v5059
    %v5145 = vunpack.c.l.b16 %v5060
    %v5146 = vunpack.c.h.b16 %v5060
    %v5147 = vunpack.c.l.b16 %v5061
    %v5148 = vunpack.c.h.b16 %v5061
    %v5149 = vunpack.c.l.b16 %v5062
    %v5150 = vunpack.c.h.b16 %v5062
    %v5151 = vunpack.c.l.b16 %v5063
    %v5152 = vunpack.c.h.b16 %v5063
    %v5153 = vunpack.c.l.b16 %v5064
    %v5154 = vunpack.c.h.b16 %v5064
    %v5155 = vunpack.c.l.b16 %v5065
    %v5156 = vunpack.c.h.b16 %v5065
    %v5157 = vunpack.c.l.b16 %v5066
    %v5158 = vunpack.c.h.b16 %v5066
    %v5159 = vunpack.c.l.b16 %v5067
    %v5160 = vunpack.c.h.b16 %v5067
    %v5161 = vunpack.c.l.b16 %v5068
    %v5162 = vunpack.c.h.b16 %v5068
    %v5163 = vunpack.c.l.b16 %v5069
    %v5164 = vunpack.c.h.b16 %v5069
    %v5165 = vunpack.c.l.b16 %v5070
    %v5166 = vunpack.c.h.b16 %v5070
    %v5167 = vpack.c.b16 %v5107, %v5103
    %v5168 = vpack.c.b16 %v5108, %v5104
    %v5169 = vpack.c.b16 %v5109, %v5105
    %v5170 = vpack.c.b16 %v5110, %v5106
    %v5171 = vpack.c.b16 %v5115, %v5111
    %v5172 = vpack.c.b16 %v5116, %v5112
    %v5173 = vpack.c.b16 %v5117, %v5113
    %v5174 = vpack.c.b16 %v5118, %v5114
    %v5175 = vpack.c.b16 %v5123, %v5119
    %v5176 = vpack.c.b16 %v5124, %v5120
    %v5177 = vpack.c.b16 %v5125, %v5121
    %v5178 = vpack.c.b16 %v5126, %v5122
    %v5179 = vpack.c.b16 %v5131, %v5127
    %v5180 = vpack.c.b16 %v5132, %v5128
    %v5181 = vpack.c.b16 %v5133, %v5129
    %v5182 = vpack.c.b16 %v5134, %v5130
    %v5183 = vpack.c.b16 %v5139, %v5135
    %v5184 = vpack.c.b16 %v5140, %v5136
    %v5185 = vpack.c.b16 %v5141, %v5137
    %v5186 = vpack.c.b16 %v5142, %v5138
    %v5187 = vpack.c.b16 %v5147, %v5143
    %v5188 = vpack.c.b16 %v5148, %v5144
    %v5189 = vpack.c.b16 %v5149, %v5145
    %v5190 = vpack.c.b16 %v5150, %v5146
    %v5191 = vpack.c.b16 %v5155, %v5151
    %v5192 = vpack.c.b16 %v5156, %v5152
    %v5193 = vpack.c.b16 %v5157, %v5153
    %v5194 = vpack.c.b16 %v5158, %v5154
    %v5195 = vpack.c.b16 %v5163, %v5159
    %v5196 = vpack.c.b16 %v5164, %v5160
    %v5197 = vpack.c.b16 %v5165, %v5161
    %v5198 = vpack.c.b16 %v5166, %v5162
    %5231 = vmatpush.bf16.msra.mxu0 %v5195
    %5232 = vmatpush.bf16.msra.mxu0 %v5191
    %5233 = vmatpush.bf16.msra.mxu0 %v5187
    %5234 = vmatpush.bf16.msra.mxu0 %v5183
    %5235 = vmatpush.bf16.msra.mxu0 %v5179
    %5236 = vmatpush.bf16.msra.mxu0 %v5175
    %5237 = vmatpush.bf16.msra.mxu0 %v5171
    %5238 = vmatpush.bf16.msra.mxu0 %v5167
    %5239 = vmatmul.bf16.gmra.mxu0 %v5038
    %v5240 = vpop.f32.mrf.mxu0
    %v5241 = vadd.f32 0.0, %v5240
    %v5242 = vpop.f32.mrf.mxu0
    %5243 = vdwg.mxu0
    %5244 = vmatpush.bf16.msra.mxu0 %v5196
    %5245 = vmatpush.bf16.msra.mxu0 %v5192
    %5246 = vmatpush.bf16.msra.mxu0 %v5188
    %5247 = vmatpush.bf16.msra.mxu0 %v5184
    %5248 = vmatpush.bf16.msra.mxu0 %v5180
    %5249 = vmatpush.bf16.msra.mxu0 %v5176
    %5250 = vmatpush.bf16.msra.mxu0 %v5172
    %5251 = vmatpush.bf16.msra.mxu0 %v5168
    %5252 = vmatmul.bf16.gmra.mxu0 %v5038
    %v5253 = vpop.f32.mrf.mxu0
    %v5254 = vadd.f32 0.0, %v5253
    %v5255 = vpop.f32.mrf.mxu0
    %5256 = vdwg.mxu0
    %5257 = vmatpush.bf16.msra.mxu0 %v5197
    %5258 = vmatpush.bf16.msra.mxu0 %v5193
    %5259 = vmatpush.bf16.msra.mxu0 %v5189
    %5260 = vmatpush.bf16.msra.mxu0 %v5185
    %5261 = vmatpush.bf16.msra.mxu0 %v5181
    %5262 = vmatpush.bf16.msra.mxu0 %v5177
    %5263 = vmatpush.bf16.msra.mxu0 %v5173
    %5264 = vmatpush.bf16.msra.mxu0 %v5169
    %5265 = vmatmul.bf16.gmra.mxu0 %v5038
    %v5266 = vpop.f32.mrf.mxu0
    %v5267 = vadd.f32 0.0, %v5266
    %v5268 = vpop.f32.mrf.mxu0
    %5269 = vdwg.mxu0
    %5270 = vmatpush.bf16.msra.mxu0 %v5198
    %5271 = vmatpush.bf16.msra.mxu0 %v5194
    %5272 = vmatpush.bf16.msra.mxu0 %v5190
    %5273 = vmatpush.bf16.msra.mxu0 %v5186
    %5274 = vmatpush.bf16.msra.mxu0 %v5182
    %5275 = vmatpush.bf16.msra.mxu0 %v5178
    %5276 = vmatpush.bf16.msra.mxu0 %v5174
    %5277 = vmatpush.bf16.msra.mxu0 %v5170
    %5278 = vmatmul.bf16.gmra.mxu0 %v5038
    %v5279 = vpop.f32.mrf.mxu0
    %v5280 = vadd.f32 0.0, %v5279
    %v5281 = vpop.f32.mrf.mxu0
    %5282 = vdwg.mxu0
    %v5284 = vrot.slane %v5254, 1
    %v5286 = vadd.f32 %v5241, %v5284
    %v5288 = vrot.slane %v5267, 2
    %v5290 = vadd.f32 %v5286, %v5288
    %v5292 = vrot.slane %v5280, 3
    %v5294 = vadd.f32 %v5290, %v5292
    %5295 = vst [vmem:[#allocation4 + $0x4] sm:$0x1] %v5294
    %v5296 = vld [vmem:[#allocation2 + $0xa] sm:$0xf]
    %v5297 = vpack.c.bf16 %v5296, %v5296
    %v5298 = vld [vmem:[%s3] sm:$0xff]
    %v5299 = vld [vmem:[%s3 + $0x8] sm:$0xff]
    %v5300 = vld [vmem:[%s3 + $0x10] sm:$0xff]
    %v5301 = vld [vmem:[%s3 + $0x18] sm:$0xff]
    %v5302 = vld [vmem:[%s3 + $0x20] sm:$0xff]
    %v5303 = vld [vmem:[%s3 + $0x28] sm:$0xff]
    %v5304 = vld [vmem:[%s3 + $0x30] sm:$0xff]
    %v5305 = vld [vmem:[%s3 + $0x38] sm:$0xff]
    %v5306 = vld [vmem:[%s3 + $0x40] sm:$0xff]
    %v5307 = vld [vmem:[%s3 + $0x48] sm:$0xff]
    %v5308 = vld [vmem:[%s3 + $0x50] sm:$0xff]
    %v5309 = vld [vmem:[%s3 + $0x58] sm:$0xff]
    %v5310 = vld [vmem:[%s3 + $0x60] sm:$0xff]
    %v5311 = vld [vmem:[%s3 + $0x68] sm:$0xff]
    %v5312 = vld [vmem:[%s3 + $0x70] sm:$0xff]
    %v5313 = vld [vmem:[%s3 + $0x78] sm:$0xff]
    %v5314 = vld [vmem:[%s3 + $0x80] sm:$0xff]
    %v5315 = vld [vmem:[%s3 + $0x88] sm:$0xff]
    %v5316 = vld [vmem:[%s3 + $0x90] sm:$0xff]
    %v5317 = vld [vmem:[%s3 + $0x98] sm:$0xff]
    %v5318 = vld [vmem:[%s3 + $0xa0] sm:$0xff]
    %v5319 = vld [vmem:[%s3 + $0xa8] sm:$0xff]
    %v5320 = vld [vmem:[%s3 + $0xb0] sm:$0xff]
    %v5321 = vld [vmem:[%s3 + $0xb8] sm:$0xff]
    %v5322 = vld [vmem:[%s3 + $0xc0] sm:$0xff]
    %v5323 = vld [vmem:[%s3 + $0xc8] sm:$0xff]
    %v5324 = vld [vmem:[%s3 + $0xd0] sm:$0xff]
    %v5325 = vld [vmem:[%s3 + $0xd8] sm:$0xff]
    %v5326 = vld [vmem:[%s3 + $0xe0] sm:$0xff]
    %v5327 = vld [vmem:[%s3 + $0xe8] sm:$0xff]
    %v5328 = vld [vmem:[%s3 + $0xf0] sm:$0xff]
    %v5329 = vld [vmem:[%s3 + $0xf8] sm:$0xff]
    %v5362 = vunpack.c.l.b16 %v5298
    %v5363 = vunpack.c.h.b16 %v5298
    %v5364 = vunpack.c.l.b16 %v5299
    %v5365 = vunpack.c.h.b16 %v5299
    %v5366 = vunpack.c.l.b16 %v5300
    %v5367 = vunpack.c.h.b16 %v5300
    %v5368 = vunpack.c.l.b16 %v5301
    %v5369 = vunpack.c.h.b16 %v5301
    %v5370 = vunpack.c.l.b16 %v5302
    %v5371 = vunpack.c.h.b16 %v5302
    %v5372 = vunpack.c.l.b16 %v5303
    %v5373 = vunpack.c.h.b16 %v5303
    %v5374 = vunpack.c.l.b16 %v5304
    %v5375 = vunpack.c.h.b16 %v5304
    %v5376 = vunpack.c.l.b16 %v5305
    %v5377 = vunpack.c.h.b16 %v5305
    %v5378 = vunpack.c.l.b16 %v5306
    %v5379 = vunpack.c.h.b16 %v5306
    %v5380 = vunpack.c.l.b16 %v5307
    %v5381 = vunpack.c.h.b16 %v5307
    %v5382 = vunpack.c.l.b16 %v5308
    %v5383 = vunpack.c.h.b16 %v5308
    %v5384 = vunpack.c.l.b16 %v5309
    %v5385 = vunpack.c.h.b16 %v5309
    %v5386 = vunpack.c.l.b16 %v5310
    %v5387 = vunpack.c.h.b16 %v5310
    %v5388 = vunpack.c.l.b16 %v5311
    %v5389 = vunpack.c.h.b16 %v5311
    %v5390 = vunpack.c.l.b16 %v5312
    %v5391 = vunpack.c.h.b16 %v5312
    %v5392 = vunpack.c.l.b16 %v5313
    %v5393 = vunpack.c.h.b16 %v5313
    %v5394 = vunpack.c.l.b16 %v5314
    %v5395 = vunpack.c.h.b16 %v5314
    %v5396 = vunpack.c.l.b16 %v5315
    %v5397 = vunpack.c.h.b16 %v5315
    %v5398 = vunpack.c.l.b16 %v5316
    %v5399 = vunpack.c.h.b16 %v5316
    %v5400 = vunpack.c.l.b16 %v5317
    %v5401 = vunpack.c.h.b16 %v5317
    %v5402 = vunpack.c.l.b16 %v5318
    %v5403 = vunpack.c.h.b16 %v5318
    %v5404 = vunpack.c.l.b16 %v5319
    %v5405 = vunpack.c.h.b16 %v5319
    %v5406 = vunpack.c.l.b16 %v5320
    %v5407 = vunpack.c.h.b16 %v5320
    %v5408 = vunpack.c.l.b16 %v5321
    %v5409 = vunpack.c.h.b16 %v5321
    %v5410 = vunpack.c.l.b16 %v5322
    %v5411 = vunpack.c.h.b16 %v5322
    %v5412 = vunpack.c.l.b16 %v5323
    %v5413 = vunpack.c.h.b16 %v5323
    %v5414 = vunpack.c.l.b16 %v5324
    %v5415 = vunpack.c.h.b16 %v5324
    %v5416 = vunpack.c.l.b16 %v5325
    %v5417 = vunpack.c.h.b16 %v5325
    %v5418 = vunpack.c.l.b16 %v5326
    %v5419 = vunpack.c.h.b16 %v5326
    %v5420 = vunpack.c.l.b16 %v5327
    %v5421 = vunpack.c.h.b16 %v5327
    %v5422 = vunpack.c.l.b16 %v5328
    %v5423 = vunpack.c.h.b16 %v5328
    %v5424 = vunpack.c.l.b16 %v5329
    %v5425 = vunpack.c.h.b16 %v5329
    %v5426 = vpack.c.b16 %v5366, %v5362
    %v5427 = vpack.c.b16 %v5367, %v5363
    %v5428 = vpack.c.b16 %v5368, %v5364
    %v5429 = vpack.c.b16 %v5369, %v5365
    %v5430 = vpack.c.b16 %v5374, %v5370
    %v5431 = vpack.c.b16 %v5375, %v5371
    %v5432 = vpack.c.b16 %v5376, %v5372
    %v5433 = vpack.c.b16 %v5377, %v5373
    %v5434 = vpack.c.b16 %v5382, %v5378
    %v5435 = vpack.c.b16 %v5383, %v5379
    %v5436 = vpack.c.b16 %v5384, %v5380
    %v5437 = vpack.c.b16 %v5385, %v5381
    %v5438 = vpack.c.b16 %v5390, %v5386
    %v5439 = vpack.c.b16 %v5391, %v5387
    %v5440 = vpack.c.b16 %v5392, %v5388
    %v5441 = vpack.c.b16 %v5393, %v5389
    %v5442 = vpack.c.b16 %v5398, %v5394
    %v5443 = vpack.c.b16 %v5399, %v5395
    %v5444 = vpack.c.b16 %v5400, %v5396
    %v5445 = vpack.c.b16 %v5401, %v5397
    %v5446 = vpack.c.b16 %v5406, %v5402
    %v5447 = vpack.c.b16 %v5407, %v5403
    %v5448 = vpack.c.b16 %v5408, %v5404
    %v5449 = vpack.c.b16 %v5409, %v5405
    %v5450 = vpack.c.b16 %v5414, %v5410
    %v5451 = vpack.c.b16 %v5415, %v5411
    %v5452 = vpack.c.b16 %v5416, %v5412
    %v5453 = vpack.c.b16 %v5417, %v5413
    %v5454 = vpack.c.b16 %v5422, %v5418
    %v5455 = vpack.c.b16 %v5423, %v5419
    %v5456 = vpack.c.b16 %v5424, %v5420
    %v5457 = vpack.c.b16 %v5425, %v5421
    %5490 = vmatpush.bf16.msra.mxu0 %v5454
    %5491 = vmatpush.bf16.msra.mxu0 %v5450
    %5492 = vmatpush.bf16.msra.mxu0 %v5446
    %5493 = vmatpush.bf16.msra.mxu0 %v5442
    %5494 = vmatpush.bf16.msra.mxu0 %v5438
    %5495 = vmatpush.bf16.msra.mxu0 %v5434
    %5496 = vmatpush.bf16.msra.mxu0 %v5430
    %5497 = vmatpush.bf16.msra.mxu0 %v5426
    %5498 = vmatmul.bf16.gmra.mxu0 %v5297
    %v5499 = vpop.f32.mrf.mxu0
    %v5500 = vadd.f32 0.0, %v5499
    %v5501 = vpop.f32.mrf.mxu0
    %5502 = vdwg.mxu0
    %5503 = vmatpush.bf16.msra.mxu0 %v5455
    %5504 = vmatpush.bf16.msra.mxu0 %v5451
    %5505 = vmatpush.bf16.msra.mxu0 %v5447
    %5506 = vmatpush.bf16.msra.mxu0 %v5443
    %5507 = vmatpush.bf16.msra.mxu0 %v5439
    %5508 = vmatpush.bf16.msra.mxu0 %v5435
    %5509 = vmatpush.bf16.msra.mxu0 %v5431
    %5510 = vmatpush.bf16.msra.mxu0 %v5427
    %5511 = vmatmul.bf16.gmra.mxu0 %v5297
    %v5512 = vpop.f32.mrf.mxu0
    %v5513 = vadd.f32 0.0, %v5512
    %v5514 = vpop.f32.mrf.mxu0
    %5515 = vdwg.mxu0
    %5516 = vmatpush.bf16.msra.mxu0 %v5456
    %5517 = vmatpush.bf16.msra.mxu0 %v5452
    %5518 = vmatpush.bf16.msra.mxu0 %v5448
    %5519 = vmatpush.bf16.msra.mxu0 %v5444
    %5520 = vmatpush.bf16.msra.mxu0 %v5440
    %5521 = vmatpush.bf16.msra.mxu0 %v5436
    %5522 = vmatpush.bf16.msra.mxu0 %v5432
    %5523 = vmatpush.bf16.msra.mxu0 %v5428
    %5524 = vmatmul.bf16.gmra.mxu0 %v5297
    %v5525 = vpop.f32.mrf.mxu0
    %v5526 = vadd.f32 0.0, %v5525
    %v5527 = vpop.f32.mrf.mxu0
    %5528 = vdwg.mxu0
    %5529 = vmatpush.bf16.msra.mxu0 %v5457
    %5530 = vmatpush.bf16.msra.mxu0 %v5453
    %5531 = vmatpush.bf16.msra.mxu0 %v5449
    %5532 = vmatpush.bf16.msra.mxu0 %v5445
    %5533 = vmatpush.bf16.msra.mxu0 %v5441
    %5534 = vmatpush.bf16.msra.mxu0 %v5437
    %5535 = vmatpush.bf16.msra.mxu0 %v5433
    %5536 = vmatpush.bf16.msra.mxu0 %v5429
    %5537 = vmatmul.bf16.gmra.mxu0 %v5297
    %v5538 = vpop.f32.mrf.mxu0
    %v5539 = vadd.f32 0.0, %v5538
    %v5540 = vpop.f32.mrf.mxu0
    %5541 = vdwg.mxu0
    %v5543 = vrot.slane %v5513, 1
    %v5545 = vadd.f32 %v5500, %v5543
    %v5547 = vrot.slane %v5526, 2
    %v5549 = vadd.f32 %v5545, %v5547
    %v5551 = vrot.slane %v5539, 3
    %v5553 = vadd.f32 %v5549, %v5551
    %5554 = vst [vmem:[#allocation4 + $0x5] sm:$0x1] %v5553
    %v5555 = vld [vmem:[#allocation2 + $0xc] sm:$0xf]
    %v5556 = vpack.c.bf16 %v5555, %v5555
    %v5557 = vld [vmem:[%s3] sm:$0xff]
    %v5558 = vld [vmem:[%s3 + $0x8] sm:$0xff]
    %v5559 = vld [vmem:[%s3 + $0x10] sm:$0xff]
    %v5560 = vld [vmem:[%s3 + $0x18] sm:$0xff]
    %v5561 = vld [vmem:[%s3 + $0x20] sm:$0xff]
    %v5562 = vld [vmem:[%s3 + $0x28] sm:$0xff]
    %v5563 = vld [vmem:[%s3 + $0x30] sm:$0xff]
    %v5564 = vld [vmem:[%s3 + $0x38] sm:$0xff]
    %v5565 = vld [vmem:[%s3 + $0x40] sm:$0xff]
    %v5566 = vld [vmem:[%s3 + $0x48] sm:$0xff]
    %v5567 = vld [vmem:[%s3 + $0x50] sm:$0xff]
    %v5568 = vld [vmem:[%s3 + $0x58] sm:$0xff]
    %v5569 = vld [vmem:[%s3 + $0x60] sm:$0xff]
    %v5570 = vld [vmem:[%s3 + $0x68] sm:$0xff]
    %v5571 = vld [vmem:[%s3 + $0x70] sm:$0xff]
    %v5572 = vld [vmem:[%s3 + $0x78] sm:$0xff]
    %v5573 = vld [vmem:[%s3 + $0x80] sm:$0xff]
    %v5574 = vld [vmem:[%s3 + $0x88] sm:$0xff]
    %v5575 = vld [vmem:[%s3 + $0x90] sm:$0xff]
    %v5576 = vld [vmem:[%s3 + $0x98] sm:$0xff]
    %v5577 = vld [vmem:[%s3 + $0xa0] sm:$0xff]
    %v5578 = vld [vmem:[%s3 + $0xa8] sm:$0xff]
    %v5579 = vld [vmem:[%s3 + $0xb0] sm:$0xff]
    %v5580 = vld [vmem:[%s3 + $0xb8] sm:$0xff]
    %v5581 = vld [vmem:[%s3 + $0xc0] sm:$0xff]
    %v5582 = vld [vmem:[%s3 + $0xc8] sm:$0xff]
    %v5583 = vld [vmem:[%s3 + $0xd0] sm:$0xff]
    %v5584 = vld [vmem:[%s3 + $0xd8] sm:$0xff]
    %v5585 = vld [vmem:[%s3 + $0xe0] sm:$0xff]
    %v5586 = vld [vmem:[%s3 + $0xe8] sm:$0xff]
    %v5587 = vld [vmem:[%s3 + $0xf0] sm:$0xff]
    %v5588 = vld [vmem:[%s3 + $0xf8] sm:$0xff]
    %v5621 = vunpack.c.l.b16 %v5557
    %v5622 = vunpack.c.h.b16 %v5557
    %v5623 = vunpack.c.l.b16 %v5558
    %v5624 = vunpack.c.h.b16 %v5558
    %v5625 = vunpack.c.l.b16 %v5559
    %v5626 = vunpack.c.h.b16 %v5559
    %v5627 = vunpack.c.l.b16 %v5560
    %v5628 = vunpack.c.h.b16 %v5560
    %v5629 = vunpack.c.l.b16 %v5561
    %v5630 = vunpack.c.h.b16 %v5561
    %v5631 = vunpack.c.l.b16 %v5562
    %v5632 = vunpack.c.h.b16 %v5562
    %v5633 = vunpack.c.l.b16 %v5563
    %v5634 = vunpack.c.h.b16 %v5563
    %v5635 = vunpack.c.l.b16 %v5564
    %v5636 = vunpack.c.h.b16 %v5564
    %v5637 = vunpack.c.l.b16 %v5565
    %v5638 = vunpack.c.h.b16 %v5565
    %v5639 = vunpack.c.l.b16 %v5566
    %v5640 = vunpack.c.h.b16 %v5566
    %v5641 = vunpack.c.l.b16 %v5567
    %v5642 = vunpack.c.h.b16 %v5567
    %v5643 = vunpack.c.l.b16 %v5568
    %v5644 = vunpack.c.h.b16 %v5568
    %v5645 = vunpack.c.l.b16 %v5569
    %v5646 = vunpack.c.h.b16 %v5569
    %v5647 = vunpack.c.l.b16 %v5570
    %v5648 = vunpack.c.h.b16 %v5570
    %v5649 = vunpack.c.l.b16 %v5571
    %v5650 = vunpack.c.h.b16 %v5571
    %v5651 = vunpack.c.l.b16 %v5572
    %v5652 = vunpack.c.h.b16 %v5572
    %v5653 = vunpack.c.l.b16 %v5573
    %v5654 = vunpack.c.h.b16 %v5573
    %v5655 = vunpack.c.l.b16 %v5574
    %v5656 = vunpack.c.h.b16 %v5574
    %v5657 = vunpack.c.l.b16 %v5575
    %v5658 = vunpack.c.h.b16 %v5575
    %v5659 = vunpack.c.l.b16 %v5576
    %v5660 = vunpack.c.h.b16 %v5576
    %v5661 = vunpack.c.l.b16 %v5577
    %v5662 = vunpack.c.h.b16 %v5577
    %v5663 = vunpack.c.l.b16 %v5578
    %v5664 = vunpack.c.h.b16 %v5578
    %v5665 = vunpack.c.l.b16 %v5579
    %v5666 = vunpack.c.h.b16 %v5579
    %v5667 = vunpack.c.l.b16 %v5580
    %v5668 = vunpack.c.h.b16 %v5580
    %v5669 = vunpack.c.l.b16 %v5581
    %v5670 = vunpack.c.h.b16 %v5581
    %v5671 = vunpack.c.l.b16 %v5582
    %v5672 = vunpack.c.h.b16 %v5582
    %v5673 = vunpack.c.l.b16 %v5583
    %v5674 = vunpack.c.h.b16 %v5583
    %v5675 = vunpack.c.l.b16 %v5584
    %v5676 = vunpack.c.h.b16 %v5584
    %v5677 = vunpack.c.l.b16 %v5585
    %v5678 = vunpack.c.h.b16 %v5585
    %v5679 = vunpack.c.l.b16 %v5586
    %v5680 = vunpack.c.h.b16 %v5586
    %v5681 = vunpack.c.l.b16 %v5587
    %v5682 = vunpack.c.h.b16 %v5587
    %v5683 = vunpack.c.l.b16 %v5588
    %v5684 = vunpack.c.h.b16 %v5588
    %v5685 = vpack.c.b16 %v5625, %v5621
    %v5686 = vpack.c.b16 %v5626, %v5622
    %v5687 = vpack.c.b16 %v5627, %v5623
    %v5688 = vpack.c.b16 %v5628, %v5624
    %v5689 = vpack.c.b16 %v5633, %v5629
    %v5690 = vpack.c.b16 %v5634, %v5630
    %v5691 = vpack.c.b16 %v5635, %v5631
    %v5692 = vpack.c.b16 %v5636, %v5632
    %v5693 = vpack.c.b16 %v5641, %v5637
    %v5694 = vpack.c.b16 %v5642, %v5638
    %v5695 = vpack.c.b16 %v5643, %v5639
    %v5696 = vpack.c.b16 %v5644, %v5640
    %v5697 = vpack.c.b16 %v5649, %v5645
    %v5698 = vpack.c.b16 %v5650, %v5646
    %v5699 = vpack.c.b16 %v5651, %v5647
    %v5700 = vpack.c.b16 %v5652, %v5648
    %v5701 = vpack.c.b16 %v5657, %v5653
    %v5702 = vpack.c.b16 %v5658, %v5654
    %v5703 = vpack.c.b16 %v5659, %v5655
    %v5704 = vpack.c.b16 %v5660, %v5656
    %v5705 = vpack.c.b16 %v5665, %v5661
    %v5706 = vpack.c.b16 %v5666, %v5662
    %v5707 = vpack.c.b16 %v5667, %v5663
    %v5708 = vpack.c.b16 %v5668, %v5664
    %v5709 = vpack.c.b16 %v5673, %v5669
    %v5710 = vpack.c.b16 %v5674, %v5670
    %v5711 = vpack.c.b16 %v5675, %v5671
    %v5712 = vpack.c.b16 %v5676, %v5672
    %v5713 = vpack.c.b16 %v5681, %v5677
    %v5714 = vpack.c.b16 %v5682, %v5678
    %v5715 = vpack.c.b16 %v5683, %v5679
    %v5716 = vpack.c.b16 %v5684, %v5680
    %5749 = vmatpush.bf16.msra.mxu0 %v5713
    %5750 = vmatpush.bf16.msra.mxu0 %v5709
    %5751 = vmatpush.bf16.msra.mxu0 %v5705
    %5752 = vmatpush.bf16.msra.mxu0 %v5701
    %5753 = vmatpush.bf16.msra.mxu0 %v5697
    %5754 = vmatpush.bf16.msra.mxu0 %v5693
    %5755 = vmatpush.bf16.msra.mxu0 %v5689
    %5756 = vmatpush.bf16.msra.mxu0 %v5685
    %5757 = vmatmul.bf16.gmra.mxu0 %v5556
    %v5758 = vpop.f32.mrf.mxu0
    %v5759 = vadd.f32 0.0, %v5758
    %v5760 = vpop.f32.mrf.mxu0
    %5761 = vdwg.mxu0
    %5762 = vmatpush.bf16.msra.mxu0 %v5714
    %5763 = vmatpush.bf16.msra.mxu0 %v5710
    %5764 = vmatpush.bf16.msra.mxu0 %v5706
    %5765 = vmatpush.bf16.msra.mxu0 %v5702
    %5766 = vmatpush.bf16.msra.mxu0 %v5698
    %5767 = vmatpush.bf16.msra.mxu0 %v5694
    %5768 = vmatpush.bf16.msra.mxu0 %v5690
    %5769 = vmatpush.bf16.msra.mxu0 %v5686
    %5770 = vmatmul.bf16.gmra.mxu0 %v5556
    %v5771 = vpop.f32.mrf.mxu0
    %v5772 = vadd.f32 0.0, %v5771
    %v5773 = vpop.f32.mrf.mxu0
    %5774 = vdwg.mxu0
    %5775 = vmatpush.bf16.msra.mxu0 %v5715
    %5776 = vmatpush.bf16.msra.mxu0 %v5711
    %5777 = vmatpush.bf16.msra.mxu0 %v5707
    %5778 = vmatpush.bf16.msra.mxu0 %v5703
    %5779 = vmatpush.bf16.msra.mxu0 %v5699
    %5780 = vmatpush.bf16.msra.mxu0 %v5695
    %5781 = vmatpush.bf16.msra.mxu0 %v5691
    %5782 = vmatpush.bf16.msra.mxu0 %v5687
    %5783 = vmatmul.bf16.gmra.mxu0 %v5556
    %v5784 = vpop.f32.mrf.mxu0
    %v5785 = vadd.f32 0.0, %v5784
    %v5786 = vpop.f32.mrf.mxu0
    %5787 = vdwg.mxu0
    %5788 = vmatpush.bf16.msra.mxu0 %v5716
    %5789 = vmatpush.bf16.msra.mxu0 %v5712
    %5790 = vmatpush.bf16.msra.mxu0 %v5708
    %5791 = vmatpush.bf16.msra.mxu0 %v5704
    %5792 = vmatpush.bf16.msra.mxu0 %v5700
    %5793 = vmatpush.bf16.msra.mxu0 %v5696
    %5794 = vmatpush.bf16.msra.mxu0 %v5692
    %5795 = vmatpush.bf16.msra.mxu0 %v5688
    %5796 = vmatmul.bf16.gmra.mxu0 %v5556
    %v5797 = vpop.f32.mrf.mxu0
    %v5798 = vadd.f32 0.0, %v5797
    %v5799 = vpop.f32.mrf.mxu0
    %5800 = vdwg.mxu0
    %v5802 = vrot.slane %v5772, 1
    %v5804 = vadd.f32 %v5759, %v5802
    %v5806 = vrot.slane %v5785, 2
    %v5808 = vadd.f32 %v5804, %v5806
    %v5810 = vrot.slane %v5798, 3
    %v5812 = vadd.f32 %v5808, %v5810
    %5813 = vst [vmem:[#allocation4 + $0x6] sm:$0x1] %v5812
    %v5814 = vld [vmem:[#allocation2 + $0xe] sm:$0xf]
    %v5815 = vpack.c.bf16 %v5814, %v5814
    %v5816 = vld [vmem:[%s3] sm:$0xff]
    %v5817 = vld [vmem:[%s3 + $0x8] sm:$0xff]
    %v5818 = vld [vmem:[%s3 + $0x10] sm:$0xff]
    %v5819 = vld [vmem:[%s3 + $0x18] sm:$0xff]
    %v5820 = vld [vmem:[%s3 + $0x20] sm:$0xff]
    %v5821 = vld [vmem:[%s3 + $0x28] sm:$0xff]
    %v5822 = vld [vmem:[%s3 + $0x30] sm:$0xff]
    %v5823 = vld [vmem:[%s3 + $0x38] sm:$0xff]
    %v5824 = vld [vmem:[%s3 + $0x40] sm:$0xff]
    %v5825 = vld [vmem:[%s3 + $0x48] sm:$0xff]
    %v5826 = vld [vmem:[%s3 + $0x50] sm:$0xff]
    %v5827 = vld [vmem:[%s3 + $0x58] sm:$0xff]
    %v5828 = vld [vmem:[%s3 + $0x60] sm:$0xff]
    %v5829 = vld [vmem:[%s3 + $0x68] sm:$0xff]
    %v5830 = vld [vmem:[%s3 + $0x70] sm:$0xff]
    %v5831 = vld [vmem:[%s3 + $0x78] sm:$0xff]
    %v5832 = vld [vmem:[%s3 + $0x80] sm:$0xff]
    %v5833 = vld [vmem:[%s3 + $0x88] sm:$0xff]
    %v5834 = vld [vmem:[%s3 + $0x90] sm:$0xff]
    %v5835 = vld [vmem:[%s3 + $0x98] sm:$0xff]
    %v5836 = vld [vmem:[%s3 + $0xa0] sm:$0xff]
    %v5837 = vld [vmem:[%s3 + $0xa8] sm:$0xff]
    %v5838 = vld [vmem:[%s3 + $0xb0] sm:$0xff]
    %v5839 = vld [vmem:[%s3 + $0xb8] sm:$0xff]
    %v5840 = vld [vmem:[%s3 + $0xc0] sm:$0xff]
    %v5841 = vld [vmem:[%s3 + $0xc8] sm:$0xff]
    %v5842 = vld [vmem:[%s3 + $0xd0] sm:$0xff]
    %v5843 = vld [vmem:[%s3 + $0xd8] sm:$0xff]
    %v5844 = vld [vmem:[%s3 + $0xe0] sm:$0xff]
    %v5845 = vld [vmem:[%s3 + $0xe8] sm:$0xff]
    %v5846 = vld [vmem:[%s3 + $0xf0] sm:$0xff]
    %v5847 = vld [vmem:[%s3 + $0xf8] sm:$0xff]
    %v5880 = vunpack.c.l.b16 %v5816
    %v5881 = vunpack.c.h.b16 %v5816
    %v5882 = vunpack.c.l.b16 %v5817
    %v5883 = vunpack.c.h.b16 %v5817
    %v5884 = vunpack.c.l.b16 %v5818
    %v5885 = vunpack.c.h.b16 %v5818
    %v5886 = vunpack.c.l.b16 %v5819
    %v5887 = vunpack.c.h.b16 %v5819
    %v5888 = vunpack.c.l.b16 %v5820
    %v5889 = vunpack.c.h.b16 %v5820
    %v5890 = vunpack.c.l.b16 %v5821
    %v5891 = vunpack.c.h.b16 %v5821
    %v5892 = vunpack.c.l.b16 %v5822
    %v5893 = vunpack.c.h.b16 %v5822
    %v5894 = vunpack.c.l.b16 %v5823
    %v5895 = vunpack.c.h.b16 %v5823
    %v5896 = vunpack.c.l.b16 %v5824
    %v5897 = vunpack.c.h.b16 %v5824
    %v5898 = vunpack.c.l.b16 %v5825
    %v5899 = vunpack.c.h.b16 %v5825
    %v5900 = vunpack.c.l.b16 %v5826
    %v5901 = vunpack.c.h.b16 %v5826
    %v5902 = vunpack.c.l.b16 %v5827
    %v5903 = vunpack.c.h.b16 %v5827
    %v5904 = vunpack.c.l.b16 %v5828
    %v5905 = vunpack.c.h.b16 %v5828
    %v5906 = vunpack.c.l.b16 %v5829
    %v5907 = vunpack.c.h.b16 %v5829
    %v5908 = vunpack.c.l.b16 %v5830
    %v5909 = vunpack.c.h.b16 %v5830
    %v5910 = vunpack.c.l.b16 %v5831
    %v5911 = vunpack.c.h.b16 %v5831
    %v5912 = vunpack.c.l.b16 %v5832
    %v5913 = vunpack.c.h.b16 %v5832
    %v5914 = vunpack.c.l.b16 %v5833
    %v5915 = vunpack.c.h.b16 %v5833
    %v5916 = vunpack.c.l.b16 %v5834
    %v5917 = vunpack.c.h.b16 %v5834
    %v5918 = vunpack.c.l.b16 %v5835
    %v5919 = vunpack.c.h.b16 %v5835
    %v5920 = vunpack.c.l.b16 %v5836
    %v5921 = vunpack.c.h.b16 %v5836
    %v5922 = vunpack.c.l.b16 %v5837
    %v5923 = vunpack.c.h.b16 %v5837
    %v5924 = vunpack.c.l.b16 %v5838
    %v5925 = vunpack.c.h.b16 %v5838
    %v5926 = vunpack.c.l.b16 %v5839
    %v5927 = vunpack.c.h.b16 %v5839
    %v5928 = vunpack.c.l.b16 %v5840
    %v5929 = vunpack.c.h.b16 %v5840
    %v5930 = vunpack.c.l.b16 %v5841
    %v5931 = vunpack.c.h.b16 %v5841
    %v5932 = vunpack.c.l.b16 %v5842
    %v5933 = vunpack.c.h.b16 %v5842
    %v5934 = vunpack.c.l.b16 %v5843
    %v5935 = vunpack.c.h.b16 %v5843
    %v5936 = vunpack.c.l.b16 %v5844
    %v5937 = vunpack.c.h.b16 %v5844
    %v5938 = vunpack.c.l.b16 %v5845
    %v5939 = vunpack.c.h.b16 %v5845
    %v5940 = vunpack.c.l.b16 %v5846
    %v5941 = vunpack.c.h.b16 %v5846
    %v5942 = vunpack.c.l.b16 %v5847
    %v5943 = vunpack.c.h.b16 %v5847
    %v5944 = vpack.c.b16 %v5884, %v5880
    %v5945 = vpack.c.b16 %v5885, %v5881
    %v5946 = vpack.c.b16 %v5886, %v5882
    %v5947 = vpack.c.b16 %v5887, %v5883
    %v5948 = vpack.c.b16 %v5892, %v5888
    %v5949 = vpack.c.b16 %v5893, %v5889
    %v5950 = vpack.c.b16 %v5894, %v5890
    %v5951 = vpack.c.b16 %v5895, %v5891
    %v5952 = vpack.c.b16 %v5900, %v5896
    %v5953 = vpack.c.b16 %v5901, %v5897
    %v5954 = vpack.c.b16 %v5902, %v5898
    %v5955 = vpack.c.b16 %v5903, %v5899
    %v5956 = vpack.c.b16 %v5908, %v5904
    %v5957 = vpack.c.b16 %v5909, %v5905
    %v5958 = vpack.c.b16 %v5910, %v5906
    %v5959 = vpack.c.b16 %v5911, %v5907
    %v5960 = vpack.c.b16 %v5916, %v5912
    %v5961 = vpack.c.b16 %v5917, %v5913
    %v5962 = vpack.c.b16 %v5918, %v5914
    %v5963 = vpack.c.b16 %v5919, %v5915
    %v5964 = vpack.c.b16 %v5924, %v5920
    %v5965 = vpack.c.b16 %v5925, %v5921
    %v5966 = vpack.c.b16 %v5926, %v5922
    %v5967 = vpack.c.b16 %v5927, %v5923
    %v5968 = vpack.c.b16 %v5932, %v5928
    %v5969 = vpack.c.b16 %v5933, %v5929
    %v5970 = vpack.c.b16 %v5934, %v5930
    %v5971 = vpack.c.b16 %v5935, %v5931
    %v5972 = vpack.c.b16 %v5940, %v5936
    %v5973 = vpack.c.b16 %v5941, %v5937
    %v5974 = vpack.c.b16 %v5942, %v5938
    %v5975 = vpack.c.b16 %v5943, %v5939
    %6008 = vmatpush.bf16.msra.mxu0 %v5972
    %6009 = vmatpush.bf16.msra.mxu0 %v5968
    %6010 = vmatpush.bf16.msra.mxu0 %v5964
    %6011 = vmatpush.bf16.msra.mxu0 %v5960
    %6012 = vmatpush.bf16.msra.mxu0 %v5956
    %6013 = vmatpush.bf16.msra.mxu0 %v5952
    %6014 = vmatpush.bf16.msra.mxu0 %v5948
    %6015 = vmatpush.bf16.msra.mxu0 %v5944
    %6016 = vmatmul.bf16.gmra.mxu0 %v5815
    %v6017 = vpop.f32.mrf.mxu0
    %v6018 = vadd.f32 0.0, %v6017
    %v6019 = vpop.f32.mrf.mxu0
    %6020 = vdwg.mxu0
    %6021 = vmatpush.bf16.msra.mxu0 %v5973
    %6022 = vmatpush.bf16.msra.mxu0 %v5969
    %6023 = vmatpush.bf16.msra.mxu0 %v5965
    %6024 = vmatpush.bf16.msra.mxu0 %v5961
    %6025 = vmatpush.bf16.msra.mxu0 %v5957
    %6026 = vmatpush.bf16.msra.mxu0 %v5953
    %6027 = vmatpush.bf16.msra.mxu0 %v5949
    %6028 = vmatpush.bf16.msra.mxu0 %v5945
    %6029 = vmatmul.bf16.gmra.mxu0 %v5815
    %v6030 = vpop.f32.mrf.mxu0
    %v6031 = vadd.f32 0.0, %v6030
    %v6032 = vpop.f32.mrf.mxu0
    %6033 = vdwg.mxu0
    %6034 = vmatpush.bf16.msra.mxu0 %v5974
    %6035 = vmatpush.bf16.msra.mxu0 %v5970
    %6036 = vmatpush.bf16.msra.mxu0 %v5966
    %6037 = vmatpush.bf16.msra.mxu0 %v5962
    %6038 = vmatpush.bf16.msra.mxu0 %v5958
    %6039 = vmatpush.bf16.msra.mxu0 %v5954
    %6040 = vmatpush.bf16.msra.mxu0 %v5950
    %6041 = vmatpush.bf16.msra.mxu0 %v5946
    %6042 = vmatmul.bf16.gmra.mxu0 %v5815
    %v6043 = vpop.f32.mrf.mxu0
    %v6044 = vadd.f32 0.0, %v6043
    %v6045 = vpop.f32.mrf.mxu0
    %6046 = vdwg.mxu0
    %6047 = vmatpush.bf16.msra.mxu0 %v5975
    %6048 = vmatpush.bf16.msra.mxu0 %v5971
    %6049 = vmatpush.bf16.msra.mxu0 %v5967
    %6050 = vmatpush.bf16.msra.mxu0 %v5963
    %6051 = vmatpush.bf16.msra.mxu0 %v5959
    %6052 = vmatpush.bf16.msra.mxu0 %v5955
    %6053 = vmatpush.bf16.msra.mxu0 %v5951
    %6054 = vmatpush.bf16.msra.mxu0 %v5947
    %6055 = vmatmul.bf16.gmra.mxu0 %v5815
    %v6056 = vpop.f32.mrf.mxu0
    %v6057 = vadd.f32 0.0, %v6056
    %v6058 = vpop.f32.mrf.mxu0
    %6059 = vdwg.mxu0
    %v6061 = vrot.slane %v6031, 1
    %v6063 = vadd.f32 %v6018, %v6061
    %v6065 = vrot.slane %v6044, 2
    %v6067 = vadd.f32 %v6063, %v6065
    %v6069 = vrot.slane %v6057, 3
    %v6071 = vadd.f32 %v6067, %v6069
    %6072 = vst [vmem:[#allocation4 + $0x7] sm:$0x1] %v6071
    %v6073 = vld [vmem:[#allocation2 + $0x12] sm:$0xf]
    %v6074 = vpack.c.bf16 %v6073, %v6073
    %v6075 = vld [vmem:[%s3] sm:$0xff]
    %v6076 = vld [vmem:[%s3 + $0x8] sm:$0xff]
    %v6077 = vld [vmem:[%s3 + $0x10] sm:$0xff]
    %v6078 = vld [vmem:[%s3 + $0x18] sm:$0xff]
    %v6079 = vld [vmem:[%s3 + $0x20] sm:$0xff]
    %v6080 = vld [vmem:[%s3 + $0x28] sm:$0xff]
    %v6081 = vld [vmem:[%s3 + $0x30] sm:$0xff]
    %v6082 = vld [vmem:[%s3 + $0x38] sm:$0xff]
    %v6083 = vld [vmem:[%s3 + $0x40] sm:$0xff]
    %v6084 = vld [vmem:[%s3 + $0x48] sm:$0xff]
    %v6085 = vld [vmem:[%s3 + $0x50] sm:$0xff]
    %v6086 = vld [vmem:[%s3 + $0x58] sm:$0xff]
    %v6087 = vld [vmem:[%s3 + $0x60] sm:$0xff]
    %v6088 = vld [vmem:[%s3 + $0x68] sm:$0xff]
    %v6089 = vld [vmem:[%s3 + $0x70] sm:$0xff]
    %v6090 = vld [vmem:[%s3 + $0x78] sm:$0xff]
    %v6091 = vld [vmem:[%s3 + $0x80] sm:$0xff]
    %v6092 = vld [vmem:[%s3 + $0x88] sm:$0xff]
    %v6093 = vld [vmem:[%s3 + $0x90] sm:$0xff]
    %v6094 = vld [vmem:[%s3 + $0x98] sm:$0xff]
    %v6095 = vld [vmem:[%s3 + $0xa0] sm:$0xff]
    %v6096 = vld [vmem:[%s3 + $0xa8] sm:$0xff]
    %v6097 = vld [vmem:[%s3 + $0xb0] sm:$0xff]
    %v6098 = vld [vmem:[%s3 + $0xb8] sm:$0xff]
    %v6099 = vld [vmem:[%s3 + $0xc0] sm:$0xff]
    %v6100 = vld [vmem:[%s3 + $0xc8] sm:$0xff]
    %v6101 = vld [vmem:[%s3 + $0xd0] sm:$0xff]
    %v6102 = vld [vmem:[%s3 + $0xd8] sm:$0xff]
    %v6103 = vld [vmem:[%s3 + $0xe0] sm:$0xff]
    %v6104 = vld [vmem:[%s3 + $0xe8] sm:$0xff]
    %v6105 = vld [vmem:[%s3 + $0xf0] sm:$0xff]
    %v6106 = vld [vmem:[%s3 + $0xf8] sm:$0xff]
    %v6139 = vunpack.c.l.b16 %v6075
    %v6140 = vunpack.c.h.b16 %v6075
    %v6141 = vunpack.c.l.b16 %v6076
    %v6142 = vunpack.c.h.b16 %v6076
    %v6143 = vunpack.c.l.b16 %v6077
    %v6144 = vunpack.c.h.b16 %v6077
    %v6145 = vunpack.c.l.b16 %v6078
    %v6146 = vunpack.c.h.b16 %v6078
    %v6147 = vunpack.c.l.b16 %v6079
    %v6148 = vunpack.c.h.b16 %v6079
    %v6149 = vunpack.c.l.b16 %v6080
    %v6150 = vunpack.c.h.b16 %v6080
    %v6151 = vunpack.c.l.b16 %v6081
    %v6152 = vunpack.c.h.b16 %v6081
    %v6153 = vunpack.c.l.b16 %v6082
    %v6154 = vunpack.c.h.b16 %v6082
    %v6155 = vunpack.c.l.b16 %v6083
    %v6156 = vunpack.c.h.b16 %v6083
    %v6157 = vunpack.c.l.b16 %v6084
    %v6158 = vunpack.c.h.b16 %v6084
    %v6159 = vunpack.c.l.b16 %v6085
    %v6160 = vunpack.c.h.b16 %v6085
    %v6161 = vunpack.c.l.b16 %v6086
    %v6162 = vunpack.c.h.b16 %v6086
    %v6163 = vunpack.c.l.b16 %v6087
    %v6164 = vunpack.c.h.b16 %v6087
    %v6165 = vunpack.c.l.b16 %v6088
    %v6166 = vunpack.c.h.b16 %v6088
    %v6167 = vunpack.c.l.b16 %v6089
    %v6168 = vunpack.c.h.b16 %v6089
    %v6169 = vunpack.c.l.b16 %v6090
    %v6170 = vunpack.c.h.b16 %v6090
    %v6171 = vunpack.c.l.b16 %v6091
    %v6172 = vunpack.c.h.b16 %v6091
    %v6173 = vunpack.c.l.b16 %v6092
    %v6174 = vunpack.c.h.b16 %v6092
    %v6175 = vunpack.c.l.b16 %v6093
    %v6176 = vunpack.c.h.b16 %v6093
    %v6177 = vunpack.c.l.b16 %v6094
    %v6178 = vunpack.c.h.b16 %v6094
    %v6179 = vunpack.c.l.b16 %v6095
    %v6180 = vunpack.c.h.b16 %v6095
    %v6181 = vunpack.c.l.b16 %v6096
    %v6182 = vunpack.c.h.b16 %v6096
    %v6183 = vunpack.c.l.b16 %v6097
    %v6184 = vunpack.c.h.b16 %v6097
    %v6185 = vunpack.c.l.b16 %v6098
    %v6186 = vunpack.c.h.b16 %v6098
    %v6187 = vunpack.c.l.b16 %v6099
    %v6188 = vunpack.c.h.b16 %v6099
    %v6189 = vunpack.c.l.b16 %v6100
    %v6190 = vunpack.c.h.b16 %v6100
    %v6191 = vunpack.c.l.b16 %v6101
    %v6192 = vunpack.c.h.b16 %v6101
    %v6193 = vunpack.c.l.b16 %v6102
    %v6194 = vunpack.c.h.b16 %v6102
    %v6195 = vunpack.c.l.b16 %v6103
    %v6196 = vunpack.c.h.b16 %v6103
    %v6197 = vunpack.c.l.b16 %v6104
    %v6198 = vunpack.c.h.b16 %v6104
    %v6199 = vunpack.c.l.b16 %v6105
    %v6200 = vunpack.c.h.b16 %v6105
    %v6201 = vunpack.c.l.b16 %v6106
    %v6202 = vunpack.c.h.b16 %v6106
    %v6203 = vpack.c.b16 %v6143, %v6139
    %v6204 = vpack.c.b16 %v6144, %v6140
    %v6205 = vpack.c.b16 %v6145, %v6141
    %v6206 = vpack.c.b16 %v6146, %v6142
    %v6207 = vpack.c.b16 %v6151, %v6147
    %v6208 = vpack.c.b16 %v6152, %v6148
    %v6209 = vpack.c.b16 %v6153, %v6149
    %v6210 = vpack.c.b16 %v6154, %v6150
    %v6211 = vpack.c.b16 %v6159, %v6155
    %v6212 = vpack.c.b16 %v6160, %v6156
    %v6213 = vpack.c.b16 %v6161, %v6157
    %v6214 = vpack.c.b16 %v6162, %v6158
    %v6215 = vpack.c.b16 %v6167, %v6163
    %v6216 = vpack.c.b16 %v6168, %v6164
    %v6217 = vpack.c.b16 %v6169, %v6165
    %v6218 = vpack.c.b16 %v6170, %v6166
    %v6219 = vpack.c.b16 %v6175, %v6171
    %v6220 = vpack.c.b16 %v6176, %v6172
    %v6221 = vpack.c.b16 %v6177, %v6173
    %v6222 = vpack.c.b16 %v6178, %v6174
    %v6223 = vpack.c.b16 %v6183, %v6179
    %v6224 = vpack.c.b16 %v6184, %v6180
    %v6225 = vpack.c.b16 %v6185, %v6181
    %v6226 = vpack.c.b16 %v6186, %v6182
    %v6227 = vpack.c.b16 %v6191, %v6187
    %v6228 = vpack.c.b16 %v6192, %v6188
    %v6229 = vpack.c.b16 %v6193, %v6189
    %v6230 = vpack.c.b16 %v6194, %v6190
    %v6231 = vpack.c.b16 %v6199, %v6195
    %v6232 = vpack.c.b16 %v6200, %v6196
    %v6233 = vpack.c.b16 %v6201, %v6197
    %v6234 = vpack.c.b16 %v6202, %v6198
    %6267 = vmatpush.bf16.msra.mxu0 %v6231
    %6268 = vmatpush.bf16.msra.mxu0 %v6227
    %6269 = vmatpush.bf16.msra.mxu0 %v6223
    %6270 = vmatpush.bf16.msra.mxu0 %v6219
    %6271 = vmatpush.bf16.msra.mxu0 %v6215
    %6272 = vmatpush.bf16.msra.mxu0 %v6211
    %6273 = vmatpush.bf16.msra.mxu0 %v6207
    %6274 = vmatpush.bf16.msra.mxu0 %v6203
    %6275 = vmatmul.bf16.gmra.mxu0 %v6074
    %v6276 = vpop.f32.mrf.mxu0
    %v6277 = vadd.f32 0.0, %v6276
    %v6278 = vpop.f32.mrf.mxu0
    %6279 = vdwg.mxu0
    %6280 = vmatpush.bf16.msra.mxu0 %v6232
    %6281 = vmatpush.bf16.msra.mxu0 %v6228
    %6282 = vmatpush.bf16.msra.mxu0 %v6224
    %6283 = vmatpush.bf16.msra.mxu0 %v6220
    %6284 = vmatpush.bf16.msra.mxu0 %v6216
    %6285 = vmatpush.bf16.msra.mxu0 %v6212
    %6286 = vmatpush.bf16.msra.mxu0 %v6208
    %6287 = vmatpush.bf16.msra.mxu0 %v6204
    %6288 = vmatmul.bf16.gmra.mxu0 %v6074
    %v6289 = vpop.f32.mrf.mxu0
    %v6290 = vadd.f32 0.0, %v6289
    %v6291 = vpop.f32.mrf.mxu0
    %6292 = vdwg.mxu0
    %6293 = vmatpush.bf16.msra.mxu0 %v6233
    %6294 = vmatpush.bf16.msra.mxu0 %v6229
    %6295 = vmatpush.bf16.msra.mxu0 %v6225
    %6296 = vmatpush.bf16.msra.mxu0 %v6221
    %6297 = vmatpush.bf16.msra.mxu0 %v6217
    %6298 = vmatpush.bf16.msra.mxu0 %v6213
    %6299 = vmatpush.bf16.msra.mxu0 %v6209
    %6300 = vmatpush.bf16.msra.mxu0 %v6205
    %6301 = vmatmul.bf16.gmra.mxu0 %v6074
    %v6302 = vpop.f32.mrf.mxu0
    %v6303 = vadd.f32 0.0, %v6302
    %v6304 = vpop.f32.mrf.mxu0
    %6305 = vdwg.mxu0
    %6306 = vmatpush.bf16.msra.mxu0 %v6234
    %6307 = vmatpush.bf16.msra.mxu0 %v6230
    %6308 = vmatpush.bf16.msra.mxu0 %v6226
    %6309 = vmatpush.bf16.msra.mxu0 %v6222
    %6310 = vmatpush.bf16.msra.mxu0 %v6218
    %6311 = vmatpush.bf16.msra.mxu0 %v6214
    %6312 = vmatpush.bf16.msra.mxu0 %v6210
    %6313 = vmatpush.bf16.msra.mxu0 %v6206
    %6314 = vmatmul.bf16.gmra.mxu0 %v6074
    %v6315 = vpop.f32.mrf.mxu0
    %v6316 = vadd.f32 0.0, %v6315
    %v6317 = vpop.f32.mrf.mxu0
    %6318 = vdwg.mxu0
    %v6320 = vrot.slane %v6290, 1
    %v6322 = vadd.f32 %v6277, %v6320
    %v6324 = vrot.slane %v6303, 2
    %v6326 = vadd.f32 %v6322, %v6324
    %v6328 = vrot.slane %v6316, 3
    %v6330 = vadd.f32 %v6326, %v6328
    %6331 = vst [vmem:[#allocation4 + $0x8] sm:$0x1] %v6330
    %v6332 = vld [vmem:[#allocation2 + $0x14] sm:$0xf]
    %v6333 = vpack.c.bf16 %v6332, %v6332
    %v6334 = vld [vmem:[%s3] sm:$0xff]
    %v6335 = vld [vmem:[%s3 + $0x8] sm:$0xff]
    %v6336 = vld [vmem:[%s3 + $0x10] sm:$0xff]
    %v6337 = vld [vmem:[%s3 + $0x18] sm:$0xff]
    %v6338 = vld [vmem:[%s3 + $0x20] sm:$0xff]
    %v6339 = vld [vmem:[%s3 + $0x28] sm:$0xff]
    %v6340 = vld [vmem:[%s3 + $0x30] sm:$0xff]
    %v6341 = vld [vmem:[%s3 + $0x38] sm:$0xff]
    %v6342 = vld [vmem:[%s3 + $0x40] sm:$0xff]
    %v6343 = vld [vmem:[%s3 + $0x48] sm:$0xff]
    %v6344 = vld [vmem:[%s3 + $0x50] sm:$0xff]
    %v6345 = vld [vmem:[%s3 + $0x58] sm:$0xff]
    %v6346 = vld [vmem:[%s3 + $0x60] sm:$0xff]
    %v6347 = vld [vmem:[%s3 + $0x68] sm:$0xff]
    %v6348 = vld [vmem:[%s3 + $0x70] sm:$0xff]
    %v6349 = vld [vmem:[%s3 + $0x78] sm:$0xff]
    %v6350 = vld [vmem:[%s3 + $0x80] sm:$0xff]
    %v6351 = vld [vmem:[%s3 + $0x88] sm:$0xff]
    %v6352 = vld [vmem:[%s3 + $0x90] sm:$0xff]
    %v6353 = vld [vmem:[%s3 + $0x98] sm:$0xff]
    %v6354 = vld [vmem:[%s3 + $0xa0] sm:$0xff]
    %v6355 = vld [vmem:[%s3 + $0xa8] sm:$0xff]
    %v6356 = vld [vmem:[%s3 + $0xb0] sm:$0xff]
    %v6357 = vld [vmem:[%s3 + $0xb8] sm:$0xff]
    %v6358 = vld [vmem:[%s3 + $0xc0] sm:$0xff]
    %v6359 = vld [vmem:[%s3 + $0xc8] sm:$0xff]
    %v6360 = vld [vmem:[%s3 + $0xd0] sm:$0xff]
    %v6361 = vld [vmem:[%s3 + $0xd8] sm:$0xff]
    %v6362 = vld [vmem:[%s3 + $0xe0] sm:$0xff]
    %v6363 = vld [vmem:[%s3 + $0xe8] sm:$0xff]
    %v6364 = vld [vmem:[%s3 + $0xf0] sm:$0xff]
    %v6365 = vld [vmem:[%s3 + $0xf8] sm:$0xff]
    %v6398 = vunpack.c.l.b16 %v6334
    %v6399 = vunpack.c.h.b16 %v6334
    %v6400 = vunpack.c.l.b16 %v6335
    %v6401 = vunpack.c.h.b16 %v6335
    %v6402 = vunpack.c.l.b16 %v6336
    %v6403 = vunpack.c.h.b16 %v6336
    %v6404 = vunpack.c.l.b16 %v6337
    %v6405 = vunpack.c.h.b16 %v6337
    %v6406 = vunpack.c.l.b16 %v6338
    %v6407 = vunpack.c.h.b16 %v6338
    %v6408 = vunpack.c.l.b16 %v6339
    %v6409 = vunpack.c.h.b16 %v6339
    %v6410 = vunpack.c.l.b16 %v6340
    %v6411 = vunpack.c.h.b16 %v6340
    %v6412 = vunpack.c.l.b16 %v6341
    %v6413 = vunpack.c.h.b16 %v6341
    %v6414 = vunpack.c.l.b16 %v6342
    %v6415 = vunpack.c.h.b16 %v6342
    %v6416 = vunpack.c.l.b16 %v6343
    %v6417 = vunpack.c.h.b16 %v6343
    %v6418 = vunpack.c.l.b16 %v6344
    %v6419 = vunpack.c.h.b16 %v6344
    %v6420 = vunpack.c.l.b16 %v6345
    %v6421 = vunpack.c.h.b16 %v6345
    %v6422 = vunpack.c.l.b16 %v6346
    %v6423 = vunpack.c.h.b16 %v6346
    %v6424 = vunpack.c.l.b16 %v6347
    %v6425 = vunpack.c.h.b16 %v6347
    %v6426 = vunpack.c.l.b16 %v6348
    %v6427 = vunpack.c.h.b16 %v6348
    %v6428 = vunpack.c.l.b16 %v6349
    %v6429 = vunpack.c.h.b16 %v6349
    %v6430 = vunpack.c.l.b16 %v6350
    %v6431 = vunpack.c.h.b16 %v6350
    %v6432 = vunpack.c.l.b16 %v6351
    %v6433 = vunpack.c.h.b16 %v6351
    %v6434 = vunpack.c.l.b16 %v6352
    %v6435 = vunpack.c.h.b16 %v6352
    %v6436 = vunpack.c.l.b16 %v6353
    %v6437 = vunpack.c.h.b16 %v6353
    %v6438 = vunpack.c.l.b16 %v6354
    %v6439 = vunpack.c.h.b16 %v6354
    %v6440 = vunpack.c.l.b16 %v6355
    %v6441 = vunpack.c.h.b16 %v6355
    %v6442 = vunpack.c.l.b16 %v6356
    %v6443 = vunpack.c.h.b16 %v6356
    %v6444 = vunpack.c.l.b16 %v6357
    %v6445 = vunpack.c.h.b16 %v6357
    %v6446 = vunpack.c.l.b16 %v6358
    %v6447 = vunpack.c.h.b16 %v6358
    %v6448 = vunpack.c.l.b16 %v6359
    %v6449 = vunpack.c.h.b16 %v6359
    %v6450 = vunpack.c.l.b16 %v6360
    %v6451 = vunpack.c.h.b16 %v6360
    %v6452 = vunpack.c.l.b16 %v6361
    %v6453 = vunpack.c.h.b16 %v6361
    %v6454 = vunpack.c.l.b16 %v6362
    %v6455 = vunpack.c.h.b16 %v6362
    %v6456 = vunpack.c.l.b16 %v6363
    %v6457 = vunpack.c.h.b16 %v6363
    %v6458 = vunpack.c.l.b16 %v6364
    %v6459 = vunpack.c.h.b16 %v6364
    %v6460 = vunpack.c.l.b16 %v6365
    %v6461 = vunpack.c.h.b16 %v6365
    %v6462 = vpack.c.b16 %v6402, %v6398
    %v6463 = vpack.c.b16 %v6403, %v6399
    %v6464 = vpack.c.b16 %v6404, %v6400
    %v6465 = vpack.c.b16 %v6405, %v6401
    %v6466 = vpack.c.b16 %v6410, %v6406
    %v6467 = vpack.c.b16 %v6411, %v6407
    %v6468 = vpack.c.b16 %v6412, %v6408
    %v6469 = vpack.c.b16 %v6413, %v6409
    %v6470 = vpack.c.b16 %v6418, %v6414
    %v6471 = vpack.c.b16 %v6419, %v6415
    %v6472 = vpack.c.b16 %v6420, %v6416
    %v6473 = vpack.c.b16 %v6421, %v6417
    %v6474 = vpack.c.b16 %v6426, %v6422
    %v6475 = vpack.c.b16 %v6427, %v6423
    %v6476 = vpack.c.b16 %v6428, %v6424
    %v6477 = vpack.c.b16 %v6429, %v6425
    %v6478 = vpack.c.b16 %v6434, %v6430
    %v6479 = vpack.c.b16 %v6435, %v6431
    %v6480 = vpack.c.b16 %v6436, %v6432
    %v6481 = vpack.c.b16 %v6437, %v6433
    %v6482 = vpack.c.b16 %v6442, %v6438
    %v6483 = vpack.c.b16 %v6443, %v6439
    %v6484 = vpack.c.b16 %v6444, %v6440
    %v6485 = vpack.c.b16 %v6445, %v6441
    %v6486 = vpack.c.b16 %v6450, %v6446
    %v6487 = vpack.c.b16 %v6451, %v6447
    %v6488 = vpack.c.b16 %v6452, %v6448
    %v6489 = vpack.c.b16 %v6453, %v6449
    %v6490 = vpack.c.b16 %v6458, %v6454
    %v6491 = vpack.c.b16 %v6459, %v6455
    %v6492 = vpack.c.b16 %v6460, %v6456
    %v6493 = vpack.c.b16 %v6461, %v6457
    %6526 = vmatpush.bf16.msra.mxu0 %v6490
    %6527 = vmatpush.bf16.msra.mxu0 %v6486
    %6528 = vmatpush.bf16.msra.mxu0 %v6482
    %6529 = vmatpush.bf16.msra.mxu0 %v6478
    %6530 = vmatpush.bf16.msra.mxu0 %v6474
    %6531 = vmatpush.bf16.msra.mxu0 %v6470
    %6532 = vmatpush.bf16.msra.mxu0 %v6466
    %6533 = vmatpush.bf16.msra.mxu0 %v6462
    %6534 = vmatmul.bf16.gmra.mxu0 %v6333
    %v6535 = vpop.f32.mrf.mxu0
    %v6536 = vadd.f32 0.0, %v6535
    %v6537 = vpop.f32.mrf.mxu0
    %6538 = vdwg.mxu0
    %6539 = vmatpush.bf16.msra.mxu0 %v6491
    %6540 = vmatpush.bf16.msra.mxu0 %v6487
    %6541 = vmatpush.bf16.msra.mxu0 %v6483
    %6542 = vmatpush.bf16.msra.mxu0 %v6479
    %6543 = vmatpush.bf16.msra.mxu0 %v6475
    %6544 = vmatpush.bf16.msra.mxu0 %v6471
    %6545 = vmatpush.bf16.msra.mxu0 %v6467
    %6546 = vmatpush.bf16.msra.mxu0 %v6463
    %6547 = vmatmul.bf16.gmra.mxu0 %v6333
    %v6548 = vpop.f32.mrf.mxu0
    %v6549 = vadd.f32 0.0, %v6548
    %v6550 = vpop.f32.mrf.mxu0
    %6551 = vdwg.mxu0
    %6552 = vmatpush.bf16.msra.mxu0 %v6492
    %6553 = vmatpush.bf16.msra.mxu0 %v6488
    %6554 = vmatpush.bf16.msra.mxu0 %v6484
    %6555 = vmatpush.bf16.msra.mxu0 %v6480
    %6556 = vmatpush.bf16.msra.mxu0 %v6476
    %6557 = vmatpush.bf16.msra.mxu0 %v6472
    %6558 = vmatpush.bf16.msra.mxu0 %v6468
    %6559 = vmatpush.bf16.msra.mxu0 %v6464
    %6560 = vmatmul.bf16.gmra.mxu0 %v6333
    %v6561 = vpop.f32.mrf.mxu0
    %v6562 = vadd.f32 0.0, %v6561
    %v6563 = vpop.f32.mrf.mxu0
    %6564 = vdwg.mxu0
    %6565 = vmatpush.bf16.msra.mxu0 %v6493
    %6566 = vmatpush.bf16.msra.mxu0 %v6489
    %6567 = vmatpush.bf16.msra.mxu0 %v6485
    %6568 = vmatpush.bf16.msra.mxu0 %v6481
    %6569 = vmatpush.bf16.msra.mxu0 %v6477
    %6570 = vmatpush.bf16.msra.mxu0 %v6473
    %6571 = vmatpush.bf16.msra.mxu0 %v6469
    %6572 = vmatpush.bf16.msra.mxu0 %v6465
    %6573 = vmatmul.bf16.gmra.mxu0 %v6333
    %v6574 = vpop.f32.mrf.mxu0
    %v6575 = vadd.f32 0.0, %v6574
    %v6576 = vpop.f32.mrf.mxu0
    %6577 = vdwg.mxu0
    %v6579 = vrot.slane %v6549, 1
    %v6581 = vadd.f32 %v6536, %v6579
    %v6583 = vrot.slane %v6562, 2
    %v6585 = vadd.f32 %v6581, %v6583
    %v6587 = vrot.slane %v6575, 3
    %v6589 = vadd.f32 %v6585, %v6587
    %6590 = vst [vmem:[#allocation4 + $0x9] sm:$0x1] %v6589
    %v6591 = vld [vmem:[#allocation2 + $0x16] sm:$0xf]
    %v6592 = vpack.c.bf16 %v6591, %v6591
    %v6593 = vld [vmem:[%s3] sm:$0xff]
    %v6594 = vld [vmem:[%s3 + $0x8] sm:$0xff]
    %v6595 = vld [vmem:[%s3 + $0x10] sm:$0xff]
    %v6596 = vld [vmem:[%s3 + $0x18] sm:$0xff]
    %v6597 = vld [vmem:[%s3 + $0x20] sm:$0xff]
    %v6598 = vld [vmem:[%s3 + $0x28] sm:$0xff]
    %v6599 = vld [vmem:[%s3 + $0x30] sm:$0xff]
    %v6600 = vld [vmem:[%s3 + $0x38] sm:$0xff]
    %v6601 = vld [vmem:[%s3 + $0x40] sm:$0xff]
    %v6602 = vld [vmem:[%s3 + $0x48] sm:$0xff]
    %v6603 = vld [vmem:[%s3 + $0x50] sm:$0xff]
    %v6604 = vld [vmem:[%s3 + $0x58] sm:$0xff]
    %v6605 = vld [vmem:[%s3 + $0x60] sm:$0xff]
    %v6606 = vld [vmem:[%s3 + $0x68] sm:$0xff]
    %v6607 = vld [vmem:[%s3 + $0x70] sm:$0xff]
    %v6608 = vld [vmem:[%s3 + $0x78] sm:$0xff]
    %v6609 = vld [vmem:[%s3 + $0x80] sm:$0xff]
    %v6610 = vld [vmem:[%s3 + $0x88] sm:$0xff]
    %v6611 = vld [vmem:[%s3 + $0x90] sm:$0xff]
    %v6612 = vld [vmem:[%s3 + $0x98] sm:$0xff]
    %v6613 = vld [vmem:[%s3 + $0xa0] sm:$0xff]
    %v6614 = vld [vmem:[%s3 + $0xa8] sm:$0xff]
    %v6615 = vld [vmem:[%s3 + $0xb0] sm:$0xff]
    %v6616 = vld [vmem:[%s3 + $0xb8] sm:$0xff]
    %v6617 = vld [vmem:[%s3 + $0xc0] sm:$0xff]
    %v6618 = vld [vmem:[%s3 + $0xc8] sm:$0xff]
    %v6619 = vld [vmem:[%s3 + $0xd0] sm:$0xff]
    %v6620 = vld [vmem:[%s3 + $0xd8] sm:$0xff]
    %v6621 = vld [vmem:[%s3 + $0xe0] sm:$0xff]
    %v6622 = vld [vmem:[%s3 + $0xe8] sm:$0xff]
    %v6623 = vld [vmem:[%s3 + $0xf0] sm:$0xff]
    %v6624 = vld [vmem:[%s3 + $0xf8] sm:$0xff]
    %v6657 = vunpack.c.l.b16 %v6593
    %v6658 = vunpack.c.h.b16 %v6593
    %v6659 = vunpack.c.l.b16 %v6594
    %v6660 = vunpack.c.h.b16 %v6594
    %v6661 = vunpack.c.l.b16 %v6595
    %v6662 = vunpack.c.h.b16 %v6595
    %v6663 = vunpack.c.l.b16 %v6596
    %v6664 = vunpack.c.h.b16 %v6596
    %v6665 = vunpack.c.l.b16 %v6597
    %v6666 = vunpack.c.h.b16 %v6597
    %v6667 = vunpack.c.l.b16 %v6598
    %v6668 = vunpack.c.h.b16 %v6598
    %v6669 = vunpack.c.l.b16 %v6599
    %v6670 = vunpack.c.h.b16 %v6599
    %v6671 = vunpack.c.l.b16 %v6600
    %v6672 = vunpack.c.h.b16 %v6600
    %v6673 = vunpack.c.l.b16 %v6601
    %v6674 = vunpack.c.h.b16 %v6601
    %v6675 = vunpack.c.l.b16 %v6602
    %v6676 = vunpack.c.h.b16 %v6602
    %v6677 = vunpack.c.l.b16 %v6603
    %v6678 = vunpack.c.h.b16 %v6603
    %v6679 = vunpack.c.l.b16 %v6604
    %v6680 = vunpack.c.h.b16 %v6604
    %v6681 = vunpack.c.l.b16 %v6605
    %v6682 = vunpack.c.h.b16 %v6605
    %v6683 = vunpack.c.l.b16 %v6606
    %v6684 = vunpack.c.h.b16 %v6606
    %v6685 = vunpack.c.l.b16 %v6607
    %v6686 = vunpack.c.h.b16 %v6607
    %v6687 = vunpack.c.l.b16 %v6608
    %v6688 = vunpack.c.h.b16 %v6608
    %v6689 = vunpack.c.l.b16 %v6609
    %v6690 = vunpack.c.h.b16 %v6609
    %v6691 = vunpack.c.l.b16 %v6610
    %v6692 = vunpack.c.h.b16 %v6610
    %v6693 = vunpack.c.l.b16 %v6611
    %v6694 = vunpack.c.h.b16 %v6611
    %v6695 = vunpack.c.l.b16 %v6612
    %v6696 = vunpack.c.h.b16 %v6612
    %v6697 = vunpack.c.l.b16 %v6613
    %v6698 = vunpack.c.h.b16 %v6613
    %v6699 = vunpack.c.l.b16 %v6614
    %v6700 = vunpack.c.h.b16 %v6614
    %v6701 = vunpack.c.l.b16 %v6615
    %v6702 = vunpack.c.h.b16 %v6615
    %v6703 = vunpack.c.l.b16 %v6616
    %v6704 = vunpack.c.h.b16 %v6616
    %v6705 = vunpack.c.l.b16 %v6617
    %v6706 = vunpack.c.h.b16 %v6617
    %v6707 = vunpack.c.l.b16 %v6618
    %v6708 = vunpack.c.h.b16 %v6618
    %v6709 = vunpack.c.l.b16 %v6619
    %v6710 = vunpack.c.h.b16 %v6619
    %v6711 = vunpack.c.l.b16 %v6620
    %v6712 = vunpack.c.h.b16 %v6620
    %v6713 = vunpack.c.l.b16 %v6621
    %v6714 = vunpack.c.h.b16 %v6621
    %v6715 = vunpack.c.l.b16 %v6622
    %v6716 = vunpack.c.h.b16 %v6622
    %v6717 = vunpack.c.l.b16 %v6623
    %v6718 = vunpack.c.h.b16 %v6623
    %v6719 = vunpack.c.l.b16 %v6624
    %v6720 = vunpack.c.h.b16 %v6624
    %v6721 = vpack.c.b16 %v6661, %v6657
    %v6722 = vpack.c.b16 %v6662, %v6658
    %v6723 = vpack.c.b16 %v6663, %v6659
    %v6724 = vpack.c.b16 %v6664, %v6660
    %v6725 = vpack.c.b16 %v6669, %v6665
    %v6726 = vpack.c.b16 %v6670, %v6666
    %v6727 = vpack.c.b16 %v6671, %v6667
    %v6728 = vpack.c.b16 %v6672, %v6668
    %v6729 = vpack.c.b16 %v6677, %v6673
    %v6730 = vpack.c.b16 %v6678, %v6674
    %v6731 = vpack.c.b16 %v6679, %v6675
    %v6732 = vpack.c.b16 %v6680, %v6676
    %v6733 = vpack.c.b16 %v6685, %v6681
    %v6734 = vpack.c.b16 %v6686, %v6682
    %v6735 = vpack.c.b16 %v6687, %v6683
    %v6736 = vpack.c.b16 %v6688, %v6684
    %v6737 = vpack.c.b16 %v6693, %v6689
    %v6738 = vpack.c.b16 %v6694, %v6690
    %v6739 = vpack.c.b16 %v6695, %v6691
    %v6740 = vpack.c.b16 %v6696, %v6692
    %v6741 = vpack.c.b16 %v6701, %v6697
    %v6742 = vpack.c.b16 %v6702, %v6698
    %v6743 = vpack.c.b16 %v6703, %v6699
    %v6744 = vpack.c.b16 %v6704, %v6700
    %v6745 = vpack.c.b16 %v6709, %v6705
    %v6746 = vpack.c.b16 %v6710, %v6706
    %v6747 = vpack.c.b16 %v6711, %v6707
    %v6748 = vpack.c.b16 %v6712, %v6708
    %v6749 = vpack.c.b16 %v6717, %v6713
    %v6750 = vpack.c.b16 %v6718, %v6714
    %v6751 = vpack.c.b16 %v6719, %v6715
    %v6752 = vpack.c.b16 %v6720, %v6716
    %6785 = vmatpush.bf16.msra.mxu0 %v6749
    %6786 = vmatpush.bf16.msra.mxu0 %v6745
    %6787 = vmatpush.bf16.msra.mxu0 %v6741
    %6788 = vmatpush.bf16.msra.mxu0 %v6737
    %6789 = vmatpush.bf16.msra.mxu0 %v6733
    %6790 = vmatpush.bf16.msra.mxu0 %v6729
    %6791 = vmatpush.bf16.msra.mxu0 %v6725
    %6792 = vmatpush.bf16.msra.mxu0 %v6721
    %6793 = vmatmul.bf16.gmra.mxu0 %v6592
    %v6794 = vpop.f32.mrf.mxu0
    %v6795 = vadd.f32 0.0, %v6794
    %v6796 = vpop.f32.mrf.mxu0
    %6797 = vdwg.mxu0
    %6798 = vmatpush.bf16.msra.mxu0 %v6750
    %6799 = vmatpush.bf16.msra.mxu0 %v6746
    %6800 = vmatpush.bf16.msra.mxu0 %v6742
    %6801 = vmatpush.bf16.msra.mxu0 %v6738
    %6802 = vmatpush.bf16.msra.mxu0 %v6734
    %6803 = vmatpush.bf16.msra.mxu0 %v6730
    %6804 = vmatpush.bf16.msra.mxu0 %v6726
    %6805 = vmatpush.bf16.msra.mxu0 %v6722
    %6806 = vmatmul.bf16.gmra.mxu0 %v6592
    %v6807 = vpop.f32.mrf.mxu0
    %v6808 = vadd.f32 0.0, %v6807
    %v6809 = vpop.f32.mrf.mxu0
    %6810 = vdwg.mxu0
    %6811 = vmatpush.bf16.msra.mxu0 %v6751
    %6812 = vmatpush.bf16.msra.mxu0 %v6747
    %6813 = vmatpush.bf16.msra.mxu0 %v6743
    %6814 = vmatpush.bf16.msra.mxu0 %v6739
    %6815 = vmatpush.bf16.msra.mxu0 %v6735
    %6816 = vmatpush.bf16.msra.mxu0 %v6731
    %6817 = vmatpush.bf16.msra.mxu0 %v6727
    %6818 = vmatpush.bf16.msra.mxu0 %v6723
    %6819 = vmatmul.bf16.gmra.mxu0 %v6592
    %v6820 = vpop.f32.mrf.mxu0
    %v6821 = vadd.f32 0.0, %v6820
    %v6822 = vpop.f32.mrf.mxu0
    %6823 = vdwg.mxu0
    %6824 = vmatpush.bf16.msra.mxu0 %v6752
    %6825 = vmatpush.bf16.msra.mxu0 %v6748
    %6826 = vmatpush.bf16.msra.mxu0 %v6744
    %6827 = vmatpush.bf16.msra.mxu0 %v6740
    %6828 = vmatpush.bf16.msra.mxu0 %v6736
    %6829 = vmatpush.bf16.msra.mxu0 %v6732
    %6830 = vmatpush.bf16.msra.mxu0 %v6728
    %6831 = vmatpush.bf16.msra.mxu0 %v6724
    %6832 = vmatmul.bf16.gmra.mxu0 %v6592
    %v6833 = vpop.f32.mrf.mxu0
    %v6834 = vadd.f32 0.0, %v6833
    %v6835 = vpop.f32.mrf.mxu0
    %6836 = vdwg.mxu0
    %v6838 = vrot.slane %v6808, 1
    %v6840 = vadd.f32 %v6795, %v6838
    %v6842 = vrot.slane %v6821, 2
    %v6844 = vadd.f32 %v6840, %v6842
    %v6846 = vrot.slane %v6834, 3
    %v6848 = vadd.f32 %v6844, %v6846
    %6849 = vst [vmem:[#allocation4 + $0xa] sm:$0x1] %v6848
    %v6850 = vld [vmem:[#allocation2 + $0x18] sm:$0xf]
    %v6851 = vpack.c.bf16 %v6850, %v6850
    %v6852 = vld [vmem:[%s3] sm:$0xff]
    %v6853 = vld [vmem:[%s3 + $0x8] sm:$0xff]
    %v6854 = vld [vmem:[%s3 + $0x10] sm:$0xff]
    %v6855 = vld [vmem:[%s3 + $0x18] sm:$0xff]
    %v6856 = vld [vmem:[%s3 + $0x20] sm:$0xff]
    %v6857 = vld [vmem:[%s3 + $0x28] sm:$0xff]
    %v6858 = vld [vmem:[%s3 + $0x30] sm:$0xff]
    %v6859 = vld [vmem:[%s3 + $0x38] sm:$0xff]
    %v6860 = vld [vmem:[%s3 + $0x40] sm:$0xff]
    %v6861 = vld [vmem:[%s3 + $0x48] sm:$0xff]
    %v6862 = vld [vmem:[%s3 + $0x50] sm:$0xff]
    %v6863 = vld [vmem:[%s3 + $0x58] sm:$0xff]
    %v6864 = vld [vmem:[%s3 + $0x60] sm:$0xff]
    %v6865 = vld [vmem:[%s3 + $0x68] sm:$0xff]
    %v6866 = vld [vmem:[%s3 + $0x70] sm:$0xff]
    %v6867 = vld [vmem:[%s3 + $0x78] sm:$0xff]
    %v6868 = vld [vmem:[%s3 + $0x80] sm:$0xff]
    %v6869 = vld [vmem:[%s3 + $0x88] sm:$0xff]
    %v6870 = vld [vmem:[%s3 + $0x90] sm:$0xff]
    %v6871 = vld [vmem:[%s3 + $0x98] sm:$0xff]
    %v6872 = vld [vmem:[%s3 + $0xa0] sm:$0xff]
    %v6873 = vld [vmem:[%s3 + $0xa8] sm:$0xff]
    %v6874 = vld [vmem:[%s3 + $0xb0] sm:$0xff]
    %v6875 = vld [vmem:[%s3 + $0xb8] sm:$0xff]
    %v6876 = vld [vmem:[%s3 + $0xc0] sm:$0xff]
    %v6877 = vld [vmem:[%s3 + $0xc8] sm:$0xff]
    %v6878 = vld [vmem:[%s3 + $0xd0] sm:$0xff]
    %v6879 = vld [vmem:[%s3 + $0xd8] sm:$0xff]
    %v6880 = vld [vmem:[%s3 + $0xe0] sm:$0xff]
    %v6881 = vld [vmem:[%s3 + $0xe8] sm:$0xff]
    %v6882 = vld [vmem:[%s3 + $0xf0] sm:$0xff]
    %v6883 = vld [vmem:[%s3 + $0xf8] sm:$0xff]
    %v6916 = vunpack.c.l.b16 %v6852
    %v6917 = vunpack.c.h.b16 %v6852
    %v6918 = vunpack.c.l.b16 %v6853
    %v6919 = vunpack.c.h.b16 %v6853
    %v6920 = vunpack.c.l.b16 %v6854
    %v6921 = vunpack.c.h.b16 %v6854
    %v6922 = vunpack.c.l.b16 %v6855
    %v6923 = vunpack.c.h.b16 %v6855
    %v6924 = vunpack.c.l.b16 %v6856
    %v6925 = vunpack.c.h.b16 %v6856
    %v6926 = vunpack.c.l.b16 %v6857
    %v6927 = vunpack.c.h.b16 %v6857
    %v6928 = vunpack.c.l.b16 %v6858
    %v6929 = vunpack.c.h.b16 %v6858
    %v6930 = vunpack.c.l.b16 %v6859
    %v6931 = vunpack.c.h.b16 %v6859
    %v6932 = vunpack.c.l.b16 %v6860
    %v6933 = vunpack.c.h.b16 %v6860
    %v6934 = vunpack.c.l.b16 %v6861
    %v6935 = vunpack.c.h.b16 %v6861
    %v6936 = vunpack.c.l.b16 %v6862
    %v6937 = vunpack.c.h.b16 %v6862
    %v6938 = vunpack.c.l.b16 %v6863
    %v6939 = vunpack.c.h.b16 %v6863
    %v6940 = vunpack.c.l.b16 %v6864
    %v6941 = vunpack.c.h.b16 %v6864
    %v6942 = vunpack.c.l.b16 %v6865
    %v6943 = vunpack.c.h.b16 %v6865
    %v6944 = vunpack.c.l.b16 %v6866
    %v6945 = vunpack.c.h.b16 %v6866
    %v6946 = vunpack.c.l.b16 %v6867
    %v6947 = vunpack.c.h.b16 %v6867
    %v6948 = vunpack.c.l.b16 %v6868
    %v6949 = vunpack.c.h.b16 %v6868
    %v6950 = vunpack.c.l.b16 %v6869
    %v6951 = vunpack.c.h.b16 %v6869
    %v6952 = vunpack.c.l.b16 %v6870
    %v6953 = vunpack.c.h.b16 %v6870
    %v6954 = vunpack.c.l.b16 %v6871
    %v6955 = vunpack.c.h.b16 %v6871
    %v6956 = vunpack.c.l.b16 %v6872
    %v6957 = vunpack.c.h.b16 %v6872
    %v6958 = vunpack.c.l.b16 %v6873
    %v6959 = vunpack.c.h.b16 %v6873
    %v6960 = vunpack.c.l.b16 %v6874
    %v6961 = vunpack.c.h.b16 %v6874
    %v6962 = vunpack.c.l.b16 %v6875
    %v6963 = vunpack.c.h.b16 %v6875
    %v6964 = vunpack.c.l.b16 %v6876
    %v6965 = vunpack.c.h.b16 %v6876
    %v6966 = vunpack.c.l.b16 %v6877
    %v6967 = vunpack.c.h.b16 %v6877
    %v6968 = vunpack.c.l.b16 %v6878
    %v6969 = vunpack.c.h.b16 %v6878
    %v6970 = vunpack.c.l.b16 %v6879
    %v6971 = vunpack.c.h.b16 %v6879
    %v6972 = vunpack.c.l.b16 %v6880
    %v6973 = vunpack.c.h.b16 %v6880
    %v6974 = vunpack.c.l.b16 %v6881
    %v6975 = vunpack.c.h.b16 %v6881
    %v6976 = vunpack.c.l.b16 %v6882
    %v6977 = vunpack.c.h.b16 %v6882
    %v6978 = vunpack.c.l.b16 %v6883
    %v6979 = vunpack.c.h.b16 %v6883
    %v6980 = vpack.c.b16 %v6920, %v6916
    %v6981 = vpack.c.b16 %v6921, %v6917
    %v6982 = vpack.c.b16 %v6922, %v6918
    %v6983 = vpack.c.b16 %v6923, %v6919
    %v6984 = vpack.c.b16 %v6928, %v6924
    %v6985 = vpack.c.b16 %v6929, %v6925
    %v6986 = vpack.c.b16 %v6930, %v6926
    %v6987 = vpack.c.b16 %v6931, %v6927
    %v6988 = vpack.c.b16 %v6936, %v6932
    %v6989 = vpack.c.b16 %v6937, %v6933
    %v6990 = vpack.c.b16 %v6938, %v6934
    %v6991 = vpack.c.b16 %v6939, %v6935
    %v6992 = vpack.c.b16 %v6944, %v6940
    %v6993 = vpack.c.b16 %v6945, %v6941
    %v6994 = vpack.c.b16 %v6946, %v6942
    %v6995 = vpack.c.b16 %v6947, %v6943
    %v6996 = vpack.c.b16 %v6952, %v6948
    %v6997 = vpack.c.b16 %v6953, %v6949
    %v6998 = vpack.c.b16 %v6954, %v6950
    %v6999 = vpack.c.b16 %v6955, %v6951
    %v7000 = vpack.c.b16 %v6960, %v6956
    %v7001 = vpack.c.b16 %v6961, %v6957
    %v7002 = vpack.c.b16 %v6962, %v6958
    %v7003 = vpack.c.b16 %v6963, %v6959
    %v7004 = vpack.c.b16 %v6968, %v6964
    %v7005 = vpack.c.b16 %v6969, %v6965
    %v7006 = vpack.c.b16 %v6970, %v6966
    %v7007 = vpack.c.b16 %v6971, %v6967
    %v7008 = vpack.c.b16 %v6976, %v6972
    %v7009 = vpack.c.b16 %v6977, %v6973
    %v7010 = vpack.c.b16 %v6978, %v6974
    %v7011 = vpack.c.b16 %v6979, %v6975
    %7044 = vmatpush.bf16.msra.mxu0 %v7008
    %7045 = vmatpush.bf16.msra.mxu0 %v7004
    %7046 = vmatpush.bf16.msra.mxu0 %v7000
    %7047 = vmatpush.bf16.msra.mxu0 %v6996
    %7048 = vmatpush.bf16.msra.mxu0 %v6992
    %7049 = vmatpush.bf16.msra.mxu0 %v6988
    %7050 = vmatpush.bf16.msra.mxu0 %v6984
    %7051 = vmatpush.bf16.msra.mxu0 %v6980
    %7052 = vmatmul.bf16.gmra.mxu0 %v6851
    %v7053 = vpop.f32.mrf.mxu0
    %v7054 = vadd.f32 0.0, %v7053
    %v7055 = vpop.f32.mrf.mxu0
    %7056 = vdwg.mxu0
    %7057 = vmatpush.bf16.msra.mxu0 %v7009
    %7058 = vmatpush.bf16.msra.mxu0 %v7005
    %7059 = vmatpush.bf16.msra.mxu0 %v7001
    %7060 = vmatpush.bf16.msra.mxu0 %v6997
    %7061 = vmatpush.bf16.msra.mxu0 %v6993
    %7062 = vmatpush.bf16.msra.mxu0 %v6989
    %7063 = vmatpush.bf16.msra.mxu0 %v6985
    %7064 = vmatpush.bf16.msra.mxu0 %v6981
    %7065 = vmatmul.bf16.gmra.mxu0 %v6851
    %v7066 = vpop.f32.mrf.mxu0
    %v7067 = vadd.f32 0.0, %v7066
    %v7068 = vpop.f32.mrf.mxu0
    %7069 = vdwg.mxu0
    %7070 = vmatpush.bf16.msra.mxu0 %v7010
    %7071 = vmatpush.bf16.msra.mxu0 %v7006
    %7072 = vmatpush.bf16.msra.mxu0 %v7002
    %7073 = vmatpush.bf16.msra.mxu0 %v6998
    %7074 = vmatpush.bf16.msra.mxu0 %v6994
    %7075 = vmatpush.bf16.msra.mxu0 %v6990
    %7076 = vmatpush.bf16.msra.mxu0 %v6986
    %7077 = vmatpush.bf16.msra.mxu0 %v6982
    %7078 = vmatmul.bf16.gmra.mxu0 %v6851
    %v7079 = vpop.f32.mrf.mxu0
    %v7080 = vadd.f32 0.0, %v7079
    %v7081 = vpop.f32.mrf.mxu0
    %7082 = vdwg.mxu0
    %7083 = vmatpush.bf16.msra.mxu0 %v7011
    %7084 = vmatpush.bf16.msra.mxu0 %v7007
    %7085 = vmatpush.bf16.msra.mxu0 %v7003
    %7086 = vmatpush.bf16.msra.mxu0 %v6999
    %7087 = vmatpush.bf16.msra.mxu0 %v6995
    %7088 = vmatpush.bf16.msra.mxu0 %v6991
    %7089 = vmatpush.bf16.msra.mxu0 %v6987
    %7090 = vmatpush.bf16.msra.mxu0 %v6983
    %7091 = vmatmul.bf16.gmra.mxu0 %v6851
    %v7092 = vpop.f32.mrf.mxu0
    %v7093 = vadd.f32 0.0, %v7092
    %v7094 = vpop.f32.mrf.mxu0
    %7095 = vdwg.mxu0
    %v7097 = vrot.slane %v7067, 1
    %v7099 = vadd.f32 %v7054, %v7097
    %v7101 = vrot.slane %v7080, 2
    %v7103 = vadd.f32 %v7099, %v7101
    %v7105 = vrot.slane %v7093, 3
    %v7107 = vadd.f32 %v7103, %v7105
    %7108 = vst [vmem:[#allocation4 + $0xb] sm:$0x1] %v7107
    %v7109 = vld [vmem:[#allocation2 + $0x1a] sm:$0xf]
    %v7110 = vpack.c.bf16 %v7109, %v7109
    %v7111 = vld [vmem:[%s3] sm:$0xff]
    %v7112 = vld [vmem:[%s3 + $0x8] sm:$0xff]
    %v7113 = vld [vmem:[%s3 + $0x10] sm:$0xff]
    %v7114 = vld [vmem:[%s3 + $0x18] sm:$0xff]
    %v7115 = vld [vmem:[%s3 + $0x20] sm:$0xff]
    %v7116 = vld [vmem:[%s3 + $0x28] sm:$0xff]
    %v7117 = vld [vmem:[%s3 + $0x30] sm:$0xff]
    %v7118 = vld [vmem:[%s3 + $0x38] sm:$0xff]
    %v7119 = vld [vmem:[%s3 + $0x40] sm:$0xff]
    %v7120 = vld [vmem:[%s3 + $0x48] sm:$0xff]
    %v7121 = vld [vmem:[%s3 + $0x50] sm:$0xff]
    %v7122 = vld [vmem:[%s3 + $0x58] sm:$0xff]
    %v7123 = vld [vmem:[%s3 + $0x60] sm:$0xff]
    %v7124 = vld [vmem:[%s3 + $0x68] sm:$0xff]
    %v7125 = vld [vmem:[%s3 + $0x70] sm:$0xff]
    %v7126 = vld [vmem:[%s3 + $0x78] sm:$0xff]
    %v7127 = vld [vmem:[%s3 + $0x80] sm:$0xff]
    %v7128 = vld [vmem:[%s3 + $0x88] sm:$0xff]
    %v7129 = vld [vmem:[%s3 + $0x90] sm:$0xff]
    %v7130 = vld [vmem:[%s3 + $0x98] sm:$0xff]
    %v7131 = vld [vmem:[%s3 + $0xa0] sm:$0xff]
    %v7132 = vld [vmem:[%s3 + $0xa8] sm:$0xff]
    %v7133 = vld [vmem:[%s3 + $0xb0] sm:$0xff]
    %v7134 = vld [vmem:[%s3 + $0xb8] sm:$0xff]
    %v7135 = vld [vmem:[%s3 + $0xc0] sm:$0xff]
    %v7136 = vld [vmem:[%s3 + $0xc8] sm:$0xff]
    %v7137 = vld [vmem:[%s3 + $0xd0] sm:$0xff]
    %v7138 = vld [vmem:[%s3 + $0xd8] sm:$0xff]
    %v7139 = vld [vmem:[%s3 + $0xe0] sm:$0xff]
    %v7140 = vld [vmem:[%s3 + $0xe8] sm:$0xff]
    %v7141 = vld [vmem:[%s3 + $0xf0] sm:$0xff]
    %v7142 = vld [vmem:[%s3 + $0xf8] sm:$0xff]
    %v7175 = vunpack.c.l.b16 %v7111
    %v7176 = vunpack.c.h.b16 %v7111
    %v7177 = vunpack.c.l.b16 %v7112
    %v7178 = vunpack.c.h.b16 %v7112
    %v7179 = vunpack.c.l.b16 %v7113
    %v7180 = vunpack.c.h.b16 %v7113
    %v7181 = vunpack.c.l.b16 %v7114
    %v7182 = vunpack.c.h.b16 %v7114
    %v7183 = vunpack.c.l.b16 %v7115
    %v7184 = vunpack.c.h.b16 %v7115
    %v7185 = vunpack.c.l.b16 %v7116
    %v7186 = vunpack.c.h.b16 %v7116
    %v7187 = vunpack.c.l.b16 %v7117
    %v7188 = vunpack.c.h.b16 %v7117
    %v7189 = vunpack.c.l.b16 %v7118
    %v7190 = vunpack.c.h.b16 %v7118
    %v7191 = vunpack.c.l.b16 %v7119
    %v7192 = vunpack.c.h.b16 %v7119
    %v7193 = vunpack.c.l.b16 %v7120
    %v7194 = vunpack.c.h.b16 %v7120
    %v7195 = vunpack.c.l.b16 %v7121
    %v7196 = vunpack.c.h.b16 %v7121
    %v7197 = vunpack.c.l.b16 %v7122
    %v7198 = vunpack.c.h.b16 %v7122
    %v7199 = vunpack.c.l.b16 %v7123
    %v7200 = vunpack.c.h.b16 %v7123
    %v7201 = vunpack.c.l.b16 %v7124
    %v7202 = vunpack.c.h.b16 %v7124
    %v7203 = vunpack.c.l.b16 %v7125
    %v7204 = vunpack.c.h.b16 %v7125
    %v7205 = vunpack.c.l.b16 %v7126
    %v7206 = vunpack.c.h.b16 %v7126
    %v7207 = vunpack.c.l.b16 %v7127
    %v7208 = vunpack.c.h.b16 %v7127
    %v7209 = vunpack.c.l.b16 %v7128
    %v7210 = vunpack.c.h.b16 %v7128
    %v7211 = vunpack.c.l.b16 %v7129
    %v7212 = vunpack.c.h.b16 %v7129
    %v7213 = vunpack.c.l.b16 %v7130
    %v7214 = vunpack.c.h.b16 %v7130
    %v7215 = vunpack.c.l.b16 %v7131
    %v7216 = vunpack.c.h.b16 %v7131
    %v7217 = vunpack.c.l.b16 %v7132
    %v7218 = vunpack.c.h.b16 %v7132
    %v7219 = vunpack.c.l.b16 %v7133
    %v7220 = vunpack.c.h.b16 %v7133
    %v7221 = vunpack.c.l.b16 %v7134
    %v7222 = vunpack.c.h.b16 %v7134
    %v7223 = vunpack.c.l.b16 %v7135
    %v7224 = vunpack.c.h.b16 %v7135
    %v7225 = vunpack.c.l.b16 %v7136
    %v7226 = vunpack.c.h.b16 %v7136
    %v7227 = vunpack.c.l.b16 %v7137
    %v7228 = vunpack.c.h.b16 %v7137
    %v7229 = vunpack.c.l.b16 %v7138
    %v7230 = vunpack.c.h.b16 %v7138
    %v7231 = vunpack.c.l.b16 %v7139
    %v7232 = vunpack.c.h.b16 %v7139
    %v7233 = vunpack.c.l.b16 %v7140
    %v7234 = vunpack.c.h.b16 %v7140
    %v7235 = vunpack.c.l.b16 %v7141
    %v7236 = vunpack.c.h.b16 %v7141
    %v7237 = vunpack.c.l.b16 %v7142
    %v7238 = vunpack.c.h.b16 %v7142
    %v7239 = vpack.c.b16 %v7179, %v7175
    %v7240 = vpack.c.b16 %v7180, %v7176
    %v7241 = vpack.c.b16 %v7181, %v7177
    %v7242 = vpack.c.b16 %v7182, %v7178
    %v7243 = vpack.c.b16 %v7187, %v7183
    %v7244 = vpack.c.b16 %v7188, %v7184
    %v7245 = vpack.c.b16 %v7189, %v7185
    %v7246 = vpack.c.b16 %v7190, %v7186
    %v7247 = vpack.c.b16 %v7195, %v7191
    %v7248 = vpack.c.b16 %v7196, %v7192
    %v7249 = vpack.c.b16 %v7197, %v7193
    %v7250 = vpack.c.b16 %v7198, %v7194
    %v7251 = vpack.c.b16 %v7203, %v7199
    %v7252 = vpack.c.b16 %v7204, %v7200
    %v7253 = vpack.c.b16 %v7205, %v7201
    %v7254 = vpack.c.b16 %v7206, %v7202
    %v7255 = vpack.c.b16 %v7211, %v7207
    %v7256 = vpack.c.b16 %v7212, %v7208
    %v7257 = vpack.c.b16 %v7213, %v7209
    %v7258 = vpack.c.b16 %v7214, %v7210
    %v7259 = vpack.c.b16 %v7219, %v7215
    %v7260 = vpack.c.b16 %v7220, %v7216
    %v7261 = vpack.c.b16 %v7221, %v7217
    %v7262 = vpack.c.b16 %v7222, %v7218
    %v7263 = vpack.c.b16 %v7227, %v7223
    %v7264 = vpack.c.b16 %v7228, %v7224
    %v7265 = vpack.c.b16 %v7229, %v7225
    %v7266 = vpack.c.b16 %v7230, %v7226
    %v7267 = vpack.c.b16 %v7235, %v7231
    %v7268 = vpack.c.b16 %v7236, %v7232
    %v7269 = vpack.c.b16 %v7237, %v7233
    %v7270 = vpack.c.b16 %v7238, %v7234
    %7303 = vmatpush.bf16.msra.mxu0 %v7267
    %7304 = vmatpush.bf16.msra.mxu0 %v7263
    %7305 = vmatpush.bf16.msra.mxu0 %v7259
    %7306 = vmatpush.bf16.msra.mxu0 %v7255
    %7307 = vmatpush.bf16.msra.mxu0 %v7251
    %7308 = vmatpush.bf16.msra.mxu0 %v7247
    %7309 = vmatpush.bf16.msra.mxu0 %v7243
    %7310 = vmatpush.bf16.msra.mxu0 %v7239
    %7311 = vmatmul.bf16.gmra.mxu0 %v7110
    %v7312 = vpop.f32.mrf.mxu0
    %v7313 = vadd.f32 0.0, %v7312
    %v7314 = vpop.f32.mrf.mxu0
    %7315 = vdwg.mxu0
    %7316 = vmatpush.bf16.msra.mxu0 %v7268
    %7317 = vmatpush.bf16.msra.mxu0 %v7264
    %7318 = vmatpush.bf16.msra.mxu0 %v7260
    %7319 = vmatpush.bf16.msra.mxu0 %v7256
    %7320 = vmatpush.bf16.msra.mxu0 %v7252
    %7321 = vmatpush.bf16.msra.mxu0 %v7248
    %7322 = vmatpush.bf16.msra.mxu0 %v7244
    %7323 = vmatpush.bf16.msra.mxu0 %v7240
    %7324 = vmatmul.bf16.gmra.mxu0 %v7110
    %v7325 = vpop.f32.mrf.mxu0
    %v7326 = vadd.f32 0.0, %v7325
    %v7327 = vpop.f32.mrf.mxu0
    %7328 = vdwg.mxu0
    %7329 = vmatpush.bf16.msra.mxu0 %v7269
    %7330 = vmatpush.bf16.msra.mxu0 %v7265
    %7331 = vmatpush.bf16.msra.mxu0 %v7261
    %7332 = vmatpush.bf16.msra.mxu0 %v7257
    %7333 = vmatpush.bf16.msra.mxu0 %v7253
    %7334 = vmatpush.bf16.msra.mxu0 %v7249
    %7335 = vmatpush.bf16.msra.mxu0 %v7245
    %7336 = vmatpush.bf16.msra.mxu0 %v7241
    %7337 = vmatmul.bf16.gmra.mxu0 %v7110
    %v7338 = vpop.f32.mrf.mxu0
    %v7339 = vadd.f32 0.0, %v7338
    %v7340 = vpop.f32.mrf.mxu0
    %7341 = vdwg.mxu0
    %7342 = vmatpush.bf16.msra.mxu0 %v7270
    %7343 = vmatpush.bf16.msra.mxu0 %v7266
    %7344 = vmatpush.bf16.msra.mxu0 %v7262
    %7345 = vmatpush.bf16.msra.mxu0 %v7258
    %7346 = vmatpush.bf16.msra.mxu0 %v7254
    %7347 = vmatpush.bf16.msra.mxu0 %v7250
    %7348 = vmatpush.bf16.msra.mxu0 %v7246
    %7349 = vmatpush.bf16.msra.mxu0 %v7242
    %7350 = vmatmul.bf16.gmra.mxu0 %v7110
    %v7351 = vpop.f32.mrf.mxu0
    %v7352 = vadd.f32 0.0, %v7351
    %v7353 = vpop.f32.mrf.mxu0
    %7354 = vdwg.mxu0
    %v7356 = vrot.slane %v7326, 1
    %v7358 = vadd.f32 %v7313, %v7356
    %v7360 = vrot.slane %v7339, 2
    %v7362 = vadd.f32 %v7358, %v7360
    %v7364 = vrot.slane %v7352, 3
    %v7366 = vadd.f32 %v7362, %v7364
    %7367 = vst [vmem:[#allocation4 + $0xc] sm:$0x1] %v7366
    %v7368 = vld [vmem:[#allocation2 + $0x1c] sm:$0xf]
    %v7369 = vpack.c.bf16 %v7368, %v7368
    %v7370 = vld [vmem:[%s3] sm:$0xff]
    %v7371 = vld [vmem:[%s3 + $0x8] sm:$0xff]
    %v7372 = vld [vmem:[%s3 + $0x10] sm:$0xff]
    %v7373 = vld [vmem:[%s3 + $0x18] sm:$0xff]
    %v7374 = vld [vmem:[%s3 + $0x20] sm:$0xff]
    %v7375 = vld [vmem:[%s3 + $0x28] sm:$0xff]
    %v7376 = vld [vmem:[%s3 + $0x30] sm:$0xff]
    %v7377 = vld [vmem:[%s3 + $0x38] sm:$0xff]
    %v7378 = vld [vmem:[%s3 + $0x40] sm:$0xff]
    %v7379 = vld [vmem:[%s3 + $0x48] sm:$0xff]
    %v7380 = vld [vmem:[%s3 + $0x50] sm:$0xff]
    %v7381 = vld [vmem:[%s3 + $0x58] sm:$0xff]
    %v7382 = vld [vmem:[%s3 + $0x60] sm:$0xff]
    %v7383 = vld [vmem:[%s3 + $0x68] sm:$0xff]
    %v7384 = vld [vmem:[%s3 + $0x70] sm:$0xff]
    %v7385 = vld [vmem:[%s3 + $0x78] sm:$0xff]
    %v7386 = vld [vmem:[%s3 + $0x80] sm:$0xff]
    %v7387 = vld [vmem:[%s3 + $0x88] sm:$0xff]
    %v7388 = vld [vmem:[%s3 + $0x90] sm:$0xff]
    %v7389 = vld [vmem:[%s3 + $0x98] sm:$0xff]
    %v7390 = vld [vmem:[%s3 + $0xa0] sm:$0xff]
    %v7391 = vld [vmem:[%s3 + $0xa8] sm:$0xff]
    %v7392 = vld [vmem:[%s3 + $0xb0] sm:$0xff]
    %v7393 = vld [vmem:[%s3 + $0xb8] sm:$0xff]
    %v7394 = vld [vmem:[%s3 + $0xc0] sm:$0xff]
    %v7395 = vld [vmem:[%s3 + $0xc8] sm:$0xff]
    %v7396 = vld [vmem:[%s3 + $0xd0] sm:$0xff]
    %v7397 = vld [vmem:[%s3 + $0xd8] sm:$0xff]
    %v7398 = vld [vmem:[%s3 + $0xe0] sm:$0xff]
    %v7399 = vld [vmem:[%s3 + $0xe8] sm:$0xff]
    %v7400 = vld [vmem:[%s3 + $0xf0] sm:$0xff]
    %v7401 = vld [vmem:[%s3 + $0xf8] sm:$0xff]
    %v7434 = vunpack.c.l.b16 %v7370
    %v7435 = vunpack.c.h.b16 %v7370
    %v7436 = vunpack.c.l.b16 %v7371
    %v7437 = vunpack.c.h.b16 %v7371
    %v7438 = vunpack.c.l.b16 %v7372
    %v7439 = vunpack.c.h.b16 %v7372
    %v7440 = vunpack.c.l.b16 %v7373
    %v7441 = vunpack.c.h.b16 %v7373
    %v7442 = vunpack.c.l.b16 %v7374
    %v7443 = vunpack.c.h.b16 %v7374
    %v7444 = vunpack.c.l.b16 %v7375
    %v7445 = vunpack.c.h.b16 %v7375
    %v7446 = vunpack.c.l.b16 %v7376
    %v7447 = vunpack.c.h.b16 %v7376
    %v7448 = vunpack.c.l.b16 %v7377
    %v7449 = vunpack.c.h.b16 %v7377
    %v7450 = vunpack.c.l.b16 %v7378
    %v7451 = vunpack.c.h.b16 %v7378
    %v7452 = vunpack.c.l.b16 %v7379
    %v7453 = vunpack.c.h.b16 %v7379
    %v7454 = vunpack.c.l.b16 %v7380
    %v7455 = vunpack.c.h.b16 %v7380
    %v7456 = vunpack.c.l.b16 %v7381
    %v7457 = vunpack.c.h.b16 %v7381
    %v7458 = vunpack.c.l.b16 %v7382
    %v7459 = vunpack.c.h.b16 %v7382
    %v7460 = vunpack.c.l.b16 %v7383
    %v7461 = vunpack.c.h.b16 %v7383
    %v7462 = vunpack.c.l.b16 %v7384
    %v7463 = vunpack.c.h.b16 %v7384
    %v7464 = vunpack.c.l.b16 %v7385
    %v7465 = vunpack.c.h.b16 %v7385
    %v7466 = vunpack.c.l.b16 %v7386
    %v7467 = vunpack.c.h.b16 %v7386
    %v7468 = vunpack.c.l.b16 %v7387
    %v7469 = vunpack.c.h.b16 %v7387
    %v7470 = vunpack.c.l.b16 %v7388
    %v7471 = vunpack.c.h.b16 %v7388
    %v7472 = vunpack.c.l.b16 %v7389
    %v7473 = vunpack.c.h.b16 %v7389
    %v7474 = vunpack.c.l.b16 %v7390
    %v7475 = vunpack.c.h.b16 %v7390
    %v7476 = vunpack.c.l.b16 %v7391
    %v7477 = vunpack.c.h.b16 %v7391
    %v7478 = vunpack.c.l.b16 %v7392
    %v7479 = vunpack.c.h.b16 %v7392
    %v7480 = vunpack.c.l.b16 %v7393
    %v7481 = vunpack.c.h.b16 %v7393
    %v7482 = vunpack.c.l.b16 %v7394
    %v7483 = vunpack.c.h.b16 %v7394
    %v7484 = vunpack.c.l.b16 %v7395
    %v7485 = vunpack.c.h.b16 %v7395
    %v7486 = vunpack.c.l.b16 %v7396
    %v7487 = vunpack.c.h.b16 %v7396
    %v7488 = vunpack.c.l.b16 %v7397
    %v7489 = vunpack.c.h.b16 %v7397
    %v7490 = vunpack.c.l.b16 %v7398
    %v7491 = vunpack.c.h.b16 %v7398
    %v7492 = vunpack.c.l.b16 %v7399
    %v7493 = vunpack.c.h.b16 %v7399
    %v7494 = vunpack.c.l.b16 %v7400
    %v7495 = vunpack.c.h.b16 %v7400
    %v7496 = vunpack.c.l.b16 %v7401
    %v7497 = vunpack.c.h.b16 %v7401
    %v7498 = vpack.c.b16 %v7438, %v7434
    %v7499 = vpack.c.b16 %v7439, %v7435
    %v7500 = vpack.c.b16 %v7440, %v7436
    %v7501 = vpack.c.b16 %v7441, %v7437
    %v7502 = vpack.c.b16 %v7446, %v7442
    %v7503 = vpack.c.b16 %v7447, %v7443
    %v7504 = vpack.c.b16 %v7448, %v7444
    %v7505 = vpack.c.b16 %v7449, %v7445
    %v7506 = vpack.c.b16 %v7454, %v7450
    %v7507 = vpack.c.b16 %v7455, %v7451
    %v7508 = vpack.c.b16 %v7456, %v7452
    %v7509 = vpack.c.b16 %v7457, %v7453
    %v7510 = vpack.c.b16 %v7462, %v7458
    %v7511 = vpack.c.b16 %v7463, %v7459
    %v7512 = vpack.c.b16 %v7464, %v7460
    %v7513 = vpack.c.b16 %v7465, %v7461
    %v7514 = vpack.c.b16 %v7470, %v7466
    %v7515 = vpack.c.b16 %v7471, %v7467
    %v7516 = vpack.c.b16 %v7472, %v7468
    %v7517 = vpack.c.b16 %v7473, %v7469
    %v7518 = vpack.c.b16 %v7478, %v7474
    %v7519 = vpack.c.b16 %v7479, %v7475
    %v7520 = vpack.c.b16 %v7480, %v7476
    %v7521 = vpack.c.b16 %v7481, %v7477
    %v7522 = vpack.c.b16 %v7486, %v7482
    %v7523 = vpack.c.b16 %v7487, %v7483
    %v7524 = vpack.c.b16 %v7488, %v7484
    %v7525 = vpack.c.b16 %v7489, %v7485
    %v7526 = vpack.c.b16 %v7494, %v7490
    %v7527 = vpack.c.b16 %v7495, %v7491
    %v7528 = vpack.c.b16 %v7496, %v7492
    %v7529 = vpack.c.b16 %v7497, %v7493
    %7562 = vmatpush.bf16.msra.mxu0 %v7526
    %7563 = vmatpush.bf16.msra.mxu0 %v7522
    %7564 = vmatpush.bf16.msra.mxu0 %v7518
    %7565 = vmatpush.bf16.msra.mxu0 %v7514
    %7566 = vmatpush.bf16.msra.mxu0 %v7510
    %7567 = vmatpush.bf16.msra.mxu0 %v7506
    %7568 = vmatpush.bf16.msra.mxu0 %v7502
    %7569 = vmatpush.bf16.msra.mxu0 %v7498
    %7570 = vmatmul.bf16.gmra.mxu0 %v7369
    %v7571 = vpop.f32.mrf.mxu0
    %v7572 = vadd.f32 0.0, %v7571
    %v7573 = vpop.f32.mrf.mxu0
    %7574 = vdwg.mxu0
    %7575 = vmatpush.bf16.msra.mxu0 %v7527
    %7576 = vmatpush.bf16.msra.mxu0 %v7523
    %7577 = vmatpush.bf16.msra.mxu0 %v7519
    %7578 = vmatpush.bf16.msra.mxu0 %v7515
    %7579 = vmatpush.bf16.msra.mxu0 %v7511
    %7580 = vmatpush.bf16.msra.mxu0 %v7507
    %7581 = vmatpush.bf16.msra.mxu0 %v7503
    %7582 = vmatpush.bf16.msra.mxu0 %v7499
    %7583 = vmatmul.bf16.gmra.mxu0 %v7369
    %v7584 = vpop.f32.mrf.mxu0
    %v7585 = vadd.f32 0.0, %v7584
    %v7586 = vpop.f32.mrf.mxu0
    %7587 = vdwg.mxu0
    %7588 = vmatpush.bf16.msra.mxu0 %v7528
    %7589 = vmatpush.bf16.msra.mxu0 %v7524
    %7590 = vmatpush.bf16.msra.mxu0 %v7520
    %7591 = vmatpush.bf16.msra.mxu0 %v7516
    %7592 = vmatpush.bf16.msra.mxu0 %v7512
    %7593 = vmatpush.bf16.msra.mxu0 %v7508
    %7594 = vmatpush.bf16.msra.mxu0 %v7504
    %7595 = vmatpush.bf16.msra.mxu0 %v7500
    %7596 = vmatmul.bf16.gmra.mxu0 %v7369
    %v7597 = vpop.f32.mrf.mxu0
    %v7598 = vadd.f32 0.0, %v7597
    %v7599 = vpop.f32.mrf.mxu0
    %7600 = vdwg.mxu0
    %7601 = vmatpush.bf16.msra.mxu0 %v7529
    %7602 = vmatpush.bf16.msra.mxu0 %v7525
    %7603 = vmatpush.bf16.msra.mxu0 %v7521
    %7604 = vmatpush.bf16.msra.mxu0 %v7517
    %7605 = vmatpush.bf16.msra.mxu0 %v7513
    %7606 = vmatpush.bf16.msra.mxu0 %v7509
    %7607 = vmatpush.bf16.msra.mxu0 %v7505
    %7608 = vmatpush.bf16.msra.mxu0 %v7501
    %7609 = vmatmul.bf16.gmra.mxu0 %v7369
    %v7610 = vpop.f32.mrf.mxu0
    %v7611 = vadd.f32 0.0, %v7610
    %v7612 = vpop.f32.mrf.mxu0
    %7613 = vdwg.mxu0
    %v7615 = vrot.slane %v7585, 1
    %v7617 = vadd.f32 %v7572, %v7615
    %v7619 = vrot.slane %v7598, 2
    %v7621 = vadd.f32 %v7617, %v7619
    %v7623 = vrot.slane %v7611, 3
    %v7625 = vadd.f32 %v7621, %v7623
    %7626 = vst [vmem:[#allocation4 + $0xd] sm:$0x1] %v7625
    %v7627 = vld [vmem:[#allocation2 + $0x1e] sm:$0xf]
    %v7628 = vpack.c.bf16 %v7627, %v7627
    %v7629 = vld [vmem:[%s3] sm:$0xff]
    %v7630 = vld [vmem:[%s3 + $0x8] sm:$0xff]
    %v7631 = vld [vmem:[%s3 + $0x10] sm:$0xff]
    %v7632 = vld [vmem:[%s3 + $0x18] sm:$0xff]
    %v7633 = vld [vmem:[%s3 + $0x20] sm:$0xff]
    %v7634 = vld [vmem:[%s3 + $0x28] sm:$0xff]
    %v7635 = vld [vmem:[%s3 + $0x30] sm:$0xff]
    %v7636 = vld [vmem:[%s3 + $0x38] sm:$0xff]
    %v7637 = vld [vmem:[%s3 + $0x40] sm:$0xff]
    %v7638 = vld [vmem:[%s3 + $0x48] sm:$0xff]
    %v7639 = vld [vmem:[%s3 + $0x50] sm:$0xff]
    %v7640 = vld [vmem:[%s3 + $0x58] sm:$0xff]
    %v7641 = vld [vmem:[%s3 + $0x60] sm:$0xff]
    %v7642 = vld [vmem:[%s3 + $0x68] sm:$0xff]
    %v7643 = vld [vmem:[%s3 + $0x70] sm:$0xff]
    %v7644 = vld [vmem:[%s3 + $0x78] sm:$0xff]
    %v7645 = vld [vmem:[%s3 + $0x80] sm:$0xff]
    %v7646 = vld [vmem:[%s3 + $0x88] sm:$0xff]
    %v7647 = vld [vmem:[%s3 + $0x90] sm:$0xff]
    %v7648 = vld [vmem:[%s3 + $0x98] sm:$0xff]
    %v7649 = vld [vmem:[%s3 + $0xa0] sm:$0xff]
    %v7650 = vld [vmem:[%s3 + $0xa8] sm:$0xff]
    %v7651 = vld [vmem:[%s3 + $0xb0] sm:$0xff]
    %v7652 = vld [vmem:[%s3 + $0xb8] sm:$0xff]
    %v7653 = vld [vmem:[%s3 + $0xc0] sm:$0xff]
    %v7654 = vld [vmem:[%s3 + $0xc8] sm:$0xff]
    %v7655 = vld [vmem:[%s3 + $0xd0] sm:$0xff]
    %v7656 = vld [vmem:[%s3 + $0xd8] sm:$0xff]
    %v7657 = vld [vmem:[%s3 + $0xe0] sm:$0xff]
    %v7658 = vld [vmem:[%s3 + $0xe8] sm:$0xff]
    %v7659 = vld [vmem:[%s3 + $0xf0] sm:$0xff]
    %v7660 = vld [vmem:[%s3 + $0xf8] sm:$0xff]
    %v7693 = vunpack.c.l.b16 %v7629
    %v7694 = vunpack.c.h.b16 %v7629
    %v7695 = vunpack.c.l.b16 %v7630
    %v7696 = vunpack.c.h.b16 %v7630
    %v7697 = vunpack.c.l.b16 %v7631
    %v7698 = vunpack.c.h.b16 %v7631
    %v7699 = vunpack.c.l.b16 %v7632
    %v7700 = vunpack.c.h.b16 %v7632
    %v7701 = vunpack.c.l.b16 %v7633
    %v7702 = vunpack.c.h.b16 %v7633
    %v7703 = vunpack.c.l.b16 %v7634
    %v7704 = vunpack.c.h.b16 %v7634
    %v7705 = vunpack.c.l.b16 %v7635
    %v7706 = vunpack.c.h.b16 %v7635
    %v7707 = vunpack.c.l.b16 %v7636
    %v7708 = vunpack.c.h.b16 %v7636
    %v7709 = vunpack.c.l.b16 %v7637
    %v7710 = vunpack.c.h.b16 %v7637
    %v7711 = vunpack.c.l.b16 %v7638
    %v7712 = vunpack.c.h.b16 %v7638
    %v7713 = vunpack.c.l.b16 %v7639
    %v7714 = vunpack.c.h.b16 %v7639
    %v7715 = vunpack.c.l.b16 %v7640
    %v7716 = vunpack.c.h.b16 %v7640
    %v7717 = vunpack.c.l.b16 %v7641
    %v7718 = vunpack.c.h.b16 %v7641
    %v7719 = vunpack.c.l.b16 %v7642
    %v7720 = vunpack.c.h.b16 %v7642
    %v7721 = vunpack.c.l.b16 %v7643
    %v7722 = vunpack.c.h.b16 %v7643
    %v7723 = vunpack.c.l.b16 %v7644
    %v7724 = vunpack.c.h.b16 %v7644
    %v7725 = vunpack.c.l.b16 %v7645
    %v7726 = vunpack.c.h.b16 %v7645
    %v7727 = vunpack.c.l.b16 %v7646
    %v7728 = vunpack.c.h.b16 %v7646
    %v7729 = vunpack.c.l.b16 %v7647
    %v7730 = vunpack.c.h.b16 %v7647
    %v7731 = vunpack.c.l.b16 %v7648
    %v7732 = vunpack.c.h.b16 %v7648
    %v7733 = vunpack.c.l.b16 %v7649
    %v7734 = vunpack.c.h.b16 %v7649
    %v7735 = vunpack.c.l.b16 %v7650
    %v7736 = vunpack.c.h.b16 %v7650
    %v7737 = vunpack.c.l.b16 %v7651
    %v7738 = vunpack.c.h.b16 %v7651
    %v7739 = vunpack.c.l.b16 %v7652
    %v7740 = vunpack.c.h.b16 %v7652
    %v7741 = vunpack.c.l.b16 %v7653
    %v7742 = vunpack.c.h.b16 %v7653
    %v7743 = vunpack.c.l.b16 %v7654
    %v7744 = vunpack.c.h.b16 %v7654
    %v7745 = vunpack.c.l.b16 %v7655
    %v7746 = vunpack.c.h.b16 %v7655
    %v7747 = vunpack.c.l.b16 %v7656
    %v7748 = vunpack.c.h.b16 %v7656
    %v7749 = vunpack.c.l.b16 %v7657
    %v7750 = vunpack.c.h.b16 %v7657
    %v7751 = vunpack.c.l.b16 %v7658
    %v7752 = vunpack.c.h.b16 %v7658
    %v7753 = vunpack.c.l.b16 %v7659
    %v7754 = vunpack.c.h.b16 %v7659
    %v7755 = vunpack.c.l.b16 %v7660
    %v7756 = vunpack.c.h.b16 %v7660
    %v7757 = vpack.c.b16 %v7697, %v7693
    %v7758 = vpack.c.b16 %v7698, %v7694
    %v7759 = vpack.c.b16 %v7699, %v7695
    %v7760 = vpack.c.b16 %v7700, %v7696
    %v7761 = vpack.c.b16 %v7705, %v7701
    %v7762 = vpack.c.b16 %v7706, %v7702
    %v7763 = vpack.c.b16 %v7707, %v7703
    %v7764 = vpack.c.b16 %v7708, %v7704
    %v7765 = vpack.c.b16 %v7713, %v7709
    %v7766 = vpack.c.b16 %v7714, %v7710
    %v7767 = vpack.c.b16 %v7715, %v7711
    %v7768 = vpack.c.b16 %v7716, %v7712
    %v7769 = vpack.c.b16 %v7721, %v7717
    %v7770 = vpack.c.b16 %v7722, %v7718
    %v7771 = vpack.c.b16 %v7723, %v7719
    %v7772 = vpack.c.b16 %v7724, %v7720
    %v7773 = vpack.c.b16 %v7729, %v7725
    %v7774 = vpack.c.b16 %v7730, %v7726
    %v7775 = vpack.c.b16 %v7731, %v7727
    %v7776 = vpack.c.b16 %v7732, %v7728
    %v7777 = vpack.c.b16 %v7737, %v7733
    %v7778 = vpack.c.b16 %v7738, %v7734
    %v7779 = vpack.c.b16 %v7739, %v7735
    %v7780 = vpack.c.b16 %v7740, %v7736
    %v7781 = vpack.c.b16 %v7745, %v7741
    %v7782 = vpack.c.b16 %v7746, %v7742
    %v7783 = vpack.c.b16 %v7747, %v7743
    %v7784 = vpack.c.b16 %v7748, %v7744
    %v7785 = vpack.c.b16 %v7753, %v7749
    %v7786 = vpack.c.b16 %v7754, %v7750
    %v7787 = vpack.c.b16 %v7755, %v7751
    %v7788 = vpack.c.b16 %v7756, %v7752
    %7821 = vmatpush.bf16.msra.mxu0 %v7785
    %7822 = vmatpush.bf16.msra.mxu0 %v7781
    %7823 = vmatpush.bf16.msra.mxu0 %v7777
    %7824 = vmatpush.bf16.msra.mxu0 %v7773
    %7825 = vmatpush.bf16.msra.mxu0 %v7769
    %7826 = vmatpush.bf16.msra.mxu0 %v7765
    %7827 = vmatpush.bf16.msra.mxu0 %v7761
    %7828 = vmatpush.bf16.msra.mxu0 %v7757
    %7829 = vmatmul.bf16.gmra.mxu0 %v7628
    %v7830 = vpop.f32.mrf.mxu0
    %v7831 = vadd.f32 0.0, %v7830
    %v7832 = vpop.f32.mrf.mxu0
    %7833 = vdwg.mxu0
    %7834 = vmatpush.bf16.msra.mxu0 %v7786
    %7835 = vmatpush.bf16.msra.mxu0 %v7782
    %7836 = vmatpush.bf16.msra.mxu0 %v7778
    %7837 = vmatpush.bf16.msra.mxu0 %v7774
    %7838 = vmatpush.bf16.msra.mxu0 %v7770
    %7839 = vmatpush.bf16.msra.mxu0 %v7766
    %7840 = vmatpush.bf16.msra.mxu0 %v7762
    %7841 = vmatpush.bf16.msra.mxu0 %v7758
    %7842 = vmatmul.bf16.gmra.mxu0 %v7628
    %v7843 = vpop.f32.mrf.mxu0
    %v7844 = vadd.f32 0.0, %v7843
    %v7845 = vpop.f32.mrf.mxu0
    %7846 = vdwg.mxu0
    %7847 = vmatpush.bf16.msra.mxu0 %v7787
    %7848 = vmatpush.bf16.msra.mxu0 %v7783
    %7849 = vmatpush.bf16.msra.mxu0 %v7779
    %7850 = vmatpush.bf16.msra.mxu0 %v7775
    %7851 = vmatpush.bf16.msra.mxu0 %v7771
    %7852 = vmatpush.bf16.msra.mxu0 %v7767
    %7853 = vmatpush.bf16.msra.mxu0 %v7763
    %7854 = vmatpush.bf16.msra.mxu0 %v7759
    %7855 = vmatmul.bf16.gmra.mxu0 %v7628
    %v7856 = vpop.f32.mrf.mxu0
    %v7857 = vadd.f32 0.0, %v7856
    %v7858 = vpop.f32.mrf.mxu0
    %7859 = vdwg.mxu0
    %7860 = vmatpush.bf16.msra.mxu0 %v7788
    %7861 = vmatpush.bf16.msra.mxu0 %v7784
    %7862 = vmatpush.bf16.msra.mxu0 %v7780
    %7863 = vmatpush.bf16.msra.mxu0 %v7776
    %7864 = vmatpush.bf16.msra.mxu0 %v7772
    %7865 = vmatpush.bf16.msra.mxu0 %v7768
    %7866 = vmatpush.bf16.msra.mxu0 %v7764
    %7867 = vmatpush.bf16.msra.mxu0 %v7760
    %7868 = vmatmul.bf16.gmra.mxu0 %v7628
    %v7869 = vpop.f32.mrf.mxu0
    %v7870 = vadd.f32 0.0, %v7869
    %v7871 = vpop.f32.mrf.mxu0
    %7872 = vdwg.mxu0
    %v7874 = vrot.slane %v7844, 1
    %v7876 = vadd.f32 %v7831, %v7874
    %v7878 = vrot.slane %v7857, 2
    %v7880 = vadd.f32 %v7876, %v7878
    %v7882 = vrot.slane %v7870, 3
    %v7884 = vadd.f32 %v7880, %v7882
    %7885 = vst [vmem:[#allocation4 + $0xe] sm:$0x1] %v7884
    %v7886 = vld [vmem:[#allocation2 + $0x20] sm:$0xf]
    %v7887 = vpack.c.bf16 %v7886, %v7886
    %v7888 = vld [vmem:[%s3] sm:$0xff]
    %v7889 = vld [vmem:[%s3 + $0x8] sm:$0xff]
    %v7890 = vld [vmem:[%s3 + $0x10] sm:$0xff]
    %v7891 = vld [vmem:[%s3 + $0x18] sm:$0xff]
    %v7892 = vld [vmem:[%s3 + $0x20] sm:$0xff]
    %v7893 = vld [vmem:[%s3 + $0x28] sm:$0xff]
    %v7894 = vld [vmem:[%s3 + $0x30] sm:$0xff]
    %v7895 = vld [vmem:[%s3 + $0x38] sm:$0xff]
    %v7896 = vld [vmem:[%s3 + $0x40] sm:$0xff]
    %v7897 = vld [vmem:[%s3 + $0x48] sm:$0xff]
    %v7898 = vld [vmem:[%s3 + $0x50] sm:$0xff]
    %v7899 = vld [vmem:[%s3 + $0x58] sm:$0xff]
    %v7900 = vld [vmem:[%s3 + $0x60] sm:$0xff]
    %v7901 = vld [vmem:[%s3 + $0x68] sm:$0xff]
    %v7902 = vld [vmem:[%s3 + $0x70] sm:$0xff]
    %v7903 = vld [vmem:[%s3 + $0x78] sm:$0xff]
    %v7904 = vld [vmem:[%s3 + $0x80] sm:$0xff]
    %v7905 = vld [vmem:[%s3 + $0x88] sm:$0xff]
    %v7906 = vld [vmem:[%s3 + $0x90] sm:$0xff]
    %v7907 = vld [vmem:[%s3 + $0x98] sm:$0xff]
    %v7908 = vld [vmem:[%s3 + $0xa0] sm:$0xff]
    %v7909 = vld [vmem:[%s3 + $0xa8] sm:$0xff]
    %v7910 = vld [vmem:[%s3 + $0xb0] sm:$0xff]
    %v7911 = vld [vmem:[%s3 + $0xb8] sm:$0xff]
    %v7912 = vld [vmem:[%s3 + $0xc0] sm:$0xff]
    %v7913 = vld [vmem:[%s3 + $0xc8] sm:$0xff]
    %v7914 = vld [vmem:[%s3 + $0xd0] sm:$0xff]
    %v7915 = vld [vmem:[%s3 + $0xd8] sm:$0xff]
    %v7916 = vld [vmem:[%s3 + $0xe0] sm:$0xff]
    %v7917 = vld [vmem:[%s3 + $0xe8] sm:$0xff]
    %v7918 = vld [vmem:[%s3 + $0xf0] sm:$0xff]
    %v7919 = vld [vmem:[%s3 + $0xf8] sm:$0xff]
    %v7952 = vunpack.c.l.b16 %v7888
    %v7953 = vunpack.c.h.b16 %v7888
    %v7954 = vunpack.c.l.b16 %v7889
    %v7955 = vunpack.c.h.b16 %v7889
    %v7956 = vunpack.c.l.b16 %v7890
    %v7957 = vunpack.c.h.b16 %v7890
    %v7958 = vunpack.c.l.b16 %v7891
    %v7959 = vunpack.c.h.b16 %v7891
    %v7960 = vunpack.c.l.b16 %v7892
    %v7961 = vunpack.c.h.b16 %v7892
    %v7962 = vunpack.c.l.b16 %v7893
    %v7963 = vunpack.c.h.b16 %v7893
    %v7964 = vunpack.c.l.b16 %v7894
    %v7965 = vunpack.c.h.b16 %v7894
    %v7966 = vunpack.c.l.b16 %v7895
    %v7967 = vunpack.c.h.b16 %v7895
    %v7968 = vunpack.c.l.b16 %v7896
    %v7969 = vunpack.c.h.b16 %v7896
    %v7970 = vunpack.c.l.b16 %v7897
    %v7971 = vunpack.c.h.b16 %v7897
    %v7972 = vunpack.c.l.b16 %v7898
    %v7973 = vunpack.c.h.b16 %v7898
    %v7974 = vunpack.c.l.b16 %v7899
    %v7975 = vunpack.c.h.b16 %v7899
    %v7976 = vunpack.c.l.b16 %v7900
    %v7977 = vunpack.c.h.b16 %v7900
    %v7978 = vunpack.c.l.b16 %v7901
    %v7979 = vunpack.c.h.b16 %v7901
    %v7980 = vunpack.c.l.b16 %v7902
    %v7981 = vunpack.c.h.b16 %v7902
    %v7982 = vunpack.c.l.b16 %v7903
    %v7983 = vunpack.c.h.b16 %v7903
    %v7984 = vunpack.c.l.b16 %v7904
    %v7985 = vunpack.c.h.b16 %v7904
    %v7986 = vunpack.c.l.b16 %v7905
    %v7987 = vunpack.c.h.b16 %v7905
    %v7988 = vunpack.c.l.b16 %v7906
    %v7989 = vunpack.c.h.b16 %v7906
    %v7990 = vunpack.c.l.b16 %v7907
    %v7991 = vunpack.c.h.b16 %v7907
    %v7992 = vunpack.c.l.b16 %v7908
    %v7993 = vunpack.c.h.b16 %v7908
    %v7994 = vunpack.c.l.b16 %v7909
    %v7995 = vunpack.c.h.b16 %v7909
    %v7996 = vunpack.c.l.b16 %v7910
    %v7997 = vunpack.c.h.b16 %v7910
    %v7998 = vunpack.c.l.b16 %v7911
    %v7999 = vunpack.c.h.b16 %v7911
    %v8000 = vunpack.c.l.b16 %v7912
    %v8001 = vunpack.c.h.b16 %v7912
    %v8002 = vunpack.c.l.b16 %v7913
    %v8003 = vunpack.c.h.b16 %v7913
    %v8004 = vunpack.c.l.b16 %v7914
    %v8005 = vunpack.c.h.b16 %v7914
    %v8006 = vunpack.c.l.b16 %v7915
    %v8007 = vunpack.c.h.b16 %v7915
    %v8008 = vunpack.c.l.b16 %v7916
    %v8009 = vunpack.c.h.b16 %v7916
    %v8010 = vunpack.c.l.b16 %v7917
    %v8011 = vunpack.c.h.b16 %v7917
    %v8012 = vunpack.c.l.b16 %v7918
    %v8013 = vunpack.c.h.b16 %v7918
    %v8014 = vunpack.c.l.b16 %v7919
    %v8015 = vunpack.c.h.b16 %v7919
    %v8016 = vpack.c.b16 %v7956, %v7952
    %v8017 = vpack.c.b16 %v7957, %v7953
    %v8018 = vpack.c.b16 %v7958, %v7954
    %v8019 = vpack.c.b16 %v7959, %v7955
    %v8020 = vpack.c.b16 %v7964, %v7960
    %v8021 = vpack.c.b16 %v7965, %v7961
    %v8022 = vpack.c.b16 %v7966, %v7962
    %v8023 = vpack.c.b16 %v7967, %v7963
    %v8024 = vpack.c.b16 %v7972, %v7968
    %v8025 = vpack.c.b16 %v7973, %v7969
    %v8026 = vpack.c.b16 %v7974, %v7970
    %v8027 = vpack.c.b16 %v7975, %v7971
    %v8028 = vpack.c.b16 %v7980, %v7976
    %v8029 = vpack.c.b16 %v7981, %v7977
    %v8030 = vpack.c.b16 %v7982, %v7978
    %v8031 = vpack.c.b16 %v7983, %v7979
    %v8032 = vpack.c.b16 %v7988, %v7984
    %v8033 = vpack.c.b16 %v7989, %v7985
    %v8034 = vpack.c.b16 %v7990, %v7986
    %v8035 = vpack.c.b16 %v7991, %v7987
    %v8036 = vpack.c.b16 %v7996, %v7992
    %v8037 = vpack.c.b16 %v7997, %v7993
    %v8038 = vpack.c.b16 %v7998, %v7994
    %v8039 = vpack.c.b16 %v7999, %v7995
    %v8040 = vpack.c.b16 %v8004, %v8000
    %v8041 = vpack.c.b16 %v8005, %v8001
    %v8042 = vpack.c.b16 %v8006, %v8002
    %v8043 = vpack.c.b16 %v8007, %v8003
    %v8044 = vpack.c.b16 %v8012, %v8008
    %v8045 = vpack.c.b16 %v8013, %v8009
    %v8046 = vpack.c.b16 %v8014, %v8010
    %v8047 = vpack.c.b16 %v8015, %v8011
    %8080 = vmatpush.bf16.msra.mxu0 %v8044
    %8081 = vmatpush.bf16.msra.mxu0 %v8040
    %8082 = vmatpush.bf16.msra.mxu0 %v8036
    %8083 = vmatpush.bf16.msra.mxu0 %v8032
    %8084 = vmatpush.bf16.msra.mxu0 %v8028
    %8085 = vmatpush.bf16.msra.mxu0 %v8024
    %8086 = vmatpush.bf16.msra.mxu0 %v8020
    %8087 = vmatpush.bf16.msra.mxu0 %v8016
    %8088 = vmatmul.bf16.gmra.mxu0 %v7887
    %v8089 = vpop.f32.mrf.mxu0
    %v8090 = vadd.f32 0.0, %v8089
    %v8091 = vpop.f32.mrf.mxu0
    %8092 = vdwg.mxu0
    %8093 = vmatpush.bf16.msra.mxu0 %v8045
    %8094 = vmatpush.bf16.msra.mxu0 %v8041
    %8095 = vmatpush.bf16.msra.mxu0 %v8037
    %8096 = vmatpush.bf16.msra.mxu0 %v8033
    %8097 = vmatpush.bf16.msra.mxu0 %v8029
    %8098 = vmatpush.bf16.msra.mxu0 %v8025
    %8099 = vmatpush.bf16.msra.mxu0 %v8021
    %8100 = vmatpush.bf16.msra.mxu0 %v8017
    %8101 = vmatmul.bf16.gmra.mxu0 %v7887
    %v8102 = vpop.f32.mrf.mxu0
    %v8103 = vadd.f32 0.0, %v8102
    %v8104 = vpop.f32.mrf.mxu0
    %8105 = vdwg.mxu0
    %8106 = vmatpush.bf16.msra.mxu0 %v8046
    %8107 = vmatpush.bf16.msra.mxu0 %v8042
    %8108 = vmatpush.bf16.msra.mxu0 %v8038
    %8109 = vmatpush.bf16.msra.mxu0 %v8034
    %8110 = vmatpush.bf16.msra.mxu0 %v8030
    %8111 = vmatpush.bf16.msra.mxu0 %v8026
    %8112 = vmatpush.bf16.msra.mxu0 %v8022
    %8113 = vmatpush.bf16.msra.mxu0 %v8018
    %8114 = vmatmul.bf16.gmra.mxu0 %v7887
    %v8115 = vpop.f32.mrf.mxu0
    %v8116 = vadd.f32 0.0, %v8115
    %v8117 = vpop.f32.mrf.mxu0
    %8118 = vdwg.mxu0
    %8119 = vmatpush.bf16.msra.mxu0 %v8047
    %8120 = vmatpush.bf16.msra.mxu0 %v8043
    %8121 = vmatpush.bf16.msra.mxu0 %v8039
    %8122 = vmatpush.bf16.msra.mxu0 %v8035
    %8123 = vmatpush.bf16.msra.mxu0 %v8031
    %8124 = vmatpush.bf16.msra.mxu0 %v8027
    %8125 = vmatpush.bf16.msra.mxu0 %v8023
    %8126 = vmatpush.bf16.msra.mxu0 %v8019
    %8127 = vmatmul.bf16.gmra.mxu0 %v7887
    %v8128 = vpop.f32.mrf.mxu0
    %v8129 = vadd.f32 0.0, %v8128
    %v8130 = vpop.f32.mrf.mxu0
    %8131 = vdwg.mxu0
    %v8133 = vrot.slane %v8103, 1
    %v8135 = vadd.f32 %v8090, %v8133
    %v8137 = vrot.slane %v8116, 2
    %v8139 = vadd.f32 %v8135, %v8137
    %v8141 = vrot.slane %v8129, 3
    %v8143 = vadd.f32 %v8139, %v8141
    %8144 = vst [vmem:[#allocation4 + $0xf] sm:$0x1] %v8143
    %v8145 = vld [vmem:[#allocation4] sm:$0xff]
    %v8146 = vld [vmem:[#allocation4 + $0x8] sm:$0xff]
    %v8147 = vld [vmem:[%s4] sm:$0x1]
    %v8148 = vld [vmem:[%s5] sm:$0x1]
    %v8149 = vadd.f32 %v8145, %v8146
    %v8150 = vrot.slane %v8149, 4
    %v8151 = vadd.f32 %v8149, %v8150
    %v8152 = vrot.slane %v8151, 2
    %v8153 = vadd.f32 %v8151, %v8152
    %v8154 = vrot.slane %v8153, 1
    %v8155 = vadd.f32 %v8153, %v8154
    %8157 = vrot.lane.b32.xlu0 %v8155, 112
    %v8158 = vpop.permute.xlu0 %8157
    %v8160 = vadd.f32 %v8155, %v8158
    %8161 = vrot.lane.b32.xlu0 %v8155, 96
    %v8162 = vpop.permute.xlu0 %8161
    %v8164 = vadd.f32 %v8160, %v8162
    %8165 = vrot.lane.b32.xlu0 %v8155, 80
    %v8166 = vpop.permute.xlu0 %8165
    %v8168 = vadd.f32 %v8164, %v8166
    %8169 = vrot.lane.b32.xlu0 %v8155, 64
    %v8170 = vpop.permute.xlu0 %8169
    %v8172 = vadd.f32 %v8168, %v8170
    %8173 = vrot.lane.b32.xlu0 %v8155, 48
    %v8174 = vpop.permute.xlu0 %8173
    %v8176 = vadd.f32 %v8172, %v8174
    %8177 = vrot.lane.b32.xlu0 %v8155, 32
    %v8178 = vpop.permute.xlu0 %8177
    %v8180 = vadd.f32 %v8176, %v8178
    %8181 = vrot.lane.b32.xlu0 %v8155, 16
    %v8182 = vpop.permute.xlu0 %8181
    %v8184 = vadd.f32 %v8180, %v8182
    %v8185 = vrcp.pop 128.0
    %v8186 = vmul.f32 128.0, %v8185
    %v8187 = vsub.f32 1.0, %v8186
    %v8188 = vmul.f32 %v8185, %v8187
    %v8189 = vadd.f32 %v8185, %v8188
    %vm8190 = vweird.f32 %v8185
    %v8191 = vsel %vm8190, %v8185, %v8189
    %v8192 = vmul.f32 %v8184, %v8191
    %8194 = vrot.lane.b32.xlu0 %v8192, 16
    %v8195 = vpop.permute.xlu0 %8194
    %8197 = vrot.lane.b32.xlu0 %v8192, 32
    %v8198 = vpop.permute.xlu0 %8197
    %8200 = vrot.lane.b32.xlu0 %v8192, 48
    %v8201 = vpop.permute.xlu0 %8200
    %8203 = vrot.lane.b32.xlu0 %v8192, 64
    %v8204 = vpop.permute.xlu0 %8203
    %8206 = vrot.lane.b32.xlu0 %v8192, 80
    %v8207 = vpop.permute.xlu0 %8206
    %8209 = vrot.lane.b32.xlu0 %v8192, 96
    %v8210 = vpop.permute.xlu0 %8209
    %8212 = vrot.lane.b32.xlu0 %v8192, 112
    %v8213 = vpop.permute.xlu0 %8212
    %vm8215 = vcmask 130048
    %v8216 = vsel %vm8215, %v8192, %v8195
    %v8217 = vsel %vm114, %v8216, %v8198
    %vm8218 = vcmask 392192
    %v8219 = vsel %vm8218, %v8217, %v8201
    %vm8220 = vcmask 523264
    %v8221 = vsel %vm8220, %v8219, %v8204
    %vm8222 = vcmask 654336
    %v8223 = vsel %vm8222, %v8221, %v8207
    %vm8224 = vcmask 785408
    %v8225 = vsel %vm8224, %v8223, %v8210
    %vm8226 = vcmask 916480
    %v8227 = vsel %vm8226, %v8225, %v8213
    %v8228 = vperm.slane %v8227, 0
    %v8229 = vsub.f32 %v8145, %v8228
    %v8230 = vsub.f32 %v8146, %v8228
    %v8231 = vmul.f32 %v8229, %v8229
    %v8232 = vmul.f32 %v8230, %v8230
    %v8233 = vadd.f32 %v8231, %v8232
    %v8234 = vrot.slane %v8233, 4
    %v8235 = vadd.f32 %v8233, %v8234
    %v8236 = vrot.slane %v8235, 2
    %v8237 = vadd.f32 %v8235, %v8236
    %v8238 = vrot.slane %v8237, 1
    %v8239 = vadd.f32 %v8237, %v8238
    %8241 = vrot.lane.b32.xlu0 %v8239, 112
    %v8242 = vpop.permute.xlu0 %8241
    %v8244 = vadd.f32 %v8239, %v8242
    %8245 = vrot.lane.b32.xlu0 %v8239, 96
    %v8246 = vpop.permute.xlu0 %8245
    %v8248 = vadd.f32 %v8244, %v8246
    %8249 = vrot.lane.b32.xlu0 %v8239, 80
    %v8250 = vpop.permute.xlu0 %8249
    %v8252 = vadd.f32 %v8248, %v8250
    %8253 = vrot.lane.b32.xlu0 %v8239, 64
    %v8254 = vpop.permute.xlu0 %8253
    %v8256 = vadd.f32 %v8252, %v8254
    %8257 = vrot.lane.b32.xlu0 %v8239, 48
    %v8258 = vpop.permute.xlu0 %8257
    %v8260 = vadd.f32 %v8256, %v8258
    %8261 = vrot.lane.b32.xlu0 %v8239, 32
    %v8262 = vpop.permute.xlu0 %8261
    %v8264 = vadd.f32 %v8260, %v8262
    %8265 = vrot.lane.b32.xlu0 %v8239, 16
    %v8266 = vpop.permute.xlu0 %8265
    %v8268 = vadd.f32 %v8264, %v8266
    %v8269 = vmul.f32 %v8268, %v8191
    %v8270 = vadd.f32 %v8269, 1e-05
    %v8271 = vrsqrt.pop %v8270
    %v8272 = vmul.f32 %v8271, %v8270
    %v8273 = vmul.f32 %v8272, %v8271
    %v8274 = vmul.f32 0.5, %v8273
    %v8275 = vsub.f32 1.5, %v8274
    %v8276 = vmul.f32 %v8271, %v8275
    %vm8277 = vweird.f32 %v8270
    %vm8278 = vweird.f32 %v8271
    %vm8279 = vmor %vm8277, %vm8278
    %v8280 = vsel %vm8279, %v8271, %v8276
    %v8281 = vmul.f32 %v8147, %v8280
    %v8283 = vperm.slane %v8281, 0
    %8284 = vrot.lane.b32.xlu0 %v8283, 16
    %v8285 = vpop.permute.xlu0 %8284
    %8287 = vrot.lane.b32.xlu0 %v8283, 32
    %v8288 = vpop.permute.xlu0 %8287
    %8290 = vrot.lane.b32.xlu0 %v8283, 48
    %v8291 = vpop.permute.xlu0 %8290
    %8293 = vrot.lane.b32.xlu0 %v8283, 64
    %v8294 = vpop.permute.xlu0 %8293
    %8296 = vrot.lane.b32.xlu0 %v8283, 80
    %v8297 = vpop.permute.xlu0 %8296
    %8299 = vrot.lane.b32.xlu0 %v8283, 96
    %v8300 = vpop.permute.xlu0 %8299
    %8302 = vrot.lane.b32.xlu0 %v8283, 112
    %v8303 = vpop.permute.xlu0 %8302
    %v8305 = vsel %vm8215, %v8281, %v8285
    %v8306 = vsel %vm114, %v8305, %v8288
    %v8307 = vsel %vm8218, %v8306, %v8291
    %v8308 = vsel %vm8220, %v8307, %v8294
    %v8309 = vsel %vm8222, %v8308, %v8297
    %v8310 = vsel %vm8224, %v8309, %v8300
    %v8311 = vsel %vm8226, %v8310, %v8303
    %v8312 = vperm.slane %v8311, 0
    %v8313 = vmul.f32 %v8229, %v8312
    %v8314 = vmul.f32 %v8230, %v8312
    %v8316 = vperm.slane %v8148, 0
    %8317 = vrot.lane.b32.xlu0 %v8316, 16
    %v8318 = vpop.permute.xlu0 %8317
    %8320 = vrot.lane.b32.xlu0 %v8316, 32
    %v8321 = vpop.permute.xlu0 %8320
    %8323 = vrot.lane.b32.xlu0 %v8316, 48
    %v8324 = vpop.permute.xlu0 %8323
    %8326 = vrot.lane.b32.xlu0 %v8316, 64
    %v8327 = vpop.permute.xlu0 %8326
    %8329 = vrot.lane.b32.xlu0 %v8316, 80
    %v8330 = vpop.permute.xlu0 %8329
    %8332 = vrot.lane.b32.xlu0 %v8316, 96
    %v8333 = vpop.permute.xlu0 %8332
    %8335 = vrot.lane.b32.xlu0 %v8316, 112
    %v8336 = vpop.permute.xlu0 %8335
    %v8338 = vsel %vm8215, %v8148, %v8318
    %v8339 = vsel %vm114, %v8338, %v8321
    %v8340 = vsel %vm8218, %v8339, %v8324
    %v8341 = vsel %vm8220, %v8340, %v8327
    %v8342 = vsel %vm8222, %v8341, %v8330
    %v8343 = vsel %vm8224, %v8342, %v8333
    %v8344 = vsel %vm8226, %v8343, %v8336
    %v8345 = vperm.slane %v8344, 0
    %v8346 = vadd.f32 %v8313, %v8345
    %v8347 = vadd.f32 %v8314, %v8345
    %vm8348 = vcmp.gt.f32.partialorder %v8346, 0.0
    %vm8349 = vcmp.gt.f32.partialorder %v8347, 0.0
    %v8350 = vmul.f32 %v8346, 0.2
    %v8351 = vmul.f32 %v8347, 0.2
    %v8352 = vsel %vm8348, %v8346, %v8350
    %v8353 = vsel %vm8349, %v8347, %v8351
    %8354 = vst [vmem:[#allocation3 + $0x1] sm:$0xff] %v8352
    %8355 = vst [vmem:[#allocation3 + $0xb] sm:$0xff] %v8353
    %v8356 = vld [vmem:[#allocation3] sm:$0xf]
    %v8357 = vpack.c.bf16 %v8356, %v8356
    %v8358 = vld [vmem:[#allocation6] sm:$0xff]
    %v8359 = vld [vmem:[#allocation6 + $0x8] sm:$0xff]
    %v8360 = vld [vmem:[#allocation6 + $0x10] sm:$0xff]
    %v8361 = vld [vmem:[#allocation6 + $0x18] sm:$0xff]
    %v8362 = vld [vmem:[#allocation6 + $0x20] sm:$0xff]
    %v8363 = vld [vmem:[#allocation6 + $0x28] sm:$0xff]
    %v8364 = vld [vmem:[#allocation6 + $0x30] sm:$0xff]
    %v8365 = vld [vmem:[#allocation6 + $0x38] sm:$0xff]
    %v8366 = vld [vmem:[#allocation6 + $0x40] sm:$0xff]
    %v8367 = vld [vmem:[#allocation6 + $0x48] sm:$0xff]
    %v8368 = vld [vmem:[#allocation6 + $0x50] sm:$0xff]
    %v8369 = vld [vmem:[#allocation6 + $0x58] sm:$0xff]
    %v8370 = vld [vmem:[#allocation6 + $0x60] sm:$0xff]
    %v8371 = vld [vmem:[#allocation6 + $0x68] sm:$0xff]
    %v8372 = vld [vmem:[#allocation6 + $0x70] sm:$0xff]
    %v8373 = vld [vmem:[#allocation6 + $0x78] sm:$0xff]
    %v8374 = vld [vmem:[#allocation6 + $0x80] sm:$0xff]
    %v8375 = vld [vmem:[#allocation6 + $0x88] sm:$0xff]
    %v8376 = vld [vmem:[#allocation6 + $0x90] sm:$0xff]
    %v8377 = vld [vmem:[#allocation6 + $0x98] sm:$0xff]
    %v8378 = vld [vmem:[#allocation6 + $0xa0] sm:$0xff]
    %v8379 = vld [vmem:[#allocation6 + $0xa8] sm:$0xff]
    %v8380 = vld [vmem:[#allocation6 + $0xb0] sm:$0xff]
    %v8381 = vld [vmem:[#allocation6 + $0xb8] sm:$0xff]
    %v8382 = vld [vmem:[#allocation6 + $0xc0] sm:$0xff]
    %v8383 = vld [vmem:[#allocation6 + $0xc8] sm:$0xff]
    %v8384 = vld [vmem:[#allocation6 + $0xd0] sm:$0xff]
    %v8385 = vld [vmem:[#allocation6 + $0xd8] sm:$0xff]
    %v8386 = vld [vmem:[#allocation6 + $0xe0] sm:$0xff]
    %v8387 = vld [vmem:[#allocation6 + $0xe8] sm:$0xff]
    %v8388 = vld [vmem:[#allocation6 + $0xf0] sm:$0xff]
    %v8389 = vld [vmem:[#allocation6 + $0xf8] sm:$0xff]
    %v8422 = vunpack.c.l.b16 %v8358
    %v8423 = vunpack.c.h.b16 %v8358
    %v8424 = vunpack.c.l.b16 %v8359
    %v8425 = vunpack.c.h.b16 %v8359
    %v8426 = vunpack.c.l.b16 %v8360
    %v8427 = vunpack.c.h.b16 %v8360
    %v8428 = vunpack.c.l.b16 %v8361
    %v8429 = vunpack.c.h.b16 %v8361
    %v8430 = vunpack.c.l.b16 %v8362
    %v8431 = vunpack.c.h.b16 %v8362
    %v8432 = vunpack.c.l.b16 %v8363
    %v8433 = vunpack.c.h.b16 %v8363
    %v8434 = vunpack.c.l.b16 %v8364
    %v8435 = vunpack.c.h.b16 %v8364
    %v8436 = vunpack.c.l.b16 %v8365
    %v8437 = vunpack.c.h.b16 %v8365
    %v8438 = vunpack.c.l.b16 %v8366
    %v8439 = vunpack.c.h.b16 %v8366
    %v8440 = vunpack.c.l.b16 %v8367
    %v8441 = vunpack.c.h.b16 %v8367
    %v8442 = vunpack.c.l.b16 %v8368
    %v8443 = vunpack.c.h.b16 %v8368
    %v8444 = vunpack.c.l.b16 %v8369
    %v8445 = vunpack.c.h.b16 %v8369
    %v8446 = vunpack.c.l.b16 %v8370
    %v8447 = vunpack.c.h.b16 %v8370
    %v8448 = vunpack.c.l.b16 %v8371
    %v8449 = vunpack.c.h.b16 %v8371
    %v8450 = vunpack.c.l.b16 %v8372
    %v8451 = vunpack.c.h.b16 %v8372
    %v8452 = vunpack.c.l.b16 %v8373
    %v8453 = vunpack.c.h.b16 %v8373
    %v8454 = vunpack.c.l.b16 %v8374
    %v8455 = vunpack.c.h.b16 %v8374
    %v8456 = vunpack.c.l.b16 %v8375
    %v8457 = vunpack.c.h.b16 %v8375
    %v8458 = vunpack.c.l.b16 %v8376
    %v8459 = vunpack.c.h.b16 %v8376
    %v8460 = vunpack.c.l.b16 %v8377
    %v8461 = vunpack.c.h.b16 %v8377
    %v8462 = vunpack.c.l.b16 %v8378
    %v8463 = vunpack.c.h.b16 %v8378
    %v8464 = vunpack.c.l.b16 %v8379
    %v8465 = vunpack.c.h.b16 %v8379
    %v8466 = vunpack.c.l.b16 %v8380
    %v8467 = vunpack.c.h.b16 %v8380
    %v8468 = vunpack.c.l.b16 %v8381
    %v8469 = vunpack.c.h.b16 %v8381
    %v8470 = vunpack.c.l.b16 %v8382
    %v8471 = vunpack.c.h.b16 %v8382
    %v8472 = vunpack.c.l.b16 %v8383
    %v8473 = vunpack.c.h.b16 %v8383
    %v8474 = vunpack.c.l.b16 %v8384
    %v8475 = vunpack.c.h.b16 %v8384
    %v8476 = vunpack.c.l.b16 %v8385
    %v8477 = vunpack.c.h.b16 %v8385
    %v8478 = vunpack.c.l.b16 %v8386
    %v8479 = vunpack.c.h.b16 %v8386
    %v8480 = vunpack.c.l.b16 %v8387
    %v8481 = vunpack.c.h.b16 %v8387
    %v8482 = vunpack.c.l.b16 %v8388
    %v8483 = vunpack.c.h.b16 %v8388
    %v8484 = vunpack.c.l.b16 %v8389
    %v8485 = vunpack.c.h.b16 %v8389
    %v8486 = vpack.c.b16 %v8426, %v8422
    %v8487 = vpack.c.b16 %v8427, %v8423
    %v8488 = vpack.c.b16 %v8428, %v8424
    %v8489 = vpack.c.b16 %v8429, %v8425
    %v8490 = vpack.c.b16 %v8434, %v8430
    %v8491 = vpack.c.b16 %v8435, %v8431
    %v8492 = vpack.c.b16 %v8436, %v8432
    %v8493 = vpack.c.b16 %v8437, %v8433
    %v8494 = vpack.c.b16 %v8442, %v8438
    %v8495 = vpack.c.b16 %v8443, %v8439
    %v8496 = vpack.c.b16 %v8444, %v8440
    %v8497 = vpack.c.b16 %v8445, %v8441
    %v8498 = vpack.c.b16 %v8450, %v8446
    %v8499 = vpack.c.b16 %v8451, %v8447
    %v8500 = vpack.c.b16 %v8452, %v8448
    %v8501 = vpack.c.b16 %v8453, %v8449
    %v8502 = vpack.c.b16 %v8458, %v8454
    %v8503 = vpack.c.b16 %v8459, %v8455
    %v8504 = vpack.c.b16 %v8460, %v8456
    %v8505 = vpack.c.b16 %v8461, %v8457
    %v8506 = vpack.c.b16 %v8466, %v8462
    %v8507 = vpack.c.b16 %v8467, %v8463
    %v8508 = vpack.c.b16 %v8468, %v8464
    %v8509 = vpack.c.b16 %v8469, %v8465
    %v8510 = vpack.c.b16 %v8474, %v8470
    %v8511 = vpack.c.b16 %v8475, %v8471
    %v8512 = vpack.c.b16 %v8476, %v8472
    %v8513 = vpack.c.b16 %v8477, %v8473
    %v8514 = vpack.c.b16 %v8482, %v8478
    %v8515 = vpack.c.b16 %v8483, %v8479
    %v8516 = vpack.c.b16 %v8484, %v8480
    %v8517 = vpack.c.b16 %v8485, %v8481
    %8550 = vmatpush.bf16.msra.mxu0 %v8514
    %8551 = vmatpush.bf16.msra.mxu0 %v8510
    %8552 = vmatpush.bf16.msra.mxu0 %v8506
    %8553 = vmatpush.bf16.msra.mxu0 %v8502
    %8554 = vmatpush.bf16.msra.mxu0 %v8498
    %8555 = vmatpush.bf16.msra.mxu0 %v8494
    %8556 = vmatpush.bf16.msra.mxu0 %v8490
    %8557 = vmatpush.bf16.msra.mxu0 %v8486
    %8558 = vmatmul.bf16.gmra.mxu0 %v8357
    %v8559 = vpop.f32.mrf.mxu0
    %v8560 = vadd.f32 0.0, %v8559
    %v8561 = vpop.f32.mrf.mxu0
    %8562 = vdwg.mxu0
    %8563 = vmatpush.bf16.msra.mxu0 %v8515
    %8564 = vmatpush.bf16.msra.mxu0 %v8511
    %8565 = vmatpush.bf16.msra.mxu0 %v8507
    %8566 = vmatpush.bf16.msra.mxu0 %v8503
    %8567 = vmatpush.bf16.msra.mxu0 %v8499
    %8568 = vmatpush.bf16.msra.mxu0 %v8495
    %8569 = vmatpush.bf16.msra.mxu0 %v8491
    %8570 = vmatpush.bf16.msra.mxu0 %v8487
    %8571 = vmatmul.bf16.gmra.mxu0 %v8357
    %v8572 = vpop.f32.mrf.mxu0
    %v8573 = vadd.f32 0.0, %v8572
    %v8574 = vpop.f32.mrf.mxu0
    %8575 = vdwg.mxu0
    %8576 = vmatpush.bf16.msra.mxu0 %v8516
    %8577 = vmatpush.bf16.msra.mxu0 %v8512
    %8578 = vmatpush.bf16.msra.mxu0 %v8508
    %8579 = vmatpush.bf16.msra.mxu0 %v8504
    %8580 = vmatpush.bf16.msra.mxu0 %v8500
    %8581 = vmatpush.bf16.msra.mxu0 %v8496
    %8582 = vmatpush.bf16.msra.mxu0 %v8492
    %8583 = vmatpush.bf16.msra.mxu0 %v8488
    %8584 = vmatmul.bf16.gmra.mxu0 %v8357
    %v8585 = vpop.f32.mrf.mxu0
    %v8586 = vadd.f32 0.0, %v8585
    %v8587 = vpop.f32.mrf.mxu0
    %8588 = vdwg.mxu0
    %8589 = vmatpush.bf16.msra.mxu0 %v8517
    %8590 = vmatpush.bf16.msra.mxu0 %v8513
    %8591 = vmatpush.bf16.msra.mxu0 %v8509
    %8592 = vmatpush.bf16.msra.mxu0 %v8505
    %8593 = vmatpush.bf16.msra.mxu0 %v8501
    %8594 = vmatpush.bf16.msra.mxu0 %v8497
    %8595 = vmatpush.bf16.msra.mxu0 %v8493
    %8596 = vmatpush.bf16.msra.mxu0 %v8489
    %8597 = vmatmul.bf16.gmra.mxu0 %v8357
    %v8598 = vpop.f32.mrf.mxu0
    %v8599 = vadd.f32 0.0, %v8598
    %v8600 = vpop.f32.mrf.mxu0
    %8601 = vdwg.mxu0
    %v8603 = vrot.slane %v8573, 1
    %v8605 = vadd.f32 %v8560, %v8603
    %v8607 = vrot.slane %v8586, 2
    %v8609 = vadd.f32 %v8605, %v8607
    %v8611 = vrot.slane %v8599, 3
    %v8613 = vadd.f32 %v8609, %v8611
    %8614 = vst [vmem:[#allocation5] sm:$0x1] %v8613
    %v8615 = vld [vmem:[#allocation3 + $0x2] sm:$0xf]
    %v8616 = vpack.c.bf16 %v8615, %v8615
    %v8617 = vld [vmem:[#allocation6] sm:$0xff]
    %v8618 = vld [vmem:[#allocation6 + $0x8] sm:$0xff]
    %v8619 = vld [vmem:[#allocation6 + $0x10] sm:$0xff]
    %v8620 = vld [vmem:[#allocation6 + $0x18] sm:$0xff]
    %v8621 = vld [vmem:[#allocation6 + $0x20] sm:$0xff]
    %v8622 = vld [vmem:[#allocation6 + $0x28] sm:$0xff]
    %v8623 = vld [vmem:[#allocation6 + $0x30] sm:$0xff]
    %v8624 = vld [vmem:[#allocation6 + $0x38] sm:$0xff]
    %v8625 = vld [vmem:[#allocation6 + $0x40] sm:$0xff]
    %v8626 = vld [vmem:[#allocation6 + $0x48] sm:$0xff]
    %v8627 = vld [vmem:[#allocation6 + $0x50] sm:$0xff]
    %v8628 = vld [vmem:[#allocation6 + $0x58] sm:$0xff]
    %v8629 = vld [vmem:[#allocation6 + $0x60] sm:$0xff]
    %v8630 = vld [vmem:[#allocation6 + $0x68] sm:$0xff]
    %v8631 = vld [vmem:[#allocation6 + $0x70] sm:$0xff]
    %v8632 = vld [vmem:[#allocation6 + $0x78] sm:$0xff]
    %v8633 = vld [vmem:[#allocation6 + $0x80] sm:$0xff]
    %v8634 = vld [vmem:[#allocation6 + $0x88] sm:$0xff]
    %v8635 = vld [vmem:[#allocation6 + $0x90] sm:$0xff]
    %v8636 = vld [vmem:[#allocation6 + $0x98] sm:$0xff]
    %v8637 = vld [vmem:[#allocation6 + $0xa0] sm:$0xff]
    %v8638 = vld [vmem:[#allocation6 + $0xa8] sm:$0xff]
    %v8639 = vld [vmem:[#allocation6 + $0xb0] sm:$0xff]
    %v8640 = vld [vmem:[#allocation6 + $0xb8] sm:$0xff]
    %v8641 = vld [vmem:[#allocation6 + $0xc0] sm:$0xff]
    %v8642 = vld [vmem:[#allocation6 + $0xc8] sm:$0xff]
    %v8643 = vld [vmem:[#allocation6 + $0xd0] sm:$0xff]
    %v8644 = vld [vmem:[#allocation6 + $0xd8] sm:$0xff]
    %v8645 = vld [vmem:[#allocation6 + $0xe0] sm:$0xff]
    %v8646 = vld [vmem:[#allocation6 + $0xe8] sm:$0xff]
    %v8647 = vld [vmem:[#allocation6 + $0xf0] sm:$0xff]
    %v8648 = vld [vmem:[#allocation6 + $0xf8] sm:$0xff]
    %v8681 = vunpack.c.l.b16 %v8617
    %v8682 = vunpack.c.h.b16 %v8617
    %v8683 = vunpack.c.l.b16 %v8618
    %v8684 = vunpack.c.h.b16 %v8618
    %v8685 = vunpack.c.l.b16 %v8619
    %v8686 = vunpack.c.h.b16 %v8619
    %v8687 = vunpack.c.l.b16 %v8620
    %v8688 = vunpack.c.h.b16 %v8620
    %v8689 = vunpack.c.l.b16 %v8621
    %v8690 = vunpack.c.h.b16 %v8621
    %v8691 = vunpack.c.l.b16 %v8622
    %v8692 = vunpack.c.h.b16 %v8622
    %v8693 = vunpack.c.l.b16 %v8623
    %v8694 = vunpack.c.h.b16 %v8623
    %v8695 = vunpack.c.l.b16 %v8624
    %v8696 = vunpack.c.h.b16 %v8624
    %v8697 = vunpack.c.l.b16 %v8625
    %v8698 = vunpack.c.h.b16 %v8625
    %v8699 = vunpack.c.l.b16 %v8626
    %v8700 = vunpack.c.h.b16 %v8626
    %v8701 = vunpack.c.l.b16 %v8627
    %v8702 = vunpack.c.h.b16 %v8627
    %v8703 = vunpack.c.l.b16 %v8628
    %v8704 = vunpack.c.h.b16 %v8628
    %v8705 = vunpack.c.l.b16 %v8629
    %v8706 = vunpack.c.h.b16 %v8629
    %v8707 = vunpack.c.l.b16 %v8630
    %v8708 = vunpack.c.h.b16 %v8630
    %v8709 = vunpack.c.l.b16 %v8631
    %v8710 = vunpack.c.h.b16 %v8631
    %v8711 = vunpack.c.l.b16 %v8632
    %v8712 = vunpack.c.h.b16 %v8632
    %v8713 = vunpack.c.l.b16 %v8633
    %v8714 = vunpack.c.h.b16 %v8633
    %v8715 = vunpack.c.l.b16 %v8634
    %v8716 = vunpack.c.h.b16 %v8634
    %v8717 = vunpack.c.l.b16 %v8635
    %v8718 = vunpack.c.h.b16 %v8635
    %v8719 = vunpack.c.l.b16 %v8636
    %v8720 = vunpack.c.h.b16 %v8636
    %v8721 = vunpack.c.l.b16 %v8637
    %v8722 = vunpack.c.h.b16 %v8637
    %v8723 = vunpack.c.l.b16 %v8638
    %v8724 = vunpack.c.h.b16 %v8638
    %v8725 = vunpack.c.l.b16 %v8639
    %v8726 = vunpack.c.h.b16 %v8639
    %v8727 = vunpack.c.l.b16 %v8640
    %v8728 = vunpack.c.h.b16 %v8640
    %v8729 = vunpack.c.l.b16 %v8641
    %v8730 = vunpack.c.h.b16 %v8641
    %v8731 = vunpack.c.l.b16 %v8642
    %v8732 = vunpack.c.h.b16 %v8642
    %v8733 = vunpack.c.l.b16 %v8643
    %v8734 = vunpack.c.h.b16 %v8643
    %v8735 = vunpack.c.l.b16 %v8644
    %v8736 = vunpack.c.h.b16 %v8644
    %v8737 = vunpack.c.l.b16 %v8645
    %v8738 = vunpack.c.h.b16 %v8645
    %v8739 = vunpack.c.l.b16 %v8646
    %v8740 = vunpack.c.h.b16 %v8646
    %v8741 = vunpack.c.l.b16 %v8647
    %v8742 = vunpack.c.h.b16 %v8647
    %v8743 = vunpack.c.l.b16 %v8648
    %v8744 = vunpack.c.h.b16 %v8648
    %v8745 = vpack.c.b16 %v8685, %v8681
    %v8746 = vpack.c.b16 %v8686, %v8682
    %v8747 = vpack.c.b16 %v8687, %v8683
    %v8748 = vpack.c.b16 %v8688, %v8684
    %v8749 = vpack.c.b16 %v8693, %v8689
    %v8750 = vpack.c.b16 %v8694, %v8690
    %v8751 = vpack.c.b16 %v8695, %v8691
    %v8752 = vpack.c.b16 %v8696, %v8692
    %v8753 = vpack.c.b16 %v8701, %v8697
    %v8754 = vpack.c.b16 %v8702, %v8698
    %v8755 = vpack.c.b16 %v8703, %v8699
    %v8756 = vpack.c.b16 %v8704, %v8700
    %v8757 = vpack.c.b16 %v8709, %v8705
    %v8758 = vpack.c.b16 %v8710, %v8706
    %v8759 = vpack.c.b16 %v8711, %v8707
    %v8760 = vpack.c.b16 %v8712, %v8708
    %v8761 = vpack.c.b16 %v8717, %v8713
    %v8762 = vpack.c.b16 %v8718, %v8714
    %v8763 = vpack.c.b16 %v8719, %v8715
    %v8764 = vpack.c.b16 %v8720, %v8716
    %v8765 = vpack.c.b16 %v8725, %v8721
    %v8766 = vpack.c.b16 %v8726, %v8722
    %v8767 = vpack.c.b16 %v8727, %v8723
    %v8768 = vpack.c.b16 %v8728, %v8724
    %v8769 = vpack.c.b16 %v8733, %v8729
    %v8770 = vpack.c.b16 %v8734, %v8730
    %v8771 = vpack.c.b16 %v8735, %v8731
    %v8772 = vpack.c.b16 %v8736, %v8732
    %v8773 = vpack.c.b16 %v8741, %v8737
    %v8774 = vpack.c.b16 %v8742, %v8738
    %v8775 = vpack.c.b16 %v8743, %v8739
    %v8776 = vpack.c.b16 %v8744, %v8740
    %8809 = vmatpush.bf16.msra.mxu0 %v8773
    %8810 = vmatpush.bf16.msra.mxu0 %v8769
    %8811 = vmatpush.bf16.msra.mxu0 %v8765
    %8812 = vmatpush.bf16.msra.mxu0 %v8761
    %8813 = vmatpush.bf16.msra.mxu0 %v8757
    %8814 = vmatpush.bf16.msra.mxu0 %v8753
    %8815 = vmatpush.bf16.msra.mxu0 %v8749
    %8816 = vmatpush.bf16.msra.mxu0 %v8745
    %8817 = vmatmul.bf16.gmra.mxu0 %v8616
    %v8818 = vpop.f32.mrf.mxu0
    %v8819 = vadd.f32 0.0, %v8818
    %v8820 = vpop.f32.mrf.mxu0
    %8821 = vdwg.mxu0
    %8822 = vmatpush.bf16.msra.mxu0 %v8774
    %8823 = vmatpush.bf16.msra.mxu0 %v8770
    %8824 = vmatpush.bf16.msra.mxu0 %v8766
    %8825 = vmatpush.bf16.msra.mxu0 %v8762
    %8826 = vmatpush.bf16.msra.mxu0 %v8758
    %8827 = vmatpush.bf16.msra.mxu0 %v8754
    %8828 = vmatpush.bf16.msra.mxu0 %v8750
    %8829 = vmatpush.bf16.msra.mxu0 %v8746
    %8830 = vmatmul.bf16.gmra.mxu0 %v8616
    %v8831 = vpop.f32.mrf.mxu0
    %v8832 = vadd.f32 0.0, %v8831
    %v8833 = vpop.f32.mrf.mxu0
    %8834 = vdwg.mxu0
    %8835 = vmatpush.bf16.msra.mxu0 %v8775
    %8836 = vmatpush.bf16.msra.mxu0 %v8771
    %8837 = vmatpush.bf16.msra.mxu0 %v8767
    %8838 = vmatpush.bf16.msra.mxu0 %v8763
    %8839 = vmatpush.bf16.msra.mxu0 %v8759
    %8840 = vmatpush.bf16.msra.mxu0 %v8755
    %8841 = vmatpush.bf16.msra.mxu0 %v8751
    %8842 = vmatpush.bf16.msra.mxu0 %v8747
    %8843 = vmatmul.bf16.gmra.mxu0 %v8616
    %v8844 = vpop.f32.mrf.mxu0
    %v8845 = vadd.f32 0.0, %v8844
    %v8846 = vpop.f32.mrf.mxu0
    %8847 = vdwg.mxu0
    %8848 = vmatpush.bf16.msra.mxu0 %v8776
    %8849 = vmatpush.bf16.msra.mxu0 %v8772
    %8850 = vmatpush.bf16.msra.mxu0 %v8768
    %8851 = vmatpush.bf16.msra.mxu0 %v8764
    %8852 = vmatpush.bf16.msra.mxu0 %v8760
    %8853 = vmatpush.bf16.msra.mxu0 %v8756
    %8854 = vmatpush.bf16.msra.mxu0 %v8752
    %8855 = vmatpush.bf16.msra.mxu0 %v8748
    %8856 = vmatmul.bf16.gmra.mxu0 %v8616
    %v8857 = vpop.f32.mrf.mxu0
    %v8858 = vadd.f32 0.0, %v8857
    %v8859 = vpop.f32.mrf.mxu0
    %8860 = vdwg.mxu0
    %v8862 = vrot.slane %v8832, 1
    %v8864 = vadd.f32 %v8819, %v8862
    %v8866 = vrot.slane %v8845, 2
    %v8868 = vadd.f32 %v8864, %v8866
    %v8870 = vrot.slane %v8858, 3
    %v8872 = vadd.f32 %v8868, %v8870
    %8873 = vst [vmem:[#allocation5 + $0x1] sm:$0x1] %v8872
    %v8874 = vld [vmem:[#allocation3 + $0x4] sm:$0xf]
    %v8875 = vpack.c.bf16 %v8874, %v8874
    %v8876 = vld [vmem:[#allocation6] sm:$0xff]
    %v8877 = vld [vmem:[#allocation6 + $0x8] sm:$0xff]
    %v8878 = vld [vmem:[#allocation6 + $0x10] sm:$0xff]
    %v8879 = vld [vmem:[#allocation6 + $0x18] sm:$0xff]
    %v8880 = vld [vmem:[#allocation6 + $0x20] sm:$0xff]
    %v8881 = vld [vmem:[#allocation6 + $0x28] sm:$0xff]
    %v8882 = vld [vmem:[#allocation6 + $0x30] sm:$0xff]
    %v8883 = vld [vmem:[#allocation6 + $0x38] sm:$0xff]
    %v8884 = vld [vmem:[#allocation6 + $0x40] sm:$0xff]
    %v8885 = vld [vmem:[#allocation6 + $0x48] sm:$0xff]
    %v8886 = vld [vmem:[#allocation6 + $0x50] sm:$0xff]
    %v8887 = vld [vmem:[#allocation6 + $0x58] sm:$0xff]
    %v8888 = vld [vmem:[#allocation6 + $0x60] sm:$0xff]
    %v8889 = vld [vmem:[#allocation6 + $0x68] sm:$0xff]
    %v8890 = vld [vmem:[#allocation6 + $0x70] sm:$0xff]
    %v8891 = vld [vmem:[#allocation6 + $0x78] sm:$0xff]
    %v8892 = vld [vmem:[#allocation6 + $0x80] sm:$0xff]
    %v8893 = vld [vmem:[#allocation6 + $0x88] sm:$0xff]
    %v8894 = vld [vmem:[#allocation6 + $0x90] sm:$0xff]
    %v8895 = vld [vmem:[#allocation6 + $0x98] sm:$0xff]
    %v8896 = vld [vmem:[#allocation6 + $0xa0] sm:$0xff]
    %v8897 = vld [vmem:[#allocation6 + $0xa8] sm:$0xff]
    %v8898 = vld [vmem:[#allocation6 + $0xb0] sm:$0xff]
    %v8899 = vld [vmem:[#allocation6 + $0xb8] sm:$0xff]
    %v8900 = vld [vmem:[#allocation6 + $0xc0] sm:$0xff]
    %v8901 = vld [vmem:[#allocation6 + $0xc8] sm:$0xff]
    %v8902 = vld [vmem:[#allocation6 + $0xd0] sm:$0xff]
    %v8903 = vld [vmem:[#allocation6 + $0xd8] sm:$0xff]
    %v8904 = vld [vmem:[#allocation6 + $0xe0] sm:$0xff]
    %v8905 = vld [vmem:[#allocation6 + $0xe8] sm:$0xff]
    %v8906 = vld [vmem:[#allocation6 + $0xf0] sm:$0xff]
    %v8907 = vld [vmem:[#allocation6 + $0xf8] sm:$0xff]
    %v8940 = vunpack.c.l.b16 %v8876
    %v8941 = vunpack.c.h.b16 %v8876
    %v8942 = vunpack.c.l.b16 %v8877
    %v8943 = vunpack.c.h.b16 %v8877
    %v8944 = vunpack.c.l.b16 %v8878
    %v8945 = vunpack.c.h.b16 %v8878
    %v8946 = vunpack.c.l.b16 %v8879
    %v8947 = vunpack.c.h.b16 %v8879
    %v8948 = vunpack.c.l.b16 %v8880
    %v8949 = vunpack.c.h.b16 %v8880
    %v8950 = vunpack.c.l.b16 %v8881
    %v8951 = vunpack.c.h.b16 %v8881
    %v8952 = vunpack.c.l.b16 %v8882
    %v8953 = vunpack.c.h.b16 %v8882
    %v8954 = vunpack.c.l.b16 %v8883
    %v8955 = vunpack.c.h.b16 %v8883
    %v8956 = vunpack.c.l.b16 %v8884
    %v8957 = vunpack.c.h.b16 %v8884
    %v8958 = vunpack.c.l.b16 %v8885
    %v8959 = vunpack.c.h.b16 %v8885
    %v8960 = vunpack.c.l.b16 %v8886
    %v8961 = vunpack.c.h.b16 %v8886
    %v8962 = vunpack.c.l.b16 %v8887
    %v8963 = vunpack.c.h.b16 %v8887
    %v8964 = vunpack.c.l.b16 %v8888
    %v8965 = vunpack.c.h.b16 %v8888
    %v8966 = vunpack.c.l.b16 %v8889
    %v8967 = vunpack.c.h.b16 %v8889
    %v8968 = vunpack.c.l.b16 %v8890
    %v8969 = vunpack.c.h.b16 %v8890
    %v8970 = vunpack.c.l.b16 %v8891
    %v8971 = vunpack.c.h.b16 %v8891
    %v8972 = vunpack.c.l.b16 %v8892
    %v8973 = vunpack.c.h.b16 %v8892
    %v8974 = vunpack.c.l.b16 %v8893
    %v8975 = vunpack.c.h.b16 %v8893
    %v8976 = vunpack.c.l.b16 %v8894
    %v8977 = vunpack.c.h.b16 %v8894
    %v8978 = vunpack.c.l.b16 %v8895
    %v8979 = vunpack.c.h.b16 %v8895
    %v8980 = vunpack.c.l.b16 %v8896
    %v8981 = vunpack.c.h.b16 %v8896
    %v8982 = vunpack.c.l.b16 %v8897
    %v8983 = vunpack.c.h.b16 %v8897
    %v8984 = vunpack.c.l.b16 %v8898
    %v8985 = vunpack.c.h.b16 %v8898
    %v8986 = vunpack.c.l.b16 %v8899
    %v8987 = vunpack.c.h.b16 %v8899
    %v8988 = vunpack.c.l.b16 %v8900
    %v8989 = vunpack.c.h.b16 %v8900
    %v8990 = vunpack.c.l.b16 %v8901
    %v8991 = vunpack.c.h.b16 %v8901
    %v8992 = vunpack.c.l.b16 %v8902
    %v8993 = vunpack.c.h.b16 %v8902
    %v8994 = vunpack.c.l.b16 %v8903
    %v8995 = vunpack.c.h.b16 %v8903
    %v8996 = vunpack.c.l.b16 %v8904
    %v8997 = vunpack.c.h.b16 %v8904
    %v8998 = vunpack.c.l.b16 %v8905
    %v8999 = vunpack.c.h.b16 %v8905
    %v9000 = vunpack.c.l.b16 %v8906
    %v9001 = vunpack.c.h.b16 %v8906
    %v9002 = vunpack.c.l.b16 %v8907
    %v9003 = vunpack.c.h.b16 %v8907
    %v9004 = vpack.c.b16 %v8944, %v8940
    %v9005 = vpack.c.b16 %v8945, %v8941
    %v9006 = vpack.c.b16 %v8946, %v8942
    %v9007 = vpack.c.b16 %v8947, %v8943
    %v9008 = vpack.c.b16 %v8952, %v8948
    %v9009 = vpack.c.b16 %v8953, %v8949
    %v9010 = vpack.c.b16 %v8954, %v8950
    %v9011 = vpack.c.b16 %v8955, %v8951
    %v9012 = vpack.c.b16 %v8960, %v8956
    %v9013 = vpack.c.b16 %v8961, %v8957
    %v9014 = vpack.c.b16 %v8962, %v8958
    %v9015 = vpack.c.b16 %v8963, %v8959
    %v9016 = vpack.c.b16 %v8968, %v8964
    %v9017 = vpack.c.b16 %v8969, %v8965
    %v9018 = vpack.c.b16 %v8970, %v8966
    %v9019 = vpack.c.b16 %v8971, %v8967
    %v9020 = vpack.c.b16 %v8976, %v8972
    %v9021 = vpack.c.b16 %v8977, %v8973
    %v9022 = vpack.c.b16 %v8978, %v8974
    %v9023 = vpack.c.b16 %v8979, %v8975
    %v9024 = vpack.c.b16 %v8984, %v8980
    %v9025 = vpack.c.b16 %v8985, %v8981
    %v9026 = vpack.c.b16 %v8986, %v8982
    %v9027 = vpack.c.b16 %v8987, %v8983
    %v9028 = vpack.c.b16 %v8992, %v8988
    %v9029 = vpack.c.b16 %v8993, %v8989
    %v9030 = vpack.c.b16 %v8994, %v8990
    %v9031 = vpack.c.b16 %v8995, %v8991
    %v9032 = vpack.c.b16 %v9000, %v8996
    %v9033 = vpack.c.b16 %v9001, %v8997
    %v9034 = vpack.c.b16 %v9002, %v8998
    %v9035 = vpack.c.b16 %v9003, %v8999
    %9068 = vmatpush.bf16.msra.mxu0 %v9032
    %9069 = vmatpush.bf16.msra.mxu0 %v9028
    %9070 = vmatpush.bf16.msra.mxu0 %v9024
    %9071 = vmatpush.bf16.msra.mxu0 %v9020
    %9072 = vmatpush.bf16.msra.mxu0 %v9016
    %9073 = vmatpush.bf16.msra.mxu0 %v9012
    %9074 = vmatpush.bf16.msra.mxu0 %v9008
    %9075 = vmatpush.bf16.msra.mxu0 %v9004
    %9076 = vmatmul.bf16.gmra.mxu0 %v8875
    %v9077 = vpop.f32.mrf.mxu0
    %v9078 = vadd.f32 0.0, %v9077
    %v9079 = vpop.f32.mrf.mxu0
    %9080 = vdwg.mxu0
    %9081 = vmatpush.bf16.msra.mxu0 %v9033
    %9082 = vmatpush.bf16.msra.mxu0 %v9029
    %9083 = vmatpush.bf16.msra.mxu0 %v9025
    %9084 = vmatpush.bf16.msra.mxu0 %v9021
    %9085 = vmatpush.bf16.msra.mxu0 %v9017
    %9086 = vmatpush.bf16.msra.mxu0 %v9013
    %9087 = vmatpush.bf16.msra.mxu0 %v9009
    %9088 = vmatpush.bf16.msra.mxu0 %v9005
    %9089 = vmatmul.bf16.gmra.mxu0 %v8875
    %v9090 = vpop.f32.mrf.mxu0
    %v9091 = vadd.f32 0.0, %v9090
    %v9092 = vpop.f32.mrf.mxu0
    %9093 = vdwg.mxu0
    %9094 = vmatpush.bf16.msra.mxu0 %v9034
    %9095 = vmatpush.bf16.msra.mxu0 %v9030
    %9096 = vmatpush.bf16.msra.mxu0 %v9026
    %9097 = vmatpush.bf16.msra.mxu0 %v9022
    %9098 = vmatpush.bf16.msra.mxu0 %v9018
    %9099 = vmatpush.bf16.msra.mxu0 %v9014
    %9100 = vmatpush.bf16.msra.mxu0 %v9010
    %9101 = vmatpush.bf16.msra.mxu0 %v9006
    %9102 = vmatmul.bf16.gmra.mxu0 %v8875
    %v9103 = vpop.f32.mrf.mxu0
    %v9104 = vadd.f32 0.0, %v9103
    %v9105 = vpop.f32.mrf.mxu0
    %9106 = vdwg.mxu0
    %9107 = vmatpush.bf16.msra.mxu0 %v9035
    %9108 = vmatpush.bf16.msra.mxu0 %v9031
    %9109 = vmatpush.bf16.msra.mxu0 %v9027
    %9110 = vmatpush.bf16.msra.mxu0 %v9023
    %9111 = vmatpush.bf16.msra.mxu0 %v9019
    %9112 = vmatpush.bf16.msra.mxu0 %v9015
    %9113 = vmatpush.bf16.msra.mxu0 %v9011
    %9114 = vmatpush.bf16.msra.mxu0 %v9007
    %9115 = vmatmul.bf16.gmra.mxu0 %v8875
    %v9116 = vpop.f32.mrf.mxu0
    %v9117 = vadd.f32 0.0, %v9116
    %v9118 = vpop.f32.mrf.mxu0
    %9119 = vdwg.mxu0
    %v9121 = vrot.slane %v9091, 1
    %v9123 = vadd.f32 %v9078, %v9121
    %v9125 = vrot.slane %v9104, 2
    %v9127 = vadd.f32 %v9123, %v9125
    %v9129 = vrot.slane %v9117, 3
    %v9131 = vadd.f32 %v9127, %v9129
    %9132 = vst [vmem:[#allocation5 + $0x2] sm:$0x1] %v9131
    %v9133 = vld [vmem:[#allocation3 + $0x6] sm:$0xf]
    %v9134 = vpack.c.bf16 %v9133, %v9133
    %v9135 = vld [vmem:[#allocation6] sm:$0xff]
    %v9136 = vld [vmem:[#allocation6 + $0x8] sm:$0xff]
    %v9137 = vld [vmem:[#allocation6 + $0x10] sm:$0xff]
    %v9138 = vld [vmem:[#allocation6 + $0x18] sm:$0xff]
    %v9139 = vld [vmem:[#allocation6 + $0x20] sm:$0xff]
    %v9140 = vld [vmem:[#allocation6 + $0x28] sm:$0xff]
    %v9141 = vld [vmem:[#allocation6 + $0x30] sm:$0xff]
    %v9142 = vld [vmem:[#allocation6 + $0x38] sm:$0xff]
    %v9143 = vld [vmem:[#allocation6 + $0x40] sm:$0xff]
    %v9144 = vld [vmem:[#allocation6 + $0x48] sm:$0xff]
    %v9145 = vld [vmem:[#allocation6 + $0x50] sm:$0xff]
    %v9146 = vld [vmem:[#allocation6 + $0x58] sm:$0xff]
    %v9147 = vld [vmem:[#allocation6 + $0x60] sm:$0xff]
    %v9148 = vld [vmem:[#allocation6 + $0x68] sm:$0xff]
    %v9149 = vld [vmem:[#allocation6 + $0x70] sm:$0xff]
    %v9150 = vld [vmem:[#allocation6 + $0x78] sm:$0xff]
    %v9151 = vld [vmem:[#allocation6 + $0x80] sm:$0xff]
    %v9152 = vld [vmem:[#allocation6 + $0x88] sm:$0xff]
    %v9153 = vld [vmem:[#allocation6 + $0x90] sm:$0xff]
    %v9154 = vld [vmem:[#allocation6 + $0x98] sm:$0xff]
    %v9155 = vld [vmem:[#allocation6 + $0xa0] sm:$0xff]
    %v9156 = vld [vmem:[#allocation6 + $0xa8] sm:$0xff]
    %v9157 = vld [vmem:[#allocation6 + $0xb0] sm:$0xff]
    %v9158 = vld [vmem:[#allocation6 + $0xb8] sm:$0xff]
    %v9159 = vld [vmem:[#allocation6 + $0xc0] sm:$0xff]
    %v9160 = vld [vmem:[#allocation6 + $0xc8] sm:$0xff]
    %v9161 = vld [vmem:[#allocation6 + $0xd0] sm:$0xff]
    %v9162 = vld [vmem:[#allocation6 + $0xd8] sm:$0xff]
    %v9163 = vld [vmem:[#allocation6 + $0xe0] sm:$0xff]
    %v9164 = vld [vmem:[#allocation6 + $0xe8] sm:$0xff]
    %v9165 = vld [vmem:[#allocation6 + $0xf0] sm:$0xff]
    %v9166 = vld [vmem:[#allocation6 + $0xf8] sm:$0xff]
    %v9199 = vunpack.c.l.b16 %v9135
    %v9200 = vunpack.c.h.b16 %v9135
    %v9201 = vunpack.c.l.b16 %v9136
    %v9202 = vunpack.c.h.b16 %v9136
    %v9203 = vunpack.c.l.b16 %v9137
    %v9204 = vunpack.c.h.b16 %v9137
    %v9205 = vunpack.c.l.b16 %v9138
    %v9206 = vunpack.c.h.b16 %v9138
    %v9207 = vunpack.c.l.b16 %v9139
    %v9208 = vunpack.c.h.b16 %v9139
    %v9209 = vunpack.c.l.b16 %v9140
    %v9210 = vunpack.c.h.b16 %v9140
    %v9211 = vunpack.c.l.b16 %v9141
    %v9212 = vunpack.c.h.b16 %v9141
    %v9213 = vunpack.c.l.b16 %v9142
    %v9214 = vunpack.c.h.b16 %v9142
    %v9215 = vunpack.c.l.b16 %v9143
    %v9216 = vunpack.c.h.b16 %v9143
    %v9217 = vunpack.c.l.b16 %v9144
    %v9218 = vunpack.c.h.b16 %v9144
    %v9219 = vunpack.c.l.b16 %v9145
    %v9220 = vunpack.c.h.b16 %v9145
    %v9221 = vunpack.c.l.b16 %v9146
    %v9222 = vunpack.c.h.b16 %v9146
    %v9223 = vunpack.c.l.b16 %v9147
    %v9224 = vunpack.c.h.b16 %v9147
    %v9225 = vunpack.c.l.b16 %v9148
    %v9226 = vunpack.c.h.b16 %v9148
    %v9227 = vunpack.c.l.b16 %v9149
    %v9228 = vunpack.c.h.b16 %v9149
    %v9229 = vunpack.c.l.b16 %v9150
    %v9230 = vunpack.c.h.b16 %v9150
    %v9231 = vunpack.c.l.b16 %v9151
    %v9232 = vunpack.c.h.b16 %v9151
    %v9233 = vunpack.c.l.b16 %v9152
    %v9234 = vunpack.c.h.b16 %v9152
    %v9235 = vunpack.c.l.b16 %v9153
    %v9236 = vunpack.c.h.b16 %v9153
    %v9237 = vunpack.c.l.b16 %v9154
    %v9238 = vunpack.c.h.b16 %v9154
    %v9239 = vunpack.c.l.b16 %v9155
    %v9240 = vunpack.c.h.b16 %v9155
    %v9241 = vunpack.c.l.b16 %v9156
    %v9242 = vunpack.c.h.b16 %v9156
    %v9243 = vunpack.c.l.b16 %v9157
    %v9244 = vunpack.c.h.b16 %v9157
    %v9245 = vunpack.c.l.b16 %v9158
    %v9246 = vunpack.c.h.b16 %v9158
    %v9247 = vunpack.c.l.b16 %v9159
    %v9248 = vunpack.c.h.b16 %v9159
    %v9249 = vunpack.c.l.b16 %v9160
    %v9250 = vunpack.c.h.b16 %v9160
    %v9251 = vunpack.c.l.b16 %v9161
    %v9252 = vunpack.c.h.b16 %v9161
    %v9253 = vunpack.c.l.b16 %v9162
    %v9254 = vunpack.c.h.b16 %v9162
    %v9255 = vunpack.c.l.b16 %v9163
    %v9256 = vunpack.c.h.b16 %v9163
    %v9257 = vunpack.c.l.b16 %v9164
    %v9258 = vunpack.c.h.b16 %v9164
    %v9259 = vunpack.c.l.b16 %v9165
    %v9260 = vunpack.c.h.b16 %v9165
    %v9261 = vunpack.c.l.b16 %v9166
    %v9262 = vunpack.c.h.b16 %v9166
    %v9263 = vpack.c.b16 %v9203, %v9199
    %v9264 = vpack.c.b16 %v9204, %v9200
    %v9265 = vpack.c.b16 %v9205, %v9201
    %v9266 = vpack.c.b16 %v9206, %v9202
    %v9267 = vpack.c.b16 %v9211, %v9207
    %v9268 = vpack.c.b16 %v9212, %v9208
    %v9269 = vpack.c.b16 %v9213, %v9209
    %v9270 = vpack.c.b16 %v9214, %v9210
    %v9271 = vpack.c.b16 %v9219, %v9215
    %v9272 = vpack.c.b16 %v9220, %v9216
    %v9273 = vpack.c.b16 %v9221, %v9217
    %v9274 = vpack.c.b16 %v9222, %v9218
    %v9275 = vpack.c.b16 %v9227, %v9223
    %v9276 = vpack.c.b16 %v9228, %v9224
    %v9277 = vpack.c.b16 %v9229, %v9225
    %v9278 = vpack.c.b16 %v9230, %v9226
    %v9279 = vpack.c.b16 %v9235, %v9231
    %v9280 = vpack.c.b16 %v9236, %v9232
    %v9281 = vpack.c.b16 %v9237, %v9233
    %v9282 = vpack.c.b16 %v9238, %v9234
    %v9283 = vpack.c.b16 %v9243, %v9239
    %v9284 = vpack.c.b16 %v9244, %v9240
    %v9285 = vpack.c.b16 %v9245, %v9241
    %v9286 = vpack.c.b16 %v9246, %v9242
    %v9287 = vpack.c.b16 %v9251, %v9247
    %v9288 = vpack.c.b16 %v9252, %v9248
    %v9289 = vpack.c.b16 %v9253, %v9249
    %v9290 = vpack.c.b16 %v9254, %v9250
    %v9291 = vpack.c.b16 %v9259, %v9255
    %v9292 = vpack.c.b16 %v9260, %v9256
    %v9293 = vpack.c.b16 %v9261, %v9257
    %v9294 = vpack.c.b16 %v9262, %v9258
    %9327 = vmatpush.bf16.msra.mxu0 %v9291
    %9328 = vmatpush.bf16.msra.mxu0 %v9287
    %9329 = vmatpush.bf16.msra.mxu0 %v9283
    %9330 = vmatpush.bf16.msra.mxu0 %v9279
    %9331 = vmatpush.bf16.msra.mxu0 %v9275
    %9332 = vmatpush.bf16.msra.mxu0 %v9271
    %9333 = vmatpush.bf16.msra.mxu0 %v9267
    %9334 = vmatpush.bf16.msra.mxu0 %v9263
    %9335 = vmatmul.bf16.gmra.mxu0 %v9134
    %v9336 = vpop.f32.mrf.mxu0
    %v9337 = vadd.f32 0.0, %v9336
    %v9338 = vpop.f32.mrf.mxu0
    %9339 = vdwg.mxu0
    %9340 = vmatpush.bf16.msra.mxu0 %v9292
    %9341 = vmatpush.bf16.msra.mxu0 %v9288
    %9342 = vmatpush.bf16.msra.mxu0 %v9284
    %9343 = vmatpush.bf16.msra.mxu0 %v9280
    %9344 = vmatpush.bf16.msra.mxu0 %v9276
    %9345 = vmatpush.bf16.msra.mxu0 %v9272
    %9346 = vmatpush.bf16.msra.mxu0 %v9268
    %9347 = vmatpush.bf16.msra.mxu0 %v9264
    %9348 = vmatmul.bf16.gmra.mxu0 %v9134
    %v9349 = vpop.f32.mrf.mxu0
    %v9350 = vadd.f32 0.0, %v9349
    %v9351 = vpop.f32.mrf.mxu0
    %9352 = vdwg.mxu0
    %9353 = vmatpush.bf16.msra.mxu0 %v9293
    %9354 = vmatpush.bf16.msra.mxu0 %v9289
    %9355 = vmatpush.bf16.msra.mxu0 %v9285
    %9356 = vmatpush.bf16.msra.mxu0 %v9281
    %9357 = vmatpush.bf16.msra.mxu0 %v9277
    %9358 = vmatpush.bf16.msra.mxu0 %v9273
    %9359 = vmatpush.bf16.msra.mxu0 %v9269
    %9360 = vmatpush.bf16.msra.mxu0 %v9265
    %9361 = vmatmul.bf16.gmra.mxu0 %v9134
    %v9362 = vpop.f32.mrf.mxu0
    %v9363 = vadd.f32 0.0, %v9362
    %v9364 = vpop.f32.mrf.mxu0
    %9365 = vdwg.mxu0
    %9366 = vmatpush.bf16.msra.mxu0 %v9294
    %9367 = vmatpush.bf16.msra.mxu0 %v9290
    %9368 = vmatpush.bf16.msra.mxu0 %v9286
    %9369 = vmatpush.bf16.msra.mxu0 %v9282
    %9370 = vmatpush.bf16.msra.mxu0 %v9278
    %9371 = vmatpush.bf16.msra.mxu0 %v9274
    %9372 = vmatpush.bf16.msra.mxu0 %v9270
    %9373 = vmatpush.bf16.msra.mxu0 %v9266
    %9374 = vmatmul.bf16.gmra.mxu0 %v9134
    %v9375 = vpop.f32.mrf.mxu0
    %v9376 = vadd.f32 0.0, %v9375
    %v9377 = vpop.f32.mrf.mxu0
    %9378 = vdwg.mxu0
    %v9380 = vrot.slane %v9350, 1
    %v9382 = vadd.f32 %v9337, %v9380
    %v9384 = vrot.slane %v9363, 2
    %v9386 = vadd.f32 %v9382, %v9384
    %v9388 = vrot.slane %v9376, 3
    %v9390 = vadd.f32 %v9386, %v9388
    %9391 = vst [vmem:[#allocation5 + $0x3] sm:$0x1] %v9390
    %v9392 = vld [vmem:[#allocation3 + $0xa] sm:$0xf]
    %v9393 = vpack.c.bf16 %v9392, %v9392
    %v9394 = vld [vmem:[#allocation6] sm:$0xff]
    %v9395 = vld [vmem:[#allocation6 + $0x8] sm:$0xff]
    %v9396 = vld [vmem:[#allocation6 + $0x10] sm:$0xff]
    %v9397 = vld [vmem:[#allocation6 + $0x18] sm:$0xff]
    %v9398 = vld [vmem:[#allocation6 + $0x20] sm:$0xff]
    %v9399 = vld [vmem:[#allocation6 + $0x28] sm:$0xff]
    %v9400 = vld [vmem:[#allocation6 + $0x30] sm:$0xff]
    %v9401 = vld [vmem:[#allocation6 + $0x38] sm:$0xff]
    %v9402 = vld [vmem:[#allocation6 + $0x40] sm:$0xff]
    %v9403 = vld [vmem:[#allocation6 + $0x48] sm:$0xff]
    %v9404 = vld [vmem:[#allocation6 + $0x50] sm:$0xff]
    %v9405 = vld [vmem:[#allocation6 + $0x58] sm:$0xff]
    %v9406 = vld [vmem:[#allocation6 + $0x60] sm:$0xff]
    %v9407 = vld [vmem:[#allocation6 + $0x68] sm:$0xff]
    %v9408 = vld [vmem:[#allocation6 + $0x70] sm:$0xff]
    %v9409 = vld [vmem:[#allocation6 + $0x78] sm:$0xff]
    %v9410 = vld [vmem:[#allocation6 + $0x80] sm:$0xff]
    %v9411 = vld [vmem:[#allocation6 + $0x88] sm:$0xff]
    %v9412 = vld [vmem:[#allocation6 + $0x90] sm:$0xff]
    %v9413 = vld [vmem:[#allocation6 + $0x98] sm:$0xff]
    %v9414 = vld [vmem:[#allocation6 + $0xa0] sm:$0xff]
    %v9415 = vld [vmem:[#allocation6 + $0xa8] sm:$0xff]
    %v9416 = vld [vmem:[#allocation6 + $0xb0] sm:$0xff]
    %v9417 = vld [vmem:[#allocation6 + $0xb8] sm:$0xff]
    %v9418 = vld [vmem:[#allocation6 + $0xc0] sm:$0xff]
    %v9419 = vld [vmem:[#allocation6 + $0xc8] sm:$0xff]
    %v9420 = vld [vmem:[#allocation6 + $0xd0] sm:$0xff]
    %v9421 = vld [vmem:[#allocation6 + $0xd8] sm:$0xff]
    %v9422 = vld [vmem:[#allocation6 + $0xe0] sm:$0xff]
    %v9423 = vld [vmem:[#allocation6 + $0xe8] sm:$0xff]
    %v9424 = vld [vmem:[#allocation6 + $0xf0] sm:$0xff]
    %v9425 = vld [vmem:[#allocation6 + $0xf8] sm:$0xff]
    %v9458 = vunpack.c.l.b16 %v9394
    %v9459 = vunpack.c.h.b16 %v9394
    %v9460 = vunpack.c.l.b16 %v9395
    %v9461 = vunpack.c.h.b16 %v9395
    %v9462 = vunpack.c.l.b16 %v9396
    %v9463 = vunpack.c.h.b16 %v9396
    %v9464 = vunpack.c.l.b16 %v9397
    %v9465 = vunpack.c.h.b16 %v9397
    %v9466 = vunpack.c.l.b16 %v9398
    %v9467 = vunpack.c.h.b16 %v9398
    %v9468 = vunpack.c.l.b16 %v9399
    %v9469 = vunpack.c.h.b16 %v9399
    %v9470 = vunpack.c.l.b16 %v9400
    %v9471 = vunpack.c.h.b16 %v9400
    %v9472 = vunpack.c.l.b16 %v9401
    %v9473 = vunpack.c.h.b16 %v9401
    %v9474 = vunpack.c.l.b16 %v9402
    %v9475 = vunpack.c.h.b16 %v9402
    %v9476 = vunpack.c.l.b16 %v9403
    %v9477 = vunpack.c.h.b16 %v9403
    %v9478 = vunpack.c.l.b16 %v9404
    %v9479 = vunpack.c.h.b16 %v9404
    %v9480 = vunpack.c.l.b16 %v9405
    %v9481 = vunpack.c.h.b16 %v9405
    %v9482 = vunpack.c.l.b16 %v9406
    %v9483 = vunpack.c.h.b16 %v9406
    %v9484 = vunpack.c.l.b16 %v9407
    %v9485 = vunpack.c.h.b16 %v9407
    %v9486 = vunpack.c.l.b16 %v9408
    %v9487 = vunpack.c.h.b16 %v9408
    %v9488 = vunpack.c.l.b16 %v9409
    %v9489 = vunpack.c.h.b16 %v9409
    %v9490 = vunpack.c.l.b16 %v9410
    %v9491 = vunpack.c.h.b16 %v9410
    %v9492 = vunpack.c.l.b16 %v9411
    %v9493 = vunpack.c.h.b16 %v9411
    %v9494 = vunpack.c.l.b16 %v9412
    %v9495 = vunpack.c.h.b16 %v9412
    %v9496 = vunpack.c.l.b16 %v9413
    %v9497 = vunpack.c.h.b16 %v9413
    %v9498 = vunpack.c.l.b16 %v9414
    %v9499 = vunpack.c.h.b16 %v9414
    %v9500 = vunpack.c.l.b16 %v9415
    %v9501 = vunpack.c.h.b16 %v9415
    %v9502 = vunpack.c.l.b16 %v9416
    %v9503 = vunpack.c.h.b16 %v9416
    %v9504 = vunpack.c.l.b16 %v9417
    %v9505 = vunpack.c.h.b16 %v9417
    %v9506 = vunpack.c.l.b16 %v9418
    %v9507 = vunpack.c.h.b16 %v9418
    %v9508 = vunpack.c.l.b16 %v9419
    %v9509 = vunpack.c.h.b16 %v9419
    %v9510 = vunpack.c.l.b16 %v9420
    %v9511 = vunpack.c.h.b16 %v9420
    %v9512 = vunpack.c.l.b16 %v9421
    %v9513 = vunpack.c.h.b16 %v9421
    %v9514 = vunpack.c.l.b16 %v9422
    %v9515 = vunpack.c.h.b16 %v9422
    %v9516 = vunpack.c.l.b16 %v9423
    %v9517 = vunpack.c.h.b16 %v9423
    %v9518 = vunpack.c.l.b16 %v9424
    %v9519 = vunpack.c.h.b16 %v9424
    %v9520 = vunpack.c.l.b16 %v9425
    %v9521 = vunpack.c.h.b16 %v9425
    %v9522 = vpack.c.b16 %v9462, %v9458
    %v9523 = vpack.c.b16 %v9463, %v9459
    %v9524 = vpack.c.b16 %v9464, %v9460
    %v9525 = vpack.c.b16 %v9465, %v9461
    %v9526 = vpack.c.b16 %v9470, %v9466
    %v9527 = vpack.c.b16 %v9471, %v9467
    %v9528 = vpack.c.b16 %v9472, %v9468
    %v9529 = vpack.c.b16 %v9473, %v9469
    %v9530 = vpack.c.b16 %v9478, %v9474
    %v9531 = vpack.c.b16 %v9479, %v9475
    %v9532 = vpack.c.b16 %v9480, %v9476
    %v9533 = vpack.c.b16 %v9481, %v9477
    %v9534 = vpack.c.b16 %v9486, %v9482
    %v9535 = vpack.c.b16 %v9487, %v9483
    %v9536 = vpack.c.b16 %v9488, %v9484
    %v9537 = vpack.c.b16 %v9489, %v9485
    %v9538 = vpack.c.b16 %v9494, %v9490
    %v9539 = vpack.c.b16 %v9495, %v9491
    %v9540 = vpack.c.b16 %v9496, %v9492
    %v9541 = vpack.c.b16 %v9497, %v9493
    %v9542 = vpack.c.b16 %v9502, %v9498
    %v9543 = vpack.c.b16 %v9503, %v9499
    %v9544 = vpack.c.b16 %v9504, %v9500
    %v9545 = vpack.c.b16 %v9505, %v9501
    %v9546 = vpack.c.b16 %v9510, %v9506
    %v9547 = vpack.c.b16 %v9511, %v9507
    %v9548 = vpack.c.b16 %v9512, %v9508
    %v9549 = vpack.c.b16 %v9513, %v9509
    %v9550 = vpack.c.b16 %v9518, %v9514
    %v9551 = vpack.c.b16 %v9519, %v9515
    %v9552 = vpack.c.b16 %v9520, %v9516
    %v9553 = vpack.c.b16 %v9521, %v9517
    %9586 = vmatpush.bf16.msra.mxu0 %v9550
    %9587 = vmatpush.bf16.msra.mxu0 %v9546
    %9588 = vmatpush.bf16.msra.mxu0 %v9542
    %9589 = vmatpush.bf16.msra.mxu0 %v9538
    %9590 = vmatpush.bf16.msra.mxu0 %v9534
    %9591 = vmatpush.bf16.msra.mxu0 %v9530
    %9592 = vmatpush.bf16.msra.mxu0 %v9526
    %9593 = vmatpush.bf16.msra.mxu0 %v9522
    %9594 = vmatmul.bf16.gmra.mxu0 %v9393
    %v9595 = vpop.f32.mrf.mxu0
    %v9596 = vadd.f32 0.0, %v9595
    %v9597 = vpop.f32.mrf.mxu0
    %9598 = vdwg.mxu0
    %9599 = vmatpush.bf16.msra.mxu0 %v9551
    %9600 = vmatpush.bf16.msra.mxu0 %v9547
    %9601 = vmatpush.bf16.msra.mxu0 %v9543
    %9602 = vmatpush.bf16.msra.mxu0 %v9539
    %9603 = vmatpush.bf16.msra.mxu0 %v9535
    %9604 = vmatpush.bf16.msra.mxu0 %v9531
    %9605 = vmatpush.bf16.msra.mxu0 %v9527
    %9606 = vmatpush.bf16.msra.mxu0 %v9523
    %9607 = vmatmul.bf16.gmra.mxu0 %v9393
    %v9608 = vpop.f32.mrf.mxu0
    %v9609 = vadd.f32 0.0, %v9608
    %v9610 = vpop.f32.mrf.mxu0
    %9611 = vdwg.mxu0
    %9612 = vmatpush.bf16.msra.mxu0 %v9552
    %9613 = vmatpush.bf16.msra.mxu0 %v9548
    %9614 = vmatpush.bf16.msra.mxu0 %v9544
    %9615 = vmatpush.bf16.msra.mxu0 %v9540
    %9616 = vmatpush.bf16.msra.mxu0 %v9536
    %9617 = vmatpush.bf16.msra.mxu0 %v9532
    %9618 = vmatpush.bf16.msra.mxu0 %v9528
    %9619 = vmatpush.bf16.msra.mxu0 %v9524
    %9620 = vmatmul.bf16.gmra.mxu0 %v9393
    %v9621 = vpop.f32.mrf.mxu0
    %v9622 = vadd.f32 0.0, %v9621
    %v9623 = vpop.f32.mrf.mxu0
    %9624 = vdwg.mxu0
    %9625 = vmatpush.bf16.msra.mxu0 %v9553
    %9626 = vmatpush.bf16.msra.mxu0 %v9549
    %9627 = vmatpush.bf16.msra.mxu0 %v9545
    %9628 = vmatpush.bf16.msra.mxu0 %v9541
    %9629 = vmatpush.bf16.msra.mxu0 %v9537
    %9630 = vmatpush.bf16.msra.mxu0 %v9533
    %9631 = vmatpush.bf16.msra.mxu0 %v9529
    %9632 = vmatpush.bf16.msra.mxu0 %v9525
    %9633 = vmatmul.bf16.gmra.mxu0 %v9393
    %v9634 = vpop.f32.mrf.mxu0
    %v9635 = vadd.f32 0.0, %v9634
    %v9636 = vpop.f32.mrf.mxu0
    %9637 = vdwg.mxu0
    %v9639 = vrot.slane %v9609, 1
    %v9641 = vadd.f32 %v9596, %v9639
    %v9643 = vrot.slane %v9622, 2
    %v9645 = vadd.f32 %v9641, %v9643
    %v9647 = vrot.slane %v9635, 3
    %v9649 = vadd.f32 %v9645, %v9647
    %9650 = vst [vmem:[#allocation5 + $0x4] sm:$0x1] %v9649
    %v9651 = vld [vmem:[#allocation3 + $0xc] sm:$0xf]
    %v9652 = vpack.c.bf16 %v9651, %v9651
    %v9653 = vld [vmem:[#allocation6] sm:$0xff]
    %v9654 = vld [vmem:[#allocation6 + $0x8] sm:$0xff]
    %v9655 = vld [vmem:[#allocation6 + $0x10] sm:$0xff]
    %v9656 = vld [vmem:[#allocation6 + $0x18] sm:$0xff]
    %v9657 = vld [vmem:[#allocation6 + $0x20] sm:$0xff]
    %v9658 = vld [vmem:[#allocation6 + $0x28] sm:$0xff]
    %v9659 = vld [vmem:[#allocation6 + $0x30] sm:$0xff]
    %v9660 = vld [vmem:[#allocation6 + $0x38] sm:$0xff]
    %v9661 = vld [vmem:[#allocation6 + $0x40] sm:$0xff]
    %v9662 = vld [vmem:[#allocation6 + $0x48] sm:$0xff]
    %v9663 = vld [vmem:[#allocation6 + $0x50] sm:$0xff]
    %v9664 = vld [vmem:[#allocation6 + $0x58] sm:$0xff]
    %v9665 = vld [vmem:[#allocation6 + $0x60] sm:$0xff]
    %v9666 = vld [vmem:[#allocation6 + $0x68] sm:$0xff]
    %v9667 = vld [vmem:[#allocation6 + $0x70] sm:$0xff]
    %v9668 = vld [vmem:[#allocation6 + $0x78] sm:$0xff]
    %v9669 = vld [vmem:[#allocation6 + $0x80] sm:$0xff]
    %v9670 = vld [vmem:[#allocation6 + $0x88] sm:$0xff]
    %v9671 = vld [vmem:[#allocation6 + $0x90] sm:$0xff]
    %v9672 = vld [vmem:[#allocation6 + $0x98] sm:$0xff]
    %v9673 = vld [vmem:[#allocation6 + $0xa0] sm:$0xff]
    %v9674 = vld [vmem:[#allocation6 + $0xa8] sm:$0xff]
    %v9675 = vld [vmem:[#allocation6 + $0xb0] sm:$0xff]
    %v9676 = vld [vmem:[#allocation6 + $0xb8] sm:$0xff]
    %v9677 = vld [vmem:[#allocation6 + $0xc0] sm:$0xff]
    %v9678 = vld [vmem:[#allocation6 + $0xc8] sm:$0xff]
    %v9679 = vld [vmem:[#allocation6 + $0xd0] sm:$0xff]
    %v9680 = vld [vmem:[#allocation6 + $0xd8] sm:$0xff]
    %v9681 = vld [vmem:[#allocation6 + $0xe0] sm:$0xff]
    %v9682 = vld [vmem:[#allocation6 + $0xe8] sm:$0xff]
    %v9683 = vld [vmem:[#allocation6 + $0xf0] sm:$0xff]
    %v9684 = vld [vmem:[#allocation6 + $0xf8] sm:$0xff]
    %v9717 = vunpack.c.l.b16 %v9653
    %v9718 = vunpack.c.h.b16 %v9653
    %v9719 = vunpack.c.l.b16 %v9654
    %v9720 = vunpack.c.h.b16 %v9654
    %v9721 = vunpack.c.l.b16 %v9655
    %v9722 = vunpack.c.h.b16 %v9655
    %v9723 = vunpack.c.l.b16 %v9656
    %v9724 = vunpack.c.h.b16 %v9656
    %v9725 = vunpack.c.l.b16 %v9657
    %v9726 = vunpack.c.h.b16 %v9657
    %v9727 = vunpack.c.l.b16 %v9658
    %v9728 = vunpack.c.h.b16 %v9658
    %v9729 = vunpack.c.l.b16 %v9659
    %v9730 = vunpack.c.h.b16 %v9659
    %v9731 = vunpack.c.l.b16 %v9660
    %v9732 = vunpack.c.h.b16 %v9660
    %v9733 = vunpack.c.l.b16 %v9661
    %v9734 = vunpack.c.h.b16 %v9661
    %v9735 = vunpack.c.l.b16 %v9662
    %v9736 = vunpack.c.h.b16 %v9662
    %v9737 = vunpack.c.l.b16 %v9663
    %v9738 = vunpack.c.h.b16 %v9663
    %v9739 = vunpack.c.l.b16 %v9664
    %v9740 = vunpack.c.h.b16 %v9664
    %v9741 = vunpack.c.l.b16 %v9665
    %v9742 = vunpack.c.h.b16 %v9665
    %v9743 = vunpack.c.l.b16 %v9666
    %v9744 = vunpack.c.h.b16 %v9666
    %v9745 = vunpack.c.l.b16 %v9667
    %v9746 = vunpack.c.h.b16 %v9667
    %v9747 = vunpack.c.l.b16 %v9668
    %v9748 = vunpack.c.h.b16 %v9668
    %v9749 = vunpack.c.l.b16 %v9669
    %v9750 = vunpack.c.h.b16 %v9669
    %v9751 = vunpack.c.l.b16 %v9670
    %v9752 = vunpack.c.h.b16 %v9670
    %v9753 = vunpack.c.l.b16 %v9671
    %v9754 = vunpack.c.h.b16 %v9671
    %v9755 = vunpack.c.l.b16 %v9672
    %v9756 = vunpack.c.h.b16 %v9672
    %v9757 = vunpack.c.l.b16 %v9673
    %v9758 = vunpack.c.h.b16 %v9673
    %v9759 = vunpack.c.l.b16 %v9674
    %v9760 = vunpack.c.h.b16 %v9674
    %v9761 = vunpack.c.l.b16 %v9675
    %v9762 = vunpack.c.h.b16 %v9675
    %v9763 = vunpack.c.l.b16 %v9676
    %v9764 = vunpack.c.h.b16 %v9676
    %v9765 = vunpack.c.l.b16 %v9677
    %v9766 = vunpack.c.h.b16 %v9677
    %v9767 = vunpack.c.l.b16 %v9678
    %v9768 = vunpack.c.h.b16 %v9678
    %v9769 = vunpack.c.l.b16 %v9679
    %v9770 = vunpack.c.h.b16 %v9679
    %v9771 = vunpack.c.l.b16 %v9680
    %v9772 = vunpack.c.h.b16 %v9680
    %v9773 = vunpack.c.l.b16 %v9681
    %v9774 = vunpack.c.h.b16 %v9681
    %v9775 = vunpack.c.l.b16 %v9682
    %v9776 = vunpack.c.h.b16 %v9682
    %v9777 = vunpack.c.l.b16 %v9683
    %v9778 = vunpack.c.h.b16 %v9683
    %v9779 = vunpack.c.l.b16 %v9684
    %v9780 = vunpack.c.h.b16 %v9684
    %v9781 = vpack.c.b16 %v9721, %v9717
    %v9782 = vpack.c.b16 %v9722, %v9718
    %v9783 = vpack.c.b16 %v9723, %v9719
    %v9784 = vpack.c.b16 %v9724, %v9720
    %v9785 = vpack.c.b16 %v9729, %v9725
    %v9786 = vpack.c.b16 %v9730, %v9726
    %v9787 = vpack.c.b16 %v9731, %v9727
    %v9788 = vpack.c.b16 %v9732, %v9728
    %v9789 = vpack.c.b16 %v9737, %v9733
    %v9790 = vpack.c.b16 %v9738, %v9734
    %v9791 = vpack.c.b16 %v9739, %v9735
    %v9792 = vpack.c.b16 %v9740, %v9736
    %v9793 = vpack.c.b16 %v9745, %v9741
    %v9794 = vpack.c.b16 %v9746, %v9742
    %v9795 = vpack.c.b16 %v9747, %v9743
    %v9796 = vpack.c.b16 %v9748, %v9744
    %v9797 = vpack.c.b16 %v9753, %v9749
    %v9798 = vpack.c.b16 %v9754, %v9750
    %v9799 = vpack.c.b16 %v9755, %v9751
    %v9800 = vpack.c.b16 %v9756, %v9752
    %v9801 = vpack.c.b16 %v9761, %v9757
    %v9802 = vpack.c.b16 %v9762, %v9758
    %v9803 = vpack.c.b16 %v9763, %v9759
    %v9804 = vpack.c.b16 %v9764, %v9760
    %v9805 = vpack.c.b16 %v9769, %v9765
    %v9806 = vpack.c.b16 %v9770, %v9766
    %v9807 = vpack.c.b16 %v9771, %v9767
    %v9808 = vpack.c.b16 %v9772, %v9768
    %v9809 = vpack.c.b16 %v9777, %v9773
    %v9810 = vpack.c.b16 %v9778, %v9774
    %v9811 = vpack.c.b16 %v9779, %v9775
    %v9812 = vpack.c.b16 %v9780, %v9776
    %9845 = vmatpush.bf16.msra.mxu0 %v9809
    %9846 = vmatpush.bf16.msra.mxu0 %v9805
    %9847 = vmatpush.bf16.msra.mxu0 %v9801
    %9848 = vmatpush.bf16.msra.mxu0 %v9797
    %9849 = vmatpush.bf16.msra.mxu0 %v9793
    %9850 = vmatpush.bf16.msra.mxu0 %v9789
    %9851 = vmatpush.bf16.msra.mxu0 %v9785
    %9852 = vmatpush.bf16.msra.mxu0 %v9781
    %9853 = vmatmul.bf16.gmra.mxu0 %v9652
    %v9854 = vpop.f32.mrf.mxu0
    %v9855 = vadd.f32 0.0, %v9854
    %v9856 = vpop.f32.mrf.mxu0
    %9857 = vdwg.mxu0
    %9858 = vmatpush.bf16.msra.mxu0 %v9810
    %9859 = vmatpush.bf16.msra.mxu0 %v9806
    %9860 = vmatpush.bf16.msra.mxu0 %v9802
    %9861 = vmatpush.bf16.msra.mxu0 %v9798
    %9862 = vmatpush.bf16.msra.mxu0 %v9794
    %9863 = vmatpush.bf16.msra.mxu0 %v9790
    %9864 = vmatpush.bf16.msra.mxu0 %v9786
    %9865 = vmatpush.bf16.msra.mxu0 %v9782
    %9866 = vmatmul.bf16.gmra.mxu0 %v9652
    %v9867 = vpop.f32.mrf.mxu0
    %v9868 = vadd.f32 0.0, %v9867
    %v9869 = vpop.f32.mrf.mxu0
    %9870 = vdwg.mxu0
    %9871 = vmatpush.bf16.msra.mxu0 %v9811
    %9872 = vmatpush.bf16.msra.mxu0 %v9807
    %9873 = vmatpush.bf16.msra.mxu0 %v9803
    %9874 = vmatpush.bf16.msra.mxu0 %v9799
    %9875 = vmatpush.bf16.msra.mxu0 %v9795
    %9876 = vmatpush.bf16.msra.mxu0 %v9791
    %9877 = vmatpush.bf16.msra.mxu0 %v9787
    %9878 = vmatpush.bf16.msra.mxu0 %v9783
    %9879 = vmatmul.bf16.gmra.mxu0 %v9652
    %v9880 = vpop.f32.mrf.mxu0
    %v9881 = vadd.f32 0.0, %v9880
    %v9882 = vpop.f32.mrf.mxu0
    %9883 = vdwg.mxu0
    %9884 = vmatpush.bf16.msra.mxu0 %v9812
    %9885 = vmatpush.bf16.msra.mxu0 %v9808
    %9886 = vmatpush.bf16.msra.mxu0 %v9804
    %9887 = vmatpush.bf16.msra.mxu0 %v9800
    %9888 = vmatpush.bf16.msra.mxu0 %v9796
    %9889 = vmatpush.bf16.msra.mxu0 %v9792
    %9890 = vmatpush.bf16.msra.mxu0 %v9788
    %9891 = vmatpush.bf16.msra.mxu0 %v9784
    %9892 = vmatmul.bf16.gmra.mxu0 %v9652
    %v9893 = vpop.f32.mrf.mxu0
    %v9894 = vadd.f32 0.0, %v9893
    %v9895 = vpop.f32.mrf.mxu0
    %9896 = vdwg.mxu0
    %v9898 = vrot.slane %v9868, 1
    %v9900 = vadd.f32 %v9855, %v9898
    %v9902 = vrot.slane %v9881, 2
    %v9904 = vadd.f32 %v9900, %v9902
    %v9906 = vrot.slane %v9894, 3
    %v9908 = vadd.f32 %v9904, %v9906
    %9909 = vst [vmem:[#allocation5 + $0x5] sm:$0x1] %v9908
    %v9910 = vld [vmem:[#allocation3 + $0xe] sm:$0xf]
    %v9911 = vpack.c.bf16 %v9910, %v9910
    %v9912 = vld [vmem:[#allocation6] sm:$0xff]
    %v9913 = vld [vmem:[#allocation6 + $0x8] sm:$0xff]
    %v9914 = vld [vmem:[#allocation6 + $0x10] sm:$0xff]
    %v9915 = vld [vmem:[#allocation6 + $0x18] sm:$0xff]
    %v9916 = vld [vmem:[#allocation6 + $0x20] sm:$0xff]
    %v9917 = vld [vmem:[#allocation6 + $0x28] sm:$0xff]
    %v9918 = vld [vmem:[#allocation6 + $0x30] sm:$0xff]
    %v9919 = vld [vmem:[#allocation6 + $0x38] sm:$0xff]
    %v9920 = vld [vmem:[#allocation6 + $0x40] sm:$0xff]
    %v9921 = vld [vmem:[#allocation6 + $0x48] sm:$0xff]
    %v9922 = vld [vmem:[#allocation6 + $0x50] sm:$0xff]
    %v9923 = vld [vmem:[#allocation6 + $0x58] sm:$0xff]
    %v9924 = vld [vmem:[#allocation6 + $0x60] sm:$0xff]
    %v9925 = vld [vmem:[#allocation6 + $0x68] sm:$0xff]
    %v9926 = vld [vmem:[#allocation6 + $0x70] sm:$0xff]
    %v9927 = vld [vmem:[#allocation6 + $0x78] sm:$0xff]
    %v9928 = vld [vmem:[#allocation6 + $0x80] sm:$0xff]
    %v9929 = vld [vmem:[#allocation6 + $0x88] sm:$0xff]
    %v9930 = vld [vmem:[#allocation6 + $0x90] sm:$0xff]
    %v9931 = vld [vmem:[#allocation6 + $0x98] sm:$0xff]
    %v9932 = vld [vmem:[#allocation6 + $0xa0] sm:$0xff]
    %v9933 = vld [vmem:[#allocation6 + $0xa8] sm:$0xff]
    %v9934 = vld [vmem:[#allocation6 + $0xb0] sm:$0xff]
    %v9935 = vld [vmem:[#allocation6 + $0xb8] sm:$0xff]
    %v9936 = vld [vmem:[#allocation6 + $0xc0] sm:$0xff]
    %v9937 = vld [vmem:[#allocation6 + $0xc8] sm:$0xff]
    %v9938 = vld [vmem:[#allocation6 + $0xd0] sm:$0xff]
    %v9939 = vld [vmem:[#allocation6 + $0xd8] sm:$0xff]
    %v9940 = vld [vmem:[#allocation6 + $0xe0] sm:$0xff]
    %v9941 = vld [vmem:[#allocation6 + $0xe8] sm:$0xff]
    %v9942 = vld [vmem:[#allocation6 + $0xf0] sm:$0xff]
    %v9943 = vld [vmem:[#allocation6 + $0xf8] sm:$0xff]
    %v9976 = vunpack.c.l.b16 %v9912
    %v9977 = vunpack.c.h.b16 %v9912
    %v9978 = vunpack.c.l.b16 %v9913
    %v9979 = vunpack.c.h.b16 %v9913
    %v9980 = vunpack.c.l.b16 %v9914
    %v9981 = vunpack.c.h.b16 %v9914
    %v9982 = vunpack.c.l.b16 %v9915
    %v9983 = vunpack.c.h.b16 %v9915
    %v9984 = vunpack.c.l.b16 %v9916
    %v9985 = vunpack.c.h.b16 %v9916
    %v9986 = vunpack.c.l.b16 %v9917
    %v9987 = vunpack.c.h.b16 %v9917
    %v9988 = vunpack.c.l.b16 %v9918
    %v9989 = vunpack.c.h.b16 %v9918
    %v9990 = vunpack.c.l.b16 %v9919
    %v9991 = vunpack.c.h.b16 %v9919
    %v9992 = vunpack.c.l.b16 %v9920
    %v9993 = vunpack.c.h.b16 %v9920
    %v9994 = vunpack.c.l.b16 %v9921
    %v9995 = vunpack.c.h.b16 %v9921
    %v9996 = vunpack.c.l.b16 %v9922
    %v9997 = vunpack.c.h.b16 %v9922
    %v9998 = vunpack.c.l.b16 %v9923
    %v9999 = vunpack.c.h.b16 %v9923
    %v10000 = vunpack.c.l.b16 %v9924
    %v10001 = vunpack.c.h.b16 %v9924
    %v10002 = vunpack.c.l.b16 %v9925
    %v10003 = vunpack.c.h.b16 %v9925
    %v10004 = vunpack.c.l.b16 %v9926
    %v10005 = vunpack.c.h.b16 %v9926
    %v10006 = vunpack.c.l.b16 %v9927
    %v10007 = vunpack.c.h.b16 %v9927
    %v10008 = vunpack.c.l.b16 %v9928
    %v10009 = vunpack.c.h.b16 %v9928
    %v10010 = vunpack.c.l.b16 %v9929
    %v10011 = vunpack.c.h.b16 %v9929
    %v10012 = vunpack.c.l.b16 %v9930
    %v10013 = vunpack.c.h.b16 %v9930
    %v10014 = vunpack.c.l.b16 %v9931
    %v10015 = vunpack.c.h.b16 %v9931
    %v10016 = vunpack.c.l.b16 %v9932
    %v10017 = vunpack.c.h.b16 %v9932
    %v10018 = vunpack.c.l.b16 %v9933
    %v10019 = vunpack.c.h.b16 %v9933
    %v10020 = vunpack.c.l.b16 %v9934
    %v10021 = vunpack.c.h.b16 %v9934
    %v10022 = vunpack.c.l.b16 %v9935
    %v10023 = vunpack.c.h.b16 %v9935
    %v10024 = vunpack.c.l.b16 %v9936
    %v10025 = vunpack.c.h.b16 %v9936
    %v10026 = vunpack.c.l.b16 %v9937
    %v10027 = vunpack.c.h.b16 %v9937
    %v10028 = vunpack.c.l.b16 %v9938
    %v10029 = vunpack.c.h.b16 %v9938
    %v10030 = vunpack.c.l.b16 %v9939
    %v10031 = vunpack.c.h.b16 %v9939
    %v10032 = vunpack.c.l.b16 %v9940
    %v10033 = vunpack.c.h.b16 %v9940
    %v10034 = vunpack.c.l.b16 %v9941
    %v10035 = vunpack.c.h.b16 %v9941
    %v10036 = vunpack.c.l.b16 %v9942
    %v10037 = vunpack.c.h.b16 %v9942
    %v10038 = vunpack.c.l.b16 %v9943
    %v10039 = vunpack.c.h.b16 %v9943
    %v10040 = vpack.c.b16 %v9980, %v9976
    %v10041 = vpack.c.b16 %v9981, %v9977
    %v10042 = vpack.c.b16 %v9982, %v9978
    %v10043 = vpack.c.b16 %v9983, %v9979
    %v10044 = vpack.c.b16 %v9988, %v9984
    %v10045 = vpack.c.b16 %v9989, %v9985
    %v10046 = vpack.c.b16 %v9990, %v9986
    %v10047 = vpack.c.b16 %v9991, %v9987
    %v10048 = vpack.c.b16 %v9996, %v9992
    %v10049 = vpack.c.b16 %v9997, %v9993
    %v10050 = vpack.c.b16 %v9998, %v9994
    %v10051 = vpack.c.b16 %v9999, %v9995
    %v10052 = vpack.c.b16 %v10004, %v10000
    %v10053 = vpack.c.b16 %v10005, %v10001
    %v10054 = vpack.c.b16 %v10006, %v10002
    %v10055 = vpack.c.b16 %v10007, %v10003
    %v10056 = vpack.c.b16 %v10012, %v10008
    %v10057 = vpack.c.b16 %v10013, %v10009
    %v10058 = vpack.c.b16 %v10014, %v10010
    %v10059 = vpack.c.b16 %v10015, %v10011
    %v10060 = vpack.c.b16 %v10020, %v10016
    %v10061 = vpack.c.b16 %v10021, %v10017
    %v10062 = vpack.c.b16 %v10022, %v10018
    %v10063 = vpack.c.b16 %v10023, %v10019
    %v10064 = vpack.c.b16 %v10028, %v10024
    %v10065 = vpack.c.b16 %v10029, %v10025
    %v10066 = vpack.c.b16 %v10030, %v10026
    %v10067 = vpack.c.b16 %v10031, %v10027
    %v10068 = vpack.c.b16 %v10036, %v10032
    %v10069 = vpack.c.b16 %v10037, %v10033
    %v10070 = vpack.c.b16 %v10038, %v10034
    %v10071 = vpack.c.b16 %v10039, %v10035
    %10104 = vmatpush.bf16.msra.mxu0 %v10068
    %10105 = vmatpush.bf16.msra.mxu0 %v10064
    %10106 = vmatpush.bf16.msra.mxu0 %v10060
    %10107 = vmatpush.bf16.msra.mxu0 %v10056
    %10108 = vmatpush.bf16.msra.mxu0 %v10052
    %10109 = vmatpush.bf16.msra.mxu0 %v10048
    %10110 = vmatpush.bf16.msra.mxu0 %v10044
    %10111 = vmatpush.bf16.msra.mxu0 %v10040
    %10112 = vmatmul.bf16.gmra.mxu0 %v9911
    %v10113 = vpop.f32.mrf.mxu0
    %v10114 = vadd.f32 0.0, %v10113
    %v10115 = vpop.f32.mrf.mxu0
    %10116 = vdwg.mxu0
    %10117 = vmatpush.bf16.msra.mxu0 %v10069
    %10118 = vmatpush.bf16.msra.mxu0 %v10065
    %10119 = vmatpush.bf16.msra.mxu0 %v10061
    %10120 = vmatpush.bf16.msra.mxu0 %v10057
    %10121 = vmatpush.bf16.msra.mxu0 %v10053
    %10122 = vmatpush.bf16.msra.mxu0 %v10049
    %10123 = vmatpush.bf16.msra.mxu0 %v10045
    %10124 = vmatpush.bf16.msra.mxu0 %v10041
    %10125 = vmatmul.bf16.gmra.mxu0 %v9911
    %v10126 = vpop.f32.mrf.mxu0
    %v10127 = vadd.f32 0.0, %v10126
    %v10128 = vpop.f32.mrf.mxu0
    %10129 = vdwg.mxu0
    %10130 = vmatpush.bf16.msra.mxu0 %v10070
    %10131 = vmatpush.bf16.msra.mxu0 %v10066
    %10132 = vmatpush.bf16.msra.mxu0 %v10062
    %10133 = vmatpush.bf16.msra.mxu0 %v10058
    %10134 = vmatpush.bf16.msra.mxu0 %v10054
    %10135 = vmatpush.bf16.msra.mxu0 %v10050
    %10136 = vmatpush.bf16.msra.mxu0 %v10046
    %10137 = vmatpush.bf16.msra.mxu0 %v10042
    %10138 = vmatmul.bf16.gmra.mxu0 %v9911
    %v10139 = vpop.f32.mrf.mxu0
    %v10140 = vadd.f32 0.0, %v10139
    %v10141 = vpop.f32.mrf.mxu0
    %10142 = vdwg.mxu0
    %10143 = vmatpush.bf16.msra.mxu0 %v10071
    %10144 = vmatpush.bf16.msra.mxu0 %v10067
    %10145 = vmatpush.bf16.msra.mxu0 %v10063
    %10146 = vmatpush.bf16.msra.mxu0 %v10059
    %10147 = vmatpush.bf16.msra.mxu0 %v10055
    %10148 = vmatpush.bf16.msra.mxu0 %v10051
    %10149 = vmatpush.bf16.msra.mxu0 %v10047
    %10150 = vmatpush.bf16.msra.mxu0 %v10043
    %10151 = vmatmul.bf16.gmra.mxu0 %v9911
    %v10152 = vpop.f32.mrf.mxu0
    %v10153 = vadd.f32 0.0, %v10152
    %v10154 = vpop.f32.mrf.mxu0
    %10155 = vdwg.mxu0
    %v10157 = vrot.slane %v10127, 1
    %v10159 = vadd.f32 %v10114, %v10157
    %v10161 = vrot.slane %v10140, 2
    %v10163 = vadd.f32 %v10159, %v10161
    %v10165 = vrot.slane %v10153, 3
    %v10167 = vadd.f32 %v10163, %v10165
    %10168 = vst [vmem:[#allocation5 + $0x6] sm:$0x1] %v10167
    %v10169 = vld [vmem:[#allocation3 + $0x10] sm:$0xf]
    %v10170 = vpack.c.bf16 %v10169, %v10169
    %v10171 = vld [vmem:[#allocation6] sm:$0xff]
    %v10172 = vld [vmem:[#allocation6 + $0x8] sm:$0xff]
    %v10173 = vld [vmem:[#allocation6 + $0x10] sm:$0xff]
    %v10174 = vld [vmem:[#allocation6 + $0x18] sm:$0xff]
    %v10175 = vld [vmem:[#allocation6 + $0x20] sm:$0xff]
    %v10176 = vld [vmem:[#allocation6 + $0x28] sm:$0xff]
    %v10177 = vld [vmem:[#allocation6 + $0x30] sm:$0xff]
    %v10178 = vld [vmem:[#allocation6 + $0x38] sm:$0xff]
    %v10179 = vld [vmem:[#allocation6 + $0x40] sm:$0xff]
    %v10180 = vld [vmem:[#allocation6 + $0x48] sm:$0xff]
    %v10181 = vld [vmem:[#allocation6 + $0x50] sm:$0xff]
    %v10182 = vld [vmem:[#allocation6 + $0x58] sm:$0xff]
    %v10183 = vld [vmem:[#allocation6 + $0x60] sm:$0xff]
    %v10184 = vld [vmem:[#allocation6 + $0x68] sm:$0xff]
    %v10185 = vld [vmem:[#allocation6 + $0x70] sm:$0xff]
    %v10186 = vld [vmem:[#allocation6 + $0x78] sm:$0xff]
    %v10187 = vld [vmem:[#allocation6 + $0x80] sm:$0xff]
    %v10188 = vld [vmem:[#allocation6 + $0x88] sm:$0xff]
    %v10189 = vld [vmem:[#allocation6 + $0x90] sm:$0xff]
    %v10190 = vld [vmem:[#allocation6 + $0x98] sm:$0xff]
    %v10191 = vld [vmem:[#allocation6 + $0xa0] sm:$0xff]
    %v10192 = vld [vmem:[#allocation6 + $0xa8] sm:$0xff]
    %v10193 = vld [vmem:[#allocation6 + $0xb0] sm:$0xff]
    %v10194 = vld [vmem:[#allocation6 + $0xb8] sm:$0xff]
    %v10195 = vld [vmem:[#allocation6 + $0xc0] sm:$0xff]
    %v10196 = vld [vmem:[#allocation6 + $0xc8] sm:$0xff]
    %v10197 = vld [vmem:[#allocation6 + $0xd0] sm:$0xff]
    %v10198 = vld [vmem:[#allocation6 + $0xd8] sm:$0xff]
    %v10199 = vld [vmem:[#allocation6 + $0xe0] sm:$0xff]
    %v10200 = vld [vmem:[#allocation6 + $0xe8] sm:$0xff]
    %v10201 = vld [vmem:[#allocation6 + $0xf0] sm:$0xff]
    %v10202 = vld [vmem:[#allocation6 + $0xf8] sm:$0xff]
    %v10235 = vunpack.c.l.b16 %v10171
    %v10236 = vunpack.c.h.b16 %v10171
    %v10237 = vunpack.c.l.b16 %v10172
    %v10238 = vunpack.c.h.b16 %v10172
    %v10239 = vunpack.c.l.b16 %v10173
    %v10240 = vunpack.c.h.b16 %v10173
    %v10241 = vunpack.c.l.b16 %v10174
    %v10242 = vunpack.c.h.b16 %v10174
    %v10243 = vunpack.c.l.b16 %v10175
    %v10244 = vunpack.c.h.b16 %v10175
    %v10245 = vunpack.c.l.b16 %v10176
    %v10246 = vunpack.c.h.b16 %v10176
    %v10247 = vunpack.c.l.b16 %v10177
    %v10248 = vunpack.c.h.b16 %v10177
    %v10249 = vunpack.c.l.b16 %v10178
    %v10250 = vunpack.c.h.b16 %v10178
    %v10251 = vunpack.c.l.b16 %v10179
    %v10252 = vunpack.c.h.b16 %v10179
    %v10253 = vunpack.c.l.b16 %v10180
    %v10254 = vunpack.c.h.b16 %v10180
    %v10255 = vunpack.c.l.b16 %v10181
    %v10256 = vunpack.c.h.b16 %v10181
    %v10257 = vunpack.c.l.b16 %v10182
    %v10258 = vunpack.c.h.b16 %v10182
    %v10259 = vunpack.c.l.b16 %v10183
    %v10260 = vunpack.c.h.b16 %v10183
    %v10261 = vunpack.c.l.b16 %v10184
    %v10262 = vunpack.c.h.b16 %v10184
    %v10263 = vunpack.c.l.b16 %v10185
    %v10264 = vunpack.c.h.b16 %v10185
    %v10265 = vunpack.c.l.b16 %v10186
    %v10266 = vunpack.c.h.b16 %v10186
    %v10267 = vunpack.c.l.b16 %v10187
    %v10268 = vunpack.c.h.b16 %v10187
    %v10269 = vunpack.c.l.b16 %v10188
    %v10270 = vunpack.c.h.b16 %v10188
    %v10271 = vunpack.c.l.b16 %v10189
    %v10272 = vunpack.c.h.b16 %v10189
    %v10273 = vunpack.c.l.b16 %v10190
    %v10274 = vunpack.c.h.b16 %v10190
    %v10275 = vunpack.c.l.b16 %v10191
    %v10276 = vunpack.c.h.b16 %v10191
    %v10277 = vunpack.c.l.b16 %v10192
    %v10278 = vunpack.c.h.b16 %v10192
    %v10279 = vunpack.c.l.b16 %v10193
    %v10280 = vunpack.c.h.b16 %v10193
    %v10281 = vunpack.c.l.b16 %v10194
    %v10282 = vunpack.c.h.b16 %v10194
    %v10283 = vunpack.c.l.b16 %v10195
    %v10284 = vunpack.c.h.b16 %v10195
    %v10285 = vunpack.c.l.b16 %v10196
    %v10286 = vunpack.c.h.b16 %v10196
    %v10287 = vunpack.c.l.b16 %v10197
    %v10288 = vunpack.c.h.b16 %v10197
    %v10289 = vunpack.c.l.b16 %v10198
    %v10290 = vunpack.c.h.b16 %v10198
    %v10291 = vunpack.c.l.b16 %v10199
    %v10292 = vunpack.c.h.b16 %v10199
    %v10293 = vunpack.c.l.b16 %v10200
    %v10294 = vunpack.c.h.b16 %v10200
    %v10295 = vunpack.c.l.b16 %v10201
    %v10296 = vunpack.c.h.b16 %v10201
    %v10297 = vunpack.c.l.b16 %v10202
    %v10298 = vunpack.c.h.b16 %v10202
    %v10299 = vpack.c.b16 %v10239, %v10235
    %v10300 = vpack.c.b16 %v10240, %v10236
    %v10301 = vpack.c.b16 %v10241, %v10237
    %v10302 = vpack.c.b16 %v10242, %v10238
    %v10303 = vpack.c.b16 %v10247, %v10243
    %v10304 = vpack.c.b16 %v10248, %v10244
    %v10305 = vpack.c.b16 %v10249, %v10245
    %v10306 = vpack.c.b16 %v10250, %v10246
    %v10307 = vpack.c.b16 %v10255, %v10251
    %v10308 = vpack.c.b16 %v10256, %v10252
    %v10309 = vpack.c.b16 %v10257, %v10253
    %v10310 = vpack.c.b16 %v10258, %v10254
    %v10311 = vpack.c.b16 %v10263, %v10259
    %v10312 = vpack.c.b16 %v10264, %v10260
    %v10313 = vpack.c.b16 %v10265, %v10261
    %v10314 = vpack.c.b16 %v10266, %v10262
    %v10315 = vpack.c.b16 %v10271, %v10267
    %v10316 = vpack.c.b16 %v10272, %v10268
    %v10317 = vpack.c.b16 %v10273, %v10269
    %v10318 = vpack.c.b16 %v10274, %v10270
    %v10319 = vpack.c.b16 %v10279, %v10275
    %v10320 = vpack.c.b16 %v10280, %v10276
    %v10321 = vpack.c.b16 %v10281, %v10277
    %v10322 = vpack.c.b16 %v10282, %v10278
    %v10323 = vpack.c.b16 %v10287, %v10283
    %v10324 = vpack.c.b16 %v10288, %v10284
    %v10325 = vpack.c.b16 %v10289, %v10285
    %v10326 = vpack.c.b16 %v10290, %v10286
    %v10327 = vpack.c.b16 %v10295, %v10291
    %v10328 = vpack.c.b16 %v10296, %v10292
    %v10329 = vpack.c.b16 %v10297, %v10293
    %v10330 = vpack.c.b16 %v10298, %v10294
    %10363 = vmatpush.bf16.msra.mxu0 %v10327
    %10364 = vmatpush.bf16.msra.mxu0 %v10323
    %10365 = vmatpush.bf16.msra.mxu0 %v10319
    %10366 = vmatpush.bf16.msra.mxu0 %v10315
    %10367 = vmatpush.bf16.msra.mxu0 %v10311
    %10368 = vmatpush.bf16.msra.mxu0 %v10307
    %10369 = vmatpush.bf16.msra.mxu0 %v10303
    %10370 = vmatpush.bf16.msra.mxu0 %v10299
    %10371 = vmatmul.bf16.gmra.mxu0 %v10170
    %v10372 = vpop.f32.mrf.mxu0
    %v10373 = vadd.f32 0.0, %v10372
    %v10374 = vpop.f32.mrf.mxu0
    %10375 = vdwg.mxu0
    %10376 = vmatpush.bf16.msra.mxu0 %v10328
    %10377 = vmatpush.bf16.msra.mxu0 %v10324
    %10378 = vmatpush.bf16.msra.mxu0 %v10320
    %10379 = vmatpush.bf16.msra.mxu0 %v10316
    %10380 = vmatpush.bf16.msra.mxu0 %v10312
    %10381 = vmatpush.bf16.msra.mxu0 %v10308
    %10382 = vmatpush.bf16.msra.mxu0 %v10304
    %10383 = vmatpush.bf16.msra.mxu0 %v10300
    %10384 = vmatmul.bf16.gmra.mxu0 %v10170
    %v10385 = vpop.f32.mrf.mxu0
    %v10386 = vadd.f32 0.0, %v10385
    %v10387 = vpop.f32.mrf.mxu0
    %10388 = vdwg.mxu0
    %10389 = vmatpush.bf16.msra.mxu0 %v10329
    %10390 = vmatpush.bf16.msra.mxu0 %v10325
    %10391 = vmatpush.bf16.msra.mxu0 %v10321
    %10392 = vmatpush.bf16.msra.mxu0 %v10317
    %10393 = vmatpush.bf16.msra.mxu0 %v10313
    %10394 = vmatpush.bf16.msra.mxu0 %v10309
    %10395 = vmatpush.bf16.msra.mxu0 %v10305
    %10396 = vmatpush.bf16.msra.mxu0 %v10301
    %10397 = vmatmul.bf16.gmra.mxu0 %v10170
    %v10398 = vpop.f32.mrf.mxu0
    %v10399 = vadd.f32 0.0, %v10398
    %v10400 = vpop.f32.mrf.mxu0
    %10401 = vdwg.mxu0
    %10402 = vmatpush.bf16.msra.mxu0 %v10330
    %10403 = vmatpush.bf16.msra.mxu0 %v10326
    %10404 = vmatpush.bf16.msra.mxu0 %v10322
    %10405 = vmatpush.bf16.msra.mxu0 %v10318
    %10406 = vmatpush.bf16.msra.mxu0 %v10314
    %10407 = vmatpush.bf16.msra.mxu0 %v10310
    %10408 = vmatpush.bf16.msra.mxu0 %v10306
    %10409 = vmatpush.bf16.msra.mxu0 %v10302
    %10410 = vmatmul.bf16.gmra.mxu0 %v10170
    %v10411 = vpop.f32.mrf.mxu0
    %v10412 = vadd.f32 0.0, %v10411
    %v10413 = vpop.f32.mrf.mxu0
    %10414 = vdwg.mxu0
    %v10416 = vrot.slane %v10386, 1
    %v10418 = vadd.f32 %v10373, %v10416
    %v10420 = vrot.slane %v10399, 2
    %v10422 = vadd.f32 %v10418, %v10420
    %v10424 = vrot.slane %v10412, 3
    %v10426 = vadd.f32 %v10422, %v10424
    %10427 = vst [vmem:[#allocation5 + $0x7] sm:$0x1] %v10426
    %v10428 = vld [vmem:[#allocation5] sm:$0xff]
    %v10429 = vld [vmem:[%s7] sm:$0x1]
    %v10430 = vld [vmem:[%s8] sm:$0x1]
    %v10431 = vrot.slane %v10428, 4
    %v10432 = vadd.f32 %v10428, %v10431
    %v10433 = vrot.slane %v10432, 2
    %v10434 = vadd.f32 %v10432, %v10433
    %v10435 = vrot.slane %v10434, 1
    %v10436 = vadd.f32 %v10434, %v10435
    %10438 = vrot.lane.b32.xlu0 %v10436, 96
    %v10439 = vpop.permute.xlu0 %10438
    %v10441 = vadd.f32 %v10436, %v10439
    %10442 = vrot.lane.b32.xlu0 %v10436, 64
    %v10443 = vpop.permute.xlu0 %10442
    %v10445 = vadd.f32 %v10441, %v10443
    %10446 = vrot.lane.b32.xlu0 %v10436, 32
    %v10447 = vpop.permute.xlu0 %10446
    %v10449 = vadd.f32 %v10445, %v10447
    %v10450 = vrcp.pop 32.0
    %v10451 = vmul.f32 32.0, %v10450
    %v10452 = vsub.f32 1.0, %v10451
    %v10453 = vmul.f32 %v10450, %v10452
    %v10454 = vadd.f32 %v10450, %v10453
    %vm10455 = vweird.f32 %v10450
    %v10456 = vsel %vm10455, %v10450, %v10454
    %v10457 = vmul.f32 %v10449, %v10456
    %10459 = vrot.lane.b32.xlu0 %v10457, 32
    %v10460 = vpop.permute.xlu0 %10459
    %10462 = vrot.lane.b32.xlu0 %v10457, 64
    %v10463 = vpop.permute.xlu0 %10462
    %10465 = vrot.lane.b32.xlu0 %v10457, 96
    %v10466 = vpop.permute.xlu0 %10465
    %v10468 = vsel %vm114, %v10457, %v10460
    %v10469 = vsel %vm8220, %v10468, %v10463
    %v10470 = vsel %vm8224, %v10469, %v10466
    %v10471 = vperm.slane %v10470, 0
    %v10472 = vsub.f32 %v10428, %v10471
    %v10473 = vmul.f32 %v10472, %v10472
    %v10474 = vrot.slane %v10473, 4
    %v10475 = vadd.f32 %v10473, %v10474
    %v10476 = vrot.slane %v10475, 2
    %v10477 = vadd.f32 %v10475, %v10476
    %v10478 = vrot.slane %v10477, 1
    %v10479 = vadd.f32 %v10477, %v10478
    %10481 = vrot.lane.b32.xlu0 %v10479, 96
    %v10482 = vpop.permute.xlu0 %10481
    %v10484 = vadd.f32 %v10479, %v10482
    %10485 = vrot.lane.b32.xlu0 %v10479, 64
    %v10486 = vpop.permute.xlu0 %10485
    %v10488 = vadd.f32 %v10484, %v10486
    %10489 = vrot.lane.b32.xlu0 %v10479, 32
    %v10490 = vpop.permute.xlu0 %10489
    %v10492 = vadd.f32 %v10488, %v10490
    %v10493 = vmul.f32 %v10492, %v10456
    %v10494 = vadd.f32 %v10493, 1e-05
    %v10495 = vrsqrt.pop %v10494
    %v10496 = vmul.f32 %v10495, %v10494
    %v10497 = vmul.f32 %v10496, %v10495
    %v10498 = vmul.f32 0.5, %v10497
    %v10499 = vsub.f32 1.5, %v10498
    %v10500 = vmul.f32 %v10495, %v10499
    %vm10501 = vweird.f32 %v10494
    %vm10502 = vweird.f32 %v10495
    %vm10503 = vmor %vm10501, %vm10502
    %v10504 = vsel %vm10503, %v10495, %v10500
    %v10505 = vmul.f32 %v10429, %v10504
    %v10507 = vperm.slane %v10505, 0
    %10508 = vrot.lane.b32.xlu0 %v10507, 32
    %v10509 = vpop.permute.xlu0 %10508
    %10511 = vrot.lane.b32.xlu0 %v10507, 64
    %v10512 = vpop.permute.xlu0 %10511
    %10514 = vrot.lane.b32.xlu0 %v10507, 96
    %v10515 = vpop.permute.xlu0 %10514
    %v10517 = vsel %vm114, %v10505, %v10509
    %v10518 = vsel %vm8220, %v10517, %v10512
    %v10519 = vsel %vm8224, %v10518, %v10515
    %v10520 = vperm.slane %v10519, 0
    %v10521 = vmul.f32 %v10472, %v10520
    %v10523 = vperm.slane %v10430, 0
    %10524 = vrot.lane.b32.xlu0 %v10523, 32
    %v10525 = vpop.permute.xlu0 %10524
    %10527 = vrot.lane.b32.xlu0 %v10523, 64
    %v10528 = vpop.permute.xlu0 %10527
    %10530 = vrot.lane.b32.xlu0 %v10523, 96
    %v10531 = vpop.permute.xlu0 %10530
    %v10533 = vsel %vm114, %v10430, %v10525
    %v10534 = vsel %vm8220, %v10533, %v10528
    %v10535 = vsel %vm8224, %v10534, %v10531
    %v10536 = vperm.slane %v10535, 0
    %v10537 = vadd.f32 %v10521, %v10536
    %vm10538 = vcmp.gt.f32.partialorder %v10537, 0.0
    %v10539 = vmul.f32 %v10537, 0.2
    %v10540 = vsel %vm10538, %v10537, %v10539
    %10541 = vst [vmem:[#allocation5] sm:$0xff] %v10540
    %v10542 = vld [vmem:[#allocation5] sm:$0xf]
    %v10543 = vpack.c.bf16 %v10542, %v10542
    %v10544 = vld [vmem:[%s9] sm:$0xf]
    %v10545 = vld [vmem:[%s9 + $0x4] sm:$0xf]
    %v10546 = vld [vmem:[%s9 + $0x8] sm:$0xf]
    %v10547 = vld [vmem:[%s9 + $0xc] sm:$0xf]
    %v10548 = vld [vmem:[%s9 + $0x10] sm:$0xf]
    %v10549 = vld [vmem:[%s9 + $0x14] sm:$0xf]
    %v10550 = vld [vmem:[%s9 + $0x18] sm:$0xf]
    %v10551 = vld [vmem:[%s9 + $0x1c] sm:$0xf]
    %v10552 = vld [vmem:[%s9 + $0x20] sm:$0xf]
    %v10553 = vld [vmem:[%s9 + $0x24] sm:$0xf]
    %v10554 = vld [vmem:[%s9 + $0x28] sm:$0xf]
    %v10555 = vld [vmem:[%s9 + $0x2c] sm:$0xf]
    %v10556 = vld [vmem:[%s9 + $0x30] sm:$0xf]
    %v10557 = vld [vmem:[%s9 + $0x34] sm:$0xf]
    %v10558 = vld [vmem:[%s9 + $0x38] sm:$0xf]
    %v10559 = vld [vmem:[%s9 + $0x3c] sm:$0xf]
    %v10576 = vunpack.c.l.b16 %v10544
    %v10577 = vunpack.c.l.b16 %v10545
    %v10578 = vunpack.c.l.b16 %v10546
    %v10579 = vunpack.c.l.b16 %v10547
    %v10580 = vunpack.c.l.b16 %v10548
    %v10581 = vunpack.c.l.b16 %v10549
    %v10582 = vunpack.c.l.b16 %v10550
    %v10583 = vunpack.c.l.b16 %v10551
    %v10584 = vunpack.c.l.b16 %v10552
    %v10585 = vunpack.c.l.b16 %v10553
    %v10586 = vunpack.c.l.b16 %v10554
    %v10587 = vunpack.c.l.b16 %v10555
    %v10588 = vunpack.c.l.b16 %v10556
    %v10589 = vunpack.c.l.b16 %v10557
    %v10590 = vunpack.c.l.b16 %v10558
    %v10591 = vunpack.c.l.b16 %v10559
    %v10592 = vpack.c.b16 %v10577, %v10576
    %v10593 = vpack.c.b16 %v10579, %v10578
    %v10594 = vpack.c.b16 %v10581, %v10580
    %v10595 = vpack.c.b16 %v10583, %v10582
    %v10596 = vpack.c.b16 %v10585, %v10584
    %v10597 = vpack.c.b16 %v10587, %v10586
    %v10598 = vpack.c.b16 %v10589, %v10588
    %v10599 = vpack.c.b16 %v10591, %v10590
    %10608 = vmatpush.bf16.msra.mxu0 %v10599
    %10609 = vmatpush.bf16.msra.mxu0 %v10598
    %10610 = vmatpush.bf16.msra.mxu0 %v10597
    %10611 = vmatpush.bf16.msra.mxu0 %v10596
    %10612 = vmatpush.bf16.msra.mxu0 %v10595
    %10613 = vmatpush.bf16.msra.mxu0 %v10594
    %10614 = vmatpush.bf16.msra.mxu0 %v10593
    %10615 = vmatpush.bf16.msra.mxu0 %v10592
    %10616 = vmatmul.bf16.gmra.mxu0 %v10543
    %v10617 = vpop.f32.mrf.mxu0
    %v10618 = vadd.f32 0.0, %v10617
    %v10619 = vpop.f32.mrf.mxu0
    %10620 = vdwg.mxu0
    %v10622 = vrot.slane %v10618, 1
    %10623 = vrot.lane.b32.xlu0 %v10622, 112
    %v10624 = vpop.permute.xlu0 %10623
    %v10626 = vadd.f32 %v10618, %v10624
    %v10627 = vrot.slane %v10618, 2
    %10628 = vrot.lane.b32.xlu0 %v10627, 96
    %v10629 = vpop.permute.xlu0 %10628
    %v10631 = vadd.f32 %v10626, %v10629
    %v10632 = vrot.slane %v10618, 3
    %10633 = vrot.lane.b32.xlu0 %v10632, 80
    %v10634 = vpop.permute.xlu0 %10633
    %v10636 = vadd.f32 %v10631, %v10634
    %v10637 = vld [vmem:[%s10] sm:$0x1]
    %v10638 = vadd.f32 %v10636, %v10637
    %vm10639 = vcmask 122880
    %10640 = vst.msk [vmem:[#allocation9] sm:$0x1] %vm10639, %v10638
    %v10641 = vld [vmem:[#allocation5 + $0x4] sm:$0xf]
    %v10642 = vpack.c.bf16 %v10641, %v10641
    %v10643 = vld [vmem:[%s9] sm:$0xf]
    %v10644 = vld [vmem:[%s9 + $0x4] sm:$0xf]
    %v10645 = vld [vmem:[%s9 + $0x8] sm:$0xf]
    %v10646 = vld [vmem:[%s9 + $0xc] sm:$0xf]
    %v10647 = vld [vmem:[%s9 + $0x10] sm:$0xf]
    %v10648 = vld [vmem:[%s9 + $0x14] sm:$0xf]
    %v10649 = vld [vmem:[%s9 + $0x18] sm:$0xf]
    %v10650 = vld [vmem:[%s9 + $0x1c] sm:$0xf]
    %v10651 = vld [vmem:[%s9 + $0x20] sm:$0xf]
    %v10652 = vld [vmem:[%s9 + $0x24] sm:$0xf]
    %v10653 = vld [vmem:[%s9 + $0x28] sm:$0xf]
    %v10654 = vld [vmem:[%s9 + $0x2c] sm:$0xf]
    %v10655 = vld [vmem:[%s9 + $0x30] sm:$0xf]
    %v10656 = vld [vmem:[%s9 + $0x34] sm:$0xf]
    %v10657 = vld [vmem:[%s9 + $0x38] sm:$0xf]
    %v10658 = vld [vmem:[%s9 + $0x3c] sm:$0xf]
    %v10675 = vunpack.c.l.b16 %v10643
    %v10676 = vunpack.c.l.b16 %v10644
    %v10677 = vunpack.c.l.b16 %v10645
    %v10678 = vunpack.c.l.b16 %v10646
    %v10679 = vunpack.c.l.b16 %v10647
    %v10680 = vunpack.c.l.b16 %v10648
    %v10681 = vunpack.c.l.b16 %v10649
    %v10682 = vunpack.c.l.b16 %v10650
    %v10683 = vunpack.c.l.b16 %v10651
    %v10684 = vunpack.c.l.b16 %v10652
    %v10685 = vunpack.c.l.b16 %v10653
    %v10686 = vunpack.c.l.b16 %v10654
    %v10687 = vunpack.c.l.b16 %v10655
    %v10688 = vunpack.c.l.b16 %v10656
    %v10689 = vunpack.c.l.b16 %v10657
    %v10690 = vunpack.c.l.b16 %v10658
    %v10691 = vpack.c.b16 %v10676, %v10675
    %v10692 = vpack.c.b16 %v10678, %v10677
    %v10693 = vpack.c.b16 %v10680, %v10679
    %v10694 = vpack.c.b16 %v10682, %v10681
    %v10695 = vpack.c.b16 %v10684, %v10683
    %v10696 = vpack.c.b16 %v10686, %v10685
    %v10697 = vpack.c.b16 %v10688, %v10687
    %v10698 = vpack.c.b16 %v10690, %v10689
    %10707 = vmatpush.bf16.msra.mxu0 %v10698
    %10708 = vmatpush.bf16.msra.mxu0 %v10697
    %10709 = vmatpush.bf16.msra.mxu0 %v10696
    %10710 = vmatpush.bf16.msra.mxu0 %v10695
    %10711 = vmatpush.bf16.msra.mxu0 %v10694
    %10712 = vmatpush.bf16.msra.mxu0 %v10693
    %10713 = vmatpush.bf16.msra.mxu0 %v10692
    %10714 = vmatpush.bf16.msra.mxu0 %v10691
    %10715 = vmatmul.bf16.gmra.mxu0 %v10642
    %v10716 = vpop.f32.mrf.mxu0
    %v10717 = vadd.f32 0.0, %v10716
    %v10718 = vpop.f32.mrf.mxu0
    %10719 = vdwg.mxu0
    %v10721 = vrot.slane %v10717, 1
    %10722 = vrot.lane.b32.xlu0 %v10721, 112
    %v10723 = vpop.permute.xlu0 %10722
    %v10725 = vadd.f32 %v10717, %v10723
    %v10726 = vrot.slane %v10717, 2
    %10727 = vrot.lane.b32.xlu0 %v10726, 96
    %v10728 = vpop.permute.xlu0 %10727
    %v10730 = vadd.f32 %v10725, %v10728
    %v10731 = vrot.slane %v10717, 3
    %10732 = vrot.lane.b32.xlu0 %v10731, 80
    %v10733 = vpop.permute.xlu0 %10732
    %v10735 = vadd.f32 %v10730, %v10733
    %v10736 = vld [vmem:[%s10] sm:$0x1]
    %v10737 = vadd.f32 %v10735, %v10736
    %10738 = vst.msk [vmem:[#allocation9 + $0x1] sm:$0x1] %vm10639, %v10737
    // Predicated region
    $region50: #{encoder_forward.1} parent=1 // pred_check
      _
    $region51: #{encoder_forward.1} parent=1 // pred_check_branch
      %10740 = sbr.rel (0) target = $region53
    $region52: #{encoder_forward.1} parent=1 // pred_region
      %10742 = vsyncadd [#allocation8], 0
      %s10744 = sshll.u32 [#allocation9], 4
      %s10745 = int_to_ptr.vmem [resolvable:$true] %s10744
      %s10746 = sshll.u32 %s11, 4
      %s10747 = int_to_ptr.hbm [resolvable:$true] %s10746
      %10749 = dma.vmem_to_hbm [thread:$0]  %s10745, 32, %s10747, [#allocation8]
    $region53: #{encoder_forward.1} parent=1 // pred_fallthru
      _
    // Predicated region
    $region54: #{encoder_forward.1} parent=1 // pred_check
      _
    $region55: #{encoder_forward.1} parent=1 // pred_check_branch
      %10751 = sbr.rel (0) target = $region57
    $region56: #{encoder_forward.1} parent=1 // pred_region
      %10753 = dma.done [#allocation8], 32
    $region57: #{encoder_forward.1} parent=1 // pred_fallthru
      _
    %10754 = vsyncpa [#allocation7], 1
    %10755 = vsyncpa [#allocation8], 1

</llo_original>
